<compile_context>
chip_gen: v5e
topology: v5e:2x2
jax: 0.10.0
libtpu: 0.0.40
codegen_flags: <defaults>
</compile_context>

<pallas_src>
import functools

import jax
import jax.numpy as jnp
from jax.experimental import pallas as pl
from jax.experimental.pallas import tpu as pltpu


# ============================================================================
# Fused CausalLSTM cell: ONE kernel per step (3x3 convs as 9 shifted dots)
# ============================================================================
def _cell_fused_kernel(wpad,
                       p_ref, c_ref, mask_ref,
                       w1_ref, b1_ref, w2_ref, b2_ref, w3_ref, b3_ref,
                       wcc_ref, wcm_ref, bcell_ref,
                       h_ref, cnew_ref, mnew_ref,
                       pad_ref):
    nout, hd = c_ref.shape            # rows in padded-width layout, hidden dim
    bf16 = jnp.bfloat16

    def conv3x3(read_tap, w_ref, b_ref):
        # 3x3 SAME conv = 9 contiguous-row-shifted, lane-dense MXU dots.
        acc = None
        for dy in range(3):
            for dx in range(3):
                a = read_tap(dy * wpad + dx)                       # [nout, Cin] bf16
                d = jnp.dot(a, w_ref[dy * 3 + dx],
                            preferred_element_type=jnp.float32)
                acc = d if acc is None else acc + d
        return acc + b_ref[...]

    mask = mask_ref[...]                                           # [nout, 1] f32

    # ---- stage 1: fused [x|h|c|m] gate conv -> one [nout, 8H] pre-activation
    pre1 = conv3x3(lambda s: p_ref[s:s + nout, :], w1_ref, b1_ref)
    i1 = jax.nn.sigmoid(pre1[:, 0:hd])
    g1 = jnp.tanh(pre1[:, hd:2 * hd])
    f1 = jax.nn.sigmoid(pre1[:, 2 * hd:3 * hd])        # forget_bias folded in b1
    c_new = (f1 * c_ref[...] + i1 * g1) * mask         # zero the pad columns

    # ---- stage 2: c2m conv on c_new (padded rows rebuilt in VMEM scratch)
    pad_ref[...] = jnp.zeros_like(pad_ref)
    pad_ref[wpad + 1:wpad + 1 + nout, :] = c_new.astype(bf16)
    pre2 = conv3x3(lambda s: pad_ref[s:s + nout, :], w2_ref, b2_ref)
    i2 = jax.nn.sigmoid(pre2[:, 0:hd] + pre1[:, 4 * hd:5 * hd])     # + i_x' + i_m
    g2 = jnp.tanh(pre2[:, hd:2 * hd] + pre1[:, 5 * hd:6 * hd])      # + g_x'
    f2 = jax.nn.sigmoid(pre2[:, 2 * hd:3 * hd] + pre1[:, 6 * hd:7 * hd])  # + f_x'+f_m+fb
    m_new = (f2 * jnp.tanh(pre1[:, 7 * hd:8 * hd]) + i2 * g2) * mask
    o3 = pre1[:, 3 * hd:4 * hd] + pre2[:, 3 * hd:4 * hd]            # (o_x+o_h)+o_c

    # ---- stage 3: o_m conv on m_new + split 1x1 cell conv (no HBM concat)
    pad_ref[wpad + 1:wpad + 1 + nout, :] = m_new.astype(bf16)
    om = conv3x3(lambda s: pad_ref[s:s + nout, :], w3_ref, b3_ref)
    cell = (jnp.dot(c_new.astype(bf16), wcc_ref[...], preferred_element_type=jnp.float32)
            + jnp.dot(m_new.astype(bf16), wcm_ref[...], preferred_element_type=jnp.float32)
            + bcell_ref[...])
    h_ref[...] = jnp.tanh(o3 + om) * jnp.tanh(cell) * mask
    cnew_ref[...] = c_new
    mnew_ref[...] = m_new


def causal_lstm_cell(lp, p_in, c_in, mask, wpad):
    """One fused CausalLSTM step.  p_in: [B, NP, Ctot] bf16 padded-row layout,
    c_in: [B, Nout, H] f32.  Returns (h, c, m) each [B, Nout, H] f32."""
    B, NP, Ctot = p_in.shape
    _, Nout, H = c_in.shape
    kernel = functools.partial(_cell_fused_kernel, wpad)
    out_sd = jax.ShapeDtypeStruct((B, Nout, H), jnp.float32)
    return pl.pallas_call(
        kernel,
        grid=(B,),
        in_specs=[
            pl.BlockSpec((None, NP, Ctot), lambda b: (b, 0, 0)),
            pl.BlockSpec((None, Nout, H), lambda b: (b, 0, 0)),
            pl.BlockSpec((Nout, 1), lambda b: (0, 0)),
            pl.BlockSpec((9, Ctot, 8 * H), lambda b: (0, 0, 0)),
            pl.BlockSpec((1, 8 * H), lambda b: (0, 0)),
            pl.BlockSpec((9, H, 4 * H), lambda b: (0, 0, 0)),
            pl.BlockSpec((1, 4 * H), lambda b: (0, 0)),
            pl.BlockSpec((9, H, H), lambda b: (0, 0, 0)),
            pl.BlockSpec((1, H), lambda b: (0, 0)),
            pl.BlockSpec((H, H), lambda b: (0, 0)),
            pl.BlockSpec((H, H), lambda b: (0, 0)),
            pl.BlockSpec((1, H), lambda b: (0, 0)),
        ],
        out_specs=(
            pl.BlockSpec((None, Nout, H), lambda b: (b, 0, 0)),
            pl.BlockSpec((None, Nout, H), lambda b: (b, 0, 0)),
            pl.BlockSpec((None, Nout, H), lambda b: (b, 0, 0)),
        ),
        out_shape=(out_sd, out_sd, out_sd),
        scratch_shapes=[pltpu.VMEM((NP, H), jnp.bfloat16)],
        compiler_params=pltpu.CompilerParams(dimension_semantics=("parallel",)),
    )(p_in, c_in, mask, lp["w1"], lp["b1"], lp["w2"], lp["b2"],
      lp["w3"], lp["b3"], lp["wcc"], lp["wcm"], lp["bcell"])


# ============================================================================
# Encoder (Conv2d(1->8,k3) + MaxPool2d(3) fused) and decoder matmul kernels
# ============================================================================
def _enc_pool_kernel(p_ref, w_ref, b_ref, o_ref):
    w = w_ref[...]
    m = jnp.dot(p_ref[0], w, preferred_element_type=jnp.float32)
    for k in range(1, 9):
        m = jnp.maximum(m, jnp.dot(p_ref[k], w, preferred_element_type=jnp.float32))
    o_ref[...] = m + b_ref[...]


def _mm_bias_kernel(a_ref, w_ref, b_ref, o_ref):
    o_ref[...] = (jnp.dot(a_ref[...], w_ref[...], preferred_element_type=jnp.float32)
                  + b_ref[...])


def encode_conv_pool(patches, w, b):
    _, group, K = patches.shape
    N = w.shape[-1]
    return pl.pallas_call(
        _enc_pool_kernel,
        grid=(1,),
        in_specs=[
            pl.BlockSpec((9, group, K), lambda i: (0, 0, 0)),
            pl.BlockSpec((K, N), lambda i: (0, 0)),
            pl.BlockSpec((1, N), lambda i: (0, 0)),
        ],
        out_specs=pl.BlockSpec((group, N), lambda i: (0, 0)),
        out_shape=jax.ShapeDtypeStruct((group, N), jnp.float32),
    )(patches, w, b)


def matmul_bias(a, w, b):
    M, K = a.shape
    N = w.shape[-1]
    return pl.pallas_call(
        _mm_bias_kernel,
        grid=(1,),
        in_specs=[
            pl.BlockSpec((M, K), lambda i: (0, 0)),
            pl.BlockSpec((K, N), lambda i: (0, 0)),
            pl.BlockSpec((1, N), lambda i: (0, 0)),
        ],
        out_specs=pl.BlockSpec((M, N), lambda i: (0, 0)),
        out_shape=jax.ShapeDtypeStruct((M, N), jnp.float32),
    )(a, w, b)


# ============================================================================
# model building blocks (JAX glue around the kernels)
# ============================================================================
def encode_frame(params, frame):
    """Conv2d(1,8,3,pad=0) + MaxPool2d(3) fused into one kernel."""
    B, S, _ = frame.shape
    Hp = (S - 2) // 3
    crop = 3 * Hp
    taps = [frame[:, i:i + crop, j:j + crop] for i in range(3) for j in range(3)]
    P = jnp.stack(taps, axis=-1)                                 # [B, crop, crop, 9]
    P = P.reshape(B, Hp, 3, Hp, 3, 9)
    P = jnp.transpose(P, (2, 4, 0, 1, 3, 5))                     # [3,3,B,Hp,Hp,9]
    patches = P.reshape(9, B * Hp * Hp, 9).astype(jnp.bfloat16)
    feat = encode_conv_pool(patches, params["enc_w"], params["enc_b"])
    return feat.reshape(B, Hp, Hp, 8)


def decode_frame(params, h_flat, Hp, Wp, wpad):
    """ConvTranspose2d(C->1, k=6, s=3, output_padding=1) as matmul + shuffle."""
    B = h_flat.shape[0]
    C = h_flat.shape[-1]
    h_sp = h_flat.reshape(B, Hp, wpad, C)[:, :, 1:1 + Wp, :]     # drop pad cols
    dec = params["dec"]
    hp = jnp.pad(h_sp, ((0, 0), (1, 1), (1, 1), (0, 0)))
    taps = [hp[:, u:u + Hp + 1, v:v + Wp + 1, :] for u in range(2) for v in range(2)]
    patches = jnp.concatenate(taps, axis=-1).reshape(B * (Hp + 1) * (Wp + 1), 4 * C)
    y = matmul_bias(patches.astype(jnp.bfloat16), dec["w"], dec["bvec"])
    y = y.reshape(B, Hp + 1, Wp + 1, 3, 3)
    y = jnp.transpose(y, (0, 1, 3, 2, 4)).reshape(B, 3 * (Hp + 1), 3 * (Wp + 1))
    Ho, Wo = 3 * Hp + 4, 3 * Wp + 4
    out = jnp.full((B, Ho, Wo), dec["b0"][0], jnp.float32)       # output_padding: bias only
    return out.at[:, :3 * (Hp + 1), :3 * (Wp + 1)].set(y)


# ============================================================================
# PredRNN++ forward (lax.scan over time)
# ============================================================================
def predrnn_pp_forward(params, x, seq_input, seq_output):
    """x: [B, T, S, S] (T >= seq_input). Returns [B, seq_output, S, S]."""
    B, _, S, _ = x.shape
    Hp = (S - 2) // 3
    Wp = Hp
    wpad = Wp + 2
    nout = Hp * wpad                      # padded-width flat row count
    layers = params["lstm"]
    num_layers = len(layers)
    hs = [lp["b3"].shape[-1] for lp in layers]

    # 0/1 mask of the interior columns of the padded-width layout.
    col = jnp.arange(nout) % wpad
    mask = ((col >= 1) & (col <= Wp)).astype(jnp.float32).reshape(nout, 1)

    def to_pad_rows(t):                   # [B, nout, C] -> [B, NP, C] bf16
        z = jnp.zeros((B, wpad + 1, t.shape[-1]), t.dtype)
        return jnp.concatenate([z, t, z], axis=1).astype(jnp.bfloat16)

    def step(carry, frame):
        hidden, cell_st, mem = carry
        hidden, cell_st = list(hidden), list(cell_st)
        feat = encode_frame(params, frame)                               # [B,Hp,Hp,8]
        inp = jnp.pad(feat, ((0, 0), (0, 0), (1, 1), (0, 0))).reshape(B, nout, 8)
        for i in range(num_layers):                                      # use_GHU=False
            p_in = to_pad_rows(jnp.concatenate([inp, hidden[i], cell_st[i], mem], -1))
            hidden[i], cell_st[i], mem = causal_lstm_cell(
                layers[i], p_in, cell_st[i], mask, wpad)
            inp = hidden[i]
        x_gen = decode_frame(params, hidden[-1], Hp, Wp, wpad)           # [B,S,S]
        return (tuple(hidden), tuple(cell_st), mem), x_gen

    hidden0 = tuple(jnp.zeros((B, nout, h), jnp.float32) for h in hs)
    cell0 = tuple(jnp.zeros((B, nout, h), jnp.float32) for h in hs)
    mem0 = jnp.zeros((B, nout, hs[-1]), jnp.float32)

    # phase 1: teacher-forced input frames
    frames = jnp.transpose(x[:, :seq_input], (1, 0, 2, 3))
    carry, gen = jax.lax.scan(step, (hidden0, cell0, mem0), frames)
    x_last = gen[-1]

    # phase 2: closed-loop generation, feeding the generated frame back
    def gen_step(c, _):
        inner_carry, x_prev = c
        inner_carry, x_new = step(inner_carry, x_prev)
        return (inner_carry, x_new), x_new

    _, outs = jax.lax.scan(gen_step, (carry, x_last), xs=None, length=seq_output)
    return jnp.transpose(outs, (1, 0, 2, 3))


# ============================================================================
# parameter init (torch-module shapes) + kernel-layout preparation
# ============================================================================
def _init_conv(key, kh, kw, cin, cout, scale=0.1):
    kw_, kb_ = jax.random.split(key)
    w = scale * jax.random.normal(kw_, (kh, kw, cin, cout), jnp.float32)
    b = scale * jax.random.normal(kb_, (cout,), jnp.float32)
    return w, b


def init_params(key, num_hidden):
    num_layers = len(num_hidden)
    keys = jax.random.split(key, 2 + num_layers)
    enc_w, enc_b = _init_conv(keys[0], 3, 3, 1, 8)           # nn.Conv2d(1, 8, 3)
    lstm = []
    for i in range(num_layers):
        if i == 0:
            nh_in, cin = num_hidden[-1], 8
        else:
            nh_in, cin = num_hidden[i - 1], num_hidden[i - 1]
        H = num_hidden[i]
        lk = jax.random.split(keys[1 + i], 7)
        wx, bx = _init_conv(lk[0], 3, 3, cin, 7 * H)
        wh, bh = _init_conv(lk[1], 3, 3, H, 4 * H)
        wc, bc = _init_conv(lk[2], 3, 3, H, 3 * H)
        wm, bm = _init_conv(lk[3], 3, 3, nh_in, 3 * H)
        wc2m, bc2m = _init_conv(lk[4], 3, 3, H, 4 * H)
        wom, bom = _init_conv(lk[5], 3, 3, H, H)
        wcell, bcell = _init_conv(lk[6], 1, 1, 2 * H, H)
        lstm.append(dict(wx=wx, bx=bx, wh=wh, bh=bh, wc=wc, bc=bc, wm=wm, bm=bm,
                         wc2m=wc2m, bc2m=bc2m, wom=wom, bom=bom,
                         wcell=wcell, bcell=bcell))
    dk = jax.random.split(keys[1 + num_layers], 2)
    # nn.ConvTranspose2d(num_hidden[-1], 1, 6, stride=3, output_padding=1)
    dec_w = 0.1 * jax.random.normal(dk[0], (num_hidden[-1], 1, 6, 6), jnp.float32)
    dec_b = 0.1 * jax.random.normal(dk[1], (1,), jnp.float32)
    return dict(enc_w=enc_w, enc_b=enc_b, lstm=lstm, dec_w=dec_w, dec_b=dec_b)


def prepare_params(raw, forget_bias=1.0):
    """Fuse per-source conv weights into matmul-ready, tap-major layouts."""
    bf16, f32 = jnp.bfloat16, jnp.float32
    out = {
        "enc_w": raw["enc_w"].reshape(9, 8).astype(bf16),
        "enc_b": raw["enc_b"].reshape(1, 8).astype(f32),
    }

    lstm = []
    for lp in raw["lstm"]:
        H = lp["wh"].shape[-1] // 4
        Cin = lp["wx"].shape[2]
        Cm = lp["wm"].shape[2]
        Ctot = Cin + 2 * H + Cm
        ox, oh, oc, om_ = 0, Cin, Cin + H, Cin + 2 * H

        w1 = jnp.zeros((3, 3, Ctot, 8 * H), f32)

        def put(w, src, row0, nrows, chunk, col0):
            return w.at[:, :, row0:row0 + nrows,
                        chunk * H:(chunk + 1) * H].set(src[:, :, :, col0:col0 + H])

        wx, wh, wc, wm = lp["wx"], lp["wh"], lp["wc"], lp["wm"]
        # chunks 0..2: stage-1 i / g / f  (x + h + c contributions pre-summed)
        for ch in range(3):
            w1 = put(w1, wx, ox, Cin, ch, ch * H)
            w1 = put(w1, wh, oh, H, ch, ch * H)
            w1 = put(w1, wc, oc, H, ch, ch * H)
        w1 = put(w1, wx, ox, Cin, 3, 3 * H)   # chunk 3: o_x + o_h
        w1 = put(w1, wh, oh, H, 3, 3 * H)
        w1 = put(w1, wx, ox, Cin, 4, 4 * H)   # chunk 4: i_x' + i_m
        w1 = put(w1, wm, om_, Cm, 4, 0)
        w1 = put(w1, wx, ox, Cin, 5, 5 * H)   # chunk 5: g_x'
        w1 = put(w1, wx, ox, Cin, 6, 6 * H)   # chunk 6: f_x' + f_m
        w1 = put(w1, wm, om_, Cm, 6, H)
        w1 = put(w1, wm, om_, Cm, 7, 2 * H)   # chunk 7: m_m

        bx, bh, bc, bm = lp["bx"], lp["bh"], lp["bc"], lp["bm"]
        b1 = jnp.concatenate([
            bx[0:H] + bh[0:H] + bc[0:H],
            bx[H:2 * H] + bh[H:2 * H] + bc[H:2 * H],
            bx[2 * H:3 * H] + bh[2 * H:3 * H] + bc[2 * H:3 * H] + forget_bias,
            bx[3 * H:4 * H] + bh[3 * H:4 * H],
            bx[4 * H:5 * H] + bm[0:H],
            bx[5 * H:6 * H],
            bx[6 * H:7 * H] + bm[H:2 * H] + forget_bias,
            bm[2 * H:3 * H],
        ])

        lstm.append(dict(
            w1=w1.reshape(9, Ctot, 8 * H).astype(bf16),     # tap-major, lane-dense
            b1=b1.reshape(1, 8 * H).astype(f32),
            w2=lp["wc2m"].reshape(9, H, 4 * H).astype(bf16),
            b2=lp["bc2m"].reshape(1, 4 * H).astype(f32),
            w3=lp["wom"].reshape(9, H, H).astype(bf16),
            b3=lp["bom"].reshape(1, H).astype(f32),
            wcc=lp["wcell"][0, 0, :H, :].astype(bf16),      # 1x1 cell conv, c part
            wcm=lp["wcell"][0, 0, H:, :].astype(bf16),      # 1x1 cell conv, m part
            bcell=lp["bcell"].reshape(1, H).astype(f32),
        ))
    out["lstm"] = lstm

    # ConvTranspose as a 2x2 conv over 1-padded input + 3x3 pixel shuffle.
    dec_w, dec_b = raw["dec_w"], raw["dec_b"]
    C = dec_w.shape[0]
    wd = dec_w[:, 0].reshape(C, 2, 3, 2, 3)                 # [C, a, ry, b, rx]
    wd = jnp.transpose(wd, (1, 3, 0, 2, 4))[::-1, ::-1]     # [u=1-a, v=1-b, C, ry, rx]
    out["dec"] = dict(
        w=wd.reshape(4 * C, 9).astype(bf16),
        bvec=jnp.broadcast_to(dec_b, (9,)).reshape(1, 9).astype(f32),
        b0=dec_b.astype(f32),
    )
    return out


# ----------------------------------------------------------------------------
if __name__ == "__main__":
    key = jax.random.PRNGKey(0)
    pkey, xkey = jax.random.split(key)

    # Spatial S must satisfy S = 3*((S-2)//3) + 4 so the generated frame can be
    # fed back through the encoder (S=16 -> conv 14 -> pool 4 -> deconv 16).
    B, SEQ_IN, SEQ_OUT, S = 2, 4, 4, 16
    num_hidden = [16, 16]
    assert S == 3 * ((S - 2) // 3) + 4

    raw = init_params(pkey, num_hidden)
    params = prepare_params(raw, forget_bias=1.0)
    x = jax.random.normal(xkey, (B, SEQ_IN, S, S), jnp.float32)

    fwd = jax.jit(functools.partial(predrnn_pp_forward,
                                    seq_input=SEQ_IN, seq_output=SEQ_OUT))
    out = jax.block_until_ready(fwd(params, x))

    assert out.shape == (B, SEQ_OUT, S, S), out.shape
    assert bool(jnp.all(jnp.isfinite(out)))
    print("KERNEL_OK")
</pallas_src>

<mosaic_0001>
module attributes {stable_mosaic.version = 11 : i64} {
  func.func @_enc_pool_kernel(%arg0: i32, %arg1: memref<9x32x9xbf16, #tpu.memory_space<vmem>>, %arg2: memref<9x8xbf16, #tpu.memory_space<vmem>>, %arg3: memref<1x8xf32, #tpu.memory_space<vmem>>, %arg4: memref<32x8xf32, #tpu.memory_space<vmem>>) attributes {dimension_semantics = [#tpu.dimension_semantics<arbitrary>], iteration_bounds = array<i64: 1>, scalar_prefetch = 0 : i64, scratch_operands = 0 : i64, tpu.core_type = #tpu.core_type<tc>, window_params = [{pipeline_mode = #tpu.pipeline_mode<synchronous>, transform_indices = @transform_0, window_bounds = array<i64: 9, 32, 9>}, {pipeline_mode = #tpu.pipeline_mode<synchronous>, transform_indices = @transform_1, window_bounds = array<i64: 9, 8>}, {pipeline_mode = #tpu.pipeline_mode<synchronous>, transform_indices = @transform_2, window_bounds = array<i64: 1, 8>}, {pipeline_mode = #tpu.pipeline_mode<synchronous>, transform_indices = @transform_3, window_bounds = array<i64: 32, 8>}]} {
    %c0 = arith.constant 0 : index
    %c0_0 = arith.constant 0 : index
    %0 = vector.load %arg2[%c0, %c0_0] : memref<9x8xbf16, #tpu.memory_space<vmem>>, vector<9x8xbf16>
    %c0_1 = arith.constant 0 : index
    %c0_2 = arith.constant 0 : index
    %c0_3 = arith.constant 0 : index
    %1 = vector.load %arg1[%c0_1, %c0_2, %c0_3] : memref<9x32x9xbf16, #tpu.memory_space<vmem>>, vector<1x32x9xbf16>
    %2 = vector.shape_cast %1 : vector<1x32x9xbf16> to vector<32x9xbf16>
    %cst = arith.constant dense<0.000000e+00> : vector<32x8xf32>
    %3 = tpu.matmul %2, %0, %cst {dimension_numbers = #tpu.dot_dimension_numbers<[1], [0], [0], [1], [0, 0, 1, 1], [], []>} : vector<32x9xbf16>, vector<9x8xbf16>, vector<32x8xf32> -> vector<32x8xf32>
    %c1 = arith.constant 1 : index
    %c0_4 = arith.constant 0 : index
    %c0_5 = arith.constant 0 : index
    %4 = vector.load %arg1[%c1, %c0_4, %c0_5] : memref<9x32x9xbf16, #tpu.memory_space<vmem>>, vector<1x32x9xbf16>
    %5 = vector.shape_cast %4 : vector<1x32x9xbf16> to vector<32x9xbf16>
    %cst_6 = arith.constant dense<0.000000e+00> : vector<32x8xf32>
    %6 = tpu.matmul %5, %0, %cst_6 {dimension_numbers = #tpu.dot_dimension_numbers<[1], [0], [0], [1], [0, 0, 1, 1], [], []>} : vector<32x9xbf16>, vector<9x8xbf16>, vector<32x8xf32> -> vector<32x8xf32>
    %7 = arith.maximumf %3, %6 : vector<32x8xf32>
    %c2 = arith.constant 2 : index
    %c0_7 = arith.constant 0 : index
    %c0_8 = arith.constant 0 : index
    %8 = vector.load %arg1[%c2, %c0_7, %c0_8] : memref<9x32x9xbf16, #tpu.memory_space<vmem>>, vector<1x32x9xbf16>
    %9 = vector.shape_cast %8 : vector<1x32x9xbf16> to vector<32x9xbf16>
    %cst_9 = arith.constant dense<0.000000e+00> : vector<32x8xf32>
    %10 = tpu.matmul %9, %0, %cst_9 {dimension_numbers = #tpu.dot_dimension_numbers<[1], [0], [0], [1], [0, 0, 1, 1], [], []>} : vector<32x9xbf16>, vector<9x8xbf16>, vector<32x8xf32> -> vector<32x8xf32>
    %11 = arith.maximumf %7, %10 : vector<32x8xf32>
    %c3 = arith.constant 3 : index
    %c0_10 = arith.constant 0 : index
    %c0_11 = arith.constant 0 : index
    %12 = vector.load %arg1[%c3, %c0_10, %c0_11] : memref<9x32x9xbf16, #tpu.memory_space<vmem>>, vector<1x32x9xbf16>
    %13 = vector.shape_cast %12 : vector<1x32x9xbf16> to vector<32x9xbf16>
    %cst_12 = arith.constant dense<0.000000e+00> : vector<32x8xf32>
    %14 = tpu.matmul %13, %0, %cst_12 {dimension_numbers = #tpu.dot_dimension_numbers<[1], [0], [0], [1], [0, 0, 1, 1], [], []>} : vector<32x9xbf16>, vector<9x8xbf16>, vector<32x8xf32> -> vector<32x8xf32>
    %15 = arith.maximumf %11, %14 : vector<32x8xf32>
    %c4 = arith.constant 4 : index
    %c0_13 = arith.constant 0 : index
    %c0_14 = arith.constant 0 : index
    %16 = vector.load %arg1[%c4, %c0_13, %c0_14] : memref<9x32x9xbf16, #tpu.memory_space<vmem>>, vector<1x32x9xbf16>
    %17 = vector.shape_cast %16 : vector<1x32x9xbf16> to vector<32x9xbf16>
    %cst_15 = arith.constant dense<0.000000e+00> : vector<32x8xf32>
    %18 = tpu.matmul %17, %0, %cst_15 {dimension_numbers = #tpu.dot_dimension_numbers<[1], [0], [0], [1], [0, 0, 1, 1], [], []>} : vector<32x9xbf16>, vector<9x8xbf16>, vector<32x8xf32> -> vector<32x8xf32>
    %19 = arith.maximumf %15, %18 : vector<32x8xf32>
    %c5 = arith.constant 5 : index
    %c0_16 = arith.constant 0 : index
    %c0_17 = arith.constant 0 : index
    %20 = vector.load %arg1[%c5, %c0_16, %c0_17] : memref<9x32x9xbf16, #tpu.memory_space<vmem>>, vector<1x32x9xbf16>
    %21 = vector.shape_cast %20 : vector<1x32x9xbf16> to vector<32x9xbf16>
    %cst_18 = arith.constant dense<0.000000e+00> : vector<32x8xf32>
    %22 = tpu.matmul %21, %0, %cst_18 {dimension_numbers = #tpu.dot_dimension_numbers<[1], [0], [0], [1], [0, 0, 1, 1], [], []>} : vector<32x9xbf16>, vector<9x8xbf16>, vector<32x8xf32> -> vector<32x8xf32>
    %23 = arith.maximumf %19, %22 : vector<32x8xf32>
    %c6 = arith.constant 6 : index
    %c0_19 = arith.constant 0 : index
    %c0_20 = arith.constant 0 : index
    %24 = vector.load %arg1[%c6, %c0_19, %c0_20] : memref<9x32x9xbf16, #tpu.memory_space<vmem>>, vector<1x32x9xbf16>
    %25 = vector.shape_cast %24 : vector<1x32x9xbf16> to vector<32x9xbf16>
    %cst_21 = arith.constant dense<0.000000e+00> : vector<32x8xf32>
    %26 = tpu.matmul %25, %0, %cst_21 {dimension_numbers = #tpu.dot_dimension_numbers<[1], [0], [0], [1], [0, 0, 1, 1], [], []>} : vector<32x9xbf16>, vector<9x8xbf16>, vector<32x8xf32> -> vector<32x8xf32>
    %27 = arith.maximumf %23, %26 : vector<32x8xf32>
    %c7 = arith.constant 7 : index
    %c0_22 = arith.constant 0 : index
    %c0_23 = arith.constant 0 : index
    %28 = vector.load %arg1[%c7, %c0_22, %c0_23] : memref<9x32x9xbf16, #tpu.memory_space<vmem>>, vector<1x32x9xbf16>
    %29 = vector.shape_cast %28 : vector<1x32x9xbf16> to vector<32x9xbf16>
    %cst_24 = arith.constant dense<0.000000e+00> : vector<32x8xf32>
    %30 = tpu.matmul %29, %0, %cst_24 {dimension_numbers = #tpu.dot_dimension_numbers<[1], [0], [0], [1], [0, 0, 1, 1], [], []>} : vector<32x9xbf16>, vector<9x8xbf16>, vector<32x8xf32> -> vector<32x8xf32>
    %31 = arith.maximumf %27, %30 : vector<32x8xf32>
    %c8 = arith.constant 8 : index
    %c0_25 = arith.constant 0 : index
    %c0_26 = arith.constant 0 : index
    %32 = vector.load %arg1[%c8, %c0_25, %c0_26] : memref<9x32x9xbf16, #tpu.memory_space<vmem>>, vector<1x32x9xbf16>
    %33 = vector.shape_cast %32 : vector<1x32x9xbf16> to vector<32x9xbf16>
    %cst_27 = arith.constant dense<0.000000e+00> : vector<32x8xf32>
    %34 = tpu.matmul %33, %0, %cst_27 {dimension_numbers = #tpu.dot_dimension_numbers<[1], [0], [0], [1], [0, 0, 1, 1], [], []>} : vector<32x9xbf16>, vector<9x8xbf16>, vector<32x8xf32> -> vector<32x8xf32>
    %35 = arith.maximumf %31, %34 : vector<32x8xf32>
    %c0_28 = arith.constant 0 : index
    %c0_29 = arith.constant 0 : index
    %36 = vector.load %arg3[%c0_28, %c0_29] : memref<1x8xf32, #tpu.memory_space<vmem>>, vector<1x8xf32>
    %37 = vector.broadcast %36 : vector<1x8xf32> to vector<32x8xf32>
    %38 = arith.addf %35, %37 : vector<32x8xf32>
    %c0_30 = arith.constant 0 : index
    %c0_31 = arith.constant 0 : index
    %39 = vector.load %arg4[%c0_30, %c0_31] : memref<32x8xf32, #tpu.memory_space<vmem>>, vector<32x8xf32>
    tpu.vector_store %arg4[%c0_30, %c0_31], %38 {strides = array<i32>} : memref<32x8xf32, #tpu.memory_space<vmem>>, vector<32x8xf32>,
    return
  }
  func.func @transform_0(%arg0: i32) -> (i32, i32, i32) {
    %c0_i32 = arith.constant 0 : i32
    %c0_i32_0 = arith.constant 0 : i32
    %c0_i32_1 = arith.constant 0 : i32
    %c0_i32_2 = arith.constant 0 : i32
    return %c0_i32, %c0_i32_0, %c0_i32_1 : i32, i32, i32
  }
  func.func @transform_1(%arg0: i32) -> (i32, i32) {
    %c0_i32 = arith.constant 0 : i32
    %c0_i32_0 = arith.constant 0 : i32
    %c0_i32_1 = arith.constant 0 : i32
    return %c0_i32, %c0_i32_0 : i32, i32
  }
  func.func @transform_2(%arg0: i32) -> (i32, i32) {
    %c0_i32 = arith.constant 0 : i32
    %c0_i32_0 = arith.constant 0 : i32
    %c0_i32_1 = arith.constant 0 : i32
    return %c0_i32, %c0_i32_0 : i32, i32
  }
  func.func @transform_3(%arg0: i32) -> (i32, i32) {
    %c0_i32 = arith.constant 0 : i32
    %c0_i32_0 = arith.constant 0 : i32
    %c0_i32_1 = arith.constant 0 : i32
    return %c0_i32, %c0_i32_0 : i32, i32
  }
}

module attributes {stable_mosaic.version = 11 : i64} {
  func.func @_cell_fused_kernel(%arg0: i32, %arg1: memref<1x38x56xbf16, #tpu.memory_space<vmem>>, %arg2: memref<1x24x16xf32, #tpu.memory_space<vmem>>, %arg3: memref<24x1xf32, #tpu.memory_space<vmem>>, %arg4: memref<9x56x128xbf16, #tpu.memory_space<vmem>>, %arg5: memref<1x128xf32, #tpu.memory_space<vmem>>, %arg6: memref<9x16x64xbf16, #tpu.memory_space<vmem>>, %arg7: memref<1x64xf32, #tpu.memory_space<vmem>>, %arg8: memref<9x16x16xbf16, #tpu.memory_space<vmem>>, %arg9: memref<1x16xf32, #tpu.memory_space<vmem>>, %arg10: memref<16x16xbf16, #tpu.memory_space<vmem>>, %arg11: memref<16x16xbf16, #tpu.memory_space<vmem>>, %arg12: memref<1x16xf32, #tpu.memory_space<vmem>>, %arg13: memref<1x24x16xf32, #tpu.memory_space<vmem>>, %arg14: memref<1x24x16xf32, #tpu.memory_space<vmem>>, %arg15: memref<1x24x16xf32, #tpu.memory_space<vmem>>, %arg16: memref<38x16xbf16, #tpu.memory_space<vmem>>) attributes {dimension_semantics = [#tpu.dimension_semantics<parallel>], iteration_bounds = array<i64: 2>, scalar_prefetch = 0 : i64, scratch_operands = 1 : i64, tpu.core_type = #tpu.core_type<tc>, window_params = [{transform_indices = @transform_0, window_bounds = array<i64: 1, 38, 56>}, {transform_indices = @transform_1, window_bounds = array<i64: 1, 24, 16>}, {pipeline_mode = #tpu.pipeline_mode<synchronous>, transform_indices = @transform_2, window_bounds = array<i64: 24, 1>}, {pipeline_mode = #tpu.pipeline_mode<synchronous>, transform_indices = @transform_3, window_bounds = array<i64: 9, 56, 128>}, {pipeline_mode = #tpu.pipeline_mode<synchronous>, transform_indices = @transform_4, window_bounds = array<i64: 1, 128>}, {pipeline_mode = #tpu.pipeline_mode<synchronous>, transform_indices = @transform_5, window_bounds = array<i64: 9, 16, 64>}, {pipeline_mode = #tpu.pipeline_mode<synchronous>, transform_indices = @transform_6, window_bounds = array<i64: 1, 64>}, {pipeline_mode = #tpu.pipeline_mode<synchronous>, transform_indices = @transform_7, window_bounds = array<i64: 9, 16, 16>}, {pipeline_mode = #tpu.pipeline_mode<synchronous>, transform_indices = @transform_8, window_bounds = array<i64: 1, 16>}, {pipeline_mode = #tpu.pipeline_mode<synchronous>, transform_indices = @transform_9, window_bounds = array<i64: 16, 16>}, {pipeline_mode = #tpu.pipeline_mode<synchronous>, transform_indices = @transform_10, window_bounds = array<i64: 16, 16>}, {pipeline_mode = #tpu.pipeline_mode<synchronous>, transform_indices = @transform_11, window_bounds = array<i64: 1, 16>}, {transform_indices = @transform_12, window_bounds = array<i64: 1, 24, 16>}, {transform_indices = @transform_13, window_bounds = array<i64: 1, 24, 16>}, {transform_indices = @transform_14, window_bounds = array<i64: 1, 24, 16>}]} {
    %c0 = arith.constant 0 : index
    %c0_0 = arith.constant 0 : index
    %0 = vector.load %arg3[%c0, %c0_0] : memref<24x1xf32, #tpu.memory_space<vmem>>, vector<24x1xf32>
    %c0_1 = arith.constant 0 : index
    %c0_2 = arith.constant 0 : index
    %c0_3 = arith.constant 0 : index
    %1 = vector.load %arg1[%c0_1, %c0_2, %c0_3] : memref<1x38x56xbf16, #tpu.memory_space<vmem>>, vector<1x24x56xbf16>
    %2 = vector.shape_cast %1 : vector<1x24x56xbf16> to vector<24x56xbf16>
    %c0_4 = arith.constant 0 : index
    %c0_5 = arith.constant 0 : index
    %c0_6 = arith.constant 0 : index
    %3 = vector.load %arg4[%c0_4, %c0_5, %c0_6] : memref<9x56x128xbf16, #tpu.memory_space<vmem>>, vector<1x56x128xbf16>
    %4 = vector.shape_cast %3 : vector<1x56x128xbf16> to vector<56x128xbf16>
    %cst = arith.constant dense<0.000000e+00> : vector<24x128xf32>
    %5 = tpu.matmul %2, %4, %cst {dimension_numbers = #tpu.dot_dimension_numbers<[1], [0], [0], [1], [0, 0, 1, 1], [], []>} : vector<24x56xbf16>, vector<56x128xbf16>, vector<24x128xf32> -> vector<24x128xf32>
    %c0_7 = arith.constant 0 : index
    %c1 = arith.constant 1 : index
    %c0_8 = arith.constant 0 : index
    %6 = vector.load %arg1[%c0_7, %c1, %c0_8] : memref<1x38x56xbf16, #tpu.memory_space<vmem>>, vector<1x24x56xbf16>
    %7 = vector.shape_cast %6 : vector<1x24x56xbf16> to vector<24x56xbf16>
    %c1_9 = arith.constant 1 : index
    %c0_10 = arith.constant 0 : index
    %c0_11 = arith.constant 0 : index
    %8 = vector.load %arg4[%c1_9, %c0_10, %c0_11] : memref<9x56x128xbf16, #tpu.memory_space<vmem>>, vector<1x56x128xbf16>
    %9 = vector.shape_cast %8 : vector<1x56x128xbf16> to vector<56x128xbf16>
    %cst_12 = arith.constant dense<0.000000e+00> : vector<24x128xf32>
    %10 = tpu.matmul %7, %9, %cst_12 {dimension_numbers = #tpu.dot_dimension_numbers<[1], [0], [0], [1], [0, 0, 1, 1], [], []>} : vector<24x56xbf16>, vector<56x128xbf16>, vector<24x128xf32> -> vector<24x128xf32>
    %11 = arith.addf %5, %10 : vector<24x128xf32>
    %c0_13 = arith.constant 0 : index
    %c2 = arith.constant 2 : index
    %c0_14 = arith.constant 0 : index
    %12 = vector.load %arg1[%c0_13, %c2, %c0_14] : memref<1x38x56xbf16, #tpu.memory_space<vmem>>, vector<1x24x56xbf16>
    %13 = vector.shape_cast %12 : vector<1x24x56xbf16> to vector<24x56xbf16>
    %c2_15 = arith.constant 2 : index
    %c0_16 = arith.constant 0 : index
    %c0_17 = arith.constant 0 : index
    %14 = vector.load %arg4[%c2_15, %c0_16, %c0_17] : memref<9x56x128xbf16, #tpu.memory_space<vmem>>, vector<1x56x128xbf16>
    %15 = vector.shape_cast %14 : vector<1x56x128xbf16> to vector<56x128xbf16>
    %cst_18 = arith.constant dense<0.000000e+00> : vector<24x128xf32>
    %16 = tpu.matmul %13, %15, %cst_18 {dimension_numbers = #tpu.dot_dimension_numbers<[1], [0], [0], [1], [0, 0, 1, 1], [], []>} : vector<24x56xbf16>, vector<56x128xbf16>, vector<24x128xf32> -> vector<24x128xf32>
    %17 = arith.addf %11, %16 : vector<24x128xf32>
    %c0_19 = arith.constant 0 : index
    %c6 = arith.constant 6 : index
    %c0_20 = arith.constant 0 : index
    %18 = vector.load %arg1[%c0_19, %c6, %c0_20] : memref<1x38x56xbf16, #tpu.memory_space<vmem>>, vector<1x24x56xbf16>
    %19 = vector.shape_cast %18 : vector<1x24x56xbf16> to vector<24x56xbf16>
    %c3 = arith.constant 3 : index
    %c0_21 = arith.constant 0 : index
    %c0_22 = arith.constant 0 : index
    %20 = vector.load %arg4[%c3, %c0_21, %c0_22] : memref<9x56x128xbf16, #tpu.memory_space<vmem>>, vector<1x56x128xbf16>
    %21 = vector.shape_cast %20 : vector<1x56x128xbf16> to vector<56x128xbf16>
    %cst_23 = arith.constant dense<0.000000e+00> : vector<24x128xf32>
    %22 = tpu.matmul %19, %21, %cst_23 {dimension_numbers = #tpu.dot_dimension_numbers<[1], [0], [0], [1], [0, 0, 1, 1], [], []>} : vector<24x56xbf16>, vector<56x128xbf16>, vector<24x128xf32> -> vector<24x128xf32>
    %23 = arith.addf %17, %22 : vector<24x128xf32>
    %c0_24 = arith.constant 0 : index
    %c7 = arith.constant 7 : index
    %c0_25 = arith.constant 0 : index
    %24 = vector.load %arg1[%c0_24, %c7, %c0_25] : memref<1x38x56xbf16, #tpu.memory_space<vmem>>, vector<1x24x56xbf16>
    %25 = vector.shape_cast %24 : vector<1x24x56xbf16> to vector<24x56xbf16>
    %c4 = arith.constant 4 : index
    %c0_26 = arith.constant 0 : index
    %c0_27 = arith.constant 0 : index
    %26 = vector.load %arg4[%c4, %c0_26, %c0_27] : memref<9x56x128xbf16, #tpu.memory_space<vmem>>, vector<1x56x128xbf16>
    %27 = vector.shape_cast %26 : vector<1x56x128xbf16> to vector<56x128xbf16>
    %cst_28 = arith.constant dense<0.000000e+00> : vector<24x128xf32>
    %28 = tpu.matmul %25, %27, %cst_28 {dimension_numbers = #tpu.dot_dimension_numbers<[1], [0], [0], [1], [0, 0, 1, 1], [], []>} : vector<24x56xbf16>, vector<56x128xbf16>, vector<24x128xf32> -> vector<24x128xf32>
    %29 = arith.addf %23, %28 : vector<24x128xf32>
    %c0_29 = arith.constant 0 : index
    %c8 = arith.constant 8 : index
    %c0_30 = arith.constant 0 : index
    %30 = vector.load %arg1[%c0_29, %c8, %c0_30] : memref<1x38x56xbf16, #tpu.memory_space<vmem>>, vector<1x24x56xbf16>
    %31 = vector.shape_cast %30 : vector<1x24x56xbf16> to vector<24x56xbf16>
    %c5 = arith.constant 5 : index
    %c0_31 = arith.constant 0 : index
    %c0_32 = arith.constant 0 : index
    %32 = vector.load %arg4[%c5, %c0_31, %c0_32] : memref<9x56x128xbf16, #tpu.memory_space<vmem>>, vector<1x56x128xbf16>
    %33 = vector.shape_cast %32 : vector<1x56x128xbf16> to vector<56x128xbf16>
    %cst_33 = arith.constant dense<0.000000e+00> : vector<24x128xf32>
    %34 = tpu.matmul %31, %33, %cst_33 {dimension_numbers = #tpu.dot_dimension_numbers<[1], [0], [0], [1], [0, 0, 1, 1], [], []>} : vector<24x56xbf16>, vector<56x128xbf16>, vector<24x128xf32> -> vector<24x128xf32>
    %35 = arith.addf %29, %34 : vector<24x128xf32>
    %c0_34 = arith.constant 0 : index
    %c12 = arith.constant 12 : index
    %c0_35 = arith.constant 0 : index
    %36 = vector.load %arg1[%c0_34, %c12, %c0_35] : memref<1x38x56xbf16, #tpu.memory_space<vmem>>, vector<1x24x56xbf16>
    %37 = vector.shape_cast %36 : vector<1x24x56xbf16> to vector<24x56xbf16>
    %c6_36 = arith.constant 6 : index
    %c0_37 = arith.constant 0 : index
    %c0_38 = arith.constant 0 : index
    %38 = vector.load %arg4[%c6_36, %c0_37, %c0_38] : memref<9x56x128xbf16, #tpu.memory_space<vmem>>, vector<1x56x128xbf16>
    %39 = vector.shape_cast %38 : vector<1x56x128xbf16> to vector<56x128xbf16>
    %cst_39 = arith.constant dense<0.000000e+00> : vector<24x128xf32>
    %40 = tpu.matmul %37, %39, %cst_39 {dimension_numbers = #tpu.dot_dimension_numbers<[1], [0], [0], [1], [0, 0, 1, 1], [], []>} : vector<24x56xbf16>, vector<56x128xbf16>, vector<24x128xf32> -> vector<24x128xf32>
    %41 = arith.addf %35, %40 : vector<24x128xf32>
    %c0_40 = arith.constant 0 : index
    %c13 = arith.constant 13 : index
    %c0_41 = arith.constant 0 : index
    %42 = vector.load %arg1[%c0_40, %c13, %c0_41] : memref<1x38x56xbf16, #tpu.memory_space<vmem>>, vector<1x24x56xbf16>
    %43 = vector.shape_cast %42 : vector<1x24x56xbf16> to vector<24x56xbf16>
    %c7_42 = arith.constant 7 : index
    %c0_43 = arith.constant 0 : index
    %c0_44 = arith.constant 0 : index
    %44 = vector.load %arg4[%c7_42, %c0_43, %c0_44] : memref<9x56x128xbf16, #tpu.memory_space<vmem>>, vector<1x56x128xbf16>
    %45 = vector.shape_cast %44 : vector<1x56x128xbf16> to vector<56x128xbf16>
    %cst_45 = arith.constant dense<0.000000e+00> : vector<24x128xf32>
    %46 = tpu.matmul %43, %45, %cst_45 {dimension_numbers = #tpu.dot_dimension_numbers<[1], [0], [0], [1], [0, 0, 1, 1], [], []>} : vector<24x56xbf16>, vector<56x128xbf16>, vector<24x128xf32> -> vector<24x128xf32>
    %47 = arith.addf %41, %46 : vector<24x128xf32>
    %c0_46 = arith.constant 0 : index
    %c14 = arith.constant 14 : index
    %c0_47 = arith.constant 0 : index
    %48 = vector.load %arg1[%c0_46, %c14, %c0_47] : memref<1x38x56xbf16, #tpu.memory_space<vmem>>, vector<1x24x56xbf16>
    %49 = vector.shape_cast %48 : vector<1x24x56xbf16> to vector<24x56xbf16>
    %c8_48 = arith.constant 8 : index
    %c0_49 = arith.constant 0 : index
    %c0_50 = arith.constant 0 : index
    %50 = vector.load %arg4[%c8_48, %c0_49, %c0_50] : memref<9x56x128xbf16, #tpu.memory_space<vmem>>, vector<1x56x128xbf16>
    %51 = vector.shape_cast %50 : vector<1x56x128xbf16> to vector<56x128xbf16>
    %cst_51 = arith.constant dense<0.000000e+00> : vector<24x128xf32>
    %52 = tpu.matmul %49, %51, %cst_51 {dimension_numbers = #tpu.dot_dimension_numbers<[1], [0], [0], [1], [0, 0, 1, 1], [], []>} : vector<24x56xbf16>, vector<56x128xbf16>, vector<24x128xf32> -> vector<24x128xf32>
    %53 = arith.addf %47, %52 : vector<24x128xf32>
    %c0_52 = arith.constant 0 : index
    %c0_53 = arith.constant 0 : index
    %54 = vector.load %arg5[%c0_52, %c0_53] : memref<1x128xf32, #tpu.memory_space<vmem>>, vector<1x128xf32>
    %55 = vector.broadcast %54 : vector<1x128xf32> to vector<24x128xf32>
    %56 = arith.addf %53, %55 : vector<24x128xf32>
    %57 = vector.extract_strided_slice %56 {offsets = [0, 0], sizes = [24, 16], strides = [1, 1]} : vector<24x128xf32> to vector<24x16xf32>
    %58 = arith.negf %57 : vector<24x16xf32>
    %59 = math.exp %58 : vector<24x16xf32>
    %cst_54 = arith.constant 1.000000e+00 : f32
    %60 = vector.broadcast %cst_54 : f32 to vector<24x16xf32>
    %61 = arith.addf %60, %59 : vector<24x16xf32>
    %62 = arith.divf %60, %61 : vector<24x16xf32>
    %63 = vector.extract_strided_slice %56 {offsets = [0, 16], sizes = [24, 16], strides = [1, 1]} : vector<24x128xf32> to vector<24x16xf32>
    %64 = math.tanh %63 : vector<24x16xf32>
    %65 = vector.extract_strided_slice %56 {offsets = [0, 32], sizes = [24, 16], strides = [1, 1]} : vector<24x128xf32> to vector<24x16xf32>
    %66 = arith.negf %65 : vector<24x16xf32>
    %67 = math.exp %66 : vector<24x16xf32>
    %cst_55 = arith.constant 1.000000e+00 : f32
    %68 = vector.broadcast %cst_55 : f32 to vector<24x16xf32>
    %69 = arith.addf %68, %67 : vector<24x16xf32>
    %70 = arith.divf %68, %69 : vector<24x16xf32>
    %c0_56 = arith.constant 0 : index
    %c0_57 = arith.constant 0 : index
    %c0_58 = arith.constant 0 : index
    %71 = vector.load %arg2[%c0_56, %c0_57, %c0_58] : memref<1x24x16xf32, #tpu.memory_space<vmem>>, vector<1x24x16xf32>
    %72 = vector.shape_cast %71 : vector<1x24x16xf32> to vector<24x16xf32>
    %73 = arith.mulf %70, %72 : vector<24x16xf32>
    %74 = arith.mulf %62, %64 : vector<24x16xf32>
    %75 = arith.addf %73, %74 : vector<24x16xf32>
    %76 = vector.broadcast %0 : vector<24x1xf32> to vector<24x16xf32>
    %77 = arith.mulf %75, %76 : vector<24x16xf32>
    %cst_59 = arith.constant 0.000000e+00 : bf16
    %78 = vector.broadcast %cst_59 : bf16 to vector<38x16xbf16>
    %c0_60 = arith.constant 0 : index
    %c0_61 = arith.constant 0 : index
    %79 = vector.load %arg16[%c0_60, %c0_61] : memref<38x16xbf16, #tpu.memory_space<vmem>>, vector<38x16xbf16>
    tpu.vector_store %arg16[%c0_60, %c0_61], %78 {strides = array<i32>} : memref<38x16xbf16, #tpu.memory_space<vmem>>, vector<38x16xbf16>,
    %80 = arith.truncf %77 : vector<24x16xf32> to vector<24x16xbf16>
    %c7_62 = arith.constant 7 : index
    %c0_63 = arith.constant 0 : index
    %81 = vector.load %arg16[%c7_62, %c0_63] : memref<38x16xbf16, #tpu.memory_space<vmem>>, vector<24x16xbf16>
    tpu.vector_store %arg16[%c7_62, %c0_63], %80 {strides = array<i32>} : memref<38x16xbf16, #tpu.memory_space<vmem>>, vector<24x16xbf16>,
    %c0_64 = arith.constant 0 : index
    %c0_65 = arith.constant 0 : index
    %82 = vector.load %arg16[%c0_64, %c0_65] : memref<38x16xbf16, #tpu.memory_space<vmem>>, vector<24x16xbf16>
    %c0_66 = arith.constant 0 : index
    %c0_67 = arith.constant 0 : index
    %c0_68 = arith.constant 0 : index
    %83 = vector.load %arg6[%c0_66, %c0_67, %c0_68] : memref<9x16x64xbf16, #tpu.memory_space<vmem>>, vector<1x16x64xbf16>
    %84 = vector.shape_cast %83 : vector<1x16x64xbf16> to vector<16x64xbf16>
    %cst_69 = arith.constant dense<0.000000e+00> : vector<24x64xf32>
    %85 = tpu.matmul %82, %84, %cst_69 {dimension_numbers = #tpu.dot_dimension_numbers<[1], [0], [0], [1], [0, 0, 1, 1], [], []>} : vector<24x16xbf16>, vector<16x64xbf16>, vector<24x64xf32> -> vector<24x64xf32>
    %c1_70 = arith.constant 1 : index
    %c0_71 = arith.constant 0 : index
    %86 = vector.load %arg16[%c1_70, %c0_71] : memref<38x16xbf16, #tpu.memory_space<vmem>>, vector<24x16xbf16>
    %c1_72 = arith.constant 1 : index
    %c0_73 = arith.constant 0 : index
    %c0_74 = arith.constant 0 : index
    %87 = vector.load %arg6[%c1_72, %c0_73, %c0_74] : memref<9x16x64xbf16, #tpu.memory_space<vmem>>, vector<1x16x64xbf16>
    %88 = vector.shape_cast %87 : vector<1x16x64xbf16> to vector<16x64xbf16>
    %cst_75 = arith.constant dense<0.000000e+00> : vector<24x64xf32>
    %89 = tpu.matmul %86, %88, %cst_75 {dimension_numbers = #tpu.dot_dimension_numbers<[1], [0], [0], [1], [0, 0, 1, 1], [], []>} : vector<24x16xbf16>, vector<16x64xbf16>, vector<24x64xf32> -> vector<24x64xf32>
    %90 = arith.addf %85, %89 : vector<24x64xf32>
    %c2_76 = arith.constant 2 : index
    %c0_77 = arith.constant 0 : index
    %91 = vector.load %arg16[%c2_76, %c0_77] : memref<38x16xbf16, #tpu.memory_space<vmem>>, vector<24x16xbf16>
    %c2_78 = arith.constant 2 : index
    %c0_79 = arith.constant 0 : index
    %c0_80 = arith.constant 0 : index
    %92 = vector.load %arg6[%c2_78, %c0_79, %c0_80] : memref<9x16x64xbf16, #tpu.memory_space<vmem>>, vector<1x16x64xbf16>
    %93 = vector.shape_cast %92 : vector<1x16x64xbf16> to vector<16x64xbf16>
    %cst_81 = arith.constant dense<0.000000e+00> : vector<24x64xf32>
    %94 = tpu.matmul %91, %93, %cst_81 {dimension_numbers = #tpu.dot_dimension_numbers<[1], [0], [0], [1], [0, 0, 1, 1], [], []>} : vector<24x16xbf16>, vector<16x64xbf16>, vector<24x64xf32> -> vector<24x64xf32>
    %95 = arith.addf %90, %94 : vector<24x64xf32>
    %c6_82 = arith.constant 6 : index
    %c0_83 = arith.constant 0 : index
    %96 = vector.load %arg16[%c6_82, %c0_83] : memref<38x16xbf16, #tpu.memory_space<vmem>>, vector<24x16xbf16>
    %c3_84 = arith.constant 3 : index
    %c0_85 = arith.constant 0 : index
    %c0_86 = arith.constant 0 : index
    %97 = vector.load %arg6[%c3_84, %c0_85, %c0_86] : memref<9x16x64xbf16, #tpu.memory_space<vmem>>, vector<1x16x64xbf16>
    %98 = vector.shape_cast %97 : vector<1x16x64xbf16> to vector<16x64xbf16>
    %cst_87 = arith.constant dense<0.000000e+00> : vector<24x64xf32>
    %99 = tpu.matmul %96, %98, %cst_87 {dimension_numbers = #tpu.dot_dimension_numbers<[1], [0], [0], [1], [0, 0, 1, 1], [], []>} : vector<24x16xbf16>, vector<16x64xbf16>, vector<24x64xf32> -> vector<24x64xf32>
    %100 = arith.addf %95, %99 : vector<24x64xf32>
    %c7_88 = arith.constant 7 : index
    %c0_89 = arith.constant 0 : index
    %101 = vector.load %arg16[%c7_88, %c0_89] : memref<38x16xbf16, #tpu.memory_space<vmem>>, vector<24x16xbf16>
    %c4_90 = arith.constant 4 : index
    %c0_91 = arith.constant 0 : index
    %c0_92 = arith.constant 0 : index
    %102 = vector.load %arg6[%c4_90, %c0_91, %c0_92] : memref<9x16x64xbf16, #tpu.memory_space<vmem>>, vector<1x16x64xbf16>
    %103 = vector.shape_cast %102 : vector<1x16x64xbf16> to vector<16x64xbf16>
    %cst_93 = arith.constant dense<0.000000e+00> : vector<24x64xf32>
    %104 = tpu.matmul %101, %103, %cst_93 {dimension_numbers = #tpu.dot_dimension_numbers<[1], [0], [0], [1], [0, 0, 1, 1], [], []>} : vector<24x16xbf16>, vector<16x64xbf16>, vector<24x64xf32> -> vector<24x64xf32>
    %105 = arith.addf %100, %104 : vector<24x64xf32>
    %c8_94 = arith.constant 8 : index
    %c0_95 = arith.constant 0 : index
    %106 = vector.load %arg16[%c8_94, %c0_95] : memref<38x16xbf16, #tpu.memory_space<vmem>>, vector<24x16xbf16>
    %c5_96 = arith.constant 5 : index
    %c0_97 = arith.constant 0 : index
    %c0_98 = arith.constant 0 : index
    %107 = vector.load %arg6[%c5_96, %c0_97, %c0_98] : memref<9x16x64xbf16, #tpu.memory_space<vmem>>, vector<1x16x64xbf16>
    %108 = vector.shape_cast %107 : vector<1x16x64xbf16> to vector<16x64xbf16>
    %cst_99 = arith.constant dense<0.000000e+00> : vector<24x64xf32>
    %109 = tpu.matmul %106, %108, %cst_99 {dimension_numbers = #tpu.dot_dimension_numbers<[1], [0], [0], [1], [0, 0, 1, 1], [], []>} : vector<24x16xbf16>, vector<16x64xbf16>, vector<24x64xf32> -> vector<24x64xf32>
    %110 = arith.addf %105, %109 : vector<24x64xf32>
    %c12_100 = arith.constant 12 : index
    %c0_101 = arith.constant 0 : index
    %111 = vector.load %arg16[%c12_100, %c0_101] : memref<38x16xbf16, #tpu.memory_space<vmem>>, vector<24x16xbf16>
    %c6_102 = arith.constant 6 : index
    %c0_103 = arith.constant 0 : index
    %c0_104 = arith.constant 0 : index
    %112 = vector.load %arg6[%c6_102, %c0_103, %c0_104] : memref<9x16x64xbf16, #tpu.memory_space<vmem>>, vector<1x16x64xbf16>
    %113 = vector.shape_cast %112 : vector<1x16x64xbf16> to vector<16x64xbf16>
    %cst_105 = arith.constant dense<0.000000e+00> : vector<24x64xf32>
    %114 = tpu.matmul %111, %113, %cst_105 {dimension_numbers = #tpu.dot_dimension_numbers<[1], [0], [0], [1], [0, 0, 1, 1], [], []>} : vector<24x16xbf16>, vector<16x64xbf16>, vector<24x64xf32> -> vector<24x64xf32>
    %115 = arith.addf %110, %114 : vector<24x64xf32>
    %c13_106 = arith.constant 13 : index
    %c0_107 = arith.constant 0 : index
    %116 = vector.load %arg16[%c13_106, %c0_107] : memref<38x16xbf16, #tpu.memory_space<vmem>>, vector<24x16xbf16>
    %c7_108 = arith.constant 7 : index
    %c0_109 = arith.constant 0 : index
    %c0_110 = arith.constant 0 : index
    %117 = vector.load %arg6[%c7_108, %c0_109, %c0_110] : memref<9x16x64xbf16, #tpu.memory_space<vmem>>, vector<1x16x64xbf16>
    %118 = vector.shape_cast %117 : vector<1x16x64xbf16> to vector<16x64xbf16>
    %cst_111 = arith.constant dense<0.000000e+00> : vector<24x64xf32>
    %119 = tpu.matmul %116, %118, %cst_111 {dimension_numbers = #tpu.dot_dimension_numbers<[1], [0], [0], [1], [0, 0, 1, 1], [], []>} : vector<24x16xbf16>, vector<16x64xbf16>, vector<24x64xf32> -> vector<24x64xf32>
    %120 = arith.addf %115, %119 : vector<24x64xf32>
    %c14_112 = arith.constant 14 : index
    %c0_113 = arith.constant 0 : index
    %121 = vector.load %arg16[%c14_112, %c0_113] : memref<38x16xbf16, #tpu.memory_space<vmem>>, vector<24x16xbf16>
    %c8_114 = arith.constant 8 : index
    %c0_115 = arith.constant 0 : index
    %c0_116 = arith.constant 0 : index
    %122 = vector.load %arg6[%c8_114, %c0_115, %c0_116] : memref<9x16x64xbf16, #tpu.memory_space<vmem>>, vector<1x16x64xbf16>
    %123 = vector.shape_cast %122 : vector<1x16x64xbf16> to vector<16x64xbf16>
    %cst_117 = arith.constant dense<0.000000e+00> : vector<24x64xf32>
    %124 = tpu.matmul %121, %123, %cst_117 {dimension_numbers = #tpu.dot_dimension_numbers<[1], [0], [0], [1], [0, 0, 1, 1], [], []>} : vector<24x16xbf16>, vector<16x64xbf16>, vector<24x64xf32> -> vector<24x64xf32>
    %125 = arith.addf %120, %124 : vector<24x64xf32>
    %c0_118 = arith.constant 0 : index
    %c0_119 = arith.constant 0 : index
    %126 = vector.load %arg7[%c0_118, %c0_119] : memref<1x64xf32, #tpu.memory_space<vmem>>, vector<1x64xf32>
    %127 = vector.broadcast %126 : vector<1x64xf32> to vector<24x64xf32>
    %128 = arith.addf %125, %127 : vector<24x64xf32>
    %129 = vector.extract_strided_slice %128 {offsets = [0, 0], sizes = [24, 16], strides = [1, 1]} : vector<24x64xf32> to vector<24x16xf32>
    %130 = vector.extract_strided_slice %56 {offsets = [0, 64], sizes = [24, 16], strides = [1, 1]} : vector<24x128xf32> to vector<24x16xf32>
    %131 = arith.addf %129, %130 : vector<24x16xf32>
    %132 = arith.negf %131 : vector<24x16xf32>
    %133 = math.exp %132 : vector<24x16xf32>
    %cst_120 = arith.constant 1.000000e+00 : f32
    %134 = vector.broadcast %cst_120 : f32 to vector<24x16xf32>
    %135 = arith.addf %134, %133 : vector<24x16xf32>
    %136 = arith.divf %134, %135 : vector<24x16xf32>
    %137 = vector.extract_strided_slice %128 {offsets = [0, 16], sizes = [24, 16], strides = [1, 1]} : vector<24x64xf32> to vector<24x16xf32>
    %138 = vector.extract_strided_slice %56 {offsets = [0, 80], sizes = [24, 16], strides = [1, 1]} : vector<24x128xf32> to vector<24x16xf32>
    %139 = arith.addf %137, %138 : vector<24x16xf32>
    %140 = math.tanh %139 : vector<24x16xf32>
    %141 = vector.extract_strided_slice %128 {offsets = [0, 32], sizes = [24, 16], strides = [1, 1]} : vector<24x64xf32> to vector<24x16xf32>
    %142 = vector.extract_strided_slice %56 {offsets = [0, 96], sizes = [24, 16], strides = [1, 1]} : vector<24x128xf32> to vector<24x16xf32>
    %143 = arith.addf %141, %142 : vector<24x16xf32>
    %144 = arith.negf %143 : vector<24x16xf32>
    %145 = math.exp %144 : vector<24x16xf32>
    %cst_121 = arith.constant 1.000000e+00 : f32
    %146 = vector.broadcast %cst_121 : f32 to vector<24x16xf32>
    %147 = arith.addf %146, %145 : vector<24x16xf32>
    %148 = arith.divf %146, %147 : vector<24x16xf32>
    %149 = vector.extract_strided_slice %56 {offsets = [0, 112], sizes = [24, 16], strides = [1, 1]} : vector<24x128xf32> to vector<24x16xf32>
    %150 = math.tanh %149 : vector<24x16xf32>
    %151 = arith.mulf %148, %150 : vector<24x16xf32>
    %152 = arith.mulf %136, %140 : vector<24x16xf32>
    %153 = arith.addf %151, %152 : vector<24x16xf32>
    %154 = vector.broadcast %0 : vector<24x1xf32> to vector<24x16xf32>
    %155 = arith.mulf %153, %154 : vector<24x16xf32>
    %156 = vector.extract_strided_slice %56 {offsets = [0, 48], sizes = [24, 16], strides = [1, 1]} : vector<24x128xf32> to vector<24x16xf32>
    %157 = vector.extract_strided_slice %128 {offsets = [0, 48], sizes = [24, 16], strides = [1, 1]} : vector<24x64xf32> to vector<24x16xf32>
    %158 = arith.addf %156, %157 : vector<24x16xf32>
    %159 = arith.truncf %155 : vector<24x16xf32> to vector<24x16xbf16>
    %c7_122 = arith.constant 7 : index
    %c0_123 = arith.constant 0 : index
    %160 = vector.load %arg16[%c7_122, %c0_123] : memref<38x16xbf16, #tpu.memory_space<vmem>>, vector<24x16xbf16>
    tpu.vector_store %arg16[%c7_122, %c0_123], %159 {strides = array<i32>} : memref<38x16xbf16, #tpu.memory_space<vmem>>, vector<24x16xbf16>,
    %c0_124 = arith.constant 0 : index
    %c0_125 = arith.constant 0 : index
    %161 = vector.load %arg16[%c0_124, %c0_125] : memref<38x16xbf16, #tpu.memory_space<vmem>>, vector<24x16xbf16>
    %c0_126 = arith.constant 0 : index
    %c0_127 = arith.constant 0 : index
    %c0_128 = arith.constant 0 : index
    %162 = vector.load %arg8[%c0_126, %c0_127, %c0_128] : memref<9x16x16xbf16, #tpu.memory_space<vmem>>, vector<1x16x16xbf16>
    %163 = vector.shape_cast %162 : vector<1x16x16xbf16> to vector<16x16xbf16>
    %cst_129 = arith.constant dense<0.000000e+00> : vector<24x16xf32>
    %164 = tpu.matmul %161, %163, %cst_129 {dimension_numbers = #tpu.dot_dimension_numbers<[1], [0], [0], [1], [0, 0, 1, 1], [], []>} : vector<24x16xbf16>, vector<16x16xbf16>, vector<24x16xf32> -> vector<24x16xf32>
    %c1_130 = arith.constant 1 : index
    %c0_131 = arith.constant 0 : index
    %165 = vector.load %arg16[%c1_130, %c0_131] : memref<38x16xbf16, #tpu.memory_space<vmem>>, vector<24x16xbf16>
    %c1_132 = arith.constant 1 : index
    %c0_133 = arith.constant 0 : index
    %c0_134 = arith.constant 0 : index
    %166 = vector.load %arg8[%c1_132, %c0_133, %c0_134] : memref<9x16x16xbf16, #tpu.memory_space<vmem>>, vector<1x16x16xbf16>
    %167 = vector.shape_cast %166 : vector<1x16x16xbf16> to vector<16x16xbf16>
    %cst_135 = arith.constant dense<0.000000e+00> : vector<24x16xf32>
    %168 = tpu.matmul %165, %167, %cst_135 {dimension_numbers = #tpu.dot_dimension_numbers<[1], [0], [0], [1], [0, 0, 1, 1], [], []>} : vector<24x16xbf16>, vector<16x16xbf16>, vector<24x16xf32> -> vector<24x16xf32>
    %169 = arith.addf %164, %168 : vector<24x16xf32>
    %c2_136 = arith.constant 2 : index
    %c0_137 = arith.constant 0 : index
    %170 = vector.load %arg16[%c2_136, %c0_137] : memref<38x16xbf16, #tpu.memory_space<vmem>>, vector<24x16xbf16>
    %c2_138 = arith.constant 2 : index
    %c0_139 = arith.constant 0 : index
    %c0_140 = arith.constant 0 : index
    %171 = vector.load %arg8[%c2_138, %c0_139, %c0_140] : memref<9x16x16xbf16, #tpu.memory_space<vmem>>, vector<1x16x16xbf16>
    %172 = vector.shape_cast %171 : vector<1x16x16xbf16> to vector<16x16xbf16>
    %cst_141 = arith.constant dense<0.000000e+00> : vector<24x16xf32>
    %173 = tpu.matmul %170, %172, %cst_141 {dimension_numbers = #tpu.dot_dimension_numbers<[1], [0], [0], [1], [0, 0, 1, 1], [], []>} : vector<24x16xbf16>, vector<16x16xbf16>, vector<24x16xf32> -> vector<24x16xf32>
    %174 = arith.addf %169, %173 : vector<24x16xf32>
    %c6_142 = arith.constant 6 : index
    %c0_143 = arith.constant 0 : index
    %175 = vector.load %arg16[%c6_142, %c0_143] : memref<38x16xbf16, #tpu.memory_space<vmem>>, vector<24x16xbf16>
    %c3_144 = arith.constant 3 : index
    %c0_145 = arith.constant 0 : index
    %c0_146 = arith.constant 0 : index
    %176 = vector.load %arg8[%c3_144, %c0_145, %c0_146] : memref<9x16x16xbf16, #tpu.memory_space<vmem>>, vector<1x16x16xbf16>
    %177 = vector.shape_cast %176 : vector<1x16x16xbf16> to vector<16x16xbf16>
    %cst_147 = arith.constant dense<0.000000e+00> : vector<24x16xf32>
    %178 = tpu.matmul %175, %177, %cst_147 {dimension_numbers = #tpu.dot_dimension_numbers<[1], [0], [0], [1], [0, 0, 1, 1], [], []>} : vector<24x16xbf16>, vector<16x16xbf16>, vector<24x16xf32> -> vector<24x16xf32>
    %179 = arith.addf %174, %178 : vector<24x16xf32>
    %c7_148 = arith.constant 7 : index
    %c0_149 = arith.constant 0 : index
    %180 = vector.load %arg16[%c7_148, %c0_149] : memref<38x16xbf16, #tpu.memory_space<vmem>>, vector<24x16xbf16>
    %c4_150 = arith.constant 4 : index
    %c0_151 = arith.constant 0 : index
    %c0_152 = arith.constant 0 : index
    %181 = vector.load %arg8[%c4_150, %c0_151, %c0_152] : memref<9x16x16xbf16, #tpu.memory_space<vmem>>, vector<1x16x16xbf16>
    %182 = vector.shape_cast %181 : vector<1x16x16xbf16> to vector<16x16xbf16>
    %cst_153 = arith.constant dense<0.000000e+00> : vector<24x16xf32>
    %183 = tpu.matmul %180, %182, %cst_153 {dimension_numbers = #tpu.dot_dimension_numbers<[1], [0], [0], [1], [0, 0, 1, 1], [], []>} : vector<24x16xbf16>, vector<16x16xbf16>, vector<24x16xf32> -> vector<24x16xf32>
    %184 = arith.addf %179, %183 : vector<24x16xf32>
    %c8_154 = arith.constant 8 : index
    %c0_155 = arith.constant 0 : index
    %185 = vector.load %arg16[%c8_154, %c0_155] : memref<38x16xbf16, #tpu.memory_space<vmem>>, vector<24x16xbf16>
    %c5_156 = arith.constant 5 : index
    %c0_157 = arith.constant 0 : index
    %c0_158 = arith.constant 0 : index
    %186 = vector.load %arg8[%c5_156, %c0_157, %c0_158] : memref<9x16x16xbf16, #tpu.memory_space<vmem>>, vector<1x16x16xbf16>
    %187 = vector.shape_cast %186 : vector<1x16x16xbf16> to vector<16x16xbf16>
    %cst_159 = arith.constant dense<0.000000e+00> : vector<24x16xf32>
    %188 = tpu.matmul %185, %187, %cst_159 {dimension_numbers = #tpu.dot_dimension_numbers<[1], [0], [0], [1], [0, 0, 1, 1], [], []>} : vector<24x16xbf16>, vector<16x16xbf16>, vector<24x16xf32> -> vector<24x16xf32>
    %189 = arith.addf %184, %188 : vector<24x16xf32>
    %c12_160 = arith.constant 12 : index
    %c0_161 = arith.constant 0 : index
    %190 = vector.load %arg16[%c12_160, %c0_161] : memref<38x16xbf16, #tpu.memory_space<vmem>>, vector<24x16xbf16>
    %c6_162 = arith.constant 6 : index
    %c0_163 = arith.constant 0 : index
    %c0_164 = arith.constant 0 : index
    %191 = vector.load %arg8[%c6_162, %c0_163, %c0_164] : memref<9x16x16xbf16, #tpu.memory_space<vmem>>, vector<1x16x16xbf16>
    %192 = vector.shape_cast %191 : vector<1x16x16xbf16> to vector<16x16xbf16>
    %cst_165 = arith.constant dense<0.000000e+00> : vector<24x16xf32>
    %193 = tpu.matmul %190, %192, %cst_165 {dimension_numbers = #tpu.dot_dimension_numbers<[1], [0], [0], [1], [0, 0, 1, 1], [], []>} : vector<24x16xbf16>, vector<16x16xbf16>, vector<24x16xf32> -> vector<24x16xf32>
    %194 = arith.addf %189, %193 : vector<24x16xf32>
    %c13_166 = arith.constant 13 : index
    %c0_167 = arith.constant 0 : index
    %195 = vector.load %arg16[%c13_166, %c0_167] : memref<38x16xbf16, #tpu.memory_space<vmem>>, vector<24x16xbf16>
    %c7_168 = arith.constant 7 : index
    %c0_169 = arith.constant 0 : index
    %c0_170 = arith.constant 0 : index
    %196 = vector.load %arg8[%c7_168, %c0_169, %c0_170] : memref<9x16x16xbf16, #tpu.memory_space<vmem>>, vector<1x16x16xbf16>
    %197 = vector.shape_cast %196 : vector<1x16x16xbf16> to vector<16x16xbf16>
    %cst_171 = arith.constant dense<0.000000e+00> : vector<24x16xf32>
    %198 = tpu.matmul %195, %197, %cst_171 {dimension_numbers = #tpu.dot_dimension_numbers<[1], [0], [0], [1], [0, 0, 1, 1], [], []>} : vector<24x16xbf16>, vector<16x16xbf16>, vector<24x16xf32> -> vector<24x16xf32>
    %199 = arith.addf %194, %198 : vector<24x16xf32>
    %c14_172 = arith.constant 14 : index
    %c0_173 = arith.constant 0 : index
    %200 = vector.load %arg16[%c14_172, %c0_173] : memref<38x16xbf16, #tpu.memory_space<vmem>>, vector<24x16xbf16>
    %c8_174 = arith.constant 8 : index
    %c0_175 = arith.constant 0 : index
    %c0_176 = arith.constant 0 : index
    %201 = vector.load %arg8[%c8_174, %c0_175, %c0_176] : memref<9x16x16xbf16, #tpu.memory_space<vmem>>, vector<1x16x16xbf16>
    %202 = vector.shape_cast %201 : vector<1x16x16xbf16> to vector<16x16xbf16>
    %cst_177 = arith.constant dense<0.000000e+00> : vector<24x16xf32>
    %203 = tpu.matmul %200, %202, %cst_177 {dimension_numbers = #tpu.dot_dimension_numbers<[1], [0], [0], [1], [0, 0, 1, 1], [], []>} : vector<24x16xbf16>, vector<16x16xbf16>, vector<24x16xf32> -> vector<24x16xf32>
    %204 = arith.addf %199, %203 : vector<24x16xf32>
    %c0_178 = arith.constant 0 : index
    %c0_179 = arith.constant 0 : index
    %205 = vector.load %arg9[%c0_178, %c0_179] : memref<1x16xf32, #tpu.memory_space<vmem>>, vector<1x16xf32>
    %206 = vector.broadcast %205 : vector<1x16xf32> to vector<24x16xf32>
    %207 = arith.addf %204, %206 : vector<24x16xf32>
    %208 = arith.truncf %77 : vector<24x16xf32> to vector<24x16xbf16>
    %c0_180 = arith.constant 0 : index
    %c0_181 = arith.constant 0 : index
    %209 = vector.load %arg10[%c0_180, %c0_181] : memref<16x16xbf16, #tpu.memory_space<vmem>>, vector<16x16xbf16>
    %cst_182 = arith.constant dense<0.000000e+00> : vector<24x16xf32>
    %210 = tpu.matmul %208, %209, %cst_182 {dimension_numbers = #tpu.dot_dimension_numbers<[1], [0], [0], [1], [0, 0, 1, 1], [], []>} : vector<24x16xbf16>, vector<16x16xbf16>, vector<24x16xf32> -> vector<24x16xf32>
    %211 = arith.truncf %155 : vector<24x16xf32> to vector<24x16xbf16>
    %c0_183 = arith.constant 0 : index
    %c0_184 = arith.constant 0 : index
    %212 = vector.load %arg11[%c0_183, %c0_184] : memref<16x16xbf16, #tpu.memory_space<vmem>>, vector<16x16xbf16>
    %cst_185 = arith.constant dense<0.000000e+00> : vector<24x16xf32>
    %213 = tpu.matmul %211, %212, %cst_185 {dimension_numbers = #tpu.dot_dimension_numbers<[1], [0], [0], [1], [0, 0, 1, 1], [], []>} : vector<24x16xbf16>, vector<16x16xbf16>, vector<24x16xf32> -> vector<24x16xf32>
    %214 = arith.addf %210, %213 : vector<24x16xf32>
    %c0_186 = arith.constant 0 : index
    %c0_187 = arith.constant 0 : index
    %215 = vector.load %arg12[%c0_186, %c0_187] : memref<1x16xf32, #tpu.memory_space<vmem>>, vector<1x16xf32>
    %216 = vector.broadcast %215 : vector<1x16xf32> to vector<24x16xf32>
    %217 = arith.addf %214, %216 : vector<24x16xf32>
    %218 = arith.addf %158, %207 : vector<24x16xf32>
    %219 = math.tanh %218 : vector<24x16xf32>
    %220 = math.tanh %217 : vector<24x16xf32>
    %221 = arith.mulf %219, %220 : vector<24x16xf32>
    %222 = vector.broadcast %0 : vector<24x1xf32> to vector<24x16xf32>
    %223 = arith.mulf %221, %222 : vector<24x16xf32>
    %c0_188 = arith.constant 0 : index
    %c0_189 = arith.constant 0 : index
    %c0_190 = arith.constant 0 : index
    %224 = vector.load %arg13[%c0_188, %c0_189, %c0_190] : memref<1x24x16xf32, #tpu.memory_space<vmem>>, vector<1x24x16xf32>
    %225 = vector.shape_cast %224 : vector<1x24x16xf32> to vector<24x16xf32>
    %226 = vector.shape_cast %223 : vector<24x16xf32> to vector<1x24x16xf32>
    tpu.vector_store %arg13[%c0_188, %c0_189, %c0_190], %226 {strides = array<i32>} : memref<1x24x16xf32, #tpu.memory_space<vmem>>, vector<1x24x16xf32>,
    %c0_191 = arith.constant 0 : index
    %c0_192 = arith.constant 0 : index
    %c0_193 = arith.constant 0 : index
    %227 = vector.load %arg14[%c0_191, %c0_192, %c0_193] : memref<1x24x16xf32, #tpu.memory_space<vmem>>, vector<1x24x16xf32>
    %228 = vector.shape_cast %227 : vector<1x24x16xf32> to vector<24x16xf32>
    %229 = vector.shape_cast %77 : vector<24x16xf32> to vector<1x24x16xf32>
    tpu.vector_store %arg14[%c0_191, %c0_192, %c0_193], %229 {strides = array<i32>} : memref<1x24x16xf32, #tpu.memory_space<vmem>>, vector<1x24x16xf32>,
    %c0_194 = arith.constant 0 : index
    %c0_195 = arith.constant 0 : index
    %c0_196 = arith.constant 0 : index
    %230 = vector.load %arg15[%c0_194, %c0_195, %c0_196] : memref<1x24x16xf32, #tpu.memory_space<vmem>>, vector<1x24x16xf32>
    %231 = vector.shape_cast %230 : vector<1x24x16xf32> to vector<24x16xf32>
    %232 = vector.shape_cast %155 : vector<24x16xf32> to vector<1x24x16xf32>
    tpu.vector_store %arg15[%c0_194, %c0_195, %c0_196], %232 {strides = array<i32>} : memref<1x24x16xf32, #tpu.memory_space<vmem>>, vector<1x24x16xf32>,
    return
  }
  func.func @transform_0(%arg0: i32) -> (i32, i32, i32) {
    %c0_i32 = arith.constant 0 : i32
    %c0_i32_0 = arith.constant 0 : i32
    %c0_i32_1 = arith.constant 0 : i32
    return %arg0, %c0_i32, %c0_i32_0 : i32, i32, i32
  }
  func.func @transform_1(%arg0: i32) -> (i32, i32, i32) {
    %c0_i32 = arith.constant 0 : i32
    %c0_i32_0 = arith.constant 0 : i32
    %c0_i32_1 = arith.constant 0 : i32
    return %arg0, %c0_i32, %c0_i32_0 : i32, i32, i32
  }
  func.func @transform_2(%arg0: i32) -> (i32, i32) {
    %c0_i32 = arith.constant 0 : i32
    %c0_i32_0 = arith.constant 0 : i32
    %c0_i32_1 = arith.constant 0 : i32
    return %c0_i32, %c0_i32_0 : i32, i32
  }
  func.func @transform_3(%arg0: i32) -> (i32, i32, i32) {
    %c0_i32 = arith.constant 0 : i32
    %c0_i32_0 = arith.constant 0 : i32
    %c0_i32_1 = arith.constant 0 : i32
    %c0_i32_2 = arith.constant 0 : i32
    return %c0_i32, %c0_i32_0, %c0_i32_1 : i32, i32, i32
  }
  func.func @transform_4(%arg0: i32) -> (i32, i32) {
    %c0_i32 = arith.constant 0 : i32
    %c0_i32_0 = arith.constant 0 : i32
    %c0_i32_1 = arith.constant 0 : i32
    return %c0_i32, %c0_i32_0 : i32, i32
  }
  func.func @transform_5(%arg0: i32) -> (i32, i32, i32) {
    %c0_i32 = arith.constant 0 : i32
    %c0_i32_0 = arith.constant 0 : i32
    %c0_i32_1 = arith.constant 0 : i32
    %c0_i32_2 = arith.constant 0 : i32
    return %c0_i32, %c0_i32_0, %c0_i32_1 : i32, i32, i32
  }
  func.func @transform_6(%arg0: i32) -> (i32, i32) {
    %c0_i32 = arith.constant 0 : i32
    %c0_i32_0 = arith.constant 0 : i32
    %c0_i32_1 = arith.constant 0 : i32
    return %c0_i32, %c0_i32_0 : i32, i32
  }
  func.func @transform_7(%arg0: i32) -> (i32, i32, i32) {
    %c0_i32 = arith.constant 0 : i32
    %c0_i32_0 = arith.constant 0 : i32
    %c0_i32_1 = arith.constant 0 : i32
    %c0_i32_2 = arith.constant 0 : i32
    return %c0_i32, %c0_i32_0, %c0_i32_1 : i32, i32, i32
  }
  func.func @transform_8(%arg0: i32) -> (i32, i32) {
    %c0_i32 = arith.constant 0 : i32
    %c0_i32_0 = arith.constant 0 : i32
    %c0_i32_1 = arith.constant 0 : i32
    return %c0_i32, %c0_i32_0 : i32, i32
  }
  func.func @transform_9(%arg0: i32) -> (i32, i32) {
    %c0_i32 = arith.constant 0 : i32
    %c0_i32_0 = arith.constant 0 : i32
    %c0_i32_1 = arith.constant 0 : i32
    return %c0_i32, %c0_i32_0 : i32, i32
  }
  func.func @transform_10(%arg0: i32) -> (i32, i32) {
    %c0_i32 = arith.constant 0 : i32
    %c0_i32_0 = arith.constant 0 : i32
    %c0_i32_1 = arith.constant 0 : i32
    return %c0_i32, %c0_i32_0 : i32, i32
  }
  func.func @transform_11(%arg0: i32) -> (i32, i32) {
    %c0_i32 = arith.constant 0 : i32
    %c0_i32_0 = arith.constant 0 : i32
    %c0_i32_1 = arith.constant 0 : i32
    return %c0_i32, %c0_i32_0 : i32, i32
  }
  func.func @transform_12(%arg0: i32) -> (i32, i32, i32) {
    %c0_i32 = arith.constant 0 : i32
    %c0_i32_0 = arith.constant 0 : i32
    %c0_i32_1 = arith.constant 0 : i32
    return %arg0, %c0_i32, %c0_i32_0 : i32, i32, i32
  }
  func.func @transform_13(%arg0: i32) -> (i32, i32, i32) {
    %c0_i32 = arith.constant 0 : i32
    %c0_i32_0 = arith.constant 0 : i32
    %c0_i32_1 = arith.constant 0 : i32
    return %arg0, %c0_i32, %c0_i32_0 : i32, i32, i32
  }
  func.func @transform_14(%arg0: i32) -> (i32, i32, i32) {
    %c0_i32 = arith.constant 0 : i32
    %c0_i32_0 = arith.constant 0 : i32
    %c0_i32_1 = arith.constant 0 : i32
    return %arg0, %c0_i32, %c0_i32_0 : i32, i32, i32
  }
}

module attributes {stable_mosaic.version = 11 : i64} {
  func.func @_cell_fused_kernel(%arg0: i32, %arg1: memref<1x38x64xbf16, #tpu.memory_space<vmem>>, %arg2: memref<1x24x16xf32, #tpu.memory_space<vmem>>, %arg3: memref<24x1xf32, #tpu.memory_space<vmem>>, %arg4: memref<9x64x128xbf16, #tpu.memory_space<vmem>>, %arg5: memref<1x128xf32, #tpu.memory_space<vmem>>, %arg6: memref<9x16x64xbf16, #tpu.memory_space<vmem>>, %arg7: memref<1x64xf32, #tpu.memory_space<vmem>>, %arg8: memref<9x16x16xbf16, #tpu.memory_space<vmem>>, %arg9: memref<1x16xf32, #tpu.memory_space<vmem>>, %arg10: memref<16x16xbf16, #tpu.memory_space<vmem>>, %arg11: memref<16x16xbf16, #tpu.memory_space<vmem>>, %arg12: memref<1x16xf32, #tpu.memory_space<vmem>>, %arg13: memref<1x24x16xf32, #tpu.memory_space<vmem>>, %arg14: memref<1x24x16xf32, #tpu.memory_space<vmem>>, %arg15: memref<1x24x16xf32, #tpu.memory_space<vmem>>, %arg16: memref<38x16xbf16, #tpu.memory_space<vmem>>) attributes {dimension_semantics = [#tpu.dimension_semantics<parallel>], iteration_bounds = array<i64: 2>, scalar_prefetch = 0 : i64, scratch_operands = 1 : i64, tpu.core_type = #tpu.core_type<tc>, window_params = [{transform_indices = @transform_0, window_bounds = array<i64: 1, 38, 64>}, {transform_indices = @transform_1, window_bounds = array<i64: 1, 24, 16>}, {pipeline_mode = #tpu.pipeline_mode<synchronous>, transform_indices = @transform_2, window_bounds = array<i64: 24, 1>}, {pipeline_mode = #tpu.pipeline_mode<synchronous>, transform_indices = @transform_3, window_bounds = array<i64: 9, 64, 128>}, {pipeline_mode = #tpu.pipeline_mode<synchronous>, transform_indices = @transform_4, window_bounds = array<i64: 1, 128>}, {pipeline_mode = #tpu.pipeline_mode<synchronous>, transform_indices = @transform_5, window_bounds = array<i64: 9, 16, 64>}, {pipeline_mode = #tpu.pipeline_mode<synchronous>, transform_indices = @transform_6, window_bounds = array<i64: 1, 64>}, {pipeline_mode = #tpu.pipeline_mode<synchronous>, transform_indices = @transform_7, window_bounds = array<i64: 9, 16, 16>}, {pipeline_mode = #tpu.pipeline_mode<synchronous>, transform_indices = @transform_8, window_bounds = array<i64: 1, 16>}, {pipeline_mode = #tpu.pipeline_mode<synchronous>, transform_indices = @transform_9, window_bounds = array<i64: 16, 16>}, {pipeline_mode = #tpu.pipeline_mode<synchronous>, transform_indices = @transform_10, window_bounds = array<i64: 16, 16>}, {pipeline_mode = #tpu.pipeline_mode<synchronous>, transform_indices = @transform_11, window_bounds = array<i64: 1, 16>}, {transform_indices = @transform_12, window_bounds = array<i64: 1, 24, 16>}, {transform_indices = @transform_13, window_bounds = array<i64: 1, 24, 16>}, {transform_indices = @transform_14, window_bounds = array<i64: 1, 24, 16>}]} {
    %c0 = arith.constant 0 : index
    %c0_0 = arith.constant 0 : index
    %0 = vector.load %arg3[%c0, %c0_0] : memref<24x1xf32, #tpu.memory_space<vmem>>, vector<24x1xf32>
    %c0_1 = arith.constant 0 : index
    %c0_2 = arith.constant 0 : index
    %c0_3 = arith.constant 0 : index
    %1 = vector.load %arg1[%c0_1, %c0_2, %c0_3] : memref<1x38x64xbf16, #tpu.memory_space<vmem>>, vector<1x24x64xbf16>
    %2 = vector.shape_cast %1 : vector<1x24x64xbf16> to vector<24x64xbf16>
    %c0_4 = arith.constant 0 : index
    %c0_5 = arith.constant 0 : index
    %c0_6 = arith.constant 0 : index
    %3 = vector.load %arg4[%c0_4, %c0_5, %c0_6] : memref<9x64x128xbf16, #tpu.memory_space<vmem>>, vector<1x64x128xbf16>
    %4 = vector.shape_cast %3 : vector<1x64x128xbf16> to vector<64x128xbf16>
    %cst = arith.constant dense<0.000000e+00> : vector<24x128xf32>
    %5 = tpu.matmul %2, %4, %cst {dimension_numbers = #tpu.dot_dimension_numbers<[1], [0], [0], [1], [0, 0, 1, 1], [], []>} : vector<24x64xbf16>, vector<64x128xbf16>, vector<24x128xf32> -> vector<24x128xf32>
    %c0_7 = arith.constant 0 : index
    %c1 = arith.constant 1 : index
    %c0_8 = arith.constant 0 : index
    %6 = vector.load %arg1[%c0_7, %c1, %c0_8] : memref<1x38x64xbf16, #tpu.memory_space<vmem>>, vector<1x24x64xbf16>
    %7 = vector.shape_cast %6 : vector<1x24x64xbf16> to vector<24x64xbf16>
    %c1_9 = arith.constant 1 : index
    %c0_10 = arith.constant 0 : index
    %c0_11 = arith.constant 0 : index
    %8 = vector.load %arg4[%c1_9, %c0_10, %c0_11] : memref<9x64x128xbf16, #tpu.memory_space<vmem>>, vector<1x64x128xbf16>
    %9 = vector.shape_cast %8 : vector<1x64x128xbf16> to vector<64x128xbf16>
    %cst_12 = arith.constant dense<0.000000e+00> : vector<24x128xf32>
    %10 = tpu.matmul %7, %9, %cst_12 {dimension_numbers = #tpu.dot_dimension_numbers<[1], [0], [0], [1], [0, 0, 1, 1], [], []>} : vector<24x64xbf16>, vector<64x128xbf16>, vector<24x128xf32> -> vector<24x128xf32>
    %11 = arith.addf %5, %10 : vector<24x128xf32>
    %c0_13 = arith.constant 0 : index
    %c2 = arith.constant 2 : index
    %c0_14 = arith.constant 0 : index
    %12 = vector.load %arg1[%c0_13, %c2, %c0_14] : memref<1x38x64xbf16, #tpu.memory_space<vmem>>, vector<1x24x64xbf16>
    %13 = vector.shape_cast %12 : vector<1x24x64xbf16> to vector<24x64xbf16>
    %c2_15 = arith.constant 2 : index
    %c0_16 = arith.constant 0 : index
    %c0_17 = arith.constant 0 : index
    %14 = vector.load %arg4[%c2_15, %c0_16, %c0_17] : memref<9x64x128xbf16, #tpu.memory_space<vmem>>, vector<1x64x128xbf16>
    %15 = vector.shape_cast %14 : vector<1x64x128xbf16> to vector<64x128xbf16>
    %cst_18 = arith.constant dense<0.000000e+00> : vector<24x128xf32>
    %16 = tpu.matmul %13, %15, %cst_18 {dimension_numbers = #tpu.dot_dimension_numbers<[1], [0], [0], [1], [0, 0, 1, 1], [], []>} : vector<24x64xbf16>, vector<64x128xbf16>, vector<24x128xf32> -> vector<24x128xf32>
    %17 = arith.addf %11, %16 : vector<24x128xf32>
    %c0_19 = arith.constant 0 : index
    %c6 = arith.constant 6 : index
    %c0_20 = arith.constant 0 : index
    %18 = vector.load %arg1[%c0_19, %c6, %c0_20] : memref<1x38x64xbf16, #tpu.memory_space<vmem>>, vector<1x24x64xbf16>
    %19 = vector.shape_cast %18 : vector<1x24x64xbf16> to vector<24x64xbf16>
    %c3 = arith.constant 3 : index
    %c0_21 = arith.constant 0 : index
    %c0_22 = arith.constant 0 : index
    %20 = vector.load %arg4[%c3, %c0_21, %c0_22] : memref<9x64x128xbf16, #tpu.memory_space<vmem>>, vector<1x64x128xbf16>
    %21 = vector.shape_cast %20 : vector<1x64x128xbf16> to vector<64x128xbf16>
    %cst_23 = arith.constant dense<0.000000e+00> : vector<24x128xf32>
    %22 = tpu.matmul %19, %21, %cst_23 {dimension_numbers = #tpu.dot_dimension_numbers<[1], [0], [0], [1], [0, 0, 1, 1], [], []>} : vector<24x64xbf16>, vector<64x128xbf16>, vector<24x128xf32> -> vector<24x128xf32>
    %23 = arith.addf %17, %22 : vector<24x128xf32>
    %c0_24 = arith.constant 0 : index
    %c7 = arith.constant 7 : index
    %c0_25 = arith.constant 0 : index
    %24 = vector.load %arg1[%c0_24, %c7, %c0_25] : memref<1x38x64xbf16, #tpu.memory_space<vmem>>, vector<1x24x64xbf16>
    %25 = vector.shape_cast %24 : vector<1x24x64xbf16> to vector<24x64xbf16>
    %c4 = arith.constant 4 : index
    %c0_26 = arith.constant 0 : index
    %c0_27 = arith.constant 0 : index
    %26 = vector.load %arg4[%c4, %c0_26, %c0_27] : memref<9x64x128xbf16, #tpu.memory_space<vmem>>, vector<1x64x128xbf16>
    %27 = vector.shape_cast %26 : vector<1x64x128xbf16> to vector<64x128xbf16>
    %cst_28 = arith.constant dense<0.000000e+00> : vector<24x128xf32>
    %28 = tpu.matmul %25, %27, %cst_28 {dimension_numbers = #tpu.dot_dimension_numbers<[1], [0], [0], [1], [0, 0, 1, 1], [], []>} : vector<24x64xbf16>, vector<64x128xbf16>, vector<24x128xf32> -> vector<24x128xf32>
    %29 = arith.addf %23, %28 : vector<24x128xf32>
    %c0_29 = arith.constant 0 : index
    %c8 = arith.constant 8 : index
    %c0_30 = arith.constant 0 : index
    %30 = vector.load %arg1[%c0_29, %c8, %c0_30] : memref<1x38x64xbf16, #tpu.memory_space<vmem>>, vector<1x24x64xbf16>
    %31 = vector.shape_cast %30 : vector<1x24x64xbf16> to vector<24x64xbf16>
    %c5 = arith.constant 5 : index
    %c0_31 = arith.constant 0 : index
    %c0_32 = arith.constant 0 : index
    %32 = vector.load %arg4[%c5, %c0_31, %c0_32] : memref<9x64x128xbf16, #tpu.memory_space<vmem>>, vector<1x64x128xbf16>
    %33 = vector.shape_cast %32 : vector<1x64x128xbf16> to vector<64x128xbf16>
    %cst_33 = arith.constant dense<0.000000e+00> : vector<24x128xf32>
    %34 = tpu.matmul %31, %33, %cst_33 {dimension_numbers = #tpu.dot_dimension_numbers<[1], [0], [0], [1], [0, 0, 1, 1], [], []>} : vector<24x64xbf16>, vector<64x128xbf16>, vector<24x128xf32> -> vector<24x128xf32>
    %35 = arith.addf %29, %34 : vector<24x128xf32>
    %c0_34 = arith.constant 0 : index
    %c12 = arith.constant 12 : index
    %c0_35 = arith.constant 0 : index
    %36 = vector.load %arg1[%c0_34, %c12, %c0_35] : memref<1x38x64xbf16, #tpu.memory_space<vmem>>, vector<1x24x64xbf16>
    %37 = vector.shape_cast %36 : vector<1x24x64xbf16> to vector<24x64xbf16>
    %c6_36 = arith.constant 6 : index
    %c0_37 = arith.constant 0 : index
    %c0_38 = arith.constant 0 : index
    %38 = vector.load %arg4[%c6_36, %c0_37, %c0_38] : memref<9x64x128xbf16, #tpu.memory_space<vmem>>, vector<1x64x128xbf16>
    %39 = vector.shape_cast %38 : vector<1x64x128xbf16> to vector<64x128xbf16>
    %cst_39 = arith.constant dense<0.000000e+00> : vector<24x128xf32>
    %40 = tpu.matmul %37, %39, %cst_39 {dimension_numbers = #tpu.dot_dimension_numbers<[1], [0], [0], [1], [0, 0, 1, 1], [], []>} : vector<24x64xbf16>, vector<64x128xbf16>, vector<24x128xf32> -> vector<24x128xf32>
    %41 = arith.addf %35, %40 : vector<24x128xf32>
    %c0_40 = arith.constant 0 : index
    %c13 = arith.constant 13 : index
    %c0_41 = arith.constant 0 : index
    %42 = vector.load %arg1[%c0_40, %c13, %c0_41] : memref<1x38x64xbf16, #tpu.memory_space<vmem>>, vector<1x24x64xbf16>
    %43 = vector.shape_cast %42 : vector<1x24x64xbf16> to vector<24x64xbf16>
    %c7_42 = arith.constant 7 : index
    %c0_43 = arith.constant 0 : index
    %c0_44 = arith.constant 0 : index
    %44 = vector.load %arg4[%c7_42, %c0_43, %c0_44] : memref<9x64x128xbf16, #tpu.memory_space<vmem>>, vector<1x64x128xbf16>
    %45 = vector.shape_cast %44 : vector<1x64x128xbf16> to vector<64x128xbf16>
    %cst_45 = arith.constant dense<0.000000e+00> : vector<24x128xf32>
    %46 = tpu.matmul %43, %45, %cst_45 {dimension_numbers = #tpu.dot_dimension_numbers<[1], [0], [0], [1], [0, 0, 1, 1], [], []>} : vector<24x64xbf16>, vector<64x128xbf16>, vector<24x128xf32> -> vector<24x128xf32>
    %47 = arith.addf %41, %46 : vector<24x128xf32>
    %c0_46 = arith.constant 0 : index
    %c14 = arith.constant 14 : index
    %c0_47 = arith.constant 0 : index
    %48 = vector.load %arg1[%c0_46, %c14, %c0_47] : memref<1x38x64xbf16, #tpu.memory_space<vmem>>, vector<1x24x64xbf16>
    %49 = vector.shape_cast %48 : vector<1x24x64xbf16> to vector<24x64xbf16>
    %c8_48 = arith.constant 8 : index
    %c0_49 = arith.constant 0 : index
    %c0_50 = arith.constant 0 : index
    %50 = vector.load %arg4[%c8_48, %c0_49, %c0_50] : memref<9x64x128xbf16, #tpu.memory_space<vmem>>, vector<1x64x128xbf16>
    %51 = vector.shape_cast %50 : vector<1x64x128xbf16> to vector<64x128xbf16>
    %cst_51 = arith.constant dense<0.000000e+00> : vector<24x128xf32>
    %52 = tpu.matmul %49, %51, %cst_51 {dimension_numbers = #tpu.dot_dimension_numbers<[1], [0], [0], [1], [0, 0, 1, 1], [], []>} : vector<24x64xbf16>, vector<64x128xbf16>, vector<24x128xf32> -> vector<24x128xf32>
    %53 = arith.addf %47, %52 : vector<24x128xf32>
    %c0_52 = arith.constant 0 : index
    %c0_53 = arith.constant 0 : index
    %54 = vector.load %arg5[%c0_52, %c0_53] : memref<1x128xf32, #tpu.memory_space<vmem>>, vector<1x128xf32>
    %55 = vector.broadcast %54 : vector<1x128xf32> to vector<24x128xf32>
    %56 = arith.addf %53, %55 : vector<24x128xf32>
    %57 = vector.extract_strided_slice %56 {offsets = [0, 0], sizes = [24, 16], strides = [1, 1]} : vector<24x128xf32> to vector<24x16xf32>
    %58 = arith.negf %57 : vector<24x16xf32>
    %59 = math.exp %58 : vector<24x16xf32>
    %cst_54 = arith.constant 1.000000e+00 : f32
    %60 = vector.broadcast %cst_54 : f32 to vector<24x16xf32>
    %61 = arith.addf %60, %59 : vector<24x16xf32>
    %62 = arith.divf %60, %61 : vector<24x16xf32>
    %63 = vector.extract_strided_slice %56 {offsets = [0, 16], sizes = [24, 16], strides = [1, 1]} : vector<24x128xf32> to vector<24x16xf32>
    %64 = math.tanh %63 : vector<24x16xf32>
    %65 = vector.extract_strided_slice %56 {offsets = [0, 32], sizes = [24, 16], strides = [1, 1]} : vector<24x128xf32> to vector<24x16xf32>
    %66 = arith.negf %65 : vector<24x16xf32>
    %67 = math.exp %66 : vector<24x16xf32>
    %cst_55 = arith.constant 1.000000e+00 : f32
    %68 = vector.broadcast %cst_55 : f32 to vector<24x16xf32>
    %69 = arith.addf %68, %67 : vector<24x16xf32>
    %70 = arith.divf %68, %69 : vector<24x16xf32>
    %c0_56 = arith.constant 0 : index
    %c0_57 = arith.constant 0 : index
    %c0_58 = arith.constant 0 : index
    %71 = vector.load %arg2[%c0_56, %c0_57, %c0_58] : memref<1x24x16xf32, #tpu.memory_space<vmem>>, vector<1x24x16xf32>
    %72 = vector.shape_cast %71 : vector<1x24x16xf32> to vector<24x16xf32>
    %73 = arith.mulf %70, %72 : vector<24x16xf32>
    %74 = arith.mulf %62, %64 : vector<24x16xf32>
    %75 = arith.addf %73, %74 : vector<24x16xf32>
    %76 = vector.broadcast %0 : vector<24x1xf32> to vector<24x16xf32>
    %77 = arith.mulf %75, %76 : vector<24x16xf32>
    %cst_59 = arith.constant 0.000000e+00 : bf16
    %78 = vector.broadcast %cst_59 : bf16 to vector<38x16xbf16>
    %c0_60 = arith.constant 0 : index
    %c0_61 = arith.constant 0 : index
    %79 = vector.load %arg16[%c0_60, %c0_61] : memref<38x16xbf16, #tpu.memory_space<vmem>>, vector<38x16xbf16>
    tpu.vector_store %arg16[%c0_60, %c0_61], %78 {strides = array<i32>} : memref<38x16xbf16, #tpu.memory_space<vmem>>, vector<38x16xbf16>,
    %80 = arith.truncf %77 : vector<24x16xf32> to vector<24x16xbf16>
    %c7_62 = arith.constant 7 : index
    %c0_63 = arith.constant 0 : index
    %81 = vector.load %arg16[%c7_62, %c0_63] : memref<38x16xbf16, #tpu.memory_space<vmem>>, vector<24x16xbf16>
    tpu.vector_store %arg16[%c7_62, %c0_63], %80 {strides = array<i32>} : memref<38x16xbf16, #tpu.memory_space<vmem>>, vector<24x16xbf16>,
    %c0_64 = arith.constant 0 : index
    %c0_65 = arith.constant 0 : index
    %82 = vector.load %arg16[%c0_64, %c0_65] : memref<38x16xbf16, #tpu.memory_space<vmem>>, vector<24x16xbf16>
    %c0_66 = arith.constant 0 : index
    %c0_67 = arith.constant 0 : index
    %c0_68 = arith.constant 0 : index
    %83 = vector.load %arg6[%c0_66, %c0_67, %c0_68] : memref<9x16x64xbf16, #tpu.memory_space<vmem>>, vector<1x16x64xbf16>
    %84 = vector.shape_cast %83 : vector<1x16x64xbf16> to vector<16x64xbf16>
    %cst_69 = arith.constant dense<0.000000e+00> : vector<24x64xf32>
    %85 = tpu.matmul %82, %84, %cst_69 {dimension_numbers = #tpu.dot_dimension_numbers<[1], [0], [0], [1], [0, 0, 1, 1], [], []>} : vector<24x16xbf16>, vector<16x64xbf16>, vector<24x64xf32> -> vector<24x64xf32>
    %c1_70 = arith.constant 1 : index
    %c0_71 = arith.constant 0 : index
    %86 = vector.load %arg16[%c1_70, %c0_71] : memref<38x16xbf16, #tpu.memory_space<vmem>>, vector<24x16xbf16>
    %c1_72 = arith.constant 1 : index
    %c0_73 = arith.constant 0 : index
    %c0_74 = arith.constant 0 : index
    %87 = vector.load %arg6[%c1_72, %c0_73, %c0_74] : memref<9x16x64xbf16, #tpu.memory_space<vmem>>, vector<1x16x64xbf16>
    %88 = vector.shape_cast %87 : vector<1x16x64xbf16> to vector<16x64xbf16>
    %cst_75 = arith.constant dense<0.000000e+00> : vector<24x64xf32>
    %89 = tpu.matmul %86, %88, %cst_75 {dimension_numbers = #tpu.dot_dimension_numbers<[1], [0], [0], [1], [0, 0, 1, 1], [], []>} : vector<24x16xbf16>, vector<16x64xbf16>, vector<24x64xf32> -> vector<24x64xf32>
    %90 = arith.addf %85, %89 : vector<24x64xf32>
    %c2_76 = arith.constant 2 : index
    %c0_77 = arith.constant 0 : index
    %91 = vector.load %arg16[%c2_76, %c0_77] : memref<38x16xbf16, #tpu.memory_space<vmem>>, vector<24x16xbf16>
    %c2_78 = arith.constant 2 : index
    %c0_79 = arith.constant 0 : index
    %c0_80 = arith.constant 0 : index
    %92 = vector.load %arg6[%c2_78, %c0_79, %c0_80] : memref<9x16x64xbf16, #tpu.memory_space<vmem>>, vector<1x16x64xbf16>
    %93 = vector.shape_cast %92 : vector<1x16x64xbf16> to vector<16x64xbf16>
    %cst_81 = arith.constant dense<0.000000e+00> : vector<24x64xf32>
    %94 = tpu.matmul %91, %93, %cst_81 {dimension_numbers = #tpu.dot_dimension_numbers<[1], [0], [0], [1], [0, 0, 1, 1], [], []>} : vector<24x16xbf16>, vector<16x64xbf16>, vector<24x64xf32> -> vector<24x64xf32>
    %95 = arith.addf %90, %94 : vector<24x64xf32>
    %c6_82 = arith.constant 6 : index
    %c0_83 = arith.constant 0 : index
    %96 = vector.load %arg16[%c6_82, %c0_83] : memref<38x16xbf16, #tpu.memory_space<vmem>>, vector<24x16xbf16>
    %c3_84 = arith.constant 3 : index
    %c0_85 = arith.constant 0 : index
    %c0_86 = arith.constant 0 : index
    %97 = vector.load %arg6[%c3_84, %c0_85, %c0_86] : memref<9x16x64xbf16, #tpu.memory_space<vmem>>, vector<1x16x64xbf16>
    %98 = vector.shape_cast %97 : vector<1x16x64xbf16> to vector<16x64xbf16>
    %cst_87 = arith.constant dense<0.000000e+00> : vector<24x64xf32>
    %99 = tpu.matmul %96, %98, %cst_87 {dimension_numbers = #tpu.dot_dimension_numbers<[1], [0], [0], [1], [0, 0, 1, 1], [], []>} : vector<24x16xbf16>, vector<16x64xbf16>, vector<24x64xf32> -> vector<24x64xf32>
    %100 = arith.addf %95, %99 : vector<24x64xf32>
    %c7_88 = arith.constant 7 : index
    %c0_89 = arith.constant 0 : index
    %101 = vector.load %arg16[%c7_88, %c0_89] : memref<38x16xbf16, #tpu.memory_space<vmem>>, vector<24x16xbf16>
    %c4_90 = arith.constant 4 : index
    %c0_91 = arith.constant 0 : index
    %c0_92 = arith.constant 0 : index
    %102 = vector.load %arg6[%c4_90, %c0_91, %c0_92] : memref<9x16x64xbf16, #tpu.memory_space<vmem>>, vector<1x16x64xbf16>
    %103 = vector.shape_cast %102 : vector<1x16x64xbf16> to vector<16x64xbf16>
    %cst_93 = arith.constant dense<0.000000e+00> : vector<24x64xf32>
    %104 = tpu.matmul %101, %103, %cst_93 {dimension_numbers = #tpu.dot_dimension_numbers<[1], [0], [0], [1], [0, 0, 1, 1], [], []>} : vector<24x16xbf16>, vector<16x64xbf16>, vector<24x64xf32> -> vector<24x64xf32>
    %105 = arith.addf %100, %104 : vector<24x64xf32>
    %c8_94 = arith.constant 8 : index
    %c0_95 = arith.constant 0 : index
    %106 = vector.load %arg16[%c8_94, %c0_95] : memref<38x16xbf16, #tpu.memory_space<vmem>>, vector<24x16xbf16>
    %c5_96 = arith.constant 5 : index
    %c0_97 = arith.constant 0 : index
    %c0_98 = arith.constant 0 : index
    %107 = vector.load %arg6[%c5_96, %c0_97, %c0_98] : memref<9x16x64xbf16, #tpu.memory_space<vmem>>, vector<1x16x64xbf16>
    %108 = vector.shape_cast %107 : vector<1x16x64xbf16> to vector<16x64xbf16>
    %cst_99 = arith.constant dense<0.000000e+00> : vector<24x64xf32>
    %109 = tpu.matmul %106, %108, %cst_99 {dimension_numbers = #tpu.dot_dimension_numbers<[1], [0], [0], [1], [0, 0, 1, 1], [], []>} : vector<24x16xbf16>, vector<16x64xbf16>, vector<24x64xf32> -> vector<24x64xf32>
    %110 = arith.addf %105, %109 : vector<24x64xf32>
    %c12_100 = arith.constant 12 : index
    %c0_101 = arith.constant 0 : index
    %111 = vector.load %arg16[%c12_100, %c0_101] : memref<38x16xbf16, #tpu.memory_space<vmem>>, vector<24x16xbf16>
    %c6_102 = arith.constant 6 : index
    %c0_103 = arith.constant 0 : index
    %c0_104 = arith.constant 0 : index
    %112 = vector.load %arg6[%c6_102, %c0_103, %c0_104] : memref<9x16x64xbf16, #tpu.memory_space<vmem>>, vector<1x16x64xbf16>
    %113 = vector.shape_cast %112 : vector<1x16x64xbf16> to vector<16x64xbf16>
    %cst_105 = arith.constant dense<0.000000e+00> : vector<24x64xf32>
    %114 = tpu.matmul %111, %113, %cst_105 {dimension_numbers = #tpu.dot_dimension_numbers<[1], [0], [0], [1], [0, 0, 1, 1], [], []>} : vector<24x16xbf16>, vector<16x64xbf16>, vector<24x64xf32> -> vector<24x64xf32>
    %115 = arith.addf %110, %114 : vector<24x64xf32>
    %c13_106 = arith.constant 13 : index
    %c0_107 = arith.constant 0 : index
    %116 = vector.load %arg16[%c13_106, %c0_107] : memref<38x16xbf16, #tpu.memory_space<vmem>>, vector<24x16xbf16>
    %c7_108 = arith.constant 7 : index
    %c0_109 = arith.constant 0 : index
    %c0_110 = arith.constant 0 : index
    %117 = vector.load %arg6[%c7_108, %c0_109, %c0_110] : memref<9x16x64xbf16, #tpu.memory_space<vmem>>, vector<1x16x64xbf16>
    %118 = vector.shape_cast %117 : vector<1x16x64xbf16> to vector<16x64xbf16>
    %cst_111 = arith.constant dense<0.000000e+00> : vector<24x64xf32>
    %119 = tpu.matmul %116, %118, %cst_111 {dimension_numbers = #tpu.dot_dimension_numbers<[1], [0], [0], [1], [0, 0, 1, 1], [], []>} : vector<24x16xbf16>, vector<16x64xbf16>, vector<24x64xf32> -> vector<24x64xf32>
    %120 = arith.addf %115, %119 : vector<24x64xf32>
    %c14_112 = arith.constant 14 : index
    %c0_113 = arith.constant 0 : index
    %121 = vector.load %arg16[%c14_112, %c0_113] : memref<38x16xbf16, #tpu.memory_space<vmem>>, vector<24x16xbf16>
    %c8_114 = arith.constant 8 : index
    %c0_115 = arith.constant 0 : index
    %c0_116 = arith.constant 0 : index
    %122 = vector.load %arg6[%c8_114, %c0_115, %c0_116] : memref<9x16x64xbf16, #tpu.memory_space<vmem>>, vector<1x16x64xbf16>
    %123 = vector.shape_cast %122 : vector<1x16x64xbf16> to vector<16x64xbf16>
    %cst_117 = arith.constant dense<0.000000e+00> : vector<24x64xf32>
    %124 = tpu.matmul %121, %123, %cst_117 {dimension_numbers = #tpu.dot_dimension_numbers<[1], [0], [0], [1], [0, 0, 1, 1], [], []>} : vector<24x16xbf16>, vector<16x64xbf16>, vector<24x64xf32> -> vector<24x64xf32>
    %125 = arith.addf %120, %124 : vector<24x64xf32>
    %c0_118 = arith.constant 0 : index
    %c0_119 = arith.constant 0 : index
    %126 = vector.load %arg7[%c0_118, %c0_119] : memref<1x64xf32, #tpu.memory_space<vmem>>, vector<1x64xf32>
    %127 = vector.broadcast %126 : vector<1x64xf32> to vector<24x64xf32>
    %128 = arith.addf %125, %127 : vector<24x64xf32>
    %129 = vector.extract_strided_slice %128 {offsets = [0, 0], sizes = [24, 16], strides = [1, 1]} : vector<24x64xf32> to vector<24x16xf32>
    %130 = vector.extract_strided_slice %56 {offsets = [0, 64], sizes = [24, 16], strides = [1, 1]} : vector<24x128xf32> to vector<24x16xf32>
    %131 = arith.addf %129, %130 : vector<24x16xf32>
    %132 = arith.negf %131 : vector<24x16xf32>
    %133 = math.exp %132 : vector<24x16xf32>
    %cst_120 = arith.constant 1.000000e+00 : f32
    %134 = vector.broadcast %cst_120 : f32 to vector<24x16xf32>
    %135 = arith.addf %134, %133 : vector<24x16xf32>
    %136 = arith.divf %134, %135 : vector<24x16xf32>
    %137 = vector.extract_strided_slice %128 {offsets = [0, 16], sizes = [24, 16], strides = [1, 1]} : vector<24x64xf32> to vector<24x16xf32>
    %138 = vector.extract_strided_slice %56 {offsets = [0, 80], sizes = [24, 16], strides = [1, 1]} : vector<24x128xf32> to vector<24x16xf32>
    %139 = arith.addf %137, %138 : vector<24x16xf32>
    %140 = math.tanh %139 : vector<24x16xf32>
    %141 = vector.extract_strided_slice %128 {offsets = [0, 32], sizes = [24, 16], strides = [1, 1]} : vector<24x64xf32> to vector<24x16xf32>
    %142 = vector.extract_strided_slice %56 {offsets = [0, 96], sizes = [24, 16], strides = [1, 1]} : vector<24x128xf32> to vector<24x16xf32>
    %143 = arith.addf %141, %142 : vector<24x16xf32>
    %144 = arith.negf %143 : vector<24x16xf32>
    %145 = math.exp %144 : vector<24x16xf32>
    %cst_121 = arith.constant 1.000000e+00 : f32
    %146 = vector.broadcast %cst_121 : f32 to vector<24x16xf32>
    %147 = arith.addf %146, %145 : vector<24x16xf32>
    %148 = arith.divf %146, %147 : vector<24x16xf32>
    %149 = vector.extract_strided_slice %56 {offsets = [0, 112], sizes = [24, 16], strides = [1, 1]} : vector<24x128xf32> to vector<24x16xf32>
    %150 = math.tanh %149 : vector<24x16xf32>
    %151 = arith.mulf %148, %150 : vector<24x16xf32>
    %152 = arith.mulf %136, %140 : vector<24x16xf32>
    %153 = arith.addf %151, %152 : vector<24x16xf32>
    %154 = vector.broadcast %0 : vector<24x1xf32> to vector<24x16xf32>
    %155 = arith.mulf %153, %154 : vector<24x16xf32>
    %156 = vector.extract_strided_slice %56 {offsets = [0, 48], sizes = [24, 16], strides = [1, 1]} : vector<24x128xf32> to vector<24x16xf32>
    %157 = vector.extract_strided_slice %128 {offsets = [0, 48], sizes = [24, 16], strides = [1, 1]} : vector<24x64xf32> to vector<24x16xf32>
    %158 = arith.addf %156, %157 : vector<24x16xf32>
    %159 = arith.truncf %155 : vector<24x16xf32> to vector<24x16xbf16>
    %c7_122 = arith.constant 7 : index
    %c0_123 = arith.constant 0 : index
    %160 = vector.load %arg16[%c7_122, %c0_123] : memref<38x16xbf16, #tpu.memory_space<vmem>>, vector<24x16xbf16>
    tpu.vector_store %arg16[%c7_122, %c0_123], %159 {strides = array<i32>} : memref<38x16xbf16, #tpu.memory_space<vmem>>, vector<24x16xbf16>,
    %c0_124 = arith.constant 0 : index
    %c0_125 = arith.constant 0 : index
    %161 = vector.load %arg16[%c0_124, %c0_125] : memref<38x16xbf16, #tpu.memory_space<vmem>>, vector<24x16xbf16>
    %c0_126 = arith.constant 0 : index
    %c0_127 = arith.constant 0 : index
    %c0_128 = arith.constant 0 : index
    %162 = vector.load %arg8[%c0_126, %c0_127, %c0_128] : memref<9x16x16xbf16, #tpu.memory_space<vmem>>, vector<1x16x16xbf16>
    %163 = vector.shape_cast %162 : vector<1x16x16xbf16> to vector<16x16xbf16>
    %cst_129 = arith.constant dense<0.000000e+00> : vector<24x16xf32>
    %164 = tpu.matmul %161, %163, %cst_129 {dimension_numbers = #tpu.dot_dimension_numbers<[1], [0], [0], [1], [0, 0, 1, 1], [], []>} : vector<24x16xbf16>, vector<16x16xbf16>, vector<24x16xf32> -> vector<24x16xf32>
    %c1_130 = arith.constant 1 : index
    %c0_131 = arith.constant 0 : index
    %165 = vector.load %arg16[%c1_130, %c0_131] : memref<38x16xbf16, #tpu.memory_space<vmem>>, vector<24x16xbf16>
    %c1_132 = arith.constant 1 : index
    %c0_133 = arith.constant 0 : index
    %c0_134 = arith.constant 0 : index
    %166 = vector.load %arg8[%c1_132, %c0_133, %c0_134] : memref<9x16x16xbf16, #tpu.memory_space<vmem>>, vector<1x16x16xbf16>
    %167 = vector.shape_cast %166 : vector<1x16x16xbf16> to vector<16x16xbf16>
    %cst_135 = arith.constant dense<0.000000e+00> : vector<24x16xf32>
    %168 = tpu.matmul %165, %167, %cst_135 {dimension_numbers = #tpu.dot_dimension_numbers<[1], [0], [0], [1], [0, 0, 1, 1], [], []>} : vector<24x16xbf16>, vector<16x16xbf16>, vector<24x16xf32> -> vector<24x16xf32>
    %169 = arith.addf %164, %168 : vector<24x16xf32>
    %c2_136 = arith.constant 2 : index
    %c0_137 = arith.constant 0 : index
    %170 = vector.load %arg16[%c2_136, %c0_137] : memref<38x16xbf16, #tpu.memory_space<vmem>>, vector<24x16xbf16>
    %c2_138 = arith.constant 2 : index
    %c0_139 = arith.constant 0 : index
    %c0_140 = arith.constant 0 : index
    %171 = vector.load %arg8[%c2_138, %c0_139, %c0_140] : memref<9x16x16xbf16, #tpu.memory_space<vmem>>, vector<1x16x16xbf16>
    %172 = vector.shape_cast %171 : vector<1x16x16xbf16> to vector<16x16xbf16>
    %cst_141 = arith.constant dense<0.000000e+00> : vector<24x16xf32>
    %173 = tpu.matmul %170, %172, %cst_141 {dimension_numbers = #tpu.dot_dimension_numbers<[1], [0], [0], [1], [0, 0, 1, 1], [], []>} : vector<24x16xbf16>, vector<16x16xbf16>, vector<24x16xf32> -> vector<24x16xf32>
    %174 = arith.addf %169, %173 : vector<24x16xf32>
    %c6_142 = arith.constant 6 : index
    %c0_143 = arith.constant 0 : index
    %175 = vector.load %arg16[%c6_142, %c0_143] : memref<38x16xbf16, #tpu.memory_space<vmem>>, vector<24x16xbf16>
    %c3_144 = arith.constant 3 : index
    %c0_145 = arith.constant 0 : index
    %c0_146 = arith.constant 0 : index
    %176 = vector.load %arg8[%c3_144, %c0_145, %c0_146] : memref<9x16x16xbf16, #tpu.memory_space<vmem>>, vector<1x16x16xbf16>
    %177 = vector.shape_cast %176 : vector<1x16x16xbf16> to vector<16x16xbf16>
    %cst_147 = arith.constant dense<0.000000e+00> : vector<24x16xf32>
    %178 = tpu.matmul %175, %177, %cst_147 {dimension_numbers = #tpu.dot_dimension_numbers<[1], [0], [0], [1], [0, 0, 1, 1], [], []>} : vector<24x16xbf16>, vector<16x16xbf16>, vector<24x16xf32> -> vector<24x16xf32>
    %179 = arith.addf %174, %178 : vector<24x16xf32>
    %c7_148 = arith.constant 7 : index
    %c0_149 = arith.constant 0 : index
    %180 = vector.load %arg16[%c7_148, %c0_149] : memref<38x16xbf16, #tpu.memory_space<vmem>>, vector<24x16xbf16>
    %c4_150 = arith.constant 4 : index
    %c0_151 = arith.constant 0 : index
    %c0_152 = arith.constant 0 : index
    %181 = vector.load %arg8[%c4_150, %c0_151, %c0_152] : memref<9x16x16xbf16, #tpu.memory_space<vmem>>, vector<1x16x16xbf16>
    %182 = vector.shape_cast %181 : vector<1x16x16xbf16> to vector<16x16xbf16>
    %cst_153 = arith.constant dense<0.000000e+00> : vector<24x16xf32>
    %183 = tpu.matmul %180, %182, %cst_153 {dimension_numbers = #tpu.dot_dimension_numbers<[1], [0], [0], [1], [0, 0, 1, 1], [], []>} : vector<24x16xbf16>, vector<16x16xbf16>, vector<24x16xf32> -> vector<24x16xf32>
    %184 = arith.addf %179, %183 : vector<24x16xf32>
    %c8_154 = arith.constant 8 : index
    %c0_155 = arith.constant 0 : index
    %185 = vector.load %arg16[%c8_154, %c0_155] : memref<38x16xbf16, #tpu.memory_space<vmem>>, vector<24x16xbf16>
    %c5_156 = arith.constant 5 : index
    %c0_157 = arith.constant 0 : index
    %c0_158 = arith.constant 0 : index
    %186 = vector.load %arg8[%c5_156, %c0_157, %c0_158] : memref<9x16x16xbf16, #tpu.memory_space<vmem>>, vector<1x16x16xbf16>
    %187 = vector.shape_cast %186 : vector<1x16x16xbf16> to vector<16x16xbf16>
    %cst_159 = arith.constant dense<0.000000e+00> : vector<24x16xf32>
    %188 = tpu.matmul %185, %187, %cst_159 {dimension_numbers = #tpu.dot_dimension_numbers<[1], [0], [0], [1], [0, 0, 1, 1], [], []>} : vector<24x16xbf16>, vector<16x16xbf16>, vector<24x16xf32> -> vector<24x16xf32>
    %189 = arith.addf %184, %188 : vector<24x16xf32>
    %c12_160 = arith.constant 12 : index
    %c0_161 = arith.constant 0 : index
    %190 = vector.load %arg16[%c12_160, %c0_161] : memref<38x16xbf16, #tpu.memory_space<vmem>>, vector<24x16xbf16>
    %c6_162 = arith.constant 6 : index
    %c0_163 = arith.constant 0 : index
    %c0_164 = arith.constant 0 : index
    %191 = vector.load %arg8[%c6_162, %c0_163, %c0_164] : memref<9x16x16xbf16, #tpu.memory_space<vmem>>, vector<1x16x16xbf16>
    %192 = vector.shape_cast %191 : vector<1x16x16xbf16> to vector<16x16xbf16>
    %cst_165 = arith.constant dense<0.000000e+00> : vector<24x16xf32>
    %193 = tpu.matmul %190, %192, %cst_165 {dimension_numbers = #tpu.dot_dimension_numbers<[1], [0], [0], [1], [0, 0, 1, 1], [], []>} : vector<24x16xbf16>, vector<16x16xbf16>, vector<24x16xf32> -> vector<24x16xf32>
    %194 = arith.addf %189, %193 : vector<24x16xf32>
    %c13_166 = arith.constant 13 : index
    %c0_167 = arith.constant 0 : index
    %195 = vector.load %arg16[%c13_166, %c0_167] : memref<38x16xbf16, #tpu.memory_space<vmem>>, vector<24x16xbf16>
    %c7_168 = arith.constant 7 : index
    %c0_169 = arith.constant 0 : index
    %c0_170 = arith.constant 0 : index
    %196 = vector.load %arg8[%c7_168, %c0_169, %c0_170] : memref<9x16x16xbf16, #tpu.memory_space<vmem>>, vector<1x16x16xbf16>
    %197 = vector.shape_cast %196 : vector<1x16x16xbf16> to vector<16x16xbf16>
    %cst_171 = arith.constant dense<0.000000e+00> : vector<24x16xf32>
    %198 = tpu.matmul %195, %197, %cst_171 {dimension_numbers = #tpu.dot_dimension_numbers<[1], [0], [0], [1], [0, 0, 1, 1], [], []>} : vector<24x16xbf16>, vector<16x16xbf16>, vector<24x16xf32> -> vector<24x16xf32>
    %199 = arith.addf %194, %198 : vector<24x16xf32>
    %c14_172 = arith.constant 14 : index
    %c0_173 = arith.constant 0 : index
    %200 = vector.load %arg16[%c14_172, %c0_173] : memref<38x16xbf16, #tpu.memory_space<vmem>>, vector<24x16xbf16>
    %c8_174 = arith.constant 8 : index
    %c0_175 = arith.constant 0 : index
    %c0_176 = arith.constant 0 : index
    %201 = vector.load %arg8[%c8_174, %c0_175, %c0_176] : memref<9x16x16xbf16, #tpu.memory_space<vmem>>, vector<1x16x16xbf16>
    %202 = vector.shape_cast %201 : vector<1x16x16xbf16> to vector<16x16xbf16>
    %cst_177 = arith.constant dense<0.000000e+00> : vector<24x16xf32>
    %203 = tpu.matmul %200, %202, %cst_177 {dimension_numbers = #tpu.dot_dimension_numbers<[1], [0], [0], [1], [0, 0, 1, 1], [], []>} : vector<24x16xbf16>, vector<16x16xbf16>, vector<24x16xf32> -> vector<24x16xf32>
    %204 = arith.addf %199, %203 : vector<24x16xf32>
    %c0_178 = arith.constant 0 : index
    %c0_179 = arith.constant 0 : index
    %205 = vector.load %arg9[%c0_178, %c0_179] : memref<1x16xf32, #tpu.memory_space<vmem>>, vector<1x16xf32>
    %206 = vector.broadcast %205 : vector<1x16xf32> to vector<24x16xf32>
    %207 = arith.addf %204, %206 : vector<24x16xf32>
    %208 = arith.truncf %77 : vector<24x16xf32> to vector<24x16xbf16>
    %c0_180 = arith.constant 0 : index
    %c0_181 = arith.constant 0 : index
    %209 = vector.load %arg10[%c0_180, %c0_181] : memref<16x16xbf16, #tpu.memory_space<vmem>>, vector<16x16xbf16>
    %cst_182 = arith.constant dense<0.000000e+00> : vector<24x16xf32>
    %210 = tpu.matmul %208, %209, %cst_182 {dimension_numbers = #tpu.dot_dimension_numbers<[1], [0], [0], [1], [0, 0, 1, 1], [], []>} : vector<24x16xbf16>, vector<16x16xbf16>, vector<24x16xf32> -> vector<24x16xf32>
    %211 = arith.truncf %155 : vector<24x16xf32> to vector<24x16xbf16>
    %c0_183 = arith.constant 0 : index
    %c0_184 = arith.constant 0 : index
    %212 = vector.load %arg11[%c0_183, %c0_184] : memref<16x16xbf16, #tpu.memory_space<vmem>>, vector<16x16xbf16>
    %cst_185 = arith.constant dense<0.000000e+00> : vector<24x16xf32>
    %213 = tpu.matmul %211, %212, %cst_185 {dimension_numbers = #tpu.dot_dimension_numbers<[1], [0], [0], [1], [0, 0, 1, 1], [], []>} : vector<24x16xbf16>, vector<16x16xbf16>, vector<24x16xf32> -> vector<24x16xf32>
    %214 = arith.addf %210, %213 : vector<24x16xf32>
    %c0_186 = arith.constant 0 : index
    %c0_187 = arith.constant 0 : index
    %215 = vector.load %arg12[%c0_186, %c0_187] : memref<1x16xf32, #tpu.memory_space<vmem>>, vector<1x16xf32>
    %216 = vector.broadcast %215 : vector<1x16xf32> to vector<24x16xf32>
    %217 = arith.addf %214, %216 : vector<24x16xf32>
    %218 = arith.addf %158, %207 : vector<24x16xf32>
    %219 = math.tanh %218 : vector<24x16xf32>
    %220 = math.tanh %217 : vector<24x16xf32>
    %221 = arith.mulf %219, %220 : vector<24x16xf32>
    %222 = vector.broadcast %0 : vector<24x1xf32> to vector<24x16xf32>
    %223 = arith.mulf %221, %222 : vector<24x16xf32>
    %c0_188 = arith.constant 0 : index
    %c0_189 = arith.constant 0 : index
    %c0_190 = arith.constant 0 : index
    %224 = vector.load %arg13[%c0_188, %c0_189, %c0_190] : memref<1x24x16xf32, #tpu.memory_space<vmem>>, vector<1x24x16xf32>
    %225 = vector.shape_cast %224 : vector<1x24x16xf32> to vector<24x16xf32>
    %226 = vector.shape_cast %223 : vector<24x16xf32> to vector<1x24x16xf32>
    tpu.vector_store %arg13[%c0_188, %c0_189, %c0_190], %226 {strides = array<i32>} : memref<1x24x16xf32, #tpu.memory_space<vmem>>, vector<1x24x16xf32>,
    %c0_191 = arith.constant 0 : index
    %c0_192 = arith.constant 0 : index
    %c0_193 = arith.constant 0 : index
    %227 = vector.load %arg14[%c0_191, %c0_192, %c0_193] : memref<1x24x16xf32, #tpu.memory_space<vmem>>, vector<1x24x16xf32>
    %228 = vector.shape_cast %227 : vector<1x24x16xf32> to vector<24x16xf32>
    %229 = vector.shape_cast %77 : vector<24x16xf32> to vector<1x24x16xf32>
    tpu.vector_store %arg14[%c0_191, %c0_192, %c0_193], %229 {strides = array<i32>} : memref<1x24x16xf32, #tpu.memory_space<vmem>>, vector<1x24x16xf32>,
    %c0_194 = arith.constant 0 : index
    %c0_195 = arith.constant 0 : index
    %c0_196 = arith.constant 0 : index
    %230 = vector.load %arg15[%c0_194, %c0_195, %c0_196] : memref<1x24x16xf32, #tpu.memory_space<vmem>>, vector<1x24x16xf32>
    %231 = vector.shape_cast %230 : vector<1x24x16xf32> to vector<24x16xf32>
    %232 = vector.shape_cast %155 : vector<24x16xf32> to vector<1x24x16xf32>
    tpu.vector_store %arg15[%c0_194, %c0_195, %c0_196], %232 {strides = array<i32>} : memref<1x24x16xf32, #tpu.memory_space<vmem>>, vector<1x24x16xf32>,
    return
  }
  func.func @transform_0(%arg0: i32) -> (i32, i32, i32) {
    %c0_i32 = arith.constant 0 : i32
    %c0_i32_0 = arith.constant 0 : i32
    %c0_i32_1 = arith.constant 0 : i32
    return %arg0, %c0_i32, %c0_i32_0 : i32, i32, i32
  }
  func.func @transform_1(%arg0: i32) -> (i32, i32, i32) {
    %c0_i32 = arith.constant 0 : i32
    %c0_i32_0 = arith.constant 0 : i32
    %c0_i32_1 = arith.constant 0 : i32
    return %arg0, %c0_i32, %c0_i32_0 : i32, i32, i32
  }
  func.func @transform_2(%arg0: i32) -> (i32, i32) {
    %c0_i32 = arith.constant 0 : i32
    %c0_i32_0 = arith.constant 0 : i32
    %c0_i32_1 = arith.constant 0 : i32
    return %c0_i32, %c0_i32_0 : i32, i32
  }
  func.func @transform_3(%arg0: i32) -> (i32, i32, i32) {
    %c0_i32 = arith.constant 0 : i32
    %c0_i32_0 = arith.constant 0 : i32
    %c0_i32_1 = arith.constant 0 : i32
    %c0_i32_2 = arith.constant 0 : i32
    return %c0_i32, %c0_i32_0, %c0_i32_1 : i32, i32, i32
  }
  func.func @transform_4(%arg0: i32) -> (i32, i32) {
    %c0_i32 = arith.constant 0 : i32
    %c0_i32_0 = arith.constant 0 : i32
    %c0_i32_1 = arith.constant 0 : i32
    return %c0_i32, %c0_i32_0 : i32, i32
  }
  func.func @transform_5(%arg0: i32) -> (i32, i32, i32) {
    %c0_i32 = arith.constant 0 : i32
    %c0_i32_0 = arith.constant 0 : i32
    %c0_i32_1 = arith.constant 0 : i32
    %c0_i32_2 = arith.constant 0 : i32
    return %c0_i32, %c0_i32_0, %c0_i32_1 : i32, i32, i32
  }
  func.func @transform_6(%arg0: i32) -> (i32, i32) {
    %c0_i32 = arith.constant 0 : i32
    %c0_i32_0 = arith.constant 0 : i32
    %c0_i32_1 = arith.constant 0 : i32
    return %c0_i32, %c0_i32_0 : i32, i32
  }
  func.func @transform_7(%arg0: i32) -> (i32, i32, i32) {
    %c0_i32 = arith.constant 0 : i32
    %c0_i32_0 = arith.constant 0 : i32
    %c0_i32_1 = arith.constant 0 : i32
    %c0_i32_2 = arith.constant 0 : i32
    return %c0_i32, %c0_i32_0, %c0_i32_1 : i32, i32, i32
  }
  func.func @transform_8(%arg0: i32) -> (i32, i32) {
    %c0_i32 = arith.constant 0 : i32
    %c0_i32_0 = arith.constant 0 : i32
    %c0_i32_1 = arith.constant 0 : i32
    return %c0_i32, %c0_i32_0 : i32, i32
  }
  func.func @transform_9(%arg0: i32) -> (i32, i32) {
    %c0_i32 = arith.constant 0 : i32
    %c0_i32_0 = arith.constant 0 : i32
    %c0_i32_1 = arith.constant 0 : i32
    return %c0_i32, %c0_i32_0 : i32, i32
  }
  func.func @transform_10(%arg0: i32) -> (i32, i32) {
    %c0_i32 = arith.constant 0 : i32
    %c0_i32_0 = arith.constant 0 : i32
    %c0_i32_1 = arith.constant 0 : i32
    return %c0_i32, %c0_i32_0 : i32, i32
  }
  func.func @transform_11(%arg0: i32) -> (i32, i32) {
    %c0_i32 = arith.constant 0 : i32
    %c0_i32_0 = arith.constant 0 : i32
    %c0_i32_1 = arith.constant 0 : i32
    return %c0_i32, %c0_i32_0 : i32, i32
  }
  func.func @transform_12(%arg0: i32) -> (i32, i32, i32) {
    %c0_i32 = arith.constant 0 : i32
    %c0_i32_0 = arith.constant 0 : i32
    %c0_i32_1 = arith.constant 0 : i32
    return %arg0, %c0_i32, %c0_i32_0 : i32, i32, i32
  }
  func.func @transform_13(%arg0: i32) -> (i32, i32, i32) {
    %c0_i32 = arith.constant 0 : i32
    %c0_i32_0 = arith.constant 0 : i32
    %c0_i32_1 = arith.constant 0 : i32
    return %arg0, %c0_i32, %c0_i32_0 : i32, i32, i32
  }
  func.func @transform_14(%arg0: i32) -> (i32, i32, i32) {
    %c0_i32 = arith.constant 0 : i32
    %c0_i32_0 = arith.constant 0 : i32
    %c0_i32_1 = arith.constant 0 : i32
    return %arg0, %c0_i32, %c0_i32_0 : i32, i32, i32
  }
}

module attributes {stable_mosaic.version = 11 : i64} {
  func.func @_mm_bias_kernel(%arg0: i32, %arg1: memref<50x64xbf16, #tpu.memory_space<vmem>>, %arg2: memref<64x9xbf16, #tpu.memory_space<vmem>>, %arg3: memref<1x9xf32, #tpu.memory_space<vmem>>, %arg4: memref<50x9xf32, #tpu.memory_space<vmem>>) attributes {dimension_semantics = [#tpu.dimension_semantics<arbitrary>], iteration_bounds = array<i64: 1>, scalar_prefetch = 0 : i64, scratch_operands = 0 : i64, tpu.core_type = #tpu.core_type<tc>, window_params = [{pipeline_mode = #tpu.pipeline_mode<synchronous>, transform_indices = @transform_0, window_bounds = array<i64: 50, 64>}, {pipeline_mode = #tpu.pipeline_mode<synchronous>, transform_indices = @transform_1, window_bounds = array<i64: 64, 9>}, {pipeline_mode = #tpu.pipeline_mode<synchronous>, transform_indices = @transform_2, window_bounds = array<i64: 1, 9>}, {pipeline_mode = #tpu.pipeline_mode<synchronous>, transform_indices = @transform_3, window_bounds = array<i64: 50, 9>}]} {
    %c0 = arith.constant 0 : index
    %c0_0 = arith.constant 0 : index
    %0 = vector.load %arg1[%c0, %c0_0] : memref<50x64xbf16, #tpu.memory_space<vmem>>, vector<50x64xbf16>
    %c0_1 = arith.constant 0 : index
    %c0_2 = arith.constant 0 : index
    %1 = vector.load %arg2[%c0_1, %c0_2] : memref<64x9xbf16, #tpu.memory_space<vmem>>, vector<64x9xbf16>
    %cst = arith.constant dense<0.000000e+00> : vector<50x9xf32>
    %2 = tpu.matmul %0, %1, %cst {dimension_numbers = #tpu.dot_dimension_numbers<[1], [0], [0], [1], [0, 0, 1, 1], [], []>} : vector<50x64xbf16>, vector<64x9xbf16>, vector<50x9xf32> -> vector<50x9xf32>
    %c0_3 = arith.constant 0 : index
    %c0_4 = arith.constant 0 : index
    %3 = vector.load %arg3[%c0_3, %c0_4] : memref<1x9xf32, #tpu.memory_space<vmem>>, vector<1x9xf32>
    %4 = vector.broadcast %3 : vector<1x9xf32> to vector<50x9xf32>
    %5 = arith.addf %2, %4 : vector<50x9xf32>
    %c0_5 = arith.constant 0 : index
    %c0_6 = arith.constant 0 : index
    %6 = vector.load %arg4[%c0_5, %c0_6] : memref<50x9xf32, #tpu.memory_space<vmem>>, vector<50x9xf32>
    tpu.vector_store %arg4[%c0_5, %c0_6], %5 {strides = array<i32>} : memref<50x9xf32, #tpu.memory_space<vmem>>, vector<50x9xf32>,
    return
  }
  func.func @transform_0(%arg0: i32) -> (i32, i32) {
    %c0_i32 = arith.constant 0 : i32
    %c0_i32_0 = arith.constant 0 : i32
    %c0_i32_1 = arith.constant 0 : i32
    return %c0_i32, %c0_i32_0 : i32, i32
  }
  func.func @transform_1(%arg0: i32) -> (i32, i32) {
    %c0_i32 = arith.constant 0 : i32
    %c0_i32_0 = arith.constant 0 : i32
    %c0_i32_1 = arith.constant 0 : i32
    return %c0_i32, %c0_i32_0 : i32, i32
  }
  func.func @transform_2(%arg0: i32) -> (i32, i32) {
    %c0_i32 = arith.constant 0 : i32
    %c0_i32_0 = arith.constant 0 : i32
    %c0_i32_1 = arith.constant 0 : i32
    return %c0_i32, %c0_i32_0 : i32, i32
  }
  func.func @transform_3(%arg0: i32) -> (i32, i32) {
    %c0_i32 = arith.constant 0 : i32
    %c0_i32_0 = arith.constant 0 : i32
    %c0_i32_1 = arith.constant 0 : i32
    return %c0_i32, %c0_i32_0 : i32, i32
  }
}

</mosaic_0001>

<llo_original>
// kernel: custom-call
$region0: #{custom-call}
  %s0 = inlined_call_operand.vmem [shape: f32[4,2,16,16], index: 0, kind: output, shape index: {}]

// kernel: closed_call.81
$region0: #{closed_call.81}
  #allocation0 [shape = 'u32[]', space=smem, size = 0x4, offset = 0x4, fixed_abs, tag = 'smem constant byte address 0x4 - core index']
  #allocation1 [shape = 'u32[72,128]{1,0:T(1,128)}', space=vmem, size = 0x9000, scoped, tag = 'internal scratch']
  %s0 = inlined_call_operand.vmem [shape: bf16[9,32,9], index: 0, kind: input, shape index: {}]
  %s1 = inlined_call_operand.vmem [shape: bf16[9,8], index: 1, kind: input, shape index: {}]
  %s2 = inlined_call_operand.vmem [shape: f32[1,8], index: 2, kind: input, shape index: {}]
  %s3 = inlined_call_operand.vmem [shape: f32[32,8], index: 3, kind: output, shape index: {}]
  %s4 = sld [smem:[#allocation0]]
  $region22: #{closed_call.81} parent=0
    _
  %s6 = ssub.s32 1, %s4
  %s7 = scalar_select 0, %s6, %s4
  // Predicated region
  $region2: #{closed_call.81} parent=0 // pred_check
    _
  $region3: #{closed_call.81} parent=0 // pred_check_branch
    %9 = sbr.rel (0) target = $region5
  $region4: #{closed_call.81} parent=0 // pred_region
    _
  $region5: #{closed_call.81} parent=0 // pred_fallthru
    _
  // Predicated region
  $region6: #{closed_call.81} parent=0 // pred_check
    _
  $region7: #{closed_call.81} parent=0 // pred_check_branch
    %11 = sbr.rel (0) target = $region9
  $region8: #{closed_call.81} parent=0 // pred_region
    _
  $region9: #{closed_call.81} parent=0 // pred_fallthru
    _
  // Predicated region
  $region10: #{closed_call.81} parent=0 // pred_check
    _
  $region11: #{closed_call.81} parent=0 // pred_check_branch
    %13 = sbr.rel (0) target = $region13
  $region12: #{closed_call.81} parent=0 // pred_region
    _
  $region13: #{closed_call.81} parent=0 // pred_fallthru
    _
  %v15 = vld [vmem:[%s1] sm:$0xf]
  %v16 = vld [vmem:[%s1 + $0x4] sm:$0x1]
  %v17 = vld [vmem:[%s0] sm:$0xf]
  %v18 = vld [vmem:[%s0 + $0x4] sm:$0xf]
  %v19 = vld [vmem:[%s0 + $0x8] sm:$0xf]
  %v20 = vld [vmem:[%s0 + $0xc] sm:$0xf]
  %v25 = vunpack.c.l.b16 %v17
  %v26 = vunpack.c.l.b16 %v18
  %v27 = vunpack.c.l.b16 %v19
  %v28 = vunpack.c.l.b16 %v20
  %v29 = vpack.c.b16 %v26, %v25
  %v30 = vpack.c.b16 %v28, %v27
  %v33 = vunpack.c.l.b16 %v15
  %v34 = vunpack.c.l.b16 %v16
  %v35 = vpack.c.b16 %v34, %v33
  %vm36 = vcmask 72704
  %v38 = vsel %vm36, %v29, 0
  %v41 = vsel %vm36, %v30, 0
  %vm43 = vcmask 1043456
  %vm44 = vcmask 1044480
  %v45 = vsel %vm43, 4294967295, 65535
  %v46 = vsel %vm44, %v45, 0
  %v48 = vand.u32 %v35, %v46
  %50 = vmatpush.bf16.msra.mxu0 0
  %51 = vmatpush.bf16.msra.mxu0 0
  %52 = vmatpush.bf16.msra.mxu0 0
  %53 = vmatpush.bf16.msra.mxu0 0
  %54 = vmatpush.bf16.msra.mxu0 0
  %55 = vmatpush.bf16.msra.mxu0 0
  %56 = vmatpush.bf16.msra.mxu0 0
  %57 = vmatpush.bf16.msra.mxu0 %v48
  %58 = vmatmul.bf16.gmra.mxu0 %v38
  %v59 = vpop.f32.mrf.mxu0
  %v60 = vadd.f32 0.0, %v59
  %v61 = vpop.f32.mrf.mxu0
  %v62 = vadd.f32 0.0, %v61
  %63 = vmatmul.bf16.gmra.mxu0 %v41
  %v64 = vpop.f32.mrf.mxu0
  %v65 = vadd.f32 0.0, %v64
  %v66 = vpop.f32.mrf.mxu0
  %v67 = vadd.f32 0.0, %v66
  %68 = vdwg.mxu0
  %s69 = scalar_lea.vmem %s0, 16
  %v70 = vld [vmem:[%s69] sm:$0xf]
  %v71 = vld [vmem:[%s69 + $0x4] sm:$0xf]
  %v72 = vld [vmem:[%s69 + $0x8] sm:$0xf]
  %v73 = vld [vmem:[%s69 + $0xc] sm:$0xf]
  %v78 = vunpack.c.l.b16 %v70
  %v79 = vunpack.c.l.b16 %v71
  %v80 = vunpack.c.l.b16 %v72
  %v81 = vunpack.c.l.b16 %v73
  %v82 = vpack.c.b16 %v79, %v78
  %v83 = vpack.c.b16 %v81, %v80
  %v85 = vsel %vm36, %v82, 0
  %v88 = vsel %vm36, %v83, 0
  %90 = vmatpush.bf16.msra.mxu0 0
  %91 = vmatpush.bf16.msra.mxu0 0
  %92 = vmatpush.bf16.msra.mxu0 0
  %93 = vmatpush.bf16.msra.mxu0 0
  %94 = vmatpush.bf16.msra.mxu0 0
  %95 = vmatpush.bf16.msra.mxu0 0
  %96 = vmatpush.bf16.msra.mxu0 0
  %97 = vmatpush.bf16.msra.mxu0 %v48
  %98 = vmatmul.bf16.gmra.mxu0 %v85
  %v99 = vpop.f32.mrf.mxu0
  %v100 = vadd.f32 0.0, %v99
  %v101 = vpop.f32.mrf.mxu0
  %v102 = vadd.f32 0.0, %v101
  %103 = vmatmul.bf16.gmra.mxu0 %v88
  %v104 = vpop.f32.mrf.mxu0
  %v105 = vadd.f32 0.0, %v104
  %v106 = vpop.f32.mrf.mxu0
  %v107 = vadd.f32 0.0, %v106
  %108 = vdwg.mxu0
  %v109 = vmax.f32 %v60, %v100
  %v110 = vmax.f32 %v62, %v102
  %v111 = vmax.f32 %v65, %v105
  %v112 = vmax.f32 %v67, %v107
  %s113 = scalar_lea.vmem %s0, 32
  %v114 = vld [vmem:[%s113] sm:$0xf]
  %v115 = vld [vmem:[%s113 + $0x4] sm:$0xf]
  %v116 = vld [vmem:[%s113 + $0x8] sm:$0xf]
  %v117 = vld [vmem:[%s113 + $0xc] sm:$0xf]
  %v122 = vunpack.c.l.b16 %v114
  %v123 = vunpack.c.l.b16 %v115
  %v124 = vunpack.c.l.b16 %v116
  %v125 = vunpack.c.l.b16 %v117
  %v126 = vpack.c.b16 %v123, %v122
  %v127 = vpack.c.b16 %v125, %v124
  %v129 = vsel %vm36, %v126, 0
  %v132 = vsel %vm36, %v127, 0
  %134 = vmatpush.bf16.msra.mxu0 0
  %135 = vmatpush.bf16.msra.mxu0 0
  %136 = vmatpush.bf16.msra.mxu0 0
  %137 = vmatpush.bf16.msra.mxu0 0
  %138 = vmatpush.bf16.msra.mxu0 0
  %139 = vmatpush.bf16.msra.mxu0 0
  %140 = vmatpush.bf16.msra.mxu0 0
  %141 = vmatpush.bf16.msra.mxu0 %v48
  %142 = vmatmul.bf16.gmra.mxu0 %v129
  %v143 = vpop.f32.mrf.mxu0
  %v144 = vadd.f32 0.0, %v143
  %v145 = vpop.f32.mrf.mxu0
  %v146 = vadd.f32 0.0, %v145
  %147 = vmatmul.bf16.gmra.mxu0 %v132
  %v148 = vpop.f32.mrf.mxu0
  %v149 = vadd.f32 0.0, %v148
  %v150 = vpop.f32.mrf.mxu0
  %v151 = vadd.f32 0.0, %v150
  %152 = vdwg.mxu0
  %v153 = vmax.f32 %v109, %v144
  %v154 = vmax.f32 %v110, %v146
  %v155 = vmax.f32 %v111, %v149
  %v156 = vmax.f32 %v112, %v151
  %s157 = scalar_lea.vmem %s0, 48
  %v158 = vld [vmem:[%s157] sm:$0xf]
  %v159 = vld [vmem:[%s157 + $0x4] sm:$0xf]
  %v160 = vld [vmem:[%s157 + $0x8] sm:$0xf]
  %v161 = vld [vmem:[%s157 + $0xc] sm:$0xf]
  %v166 = vunpack.c.l.b16 %v158
  %v167 = vunpack.c.l.b16 %v159
  %v168 = vunpack.c.l.b16 %v160
  %v169 = vunpack.c.l.b16 %v161
  %v170 = vpack.c.b16 %v167, %v166
  %v171 = vpack.c.b16 %v169, %v168
  %v173 = vsel %vm36, %v170, 0
  %v176 = vsel %vm36, %v171, 0
  %178 = vmatpush.bf16.msra.mxu0 0
  %179 = vmatpush.bf16.msra.mxu0 0
  %180 = vmatpush.bf16.msra.mxu0 0
  %181 = vmatpush.bf16.msra.mxu0 0
  %182 = vmatpush.bf16.msra.mxu0 0
  %183 = vmatpush.bf16.msra.mxu0 0
  %184 = vmatpush.bf16.msra.mxu0 0
  %185 = vmatpush.bf16.msra.mxu0 %v48
  %186 = vmatmul.bf16.gmra.mxu0 %v173
  %v187 = vpop.f32.mrf.mxu0
  %v188 = vadd.f32 0.0, %v187
  %v189 = vpop.f32.mrf.mxu0
  %v190 = vadd.f32 0.0, %v189
  %191 = vmatmul.bf16.gmra.mxu0 %v176
  %v192 = vpop.f32.mrf.mxu0
  %v193 = vadd.f32 0.0, %v192
  %v194 = vpop.f32.mrf.mxu0
  %v195 = vadd.f32 0.0, %v194
  %196 = vdwg.mxu0
  %v197 = vmax.f32 %v153, %v188
  %v198 = vmax.f32 %v154, %v190
  %v199 = vmax.f32 %v155, %v193
  %v200 = vmax.f32 %v156, %v195
  %s201 = scalar_lea.vmem %s0, 64
  %v202 = vld [vmem:[%s201] sm:$0xf]
  %v203 = vld [vmem:[%s201 + $0x4] sm:$0xf]
  %v204 = vld [vmem:[%s201 + $0x8] sm:$0xf]
  %v205 = vld [vmem:[%s201 + $0xc] sm:$0xf]
  %v210 = vunpack.c.l.b16 %v202
  %v211 = vunpack.c.l.b16 %v203
  %v212 = vunpack.c.l.b16 %v204
  %v213 = vunpack.c.l.b16 %v205
  %v214 = vpack.c.b16 %v211, %v210
  %v215 = vpack.c.b16 %v213, %v212
  %v217 = vsel %vm36, %v214, 0
  %v220 = vsel %vm36, %v215, 0
  %222 = vmatpush.bf16.msra.mxu0 0
  %223 = vmatpush.bf16.msra.mxu0 0
  %224 = vmatpush.bf16.msra.mxu0 0
  %225 = vmatpush.bf16.msra.mxu0 0
  %226 = vmatpush.bf16.msra.mxu0 0
  %227 = vmatpush.bf16.msra.mxu0 0
  %228 = vmatpush.bf16.msra.mxu0 0
  %229 = vmatpush.bf16.msra.mxu0 %v48
  %230 = vmatmul.bf16.gmra.mxu0 %v217
  %v231 = vpop.f32.mrf.mxu0
  %v232 = vadd.f32 0.0, %v231
  %v233 = vpop.f32.mrf.mxu0
  %v234 = vadd.f32 0.0, %v233
  %235 = vmatmul.bf16.gmra.mxu0 %v220
  %v236 = vpop.f32.mrf.mxu0
  %v237 = vadd.f32 0.0, %v236
  %v238 = vpop.f32.mrf.mxu0
  %v239 = vadd.f32 0.0, %v238
  %240 = vdwg.mxu0
  %v241 = vmax.f32 %v197, %v232
  %v242 = vmax.f32 %v198, %v234
  %v243 = vmax.f32 %v199, %v237
  %v244 = vmax.f32 %v200, %v239
  %s245 = scalar_lea.vmem %s0, 80
  %v246 = vld [vmem:[%s245] sm:$0xf]
  %v247 = vld [vmem:[%s245 + $0x4] sm:$0xf]
  %v248 = vld [vmem:[%s245 + $0x8] sm:$0xf]
  %v249 = vld [vmem:[%s245 + $0xc] sm:$0xf]
  %v254 = vunpack.c.l.b16 %v246
  %v255 = vunpack.c.l.b16 %v247
  %v256 = vunpack.c.l.b16 %v248
  %v257 = vunpack.c.l.b16 %v249
  %v258 = vpack.c.b16 %v255, %v254
  %v259 = vpack.c.b16 %v257, %v256
  %v261 = vsel %vm36, %v258, 0
  %v264 = vsel %vm36, %v259, 0
  %266 = vmatpush.bf16.msra.mxu0 0
  %267 = vmatpush.bf16.msra.mxu0 0
  %268 = vmatpush.bf16.msra.mxu0 0
  %269 = vmatpush.bf16.msra.mxu0 0
  %270 = vmatpush.bf16.msra.mxu0 0
  %271 = vmatpush.bf16.msra.mxu0 0
  %272 = vmatpush.bf16.msra.mxu0 0
  %273 = vmatpush.bf16.msra.mxu0 %v48
  %274 = vmatmul.bf16.gmra.mxu0 %v261
  %v275 = vpop.f32.mrf.mxu0
  %v276 = vadd.f32 0.0, %v275
  %v277 = vpop.f32.mrf.mxu0
  %v278 = vadd.f32 0.0, %v277
  %279 = vmatmul.bf16.gmra.mxu0 %v264
  %v280 = vpop.f32.mrf.mxu0
  %v281 = vadd.f32 0.0, %v280
  %v282 = vpop.f32.mrf.mxu0
  %v283 = vadd.f32 0.0, %v282
  %284 = vdwg.mxu0
  %v285 = vmax.f32 %v241, %v276
  %v286 = vmax.f32 %v242, %v278
  %v287 = vmax.f32 %v243, %v281
  %v288 = vmax.f32 %v244, %v283
  %s289 = scalar_lea.vmem %s0, 96
  %v290 = vld [vmem:[%s289] sm:$0xf]
  %v291 = vld [vmem:[%s289 + $0x4] sm:$0xf]
  %v292 = vld [vmem:[%s289 + $0x8] sm:$0xf]
  %v293 = vld [vmem:[%s289 + $0xc] sm:$0xf]
  %v298 = vunpack.c.l.b16 %v290
  %v299 = vunpack.c.l.b16 %v291
  %v300 = vunpack.c.l.b16 %v292
  %v301 = vunpack.c.l.b16 %v293
  %v302 = vpack.c.b16 %v299, %v298
  %v303 = vpack.c.b16 %v301, %v300
  %v305 = vsel %vm36, %v302, 0
  %v308 = vsel %vm36, %v303, 0
  %310 = vmatpush.bf16.msra.mxu0 0
  %311 = vmatpush.bf16.msra.mxu0 0
  %312 = vmatpush.bf16.msra.mxu0 0
  %313 = vmatpush.bf16.msra.mxu0 0
  %314 = vmatpush.bf16.msra.mxu0 0
  %315 = vmatpush.bf16.msra.mxu0 0
  %316 = vmatpush.bf16.msra.mxu0 0
  %317 = vmatpush.bf16.msra.mxu0 %v48
  %318 = vmatmul.bf16.gmra.mxu0 %v305
  %v319 = vpop.f32.mrf.mxu0
  %v320 = vadd.f32 0.0, %v319
  %v321 = vpop.f32.mrf.mxu0
  %v322 = vadd.f32 0.0, %v321
  %323 = vmatmul.bf16.gmra.mxu0 %v308
  %v324 = vpop.f32.mrf.mxu0
  %v325 = vadd.f32 0.0, %v324
  %v326 = vpop.f32.mrf.mxu0
  %v327 = vadd.f32 0.0, %v326
  %328 = vdwg.mxu0
  %v329 = vmax.f32 %v285, %v320
  %v330 = vmax.f32 %v286, %v322
  %v331 = vmax.f32 %v287, %v325
  %v332 = vmax.f32 %v288, %v327
  %s333 = scalar_lea.vmem %s0, 112
  %v334 = vld [vmem:[%s333] sm:$0xf]
  %v335 = vld [vmem:[%s333 + $0x4] sm:$0xf]
  %v336 = vld [vmem:[%s333 + $0x8] sm:$0xf]
  %v337 = vld [vmem:[%s333 + $0xc] sm:$0xf]
  %v342 = vunpack.c.l.b16 %v334
  %v343 = vunpack.c.l.b16 %v335
  %v344 = vunpack.c.l.b16 %v336
  %v345 = vunpack.c.l.b16 %v337
  %v346 = vpack.c.b16 %v343, %v342
  %v347 = vpack.c.b16 %v345, %v344
  %v349 = vsel %vm36, %v346, 0
  %v352 = vsel %vm36, %v347, 0
  %354 = vmatpush.bf16.msra.mxu0 0
  %355 = vmatpush.bf16.msra.mxu0 0
  %356 = vmatpush.bf16.msra.mxu0 0
  %357 = vmatpush.bf16.msra.mxu0 0
  %358 = vmatpush.bf16.msra.mxu0 0
  %359 = vmatpush.bf16.msra.mxu0 0
  %360 = vmatpush.bf16.msra.mxu0 0
  %361 = vmatpush.bf16.msra.mxu0 %v48
  %362 = vmatmul.bf16.gmra.mxu0 %v349
  %v363 = vpop.f32.mrf.mxu0
  %v364 = vadd.f32 0.0, %v363
  %v365 = vpop.f32.mrf.mxu0
  %v366 = vadd.f32 0.0, %v365
  %367 = vmatmul.bf16.gmra.mxu0 %v352
  %v368 = vpop.f32.mrf.mxu0
  %v369 = vadd.f32 0.0, %v368
  %v370 = vpop.f32.mrf.mxu0
  %v371 = vadd.f32 0.0, %v370
  %372 = vdwg.mxu0
  %v373 = vmax.f32 %v329, %v364
  %v374 = vmax.f32 %v330, %v366
  %v375 = vmax.f32 %v331, %v369
  %v376 = vmax.f32 %v332, %v371
  %s377 = scalar_lea.vmem %s0, 128
  %v378 = vld [vmem:[%s377] sm:$0xf]
  %v379 = vld [vmem:[%s377 + $0x4] sm:$0xf]
  %v380 = vld [vmem:[%s377 + $0x8] sm:$0xf]
  %v381 = vld [vmem:[%s377 + $0xc] sm:$0xf]
  %v386 = vunpack.c.l.b16 %v378
  %v387 = vunpack.c.l.b16 %v379
  %v388 = vunpack.c.l.b16 %v380
  %v389 = vunpack.c.l.b16 %v381
  %v390 = vpack.c.b16 %v387, %v386
  %v391 = vpack.c.b16 %v389, %v388
  %v393 = vsel %vm36, %v390, 0
  %v396 = vsel %vm36, %v391, 0
  %398 = vmatpush.bf16.msra.mxu0 0
  %399 = vmatpush.bf16.msra.mxu0 0
  %400 = vmatpush.bf16.msra.mxu0 0
  %401 = vmatpush.bf16.msra.mxu0 0
  %402 = vmatpush.bf16.msra.mxu0 0
  %403 = vmatpush.bf16.msra.mxu0 0
  %404 = vmatpush.bf16.msra.mxu0 0
  %405 = vmatpush.bf16.msra.mxu0 %v48
  %406 = vmatmul.bf16.gmra.mxu0 %v393
  %v407 = vpop.f32.mrf.mxu0
  %v408 = vadd.f32 0.0, %v407
  %v409 = vpop.f32.mrf.mxu0
  %v410 = vadd.f32 0.0, %v409
  %411 = vmatmul.bf16.gmra.mxu0 %v396
  %v412 = vpop.f32.mrf.mxu0
  %v413 = vadd.f32 0.0, %v412
  %v414 = vpop.f32.mrf.mxu0
  %v415 = vadd.f32 0.0, %v414
  %416 = vdwg.mxu0
  %v417 = vmax.f32 %v373, %v408
  %v418 = vmax.f32 %v374, %v410
  %v419 = vmax.f32 %v375, %v413
  %v420 = vmax.f32 %v376, %v415
  %v421 = vld [vmem:[%s2] sm:$0x1]
  %v423 = vperm.slane %v421, 0
  %v425 = vadd.f32 %v417, %v423
  %v426 = vadd.f32 %v418, %v423
  %v427 = vadd.f32 %v419, %v423
  %v428 = vadd.f32 %v420, %v423
  %vm429 = vcmask 64512
  %430 = vst.msk [vmem:[%s3] sm:$0xff] %vm429, %v425
  %431 = vst.msk [vmem:[%s3 + $0x8] sm:$0xff] %vm429, %v426
  %432 = vst.msk [vmem:[%s3 + $0x10] sm:$0xff] %vm429, %v427
  %433 = vst.msk [vmem:[%s3 + $0x18] sm:$0xff] %vm429, %v428
  // Predicated region
  $region14: #{closed_call.81} parent=0 // pred_check
    _
  $region15: #{closed_call.81} parent=0 // pred_check_branch
    %435 = sbr.rel (0) target = $region17
  $region16: #{closed_call.81} parent=0 // pred_region
    _
  $region17: #{closed_call.81} parent=0 // pred_fallthru
    _
  // Predicated region
  $region18: #{closed_call.81} parent=0 // pred_check
    _
  $region19: #{closed_call.81} parent=0 // pred_check_branch
    %437 = sbr.rel (0) target = $region21
  $region20: #{closed_call.81} parent=0 // pred_region
    _
  $region21: #{closed_call.81} parent=0 // pred_fallthru
    _

// kernel: closed_call.82
$region0: #{closed_call.82}
  #allocation0 [shape = 'u32[]', space=smem, size = 0x4, offset = 0x4, fixed_abs, tag = 'smem constant byte address 0x4 - core index']
  #allocation1 [shape = 'u32[72,128]{1,0:T(1,128)}', space=vmem, size = 0x9000, scoped, tag = 'internal scratch']
  #allocation2 [shape = 'bf16[38,16]{1,0:T(8,128)(2,1)}', space=vmem, size = 0x2800, scoped, tag = 'scratch operand']
  %s0 = inlined_call_operand.vmem [shape: bf16[2,38,56], index: 0, kind: input, shape index: {}]
  %s1 = inlined_call_operand.vmem [shape: f32[2,24,16], index: 1, kind: input, shape index: {}]
  %s2 = inlined_call_operand.vmem [shape: f32[24,1], index: 2, kind: input, shape index: {}]
  %s3 = inlined_call_operand.vmem [shape: bf16[9,56,128], index: 3, kind: input, shape index: {}]
  %s4 = inlined_call_operand.vmem [shape: f32[1,128], index: 4, kind: input, shape index: {}]
  %s5 = inlined_call_operand.vmem [shape: bf16[9,16,64], index: 5, kind: input, shape index: {}]
  %s6 = inlined_call_operand.vmem [shape: f32[1,64], index: 6, kind: input, shape index: {}]
  %s7 = inlined_call_operand.vmem [shape: bf16[9,16,16], index: 7, kind: input, shape index: {}]
  %s8 = inlined_call_operand.vmem [shape: f32[1,16], index: 8, kind: input, shape index: {}]
  %s9 = inlined_call_operand.vmem [shape: bf16[16,16], index: 9, kind: input, shape index: {}]
  %s10 = inlined_call_operand.vmem [shape: bf16[16,16], index: 10, kind: input, shape index: {}]
  %s11 = inlined_call_operand.vmem [shape: f32[1,16], index: 11, kind: input, shape index: {}]
  %s12 = inlined_call_operand.vmem [shape: f32[2,24,16], index: 12, kind: output, shape index: {0}]
  %s13 = inlined_call_operand.vmem [shape: f32[2,24,16], index: 13, kind: output, shape index: {1}]
  %s14 = inlined_call_operand.vmem [shape: f32[2,24,16], index: 14, kind: output, shape index: {2}]
  %15 = xla_tuple %s12, %s13, %s14
  %s16 = sld [smem:[#allocation0]]
  $region97: #{closed_call.82} parent=0
    _
  %s18 = ssub.s32 1, %s16
  %s19 = scalar_select 0, %s18, %s16
  loop: start=0, step=1, limit=4
  $region2: #{closed_call.82} parent=0 // loop_pre_header
    _
  $region3: #{closed_call.82} parent=0 // loop_header
    %s21 = sphi 0, %s25
    %p22 = scmp.ge.s32.totalorder %s21, 4
    %s31 = sphi 0, %s33
    %s34 = sphi 0, %s31
    %s35 = sphi 0, %s34
    %s51 = sphi 0, %s35
    %s57 = sphi 0, %s59
    %s60 = sphi 0, %s57
    %s61 = sphi 0, %s60
    %s77 = sphi 0, %s61
    %s81 = sphi 0, %s81
    %s83 = sphi 0, %s81
    %s84 = sphi 0, %s83
    %s98 = sphi 0, %s84
    %s102 = sphi 0, %s102
    %s104 = sphi 0, %s102
    %s105 = sphi 0, %s104
    %s119 = sphi 0, %s105
    %s123 = sphi 0, %s123
    %s125 = sphi 0, %s123
    %s126 = sphi 0, %s125
    %s140 = sphi 0, %s126
    %s144 = sphi 0, %s144
    %s146 = sphi 0, %s144
    %s147 = sphi 0, %s146
    %s161 = sphi 0, %s147
    %s165 = sphi 0, %s165
    %s167 = sphi 0, %s165
    %s168 = sphi 0, %s167
    %s182 = sphi 0, %s168
    %s186 = sphi 0, %s186
    %s188 = sphi 0, %s186
    %s189 = sphi 0, %s188
    %s203 = sphi 0, %s189
    %s207 = sphi 0, %s207
    %s209 = sphi 0, %s207
    %s210 = sphi 0, %s209
    %s224 = sphi 0, %s210
    %s228 = sphi 0, %s228
    %s230 = sphi 0, %s228
    %s231 = sphi 0, %s230
    %s245 = sphi 0, %s231
    %s249 = sphi 0, %s249
    %s251 = sphi 0, %s249
    %s252 = sphi 0, %s251
    %s266 = sphi 0, %s252
    %s270 = sphi 0, %s270
    %s272 = sphi 0, %s270
    %s273 = sphi 0, %s272
    %s287 = sphi 0, %s273
    %s293 = sphi 0, %s295
    %s296 = sphi 0, %s293
    %s297 = sphi 0, %s296
    %s313 = sphi 0, %s297
    %s319 = sphi 0, %s321
    %s322 = sphi 0, %s319
    %s323 = sphi 0, %s322
    %s339 = sphi 0, %s323
    %s345 = sphi 0, %s347
    %s348 = sphi 0, %s345
    %s349 = sphi 0, %s348
    %s365 = sphi 0, %s349
  $region4: #{closed_call.82} parent=0 // loop_header_branch
    %24 = sbr.rel (%p22) target = $region8
  $region5: #{closed_call.82} parent=0 // loop_body
    %s26 = ssub.s32 %s21, 1
    %s27 = ssub.s32 %s21, 2
    %s28 = sadd.s32 %s21, 1
    %s29 = ssub.s32 %s21, %s28
    %p30 = scmp.eq.s32.totalorder %s29, 0
    %s32 = sadd.s32 %s31, 1
    %s33 = scalar_select %p30, %s31, %s32
    %p36 = pneg %p30
    %p37 = scmp.eq.s32.totalorder %s21, 1
    %p38 = por %p36, %p37
    %p39 = scmp.ne.s32.totalorder %s31, %s34
    %p40 = scmp.eq.s32.totalorder %s21, 0
    %p41 = por %p39, %p40
    %p42 = scmp.ne.s32.totalorder %s31, %s34
    %p43 = scmp.eq.s32.totalorder %s26, 1
    %p44 = por %p42, %p43
    %p45 = scmp.ne.s32.totalorder %s34, %s35
    %p46 = scmp.eq.s32.totalorder %s26, 0
    %p47 = por %p45, %p46
    %p48 = scmp.ne.s32.totalorder %s34, %s35
    %p49 = scmp.eq.s32.totalorder %s27, 1
    %p50 = por %p48, %p49
    %p52 = scmp.ne.s32.totalorder %s35, %s51
    %p53 = scmp.eq.s32.totalorder %s27, 0
    %p54 = por %p52, %p53
    %s55 = ssub.s32 %s21, %s28
    %p56 = scmp.eq.s32.totalorder %s55, 0
    %s58 = sadd.s32 %s57, 1
    %s59 = scalar_select %p56, %s57, %s58
    %p62 = pneg %p56
    %p63 = scmp.eq.s32.totalorder %s21, 1
    %p64 = por %p62, %p63
    %p65 = scmp.ne.s32.totalorder %s57, %s60
    %p66 = scmp.eq.s32.totalorder %s21, 0
    %p67 = por %p65, %p66
    %p68 = scmp.ne.s32.totalorder %s57, %s60
    %p69 = scmp.eq.s32.totalorder %s26, 1
    %p70 = por %p68, %p69
    %p71 = scmp.ne.s32.totalorder %s60, %s61
    %p72 = scmp.eq.s32.totalorder %s26, 0
    %p73 = por %p71, %p72
    %p74 = scmp.ne.s32.totalorder %s60, %s61
    %p75 = scmp.eq.s32.totalorder %s27, 1
    %p76 = por %p74, %p75
    %p78 = scmp.ne.s32.totalorder %s61, %s77
    %p79 = scmp.eq.s32.totalorder %s27, 0
    %p80 = por %p78, %p79
    %s82 = sadd.s32 %s81, 1
    %p85 = scmp.eq.s32.totalorder %s21, 1
    %p86 = scmp.ne.s32.totalorder %s81, %s83
    %p87 = scmp.eq.s32.totalorder %s21, 0
    %p88 = por %p86, %p87
    %p89 = scmp.ne.s32.totalorder %s81, %s83
    %p90 = scmp.eq.s32.totalorder %s26, 1
    %p91 = por %p89, %p90
    %p92 = scmp.ne.s32.totalorder %s83, %s84
    %p93 = scmp.eq.s32.totalorder %s26, 0
    %p94 = por %p92, %p93
    %p95 = scmp.ne.s32.totalorder %s83, %s84
    %p96 = scmp.eq.s32.totalorder %s27, 1
    %p97 = por %p95, %p96
    %p99 = scmp.ne.s32.totalorder %s84, %s98
    %p100 = scmp.eq.s32.totalorder %s27, 0
    %p101 = por %p99, %p100
    %s103 = sadd.s32 %s102, 1
    %p106 = scmp.eq.s32.totalorder %s21, 1
    %p107 = scmp.ne.s32.totalorder %s102, %s104
    %p108 = scmp.eq.s32.totalorder %s21, 0
    %p109 = por %p107, %p108
    %p110 = scmp.ne.s32.totalorder %s102, %s104
    %p111 = scmp.eq.s32.totalorder %s26, 1
    %p112 = por %p110, %p111
    %p113 = scmp.ne.s32.totalorder %s104, %s105
    %p114 = scmp.eq.s32.totalorder %s26, 0
    %p115 = por %p113, %p114
    %p116 = scmp.ne.s32.totalorder %s104, %s105
    %p117 = scmp.eq.s32.totalorder %s27, 1
    %p118 = por %p116, %p117
    %p120 = scmp.ne.s32.totalorder %s105, %s119
    %p121 = scmp.eq.s32.totalorder %s27, 0
    %p122 = por %p120, %p121
    %s124 = sadd.s32 %s123, 1
    %p127 = scmp.eq.s32.totalorder %s21, 1
    %p128 = scmp.ne.s32.totalorder %s123, %s125
    %p129 = scmp.eq.s32.totalorder %s21, 0
    %p130 = por %p128, %p129
    %p131 = scmp.ne.s32.totalorder %s123, %s125
    %p132 = scmp.eq.s32.totalorder %s26, 1
    %p133 = por %p131, %p132
    %p134 = scmp.ne.s32.totalorder %s125, %s126
    %p135 = scmp.eq.s32.totalorder %s26, 0
    %p136 = por %p134, %p135
    %p137 = scmp.ne.s32.totalorder %s125, %s126
    %p138 = scmp.eq.s32.totalorder %s27, 1
    %p139 = por %p137, %p138
    %p141 = scmp.ne.s32.totalorder %s126, %s140
    %p142 = scmp.eq.s32.totalorder %s27, 0
    %p143 = por %p141, %p142
    %s145 = sadd.s32 %s144, 1
    %p148 = scmp.eq.s32.totalorder %s21, 1
    %p149 = scmp.ne.s32.totalorder %s144, %s146
    %p150 = scmp.eq.s32.totalorder %s21, 0
    %p151 = por %p149, %p150
    %p152 = scmp.ne.s32.totalorder %s144, %s146
    %p153 = scmp.eq.s32.totalorder %s26, 1
    %p154 = por %p152, %p153
    %p155 = scmp.ne.s32.totalorder %s146, %s147
    %p156 = scmp.eq.s32.totalorder %s26, 0
    %p157 = por %p155, %p156
    %p158 = scmp.ne.s32.totalorder %s146, %s147
    %p159 = scmp.eq.s32.totalorder %s27, 1
    %p160 = por %p158, %p159
    %p162 = scmp.ne.s32.totalorder %s147, %s161
    %p163 = scmp.eq.s32.totalorder %s27, 0
    %p164 = por %p162, %p163
    %s166 = sadd.s32 %s165, 1
    %p169 = scmp.eq.s32.totalorder %s21, 1
    %p170 = scmp.ne.s32.totalorder %s165, %s167
    %p171 = scmp.eq.s32.totalorder %s21, 0
    %p172 = por %p170, %p171
    %p173 = scmp.ne.s32.totalorder %s165, %s167
    %p174 = scmp.eq.s32.totalorder %s26, 1
    %p175 = por %p173, %p174
    %p176 = scmp.ne.s32.totalorder %s167, %s168
    %p177 = scmp.eq.s32.totalorder %s26, 0
    %p178 = por %p176, %p177
    %p179 = scmp.ne.s32.totalorder %s167, %s168
    %p180 = scmp.eq.s32.totalorder %s27, 1
    %p181 = por %p179, %p180
    %p183 = scmp.ne.s32.totalorder %s168, %s182
    %p184 = scmp.eq.s32.totalorder %s27, 0
    %p185 = por %p183, %p184
    %s187 = sadd.s32 %s186, 1
    %p190 = scmp.eq.s32.totalorder %s21, 1
    %p191 = scmp.ne.s32.totalorder %s186, %s188
    %p192 = scmp.eq.s32.totalorder %s21, 0
    %p193 = por %p191, %p192
    %p194 = scmp.ne.s32.totalorder %s186, %s188
    %p195 = scmp.eq.s32.totalorder %s26, 1
    %p196 = por %p194, %p195
    %p197 = scmp.ne.s32.totalorder %s188, %s189
    %p198 = scmp.eq.s32.totalorder %s26, 0
    %p199 = por %p197, %p198
    %p200 = scmp.ne.s32.totalorder %s188, %s189
    %p201 = scmp.eq.s32.totalorder %s27, 1
    %p202 = por %p200, %p201
    %p204 = scmp.ne.s32.totalorder %s189, %s203
    %p205 = scmp.eq.s32.totalorder %s27, 0
    %p206 = por %p204, %p205
    %s208 = sadd.s32 %s207, 1
    %p211 = scmp.eq.s32.totalorder %s21, 1
    %p212 = scmp.ne.s32.totalorder %s207, %s209
    %p213 = scmp.eq.s32.totalorder %s21, 0
    %p214 = por %p212, %p213
    %p215 = scmp.ne.s32.totalorder %s207, %s209
    %p216 = scmp.eq.s32.totalorder %s26, 1
    %p217 = por %p215, %p216
    %p218 = scmp.ne.s32.totalorder %s209, %s210
    %p219 = scmp.eq.s32.totalorder %s26, 0
    %p220 = por %p218, %p219
    %p221 = scmp.ne.s32.totalorder %s209, %s210
    %p222 = scmp.eq.s32.totalorder %s27, 1
    %p223 = por %p221, %p222
    %p225 = scmp.ne.s32.totalorder %s210, %s224
    %p226 = scmp.eq.s32.totalorder %s27, 0
    %p227 = por %p225, %p226
    %s229 = sadd.s32 %s228, 1
    %p232 = scmp.eq.s32.totalorder %s21, 1
    %p233 = scmp.ne.s32.totalorder %s228, %s230
    %p234 = scmp.eq.s32.totalorder %s21, 0
    %p235 = por %p233, %p234
    %p236 = scmp.ne.s32.totalorder %s228, %s230
    %p237 = scmp.eq.s32.totalorder %s26, 1
    %p238 = por %p236, %p237
    %p239 = scmp.ne.s32.totalorder %s230, %s231
    %p240 = scmp.eq.s32.totalorder %s26, 0
    %p241 = por %p239, %p240
    %p242 = scmp.ne.s32.totalorder %s230, %s231
    %p243 = scmp.eq.s32.totalorder %s27, 1
    %p244 = por %p242, %p243
    %p246 = scmp.ne.s32.totalorder %s231, %s245
    %p247 = scmp.eq.s32.totalorder %s27, 0
    %p248 = por %p246, %p247
    %s250 = sadd.s32 %s249, 1
    %p253 = scmp.eq.s32.totalorder %s21, 1
    %p254 = scmp.ne.s32.totalorder %s249, %s251
    %p255 = scmp.eq.s32.totalorder %s21, 0
    %p256 = por %p254, %p255
    %p257 = scmp.ne.s32.totalorder %s249, %s251
    %p258 = scmp.eq.s32.totalorder %s26, 1
    %p259 = por %p257, %p258
    %p260 = scmp.ne.s32.totalorder %s251, %s252
    %p261 = scmp.eq.s32.totalorder %s26, 0
    %p262 = por %p260, %p261
    %p263 = scmp.ne.s32.totalorder %s251, %s252
    %p264 = scmp.eq.s32.totalorder %s27, 1
    %p265 = por %p263, %p264
    %p267 = scmp.ne.s32.totalorder %s252, %s266
    %p268 = scmp.eq.s32.totalorder %s27, 0
    %p269 = por %p267, %p268
    %s271 = sadd.s32 %s270, 1
    %p274 = scmp.eq.s32.totalorder %s21, 1
    %p275 = scmp.ne.s32.totalorder %s270, %s272
    %p276 = scmp.eq.s32.totalorder %s21, 0
    %p277 = por %p275, %p276
    %p278 = scmp.ne.s32.totalorder %s270, %s272
    %p279 = scmp.eq.s32.totalorder %s26, 1
    %p280 = por %p278, %p279
    %p281 = scmp.ne.s32.totalorder %s272, %s273
    %p282 = scmp.eq.s32.totalorder %s26, 0
    %p283 = por %p281, %p282
    %p284 = scmp.ne.s32.totalorder %s272, %s273
    %p285 = scmp.eq.s32.totalorder %s27, 1
    %p286 = por %p284, %p285
    %p288 = scmp.ne.s32.totalorder %s273, %s287
    %p289 = scmp.eq.s32.totalorder %s27, 0
    %p290 = por %p288, %p289
    %s291 = ssub.s32 %s21, %s28
    %p292 = scmp.eq.s32.totalorder %s291, 0
    %s294 = sadd.s32 %s293, 1
    %s295 = scalar_select %p292, %s293, %s294
    %p298 = pneg %p292
    %p299 = scmp.eq.s32.totalorder %s21, 1
    %p300 = por %p298, %p299
    %p301 = scmp.ne.s32.totalorder %s293, %s296
    %p302 = scmp.eq.s32.totalorder %s21, 0
    %p303 = por %p301, %p302
    %p304 = scmp.ne.s32.totalorder %s293, %s296
    %p305 = scmp.eq.s32.totalorder %s26, 1
    %p306 = por %p304, %p305
    %p307 = scmp.ne.s32.totalorder %s296, %s297
    %p308 = scmp.eq.s32.totalorder %s26, 0
    %p309 = por %p307, %p308
    %p310 = scmp.ne.s32.totalorder %s296, %s297
    %p311 = scmp.eq.s32.totalorder %s27, 1
    %p312 = por %p310, %p311
    %p314 = scmp.ne.s32.totalorder %s297, %s313
    %p315 = scmp.eq.s32.totalorder %s27, 0
    %p316 = por %p314, %p315
    %s317 = ssub.s32 %s21, %s28
    %p318 = scmp.eq.s32.totalorder %s317, 0
    %s320 = sadd.s32 %s319, 1
    %s321 = scalar_select %p318, %s319, %s320
    %p324 = pneg %p318
    %p325 = scmp.eq.s32.totalorder %s21, 1
    %p326 = por %p324, %p325
    %p327 = scmp.ne.s32.totalorder %s319, %s322
    %p328 = scmp.eq.s32.totalorder %s21, 0
    %p329 = por %p327, %p328
    %p330 = scmp.ne.s32.totalorder %s319, %s322
    %p331 = scmp.eq.s32.totalorder %s26, 1
    %p332 = por %p330, %p331
    %p333 = scmp.ne.s32.totalorder %s322, %s323
    %p334 = scmp.eq.s32.totalorder %s26, 0
    %p335 = por %p333, %p334
    %p336 = scmp.ne.s32.totalorder %s322, %s323
    %p337 = scmp.eq.s32.totalorder %s27, 1
    %p338 = por %p336, %p337
    %p340 = scmp.ne.s32.totalorder %s323, %s339
    %p341 = scmp.eq.s32.totalorder %s27, 0
    %p342 = por %p340, %p341
    %s343 = ssub.s32 %s21, %s28
    %p344 = scmp.eq.s32.totalorder %s343, 0
    %s346 = sadd.s32 %s345, 1
    %s347 = scalar_select %p344, %s345, %s346
    %p350 = pneg %p344
    %p351 = scmp.eq.s32.totalorder %s21, 1
    %p352 = por %p350, %p351
    %p353 = scmp.ne.s32.totalorder %s345, %s348
    %p354 = scmp.eq.s32.totalorder %s21, 0
    %p355 = por %p353, %p354
    %p356 = scmp.ne.s32.totalorder %s345, %s348
    %p357 = scmp.eq.s32.totalorder %s26, 1
    %p358 = por %p356, %p357
    %p359 = scmp.ne.s32.totalorder %s348, %s349
    %p360 = scmp.eq.s32.totalorder %s26, 0
    %p361 = por %p359, %p360
    %p362 = scmp.ne.s32.totalorder %s348, %s349
    %p363 = scmp.eq.s32.totalorder %s27, 1
    %p364 = por %p362, %p363
    %p366 = scmp.ne.s32.totalorder %s349, %s365
    %p367 = scmp.eq.s32.totalorder %s27, 0
    %p368 = por %p366, %p367
    %p369 = scmp.le.s32.totalorder 1, %s21
    %p370 = scmp.lt.s32.totalorder %s21, 3
    %p371 = pnand %p369, %p370
    %p372 = pneg %p371
    // Predicated region
    $region9: #{closed_call.82} parent=5 // pred_check
      _
    $region10: #{closed_call.82} parent=5 // pred_check_branch
      %374 = sbr.rel (%p371) target = $region12
    $region11: #{closed_call.82} parent=5 // pred_region
      %s375 = ssub.s32 %s21, 1
      // Predicated region
      $region13: #{closed_call.82} parent=11 // pred_check
        %p376 = pneg %p94
      $region14: #{closed_call.82} parent=11 // pred_check_branch
        %378 = sbr.rel (%p376) target = $region16
      $region15: #{closed_call.82} parent=11 // pred_region
        _
      $region16: #{closed_call.82} parent=11 // pred_fallthru
        _
      // Predicated region
      $region17: #{closed_call.82} parent=11 // pred_check
        %p379 = pneg %p115
      $region18: #{closed_call.82} parent=11 // pred_check_branch
        %381 = sbr.rel (%p379) target = $region20
      $region19: #{closed_call.82} parent=11 // pred_region
        _
      $region20: #{closed_call.82} parent=11 // pred_fallthru
        _
      // Predicated region
      $region21: #{closed_call.82} parent=11 // pred_check
        %p382 = pneg %p136
      $region22: #{closed_call.82} parent=11 // pred_check_branch
        %384 = sbr.rel (%p382) target = $region24
      $region23: #{closed_call.82} parent=11 // pred_region
        _
      $region24: #{closed_call.82} parent=11 // pred_fallthru
        _
      // Predicated region
      $region25: #{closed_call.82} parent=11 // pred_check
        %p385 = pneg %p157
      $region26: #{closed_call.82} parent=11 // pred_check_branch
        %387 = sbr.rel (%p385) target = $region28
      $region27: #{closed_call.82} parent=11 // pred_region
        _
      $region28: #{closed_call.82} parent=11 // pred_fallthru
        _
      // Predicated region
      $region29: #{closed_call.82} parent=11 // pred_check
        %p388 = pneg %p178
      $region30: #{closed_call.82} parent=11 // pred_check_branch
        %390 = sbr.rel (%p388) target = $region32
      $region31: #{closed_call.82} parent=11 // pred_region
        _
      $region32: #{closed_call.82} parent=11 // pred_fallthru
        _
      // Predicated region
      $region33: #{closed_call.82} parent=11 // pred_check
        %p391 = pneg %p199
      $region34: #{closed_call.82} parent=11 // pred_check_branch
        %393 = sbr.rel (%p391) target = $region36
      $region35: #{closed_call.82} parent=11 // pred_region
        _
      $region36: #{closed_call.82} parent=11 // pred_fallthru
        _
      // Predicated region
      $region37: #{closed_call.82} parent=11 // pred_check
        %p394 = pneg %p220
      $region38: #{closed_call.82} parent=11 // pred_check_branch
        %396 = sbr.rel (%p394) target = $region40
      $region39: #{closed_call.82} parent=11 // pred_region
        _
      $region40: #{closed_call.82} parent=11 // pred_fallthru
        _
      // Predicated region
      $region41: #{closed_call.82} parent=11 // pred_check
        %p397 = pneg %p241
      $region42: #{closed_call.82} parent=11 // pred_check_branch
        %399 = sbr.rel (%p397) target = $region44
      $region43: #{closed_call.82} parent=11 // pred_region
        _
      $region44: #{closed_call.82} parent=11 // pred_fallthru
        _
      // Predicated region
      $region45: #{closed_call.82} parent=11 // pred_check
        %p400 = pneg %p262
      $region46: #{closed_call.82} parent=11 // pred_check_branch
        %402 = sbr.rel (%p400) target = $region48
      $region47: #{closed_call.82} parent=11 // pred_region
        _
      $region48: #{closed_call.82} parent=11 // pred_fallthru
        _
      // Predicated region
      $region49: #{closed_call.82} parent=11 // pred_check
        %p403 = pneg %p283
      $region50: #{closed_call.82} parent=11 // pred_check_branch
        %405 = sbr.rel (%p403) target = $region52
      $region51: #{closed_call.82} parent=11 // pred_region
        _
      $region52: #{closed_call.82} parent=11 // pred_fallthru
        _
    $region12: #{closed_call.82} parent=5 // pred_fallthru
      _
    %p406 = scmp.lt.s32.totalorder %s21, 2
    // Predicated region
    $region53: #{closed_call.82} parent=5 // pred_check
      %p407 = pneg %p406
    $region54: #{closed_call.82} parent=5 // pred_check_branch
      %409 = sbr.rel (%p407) target = $region56
    $region55: #{closed_call.82} parent=5 // pred_region
      // Predicated region
      $region57: #{closed_call.82} parent=55 // pred_check
        %p410 = pneg %p41
      $region58: #{closed_call.82} parent=55 // pred_check_branch
        %412 = sbr.rel (%p410) target = $region60
      $region59: #{closed_call.82} parent=55 // pred_region
        %p413 = scmp.lt.s32.totalorder %s21, 1
        %s414 = scalar_select %p413, %s21, 1
        %s415 = smul.addr %s414, 5
        %s416 = smul.addr %s415, 4
        %s417 = scalar_lea.vmem %s0, %s416
      $region60: #{closed_call.82} parent=55 // pred_fallthru
        _
      // Predicated region
      $region61: #{closed_call.82} parent=55 // pred_check
        %p418 = pneg %p67
      $region62: #{closed_call.82} parent=55 // pred_check_branch
        %420 = sbr.rel (%p418) target = $region64
      $region63: #{closed_call.82} parent=55 // pred_region
        %p421 = scmp.lt.s32.totalorder %s21, 1
        %s422 = scalar_select %p421, %s21, 1
        %s423 = smul.addr %s422, 3
        %s424 = smul.addr %s423, 8
        %s425 = scalar_lea.vmem %s1, %s424
      $region64: #{closed_call.82} parent=55 // pred_fallthru
        _
    $region56: #{closed_call.82} parent=5 // pred_fallthru
      _
    %p426 = scmp.le.s32.totalorder 1, %s21
    %p427 = scmp.lt.s32.totalorder %s21, 3
    %p428 = pnand %p426, %p427
    %p429 = pneg %p428
    // Predicated region
    $region65: #{closed_call.82} parent=5 // pred_check
      _
    $region66: #{closed_call.82} parent=5 // pred_check_branch
      %431 = sbr.rel (%p428) target = $region68
    $region67: #{closed_call.82} parent=5 // pred_region
      %s432 = ssub.s32 %s21, 1
      %p433 = scmp.lt.s32.totalorder %s26, 1
      %s434 = scalar_select %p433, %s26, 1
      %s435 = smul.addr %s434, 5
      %s436 = smul.addr %s435, 4
      %s437 = scalar_lea.vmem %s0, %s436
      %p438 = pneg %p47
      %p439 = pneg %p44
      %p440 = scmp.lt.s32.totalorder %s26, 1
      %s441 = scalar_select %p440, %s26, 1
      %s442 = smul.addr %s441, 3
      %s443 = smul.addr %s442, 8
      %s444 = scalar_lea.vmem %s1, %s443
      %p445 = pneg %p73
      %p446 = pneg %p70
      %p447 = pneg %p94
      %p448 = pneg %p91
      %p449 = pneg %p115
      %p450 = pneg %p112
      %p451 = pneg %p136
      %p452 = pneg %p133
      %p453 = pneg %p157
      %p454 = pneg %p154
      %p455 = pneg %p178
      %p456 = pneg %p175
      %p457 = pneg %p199
      %p458 = pneg %p196
      %p459 = pneg %p220
      %p460 = pneg %p217
      %p461 = pneg %p241
      %p462 = pneg %p238
      %p463 = pneg %p262
      %p464 = pneg %p259
      %p465 = pneg %p283
      %p466 = pneg %p280
      %p467 = pneg %p309
      %p468 = pneg %p306
      %p469 = scmp.lt.s32.totalorder %s26, 1
      %s470 = scalar_select %p469, %s26, 1
      %s471 = smul.addr %s470, 3
      %s472 = smul.addr %s471, 8
      %s473 = scalar_lea.vmem %s12, %s472
      %p474 = pneg %p335
      %p475 = pneg %p332
      %p476 = scmp.lt.s32.totalorder %s26, 1
      %s477 = scalar_select %p476, %s26, 1
      %s478 = smul.addr %s477, 3
      %s479 = smul.addr %s478, 8
      %s480 = scalar_lea.vmem %s13, %s479
      %p481 = pneg %p361
      %p482 = pneg %p358
      %p483 = scmp.lt.s32.totalorder %s26, 1
      %s484 = scalar_select %p483, %s26, 1
      %s485 = smul.addr %s484, 3
      %s486 = smul.addr %s485, 8
      %s487 = scalar_lea.vmem %s14, %s486
      %p488 = scmp.lt.s32.totalorder %s26, 1
      %s489 = scalar_select %p488, %s26, 1
      %s490 = smul.addr %s489, 5
      %s491 = smul.addr %s490, 4
      %s492 = scalar_lea.vmem %s0, %s491
      %p493 = scmp.lt.s32.totalorder %s26, 1
      %s494 = scalar_select %p493, %s26, 1
      %s495 = smul.addr %s494, 3
      %s496 = smul.addr %s495, 8
      %s497 = scalar_lea.vmem %s1, %s496
      %p498 = scmp.lt.s32.totalorder %s26, 1
      %s499 = scalar_select %p498, %s26, 1
      %s500 = smul.addr %s499, 3
      %s501 = smul.addr %s500, 8
      %s502 = scalar_lea.vmem %s12, %s501
      %p503 = scmp.lt.s32.totalorder %s26, 1
      %s504 = scalar_select %p503, %s26, 1
      %s505 = smul.addr %s504, 3
      %s506 = smul.addr %s505, 8
      %s507 = scalar_lea.vmem %s13, %s506
      %p508 = scmp.lt.s32.totalorder %s26, 1
      %s509 = scalar_select %p508, %s26, 1
      %s510 = smul.addr %s509, 3
      %s511 = smul.addr %s510, 8
      %s512 = scalar_lea.vmem %s14, %s511
      %v514 = vld [vmem:[%s2] sm:$0xff]
      %v515 = vld [vmem:[%s2 + $0x8] sm:$0xff]
      %v516 = vld [vmem:[%s2 + $0x10] sm:$0xff]
      %v517 = vld [vmem:[%s492] sm:$0xf]
      %v518 = vld [vmem:[%s492 + $0x4] sm:$0xf]
      %v519 = vld [vmem:[%s492 + $0x8] sm:$0xf]
      %v520 = vld [vmem:[%s3] sm:$0xf]
      %v521 = vld [vmem:[%s3 + $0x4] sm:$0xf]
      %v522 = vld [vmem:[%s3 + $0x8] sm:$0xf]
      %v523 = vld [vmem:[%s3 + $0xc] sm:$0xf]
      %v524 = vld [vmem:[%s3 + $0x10] sm:$0xf]
      %v525 = vld [vmem:[%s3 + $0x14] sm:$0xf]
      %v526 = vld [vmem:[%s3 + $0x18] sm:$0xf]
      %v527 = vld [vmem:[%s492 + $0xc] sm:$0x1]
      %s528 = scalar_lea.vmem %s3, 28
      %v529 = vld [vmem:[%s528] sm:$0xf]
      %v530 = vld [vmem:[%s528 + $0x4] sm:$0xf]
      %v531 = vld [vmem:[%s528 + $0x8] sm:$0xf]
      %v532 = vld [vmem:[%s528 + $0xc] sm:$0xf]
      %v533 = vld [vmem:[%s528 + $0x10] sm:$0xf]
      %v534 = vld [vmem:[%s528 + $0x14] sm:$0xf]
      %v535 = vld [vmem:[%s528 + $0x18] sm:$0xf]
      %v540 = vunpack.c.l.b16 %v517
      %v541 = vunpack.c.l.b16 %v518
      %v542 = vunpack.c.l.b16 %v519
      %v543 = vunpack.c.l.b16 %v527
      %v544 = vpack.c.b16 %v541, %v540
      %v545 = vpack.c.b16 %v543, %v542
      %vm546 = vsmask.f32 7424
      %v548 = vshrl.u32 %v544, 16
      %v550 = vshll.u32 %v544, 16
      %v552 = vrot.slane %v550, 1
      %v553 = vor.u32 %v548, %v552
      %v555 = vshll.u32 %v545, 16
      %v557 = vrot.slane %v555, 1
      %v558 = vsel %vm546, %v553, %v557
      %v559 = vshrl.u32 %v545, 16
      %v561 = vor.u32 %v559, %v557
      %v569 = vunpack.c.l.b16 %v529
      %v570 = vunpack.c.l.b16 %v530
      %v571 = vunpack.c.l.b16 %v531
      %v572 = vunpack.c.l.b16 %v532
      %v573 = vunpack.c.l.b16 %v533
      %v574 = vunpack.c.l.b16 %v534
      %v575 = vunpack.c.l.b16 %v535
      %v576 = vpack.c.b16 %v570, %v569
      %v577 = vpack.c.b16 %v572, %v571
      %v578 = vpack.c.b16 %v574, %v573
      %v579 = vpack.c.b16 %v575, %v575
      %vm583 = vcmask 457728
      %v585 = vsel %vm583, %v558, 0
      %v588 = vsel %vm583, %v561, 0
      %vm590 = vcmask 1043456
      %v592 = vsel %vm590, %v579, 0
      %594 = vmatpush.bf16.msra.mxu0 0
      %595 = vmatpush.bf16.msra.mxu0 0
      %596 = vmatpush.bf16.msra.mxu0 0
      %597 = vmatpush.bf16.msra.mxu0 0
      %598 = vmatpush.bf16.msra.mxu0 %v592
      %599 = vmatpush.bf16.msra.mxu0 %v578
      %600 = vmatpush.bf16.msra.mxu0 %v577
      %601 = vmatpush.bf16.msra.mxu0 %v576
      %602 = vmatmul.bf16.gmra.mxu0 %v585
      %v603 = vpop.f32.mrf.mxu0
      %v604 = vadd.f32 0.0, %v603
      %v605 = vpop.f32.mrf.mxu0
      %v606 = vadd.f32 0.0, %v605
      %607 = vmatmul.bf16.gmra.mxu0 %v588
      %v608 = vpop.f32.mrf.mxu0
      %v609 = vadd.f32 0.0, %v608
      %v610 = vpop.f32.mrf.mxu0
      %611 = vdwg.mxu0
      %v612 = vpack.c.b16 %v542, %v542
      %v620 = vunpack.c.l.b16 %v520
      %v621 = vunpack.c.l.b16 %v521
      %v622 = vunpack.c.l.b16 %v522
      %v623 = vunpack.c.l.b16 %v523
      %v624 = vunpack.c.l.b16 %v524
      %v625 = vunpack.c.l.b16 %v525
      %v626 = vunpack.c.l.b16 %v526
      %v627 = vpack.c.b16 %v621, %v620
      %v628 = vpack.c.b16 %v623, %v622
      %v629 = vpack.c.b16 %v625, %v624
      %v630 = vpack.c.b16 %v626, %v626
      %v634 = vsel %vm583, %v544, 0
      %v637 = vsel %vm583, %v612, 0
      %v640 = vsel %vm590, %v630, 0
      %642 = vmatpush.bf16.msra.mxu0 0
      %643 = vmatpush.bf16.msra.mxu0 0
      %644 = vmatpush.bf16.msra.mxu0 0
      %645 = vmatpush.bf16.msra.mxu0 0
      %646 = vmatpush.bf16.msra.mxu0 %v640
      %647 = vmatpush.bf16.msra.mxu0 %v629
      %648 = vmatpush.bf16.msra.mxu0 %v628
      %649 = vmatpush.bf16.msra.mxu0 %v627
      %650 = vmatmul.bf16.gmra.mxu0 %v634
      %v651 = vpop.f32.mrf.mxu0
      %v652 = vadd.f32 %v604, %v651
      %v653 = vpop.f32.mrf.mxu0
      %v654 = vadd.f32 %v606, %v653
      %655 = vmatmul.bf16.gmra.mxu0 %v637
      %v656 = vpop.f32.mrf.mxu0
      %v657 = vadd.f32 %v609, %v656
      %v658 = vpop.f32.mrf.mxu0
      %659 = vdwg.mxu0
      %v660 = vld [vmem:[%s492] sm:$0xe]
      %s661 = scalar_lea.vmem %s3, 56
      %v662 = vld [vmem:[%s661] sm:$0xf]
      %v663 = vld [vmem:[%s661 + $0x4] sm:$0xf]
      %v664 = vld [vmem:[%s661 + $0x8] sm:$0xf]
      %v665 = vld [vmem:[%s661 + $0xc] sm:$0xf]
      %v666 = vld [vmem:[%s661 + $0x10] sm:$0xf]
      %v667 = vld [vmem:[%s661 + $0x14] sm:$0xf]
      %v668 = vld [vmem:[%s661 + $0x18] sm:$0xf]
      %v670 = vunpack.c.l.b16 %v660
      %v671 = vpack.c.b16 %v541, %v670
      %vm672 = vcmask 1046528
      %v673 = vrot.slane %v671, 1
      %v674 = vrot.slane %v545, 1
      %v675 = vsel %vm672, %v673, %v674
      %v683 = vunpack.c.l.b16 %v662
      %v684 = vunpack.c.l.b16 %v663
      %v685 = vunpack.c.l.b16 %v664
      %v686 = vunpack.c.l.b16 %v665
      %v687 = vunpack.c.l.b16 %v666
      %v688 = vunpack.c.l.b16 %v667
      %v689 = vunpack.c.l.b16 %v668
      %v690 = vpack.c.b16 %v684, %v683
      %v691 = vpack.c.b16 %v686, %v685
      %v692 = vpack.c.b16 %v688, %v687
      %v693 = vpack.c.b16 %v689, %v689
      %v698 = vsel %vm583, %v675, 0
      %v701 = vsel %vm583, %v674, 0
      %v704 = vsel %vm590, %v693, 0
      %706 = vmatpush.bf16.msra.mxu0 0
      %707 = vmatpush.bf16.msra.mxu0 0
      %708 = vmatpush.bf16.msra.mxu0 0
      %709 = vmatpush.bf16.msra.mxu0 0
      %710 = vmatpush.bf16.msra.mxu0 %v704
      %711 = vmatpush.bf16.msra.mxu0 %v692
      %712 = vmatpush.bf16.msra.mxu0 %v691
      %713 = vmatpush.bf16.msra.mxu0 %v690
      %714 = vmatmul.bf16.gmra.mxu0 %v698
      %v715 = vpop.f32.mrf.mxu0
      %v716 = vadd.f32 0.0, %v715
      %v717 = vpop.f32.mrf.mxu0
      %v718 = vadd.f32 0.0, %v717
      %719 = vmatmul.bf16.gmra.mxu0 %v701
      %v720 = vpop.f32.mrf.mxu0
      %v721 = vadd.f32 0.0, %v720
      %v722 = vpop.f32.mrf.mxu0
      %723 = vdwg.mxu0
      %v724 = vadd.f32 %v652, %v716
      %v725 = vadd.f32 %v654, %v718
      %v726 = vadd.f32 %v657, %v721
      %v727 = vld [vmem:[%s492] sm:$0x8]
      %v728 = vld [vmem:[%s492 + $0xc] sm:$0x7]
      %s729 = scalar_lea.vmem %s3, 84
      %v730 = vld [vmem:[%s729] sm:$0xf]
      %v731 = vld [vmem:[%s729 + $0x4] sm:$0xf]
      %v732 = vld [vmem:[%s729 + $0x8] sm:$0xf]
      %v733 = vld [vmem:[%s729 + $0xc] sm:$0xf]
      %v734 = vld [vmem:[%s729 + $0x10] sm:$0xf]
      %v735 = vld [vmem:[%s729 + $0x14] sm:$0xf]
      %v736 = vld [vmem:[%s729 + $0x18] sm:$0xf]
      %v739 = vunpack.c.l.b16 %v727
      %v740 = vunpack.c.l.b16 %v728
      %v741 = vpack.c.b16 %v541, %v739
      %v742 = vpack.c.b16 %v740, %v542
      %vm743 = vcmask 1044480
      %v744 = vrot.slane %v741, 3
      %v745 = vrot.slane %v742, 3
      %v746 = vsel %vm743, %v744, %v745
      %v754 = vunpack.c.l.b16 %v730
      %v755 = vunpack.c.l.b16 %v731
      %v756 = vunpack.c.l.b16 %v732
      %v757 = vunpack.c.l.b16 %v733
      %v758 = vunpack.c.l.b16 %v734
      %v759 = vunpack.c.l.b16 %v735
      %v760 = vunpack.c.l.b16 %v736
      %v761 = vpack.c.b16 %v755, %v754
      %v762 = vpack.c.b16 %v757, %v756
      %v763 = vpack.c.b16 %v759, %v758
      %v764 = vpack.c.b16 %v760, %v760
      %v769 = vsel %vm583, %v746, 0
      %v772 = vsel %vm583, %v745, 0
      %v775 = vsel %vm590, %v764, 0
      %777 = vmatpush.bf16.msra.mxu0 0
      %778 = vmatpush.bf16.msra.mxu0 0
      %779 = vmatpush.bf16.msra.mxu0 0
      %780 = vmatpush.bf16.msra.mxu0 0
      %781 = vmatpush.bf16.msra.mxu0 %v775
      %782 = vmatpush.bf16.msra.mxu0 %v763
      %783 = vmatpush.bf16.msra.mxu0 %v762
      %784 = vmatpush.bf16.msra.mxu0 %v761
      %785 = vmatmul.bf16.gmra.mxu0 %v769
      %v786 = vpop.f32.mrf.mxu0
      %v787 = vadd.f32 0.0, %v786
      %v788 = vpop.f32.mrf.mxu0
      %v789 = vadd.f32 0.0, %v788
      %790 = vmatmul.bf16.gmra.mxu0 %v772
      %v791 = vpop.f32.mrf.mxu0
      %v792 = vadd.f32 0.0, %v791
      %v793 = vpop.f32.mrf.mxu0
      %794 = vdwg.mxu0
      %v795 = vadd.f32 %v724, %v787
      %v796 = vadd.f32 %v725, %v789
      %v797 = vadd.f32 %v726, %v792
      %v798 = vld [vmem:[%s492 + $0xc] sm:$0xf]
      %s799 = scalar_lea.vmem %s3, 112
      %v800 = vld [vmem:[%s799] sm:$0xf]
      %v801 = vld [vmem:[%s799 + $0x4] sm:$0xf]
      %v802 = vld [vmem:[%s799 + $0x8] sm:$0xf]
      %v803 = vld [vmem:[%s799 + $0xc] sm:$0xf]
      %v804 = vld [vmem:[%s799 + $0x10] sm:$0xf]
      %v805 = vld [vmem:[%s799 + $0x14] sm:$0xf]
      %v806 = vld [vmem:[%s799 + $0x18] sm:$0xf]
      %v808 = vunpack.c.l.b16 %v798
      %v809 = vpack.c.b16 %v808, %v542
      %vm810 = vsmask.f32 4352
      %v812 = vshrl.u32 %v741, 16
      %v814 = vrot.slane %v812, 3
      %v815 = vshll.u32 %v741, 16
      %v817 = vrot.slane %v815, 4
      %v818 = vor.u32 %v814, %v817
      %v820 = vshrl.u32 %v809, 16
      %v822 = vrot.slane %v820, 3
      %v823 = vshll.u32 %v809, 16
      %v825 = vrot.slane %v823, 4
      %v826 = vor.u32 %v822, %v825
      %v827 = vsel %vm810, %v818, %v826
      %v835 = vunpack.c.l.b16 %v800
      %v836 = vunpack.c.l.b16 %v801
      %v837 = vunpack.c.l.b16 %v802
      %v838 = vunpack.c.l.b16 %v803
      %v839 = vunpack.c.l.b16 %v804
      %v840 = vunpack.c.l.b16 %v805
      %v841 = vunpack.c.l.b16 %v806
      %v842 = vpack.c.b16 %v836, %v835
      %v843 = vpack.c.b16 %v838, %v837
      %v844 = vpack.c.b16 %v840, %v839
      %v845 = vpack.c.b16 %v841, %v841
      %v850 = vsel %vm583, %v827, 0
      %v853 = vsel %vm583, %v826, 0
      %v856 = vsel %vm590, %v845, 0
      %858 = vmatpush.bf16.msra.mxu0 0
      %859 = vmatpush.bf16.msra.mxu0 0
      %860 = vmatpush.bf16.msra.mxu0 0
      %861 = vmatpush.bf16.msra.mxu0 0
      %862 = vmatpush.bf16.msra.mxu0 %v856
      %863 = vmatpush.bf16.msra.mxu0 %v844
      %864 = vmatpush.bf16.msra.mxu0 %v843
      %865 = vmatpush.bf16.msra.mxu0 %v842
      %866 = vmatmul.bf16.gmra.mxu0 %v850
      %v867 = vpop.f32.mrf.mxu0
      %v868 = vadd.f32 0.0, %v867
      %v869 = vpop.f32.mrf.mxu0
      %v870 = vadd.f32 0.0, %v869
      %871 = vmatmul.bf16.gmra.mxu0 %v853
      %v872 = vpop.f32.mrf.mxu0
      %v873 = vadd.f32 0.0, %v872
      %v874 = vpop.f32.mrf.mxu0
      %875 = vdwg.mxu0
      %v876 = vadd.f32 %v795, %v868
      %v877 = vadd.f32 %v796, %v870
      %v878 = vadd.f32 %v797, %v873
      %s879 = scalar_lea.vmem %s3, 140
      %v880 = vld [vmem:[%s879] sm:$0xf]
      %v881 = vld [vmem:[%s879 + $0x4] sm:$0xf]
      %v882 = vld [vmem:[%s879 + $0x8] sm:$0xf]
      %v883 = vld [vmem:[%s879 + $0xc] sm:$0xf]
      %v884 = vld [vmem:[%s879 + $0x10] sm:$0xf]
      %v885 = vld [vmem:[%s879 + $0x14] sm:$0xf]
      %v886 = vld [vmem:[%s879 + $0x18] sm:$0xf]
      %v887 = vpack.c.b16 %v542, %v541
      %v888 = vpack.c.b16 %v808, %v808
      %v896 = vunpack.c.l.b16 %v880
      %v897 = vunpack.c.l.b16 %v881
      %v898 = vunpack.c.l.b16 %v882
      %v899 = vunpack.c.l.b16 %v883
      %v900 = vunpack.c.l.b16 %v884
      %v901 = vunpack.c.l.b16 %v885
      %v902 = vunpack.c.l.b16 %v886
      %v903 = vpack.c.b16 %v897, %v896
      %v904 = vpack.c.b16 %v899, %v898
      %v905 = vpack.c.b16 %v901, %v900
      %v906 = vpack.c.b16 %v902, %v902
      %v911 = vsel %vm583, %v887, 0
      %v914 = vsel %vm583, %v888, 0
      %v917 = vsel %vm590, %v906, 0
      %919 = vmatpush.bf16.msra.mxu0 0
      %920 = vmatpush.bf16.msra.mxu0 0
      %921 = vmatpush.bf16.msra.mxu0 0
      %922 = vmatpush.bf16.msra.mxu0 0
      %923 = vmatpush.bf16.msra.mxu0 %v917
      %924 = vmatpush.bf16.msra.mxu0 %v905
      %925 = vmatpush.bf16.msra.mxu0 %v904
      %926 = vmatpush.bf16.msra.mxu0 %v903
      %927 = vmatmul.bf16.gmra.mxu0 %v911
      %v928 = vpop.f32.mrf.mxu0
      %v929 = vadd.f32 0.0, %v928
      %v930 = vpop.f32.mrf.mxu0
      %v931 = vadd.f32 0.0, %v930
      %932 = vmatmul.bf16.gmra.mxu0 %v914
      %v933 = vpop.f32.mrf.mxu0
      %v934 = vadd.f32 0.0, %v933
      %v935 = vpop.f32.mrf.mxu0
      %936 = vdwg.mxu0
      %v937 = vadd.f32 %v876, %v929
      %v938 = vadd.f32 %v877, %v931
      %v939 = vadd.f32 %v878, %v934
      %v940 = vld [vmem:[%s492 + $0x4] sm:$0xc]
      %v941 = vld [vmem:[%s492 + $0x8] sm:$0xf]
      %v942 = vld [vmem:[%s492 + $0xc] sm:$0xf]
      %v943 = vld [vmem:[%s492 + $0x10] sm:$0x3]
      %s944 = scalar_lea.vmem %s3, 168
      %v945 = vld [vmem:[%s944] sm:$0xf]
      %v946 = vld [vmem:[%s944 + $0x4] sm:$0xf]
      %v947 = vld [vmem:[%s944 + $0x8] sm:$0xf]
      %v948 = vld [vmem:[%s944 + $0xc] sm:$0xf]
      %v949 = vld [vmem:[%s944 + $0x10] sm:$0xf]
      %v950 = vld [vmem:[%s944 + $0x14] sm:$0xf]
      %v951 = vld [vmem:[%s944 + $0x18] sm:$0xf]
      %v956 = vunpack.c.l.b16 %v940
      %v957 = vunpack.c.l.b16 %v941
      %v958 = vunpack.c.l.b16 %v942
      %v959 = vunpack.c.l.b16 %v943
      %v960 = vpack.c.b16 %v957, %v956
      %v961 = vpack.c.b16 %v959, %v958
      %vm962 = vcmask 1045504
      %v963 = vrot.slane %v960, 2
      %v964 = vrot.slane %v961, 2
      %v965 = vsel %vm962, %v963, %v964
      %v973 = vunpack.c.l.b16 %v945
      %v974 = vunpack.c.l.b16 %v946
      %v975 = vunpack.c.l.b16 %v947
      %v976 = vunpack.c.l.b16 %v948
      %v977 = vunpack.c.l.b16 %v949
      %v978 = vunpack.c.l.b16 %v950
      %v979 = vunpack.c.l.b16 %v951
      %v980 = vpack.c.b16 %v974, %v973
      %v981 = vpack.c.b16 %v976, %v975
      %v982 = vpack.c.b16 %v978, %v977
      %v983 = vpack.c.b16 %v979, %v979
      %v988 = vsel %vm583, %v965, 0
      %v991 = vsel %vm583, %v964, 0
      %v994 = vsel %vm590, %v983, 0
      %996 = vmatpush.bf16.msra.mxu0 0
      %997 = vmatpush.bf16.msra.mxu0 0
      %998 = vmatpush.bf16.msra.mxu0 0
      %999 = vmatpush.bf16.msra.mxu0 0
      %1000 = vmatpush.bf16.msra.mxu0 %v994
      %1001 = vmatpush.bf16.msra.mxu0 %v982
      %1002 = vmatpush.bf16.msra.mxu0 %v981
      %1003 = vmatpush.bf16.msra.mxu0 %v980
      %1004 = vmatmul.bf16.gmra.mxu0 %v988
      %v1005 = vpop.f32.mrf.mxu0
      %v1006 = vadd.f32 0.0, %v1005
      %v1007 = vpop.f32.mrf.mxu0
      %v1008 = vadd.f32 0.0, %v1007
      %1009 = vmatmul.bf16.gmra.mxu0 %v991
      %v1010 = vpop.f32.mrf.mxu0
      %v1011 = vadd.f32 0.0, %v1010
      %v1012 = vpop.f32.mrf.mxu0
      %1013 = vdwg.mxu0
      %v1014 = vadd.f32 %v937, %v1006
      %v1015 = vadd.f32 %v938, %v1008
      %v1016 = vadd.f32 %v939, %v1011
      %v1017 = vld [vmem:[%s492 + $0x10] sm:$0x7]
      %s1018 = scalar_lea.vmem %s3, 196
      %v1019 = vld [vmem:[%s1018] sm:$0xf]
      %v1020 = vld [vmem:[%s1018 + $0x4] sm:$0xf]
      %v1021 = vld [vmem:[%s1018 + $0x8] sm:$0xf]
      %v1022 = vld [vmem:[%s1018 + $0xc] sm:$0xf]
      %v1023 = vld [vmem:[%s1018 + $0x10] sm:$0xf]
      %v1024 = vld [vmem:[%s1018 + $0x14] sm:$0xf]
      %v1025 = vld [vmem:[%s1018 + $0x18] sm:$0xf]
      %v1027 = vunpack.c.l.b16 %v1017
      %v1028 = vpack.c.b16 %v1027, %v958
      %vm1029 = vsmask.f32 5376
      %v1031 = vshrl.u32 %v960, 16
      %v1033 = vrot.slane %v1031, 2
      %v1034 = vshll.u32 %v960, 16
      %v1036 = vrot.slane %v1034, 3
      %v1037 = vor.u32 %v1033, %v1036
      %v1039 = vshrl.u32 %v1028, 16
      %v1041 = vrot.slane %v1039, 2
      %v1042 = vshll.u32 %v1028, 16
      %v1044 = vrot.slane %v1042, 3
      %v1045 = vor.u32 %v1041, %v1044
      %v1046 = vsel %vm1029, %v1037, %v1045
      %v1054 = vunpack.c.l.b16 %v1019
      %v1055 = vunpack.c.l.b16 %v1020
      %v1056 = vunpack.c.l.b16 %v1021
      %v1057 = vunpack.c.l.b16 %v1022
      %v1058 = vunpack.c.l.b16 %v1023
      %v1059 = vunpack.c.l.b16 %v1024
      %v1060 = vunpack.c.l.b16 %v1025
      %v1061 = vpack.c.b16 %v1055, %v1054
      %v1062 = vpack.c.b16 %v1057, %v1056
      %v1063 = vpack.c.b16 %v1059, %v1058
      %v1064 = vpack.c.b16 %v1060, %v1060
      %v1069 = vsel %vm583, %v1046, 0
      %v1072 = vsel %vm583, %v1045, 0
      %v1075 = vsel %vm590, %v1064, 0
      %1077 = vmatpush.bf16.msra.mxu0 0
      %1078 = vmatpush.bf16.msra.mxu0 0
      %1079 = vmatpush.bf16.msra.mxu0 0
      %1080 = vmatpush.bf16.msra.mxu0 0
      %1081 = vmatpush.bf16.msra.mxu0 %v1075
      %1082 = vmatpush.bf16.msra.mxu0 %v1063
      %1083 = vmatpush.bf16.msra.mxu0 %v1062
      %1084 = vmatpush.bf16.msra.mxu0 %v1061
      %1085 = vmatmul.bf16.gmra.mxu0 %v1069
      %v1086 = vpop.f32.mrf.mxu0
      %v1087 = vadd.f32 0.0, %v1086
      %v1088 = vpop.f32.mrf.mxu0
      %v1089 = vadd.f32 0.0, %v1088
      %1090 = vmatmul.bf16.gmra.mxu0 %v1072
      %v1091 = vpop.f32.mrf.mxu0
      %v1092 = vadd.f32 0.0, %v1091
      %v1093 = vpop.f32.mrf.mxu0
      %1094 = vdwg.mxu0
      %v1095 = vadd.f32 %v1014, %v1087
      %v1096 = vadd.f32 %v1015, %v1089
      %v1097 = vadd.f32 %v1016, %v1092
      %v1098 = vld [vmem:[%s492 + $0x4] sm:$0x8]
      %s1099 = scalar_lea.vmem %s3, 224
      %v1100 = vld [vmem:[%s1099] sm:$0xf]
      %v1101 = vld [vmem:[%s1099 + $0x4] sm:$0xf]
      %v1102 = vld [vmem:[%s1099 + $0x8] sm:$0xf]
      %v1103 = vld [vmem:[%s1099 + $0xc] sm:$0xf]
      %v1104 = vld [vmem:[%s1099 + $0x10] sm:$0xf]
      %v1105 = vld [vmem:[%s1099 + $0x14] sm:$0xf]
      %v1106 = vld [vmem:[%s1099 + $0x18] sm:$0xf]
      %v1108 = vunpack.c.l.b16 %v1098
      %v1109 = vpack.c.b16 %v957, %v1108
      %v1110 = vrot.slane %v1109, 3
      %v1111 = vrot.slane %v1028, 3
      %v1112 = vsel %vm743, %v1110, %v1111
      %v1120 = vunpack.c.l.b16 %v1100
      %v1121 = vunpack.c.l.b16 %v1101
      %v1122 = vunpack.c.l.b16 %v1102
      %v1123 = vunpack.c.l.b16 %v1103
      %v1124 = vunpack.c.l.b16 %v1104
      %v1125 = vunpack.c.l.b16 %v1105
      %v1126 = vunpack.c.l.b16 %v1106
      %v1127 = vpack.c.b16 %v1121, %v1120
      %v1128 = vpack.c.b16 %v1123, %v1122
      %v1129 = vpack.c.b16 %v1125, %v1124
      %v1130 = vpack.c.b16 %v1126, %v1126
      %v1135 = vsel %vm583, %v1112, 0
      %v1138 = vsel %vm583, %v1111, 0
      %v1141 = vsel %vm590, %v1130, 0
      %1143 = vmatpush.bf16.msra.mxu0 0
      %1144 = vmatpush.bf16.msra.mxu0 0
      %1145 = vmatpush.bf16.msra.mxu0 0
      %1146 = vmatpush.bf16.msra.mxu0 0
      %1147 = vmatpush.bf16.msra.mxu0 %v1141
      %1148 = vmatpush.bf16.msra.mxu0 %v1129
      %1149 = vmatpush.bf16.msra.mxu0 %v1128
      %1150 = vmatpush.bf16.msra.mxu0 %v1127
      %1151 = vmatmul.bf16.gmra.mxu0 %v1135
      %v1152 = vpop.f32.mrf.mxu0
      %v1153 = vadd.f32 0.0, %v1152
      %v1154 = vpop.f32.mrf.mxu0
      %v1155 = vadd.f32 0.0, %v1154
      %1156 = vmatmul.bf16.gmra.mxu0 %v1138
      %v1157 = vpop.f32.mrf.mxu0
      %v1158 = vadd.f32 0.0, %v1157
      %v1159 = vpop.f32.mrf.mxu0
      %1160 = vdwg.mxu0
      %v1161 = vadd.f32 %v1095, %v1153
      %v1162 = vadd.f32 %v1096, %v1155
      %v1163 = vadd.f32 %v1097, %v1158
      %v1164 = vld [vmem:[%s4] sm:$0x1]
      %v1166 = vperm.slane %v1164, 0
      %v1168 = vadd.f32 %v1161, %v1166
      %v1169 = vadd.f32 %v1162, %v1166
      %v1170 = vadd.f32 %v1163, %v1166
      %v1171 = vxor.u32 %v1168, 2147483648
      %v1172 = vxor.u32 %v1169, 2147483648
      %v1173 = vxor.u32 %v1170, 2147483648
      %v1174 = vmul.f32 %v1171, 1.442695
      %v1175 = vpow.pop %v1174
      %v1176 = vmul.f32 %v1172, 1.442695
      %v1177 = vpow.pop %v1176
      %v1178 = vmul.f32 %v1173, 1.442695
      %v1179 = vpow.pop %v1178
      %v1180 = vadd.f32 %v1175, 1.0
      %v1181 = vadd.f32 %v1177, 1.0
      %v1182 = vadd.f32 %v1179, 1.0
      %v1183 = vrcp.pop %v1180
      %v1184 = vmul.f32 %v1180, %v1183
      %v1185 = vsub.f32 1.0, %v1184
      %v1186 = vmul.f32 %v1183, %v1185
      %v1187 = vadd.f32 %v1183, %v1186
      %vm1188 = vweird.f32 %v1180
      %vm1189 = vweird.f32 %v1183
      %vm1190 = vmor %vm1188, %vm1189
      %v1191 = vsel %vm1190, %v1183, %v1187
      %v1192 = vand.u32 2147483647, %v1180
      %vm1193 = vcmp.eq.f32.partialorder %v1192, 8.507059e+37
      %v1194 = vand.u32 %v1180, 2147483648
      %v1195 = vor.u32 1.1754944e-38, %v1194
      %v1196 = vsel %vm1193, %v1195, %v1191
      %v1197 = vmul.f32 1.0, %v1196
      %v1198 = vrcp.pop %v1181
      %v1199 = vmul.f32 %v1181, %v1198
      %v1200 = vsub.f32 1.0, %v1199
      %v1201 = vmul.f32 %v1198, %v1200
      %v1202 = vadd.f32 %v1198, %v1201
      %vm1203 = vweird.f32 %v1181
      %vm1204 = vweird.f32 %v1198
      %vm1205 = vmor %vm1203, %vm1204
      %v1206 = vsel %vm1205, %v1198, %v1202
      %v1207 = vand.u32 2147483647, %v1181
      %vm1208 = vcmp.eq.f32.partialorder %v1207, 8.507059e+37
      %v1209 = vand.u32 %v1181, 2147483648
      %v1210 = vor.u32 1.1754944e-38, %v1209
      %v1211 = vsel %vm1208, %v1210, %v1206
      %v1212 = vmul.f32 1.0, %v1211
      %v1213 = vrcp.pop %v1182
      %v1214 = vmul.f32 %v1182, %v1213
      %v1215 = vsub.f32 1.0, %v1214
      %v1216 = vmul.f32 %v1213, %v1215
      %v1217 = vadd.f32 %v1213, %v1216
      %vm1218 = vweird.f32 %v1182
      %vm1219 = vweird.f32 %v1213
      %vm1220 = vmor %vm1218, %vm1219
      %v1221 = vsel %vm1220, %v1213, %v1217
      %v1222 = vand.u32 2147483647, %v1182
      %vm1223 = vcmp.eq.f32.partialorder %v1222, 8.507059e+37
      %v1224 = vand.u32 %v1182, 2147483648
      %v1225 = vor.u32 1.1754944e-38, %v1224
      %v1226 = vsel %vm1223, %v1225, %v1221
      %v1227 = vmul.f32 1.0, %v1226
      %v1228 = vtanh.pop %v1168
      %v1229 = vtanh.pop %v1169
      %v1230 = vtanh.pop %v1170
      %v1231 = vld [vmem:[%s497] sm:$0xff]
      %v1232 = vld [vmem:[%s497 + $0x8] sm:$0xff]
      %v1233 = vld [vmem:[%s497 + $0x10] sm:$0xff]
      %1237 = vrot.lane.b32.xlu0 %v1231, 32
      %v1238 = vpop.permute.xlu0 %1237
      %1239 = vrot.lane.b32.xlu0 %v1232, 32
      %v1240 = vpop.permute.xlu0 %1239
      %1241 = vrot.lane.b32.xlu0 %v1233, 32
      %v1242 = vpop.permute.xlu0 %1241
      %v1246 = vmul.f32 %v1197, %v1238
      %v1247 = vmul.f32 %v1212, %v1240
      %v1248 = vmul.f32 %v1227, %v1242
      %1252 = vrot.lane.b32.xlu0 %v1228, 112
      %v1253 = vpop.permute.xlu0 %1252
      %1254 = vrot.lane.b32.xlu0 %v1229, 112
      %v1255 = vpop.permute.xlu0 %1254
      %1256 = vrot.lane.b32.xlu0 %v1230, 112
      %v1257 = vpop.permute.xlu0 %1256
      %v1261 = vmul.f32 %v1197, %v1253
      %v1262 = vmul.f32 %v1212, %v1255
      %v1263 = vmul.f32 %v1227, %v1257
      %1267 = vrot.lane.b32.xlu0 %v1261, 32
      %v1268 = vpop.permute.xlu0 %1267
      %1269 = vrot.lane.b32.xlu0 %v1262, 32
      %v1270 = vpop.permute.xlu0 %1269
      %1271 = vrot.lane.b32.xlu0 %v1263, 32
      %v1272 = vpop.permute.xlu0 %1271
      %v1276 = vadd.f32 %v1246, %v1268
      %v1277 = vadd.f32 %v1247, %v1270
      %v1278 = vadd.f32 %v1248, %v1272
      %1280 = vset.pattern.permute.xlu0 0
      %1281 = vperm.xlu0 %1280, %v514
      %v1282 = vpop.permute.xlu0 %1281
      %1285 = vset.pattern.permute.xlu0 0
      %1286 = vperm.xlu0 %1285, %v515
      %v1287 = vpop.permute.xlu0 %1286
      %1290 = vset.pattern.permute.xlu0 0
      %1291 = vperm.xlu0 %1290, %v516
      %v1292 = vpop.permute.xlu0 %1291
      %v1294 = vmul.f32 %v1276, %v1282
      %v1295 = vmul.f32 %v1277, %v1287
      %v1296 = vmul.f32 %v1278, %v1292
      %vm1297 = vcmask 125952
      %1298 = vst.msk [vmem:[#allocation2] sm:$0xf] %vm1297, 0
      %1299 = vst.msk [vmem:[#allocation2 + $0x4] sm:$0xf] %vm1297, 0
      %1300 = vst.msk [vmem:[#allocation2 + $0x8] sm:$0xf] %vm1297, 0
      %1301 = vst.msk [vmem:[#allocation2 + $0xc] sm:$0xf] %vm1297, 0
      %vm1302 = vcmask 124928
      %1303 = vst.msk [vmem:[#allocation2 + $0x10] sm:$0x7] %vm1302, 0
      %v1304 = vpack.c.bf16 %v1294, %v1294
      %v1305 = vpack.c.bf16 %v1295, %v1295
      %v1306 = vpack.c.bf16 %v1296, %v1296
      %vm1307 = vsmask.f32 3328
      %vm1308 = vsmask.f32 7440
      %vm1309 = vmor %vm1307, %vm1308
      %v1311 = vshll.u32 %v1304, 16
      %v1313 = vrot.slane %v1311, 5
      %v1314 = vshrl.u32 %v1304, 16
      %v1316 = vrot.slane %v1314, 4
      %v1317 = vor.u32 %v1316, %v1313
      %v1318 = vrot.slane %v1317, 4
      %v1320 = vshll.u32 %v1305, 16
      %v1322 = vrot.slane %v1320, 5
      %v1323 = vsel %vm1309, %v1318, %v1322
      %v1324 = vshrl.u32 %v1305, 16
      %v1326 = vrot.slane %v1324, 4
      %v1327 = vor.u32 %v1326, %v1322
      %v1328 = vrot.slane %v1327, 4
      %v1330 = vshll.u32 %v1306, 16
      %v1332 = vrot.slane %v1330, 5
      %v1333 = vsel %vm1309, %v1328, %v1332
      %v1334 = vshrl.u32 %v1306, 16
      %v1336 = vrot.slane %v1334, 4
      %v1337 = vor.u32 %v1336, %v1332
      %v1338 = vrot.slane %v1337, 4
      %1339 = vrot.lane.b32.xlu0 %v1313, 96
      %v1340 = vpop.permute.xlu0 %1339
      %1341 = vrot.lane.b32.xlu0 %v1323, 96
      %v1342 = vpop.permute.xlu0 %1341
      %1343 = vrot.lane.b32.xlu0 %v1333, 96
      %v1344 = vpop.permute.xlu0 %1343
      %1345 = vrot.lane.b32.xlu0 %v1338, 96
      %v1346 = vpop.permute.xlu0 %1345
      %vm1351 = vcmask 125955
      %vm1352 = vsmask.f32 7950
      %vm1353 = vmand %vm1351, %vm1352
      %v1354 = vld [vmem:[#allocation2] sm:$0x8]
      %v1355 = vsel %vm1353, %v1340, %v1354
      %1356 = vst [vmem:[#allocation2] sm:$0x8] %v1355
      %1357 = vst.msk [vmem:[#allocation2 + $0x4] sm:$0xf] %vm1297, %v1342
      %1358 = vst.msk [vmem:[#allocation2 + $0x8] sm:$0xf] %vm1297, %v1344
      %vm1359 = vcmask 125952
      %vm1360 = vmand %vm1359, %vm1307
      %v1361 = vld [vmem:[#allocation2 + $0xc] sm:$0xf]
      %v1362 = vsel %vm1360, %v1346, %v1361
      %1363 = vst [vmem:[#allocation2 + $0xc] sm:$0xf] %v1362
      %v1364 = vld [vmem:[#allocation2] sm:$0xf]
      %v1365 = vld [vmem:[#allocation2 + $0x4] sm:$0xf]
      %v1366 = vld [vmem:[#allocation2 + $0x8] sm:$0xf]
      %v1367 = vld [vmem:[%s5] sm:$0xf]
      %v1368 = vld [vmem:[%s5 + $0x4] sm:$0xf]
      %v1369 = vld [vmem:[#allocation2 + $0xc] sm:$0x1]
      %s1370 = scalar_lea.vmem %s5, 8
      %v1371 = vld [vmem:[%s1370] sm:$0xf]
      %v1372 = vld [vmem:[%s1370 + $0x4] sm:$0xf]
      %v1377 = vunpack.c.l.b16 %v1364
      %v1378 = vunpack.c.l.b16 %v1365
      %v1379 = vunpack.c.l.b16 %v1366
      %v1380 = vunpack.c.l.b16 %v1369
      %v1381 = vpack.c.b16 %v1378, %v1377
      %v1382 = vpack.c.b16 %v1380, %v1379
      %v1384 = vshrl.u32 %v1381, 16
      %v1386 = vshll.u32 %v1381, 16
      %v1388 = vrot.slane %v1386, 1
      %v1389 = vor.u32 %v1384, %v1388
      %v1391 = vshll.u32 %v1382, 16
      %v1393 = vrot.slane %v1391, 1
      %v1394 = vsel %vm546, %v1389, %v1393
      %v1395 = vshrl.u32 %v1382, 16
      %v1397 = vor.u32 %v1395, %v1393
      %v1400 = vunpack.c.l.b16 %v1371
      %v1401 = vunpack.c.l.b16 %v1372
      %v1402 = vpack.c.b16 %v1401, %v1400
      %vm1404 = vcmask 130048
      %v1406 = vsel %vm1404, %v1394, 0
      %v1409 = vsel %vm1404, %v1397, 0
      %1411 = vmatpush.bf16.msra.mxu0 0
      %1412 = vmatpush.bf16.msra.mxu0 0
      %1413 = vmatpush.bf16.msra.mxu0 0
      %1414 = vmatpush.bf16.msra.mxu0 0
      %1415 = vmatpush.bf16.msra.mxu0 0
      %1416 = vmatpush.bf16.msra.mxu0 0
      %1417 = vmatpush.bf16.msra.mxu0 0
      %1418 = vmatpush.bf16.msra.mxu0 %v1402
      %1419 = vmatmul.bf16.gmra.mxu0 %v1406
      %v1420 = vpop.f32.mrf.mxu0
      %v1421 = vadd.f32 0.0, %v1420
      %v1422 = vpop.f32.mrf.mxu0
      %v1423 = vadd.f32 0.0, %v1422
      %1424 = vmatmul.bf16.gmra.mxu0 %v1409
      %v1425 = vpop.f32.mrf.mxu0
      %v1426 = vadd.f32 0.0, %v1425
      %v1427 = vpop.f32.mrf.mxu0
      %1428 = vdwg.mxu0
      %v1429 = vpack.c.b16 %v1379, %v1379
      %v1432 = vunpack.c.l.b16 %v1367
      %v1433 = vunpack.c.l.b16 %v1368
      %v1434 = vpack.c.b16 %v1433, %v1432
      %v1436 = vsel %vm1404, %v1381, 0
      %v1439 = vsel %vm1404, %v1429, 0
      %1441 = vmatpush.bf16.msra.mxu0 0
      %1442 = vmatpush.bf16.msra.mxu0 0
      %1443 = vmatpush.bf16.msra.mxu0 0
      %1444 = vmatpush.bf16.msra.mxu0 0
      %1445 = vmatpush.bf16.msra.mxu0 0
      %1446 = vmatpush.bf16.msra.mxu0 0
      %1447 = vmatpush.bf16.msra.mxu0 0
      %1448 = vmatpush.bf16.msra.mxu0 %v1434
      %1449 = vmatmul.bf16.gmra.mxu0 %v1436
      %v1450 = vpop.f32.mrf.mxu0
      %v1451 = vadd.f32 %v1421, %v1450
      %v1452 = vpop.f32.mrf.mxu0
      %v1453 = vadd.f32 %v1423, %v1452
      %1454 = vmatmul.bf16.gmra.mxu0 %v1439
      %v1455 = vpop.f32.mrf.mxu0
      %v1456 = vadd.f32 %v1426, %v1455
      %v1457 = vpop.f32.mrf.mxu0
      %1458 = vdwg.mxu0
      %v1459 = vld [vmem:[#allocation2] sm:$0xe]
      %s1460 = scalar_lea.vmem %s5, 16
      %v1461 = vld [vmem:[%s1460] sm:$0xf]
      %v1462 = vld [vmem:[%s1460 + $0x4] sm:$0xf]
      %v1464 = vunpack.c.l.b16 %v1459
      %v1465 = vpack.c.b16 %v1378, %v1464
      %v1466 = vrot.slane %v1465, 1
      %v1467 = vrot.slane %v1382, 1
      %v1468 = vsel %vm672, %v1466, %v1467
      %v1471 = vunpack.c.l.b16 %v1461
      %v1472 = vunpack.c.l.b16 %v1462
      %v1473 = vpack.c.b16 %v1472, %v1471
      %v1476 = vsel %vm1404, %v1468, 0
      %v1479 = vsel %vm1404, %v1467, 0
      %1481 = vmatpush.bf16.msra.mxu0 0
      %1482 = vmatpush.bf16.msra.mxu0 0
      %1483 = vmatpush.bf16.msra.mxu0 0
      %1484 = vmatpush.bf16.msra.mxu0 0
      %1485 = vmatpush.bf16.msra.mxu0 0
      %1486 = vmatpush.bf16.msra.mxu0 0
      %1487 = vmatpush.bf16.msra.mxu0 0
      %1488 = vmatpush.bf16.msra.mxu0 %v1473
      %1489 = vmatmul.bf16.gmra.mxu0 %v1476
      %v1490 = vpop.f32.mrf.mxu0
      %v1491 = vadd.f32 0.0, %v1490
      %v1492 = vpop.f32.mrf.mxu0
      %v1493 = vadd.f32 0.0, %v1492
      %1494 = vmatmul.bf16.gmra.mxu0 %v1479
      %v1495 = vpop.f32.mrf.mxu0
      %v1496 = vadd.f32 0.0, %v1495
      %v1497 = vpop.f32.mrf.mxu0
      %1498 = vdwg.mxu0
      %v1499 = vadd.f32 %v1451, %v1491
      %v1500 = vadd.f32 %v1453, %v1493
      %v1501 = vadd.f32 %v1456, %v1496
      %v1502 = vld [vmem:[#allocation2] sm:$0x8]
      %v1503 = vld [vmem:[#allocation2 + $0xc] sm:$0x7]
      %s1504 = scalar_lea.vmem %s5, 24
      %v1505 = vld [vmem:[%s1504] sm:$0xf]
      %v1506 = vld [vmem:[%s1504 + $0x4] sm:$0xf]
      %v1509 = vunpack.c.l.b16 %v1502
      %v1510 = vunpack.c.l.b16 %v1503
      %v1511 = vpack.c.b16 %v1378, %v1509
      %v1512 = vpack.c.b16 %v1510, %v1379
      %v1513 = vrot.slane %v1511, 3
      %v1514 = vrot.slane %v1512, 3
      %v1515 = vsel %vm743, %v1513, %v1514
      %v1518 = vunpack.c.l.b16 %v1505
      %v1519 = vunpack.c.l.b16 %v1506
      %v1520 = vpack.c.b16 %v1519, %v1518
      %v1523 = vsel %vm1404, %v1515, 0
      %v1526 = vsel %vm1404, %v1514, 0
      %1528 = vmatpush.bf16.msra.mxu0 0
      %1529 = vmatpush.bf16.msra.mxu0 0
      %1530 = vmatpush.bf16.msra.mxu0 0
      %1531 = vmatpush.bf16.msra.mxu0 0
      %1532 = vmatpush.bf16.msra.mxu0 0
      %1533 = vmatpush.bf16.msra.mxu0 0
      %1534 = vmatpush.bf16.msra.mxu0 0
      %1535 = vmatpush.bf16.msra.mxu0 %v1520
      %1536 = vmatmul.bf16.gmra.mxu0 %v1523
      %v1537 = vpop.f32.mrf.mxu0
      %v1538 = vadd.f32 0.0, %v1537
      %v1539 = vpop.f32.mrf.mxu0
      %v1540 = vadd.f32 0.0, %v1539
      %1541 = vmatmul.bf16.gmra.mxu0 %v1526
      %v1542 = vpop.f32.mrf.mxu0
      %v1543 = vadd.f32 0.0, %v1542
      %v1544 = vpop.f32.mrf.mxu0
      %1545 = vdwg.mxu0
      %v1546 = vadd.f32 %v1499, %v1538
      %v1547 = vadd.f32 %v1500, %v1540
      %v1548 = vadd.f32 %v1501, %v1543
      %v1549 = vld [vmem:[#allocation2 + $0xc] sm:$0xf]
      %s1550 = scalar_lea.vmem %s5, 32
      %v1551 = vld [vmem:[%s1550] sm:$0xf]
      %v1552 = vld [vmem:[%s1550 + $0x4] sm:$0xf]
      %v1554 = vunpack.c.l.b16 %v1549
      %v1555 = vpack.c.b16 %v1554, %v1379
      %v1557 = vshrl.u32 %v1511, 16
      %v1559 = vrot.slane %v1557, 3
      %v1560 = vshll.u32 %v1511, 16
      %v1562 = vrot.slane %v1560, 4
      %v1563 = vor.u32 %v1559, %v1562
      %v1565 = vshrl.u32 %v1555, 16
      %v1567 = vrot.slane %v1565, 3
      %v1568 = vshll.u32 %v1555, 16
      %v1570 = vrot.slane %v1568, 4
      %v1571 = vor.u32 %v1567, %v1570
      %v1572 = vsel %vm810, %v1563, %v1571
      %v1575 = vunpack.c.l.b16 %v1551
      %v1576 = vunpack.c.l.b16 %v1552
      %v1577 = vpack.c.b16 %v1576, %v1575
      %v1580 = vsel %vm1404, %v1572, 0
      %v1583 = vsel %vm1404, %v1571, 0
      %1585 = vmatpush.bf16.msra.mxu0 0
      %1586 = vmatpush.bf16.msra.mxu0 0
      %1587 = vmatpush.bf16.msra.mxu0 0
      %1588 = vmatpush.bf16.msra.mxu0 0
      %1589 = vmatpush.bf16.msra.mxu0 0
      %1590 = vmatpush.bf16.msra.mxu0 0
      %1591 = vmatpush.bf16.msra.mxu0 0
      %1592 = vmatpush.bf16.msra.mxu0 %v1577
      %1593 = vmatmul.bf16.gmra.mxu0 %v1580
      %v1594 = vpop.f32.mrf.mxu0
      %v1595 = vadd.f32 0.0, %v1594
      %v1596 = vpop.f32.mrf.mxu0
      %v1597 = vadd.f32 0.0, %v1596
      %1598 = vmatmul.bf16.gmra.mxu0 %v1583
      %v1599 = vpop.f32.mrf.mxu0
      %v1600 = vadd.f32 0.0, %v1599
      %v1601 = vpop.f32.mrf.mxu0
      %1602 = vdwg.mxu0
      %v1603 = vadd.f32 %v1546, %v1595
      %v1604 = vadd.f32 %v1547, %v1597
      %v1605 = vadd.f32 %v1548, %v1600
      %s1606 = scalar_lea.vmem %s5, 40
      %v1607 = vld [vmem:[%s1606] sm:$0xf]
      %v1608 = vld [vmem:[%s1606 + $0x4] sm:$0xf]
      %v1609 = vpack.c.b16 %v1379, %v1378
      %v1610 = vpack.c.b16 %v1554, %v1554
      %v1613 = vunpack.c.l.b16 %v1607
      %v1614 = vunpack.c.l.b16 %v1608
      %v1615 = vpack.c.b16 %v1614, %v1613
      %v1618 = vsel %vm1404, %v1609, 0
      %v1621 = vsel %vm1404, %v1610, 0
      %1623 = vmatpush.bf16.msra.mxu0 0
      %1624 = vmatpush.bf16.msra.mxu0 0
      %1625 = vmatpush.bf16.msra.mxu0 0
      %1626 = vmatpush.bf16.msra.mxu0 0
      %1627 = vmatpush.bf16.msra.mxu0 0
      %1628 = vmatpush.bf16.msra.mxu0 0
      %1629 = vmatpush.bf16.msra.mxu0 0
      %1630 = vmatpush.bf16.msra.mxu0 %v1615
      %1631 = vmatmul.bf16.gmra.mxu0 %v1618
      %v1632 = vpop.f32.mrf.mxu0
      %v1633 = vadd.f32 0.0, %v1632
      %v1634 = vpop.f32.mrf.mxu0
      %v1635 = vadd.f32 0.0, %v1634
      %1636 = vmatmul.bf16.gmra.mxu0 %v1621
      %v1637 = vpop.f32.mrf.mxu0
      %v1638 = vadd.f32 0.0, %v1637
      %v1639 = vpop.f32.mrf.mxu0
      %1640 = vdwg.mxu0
      %v1641 = vadd.f32 %v1603, %v1633
      %v1642 = vadd.f32 %v1604, %v1635
      %v1643 = vadd.f32 %v1605, %v1638
      %v1644 = vld [vmem:[#allocation2 + $0x4] sm:$0xc]
      %v1645 = vld [vmem:[#allocation2 + $0x8] sm:$0xf]
      %v1646 = vld [vmem:[#allocation2 + $0xc] sm:$0xf]
      %v1647 = vld [vmem:[#allocation2 + $0x10] sm:$0x3]
      %s1648 = scalar_lea.vmem %s5, 48
      %v1649 = vld [vmem:[%s1648] sm:$0xf]
      %v1650 = vld [vmem:[%s1648 + $0x4] sm:$0xf]
      %v1655 = vunpack.c.l.b16 %v1644
      %v1656 = vunpack.c.l.b16 %v1645
      %v1657 = vunpack.c.l.b16 %v1646
      %v1658 = vunpack.c.l.b16 %v1647
      %v1659 = vpack.c.b16 %v1656, %v1655
      %v1660 = vpack.c.b16 %v1658, %v1657
      %v1661 = vrot.slane %v1659, 2
      %v1662 = vrot.slane %v1660, 2
      %v1663 = vsel %vm962, %v1661, %v1662
      %v1666 = vunpack.c.l.b16 %v1649
      %v1667 = vunpack.c.l.b16 %v1650
      %v1668 = vpack.c.b16 %v1667, %v1666
      %v1671 = vsel %vm1404, %v1663, 0
      %v1674 = vsel %vm1404, %v1662, 0
      %1676 = vmatpush.bf16.msra.mxu0 0
      %1677 = vmatpush.bf16.msra.mxu0 0
      %1678 = vmatpush.bf16.msra.mxu0 0
      %1679 = vmatpush.bf16.msra.mxu0 0
      %1680 = vmatpush.bf16.msra.mxu0 0
      %1681 = vmatpush.bf16.msra.mxu0 0
      %1682 = vmatpush.bf16.msra.mxu0 0
      %1683 = vmatpush.bf16.msra.mxu0 %v1668
      %1684 = vmatmul.bf16.gmra.mxu0 %v1671
      %v1685 = vpop.f32.mrf.mxu0
      %v1686 = vadd.f32 0.0, %v1685
      %v1687 = vpop.f32.mrf.mxu0
      %v1688 = vadd.f32 0.0, %v1687
      %1689 = vmatmul.bf16.gmra.mxu0 %v1674
      %v1690 = vpop.f32.mrf.mxu0
      %v1691 = vadd.f32 0.0, %v1690
      %v1692 = vpop.f32.mrf.mxu0
      %1693 = vdwg.mxu0
      %v1694 = vadd.f32 %v1641, %v1686
      %v1695 = vadd.f32 %v1642, %v1688
      %v1696 = vadd.f32 %v1643, %v1691
      %v1697 = vld [vmem:[#allocation2 + $0x10] sm:$0x7]
      %s1698 = scalar_lea.vmem %s5, 56
      %v1699 = vld [vmem:[%s1698] sm:$0xf]
      %v1700 = vld [vmem:[%s1698 + $0x4] sm:$0xf]
      %v1702 = vunpack.c.l.b16 %v1697
      %v1703 = vpack.c.b16 %v1702, %v1657
      %v1705 = vshrl.u32 %v1659, 16
      %v1707 = vrot.slane %v1705, 2
      %v1708 = vshll.u32 %v1659, 16
      %v1710 = vrot.slane %v1708, 3
      %v1711 = vor.u32 %v1707, %v1710
      %v1713 = vshrl.u32 %v1703, 16
      %v1715 = vrot.slane %v1713, 2
      %v1716 = vshll.u32 %v1703, 16
      %v1718 = vrot.slane %v1716, 3
      %v1719 = vor.u32 %v1715, %v1718
      %v1720 = vsel %vm1029, %v1711, %v1719
      %v1723 = vunpack.c.l.b16 %v1699
      %v1724 = vunpack.c.l.b16 %v1700
      %v1725 = vpack.c.b16 %v1724, %v1723
      %v1728 = vsel %vm1404, %v1720, 0
      %v1731 = vsel %vm1404, %v1719, 0
      %1733 = vmatpush.bf16.msra.mxu0 0
      %1734 = vmatpush.bf16.msra.mxu0 0
      %1735 = vmatpush.bf16.msra.mxu0 0
      %1736 = vmatpush.bf16.msra.mxu0 0
      %1737 = vmatpush.bf16.msra.mxu0 0
      %1738 = vmatpush.bf16.msra.mxu0 0
      %1739 = vmatpush.bf16.msra.mxu0 0
      %1740 = vmatpush.bf16.msra.mxu0 %v1725
      %1741 = vmatmul.bf16.gmra.mxu0 %v1728
      %v1742 = vpop.f32.mrf.mxu0
      %v1743 = vadd.f32 0.0, %v1742
      %v1744 = vpop.f32.mrf.mxu0
      %v1745 = vadd.f32 0.0, %v1744
      %1746 = vmatmul.bf16.gmra.mxu0 %v1731
      %v1747 = vpop.f32.mrf.mxu0
      %v1748 = vadd.f32 0.0, %v1747
      %v1749 = vpop.f32.mrf.mxu0
      %1750 = vdwg.mxu0
      %v1751 = vadd.f32 %v1694, %v1743
      %v1752 = vadd.f32 %v1695, %v1745
      %v1753 = vadd.f32 %v1696, %v1748
      %v1754 = vld [vmem:[#allocation2 + $0x4] sm:$0x8]
      %s1755 = scalar_lea.vmem %s5, 64
      %v1756 = vld [vmem:[%s1755] sm:$0xf]
      %v1757 = vld [vmem:[%s1755 + $0x4] sm:$0xf]
      %v1759 = vunpack.c.l.b16 %v1754
      %v1760 = vpack.c.b16 %v1656, %v1759
      %v1761 = vrot.slane %v1760, 3
      %v1762 = vrot.slane %v1703, 3
      %v1763 = vsel %vm743, %v1761, %v1762
      %v1766 = vunpack.c.l.b16 %v1756
      %v1767 = vunpack.c.l.b16 %v1757
      %v1768 = vpack.c.b16 %v1767, %v1766
      %v1771 = vsel %vm1404, %v1763, 0
      %v1774 = vsel %vm1404, %v1762, 0
      %1776 = vmatpush.bf16.msra.mxu0 0
      %1777 = vmatpush.bf16.msra.mxu0 0
      %1778 = vmatpush.bf16.msra.mxu0 0
      %1779 = vmatpush.bf16.msra.mxu0 0
      %1780 = vmatpush.bf16.msra.mxu0 0
      %1781 = vmatpush.bf16.msra.mxu0 0
      %1782 = vmatpush.bf16.msra.mxu0 0
      %1783 = vmatpush.bf16.msra.mxu0 %v1768
      %1784 = vmatmul.bf16.gmra.mxu0 %v1771
      %v1785 = vpop.f32.mrf.mxu0
      %v1786 = vadd.f32 0.0, %v1785
      %v1787 = vpop.f32.mrf.mxu0
      %v1788 = vadd.f32 0.0, %v1787
      %1789 = vmatmul.bf16.gmra.mxu0 %v1774
      %v1790 = vpop.f32.mrf.mxu0
      %v1791 = vadd.f32 0.0, %v1790
      %v1792 = vpop.f32.mrf.mxu0
      %1793 = vdwg.mxu0
      %v1794 = vadd.f32 %v1751, %v1786
      %v1795 = vadd.f32 %v1752, %v1788
      %v1796 = vadd.f32 %v1753, %v1791
      %v1797 = vld [vmem:[%s6] sm:$0x1]
      %v1799 = vperm.slane %v1797, 0
      %v1801 = vadd.f32 %v1794, %v1799
      %v1802 = vadd.f32 %v1795, %v1799
      %v1803 = vadd.f32 %v1796, %v1799
      %1807 = vrot.lane.b32.xlu0 %v1168, 64
      %v1808 = vpop.permute.xlu0 %1807
      %1809 = vrot.lane.b32.xlu0 %v1169, 64
      %v1810 = vpop.permute.xlu0 %1809
      %1811 = vrot.lane.b32.xlu0 %v1170, 64
      %v1812 = vpop.permute.xlu0 %1811
      %v1816 = vadd.f32 %v1801, %v1808
      %v1817 = vadd.f32 %v1802, %v1810
      %v1818 = vadd.f32 %v1803, %v1812
      %v1819 = vxor.u32 %v1816, 2147483648
      %v1820 = vxor.u32 %v1817, 2147483648
      %v1821 = vxor.u32 %v1818, 2147483648
      %v1822 = vmul.f32 %v1819, 1.442695
      %v1823 = vpow.pop %v1822
      %v1824 = vmul.f32 %v1820, 1.442695
      %v1825 = vpow.pop %v1824
      %v1826 = vmul.f32 %v1821, 1.442695
      %v1827 = vpow.pop %v1826
      %v1828 = vadd.f32 %v1823, 1.0
      %v1829 = vadd.f32 %v1825, 1.0
      %v1830 = vadd.f32 %v1827, 1.0
      %v1831 = vrcp.pop %v1828
      %v1832 = vmul.f32 %v1828, %v1831
      %v1833 = vsub.f32 1.0, %v1832
      %v1834 = vmul.f32 %v1831, %v1833
      %v1835 = vadd.f32 %v1831, %v1834
      %vm1836 = vweird.f32 %v1828
      %vm1837 = vweird.f32 %v1831
      %vm1838 = vmor %vm1836, %vm1837
      %v1839 = vsel %vm1838, %v1831, %v1835
      %v1840 = vand.u32 2147483647, %v1828
      %vm1841 = vcmp.eq.f32.partialorder %v1840, 8.507059e+37
      %v1842 = vand.u32 %v1828, 2147483648
      %v1843 = vor.u32 1.1754944e-38, %v1842
      %v1844 = vsel %vm1841, %v1843, %v1839
      %v1845 = vmul.f32 1.0, %v1844
      %v1846 = vrcp.pop %v1829
      %v1847 = vmul.f32 %v1829, %v1846
      %v1848 = vsub.f32 1.0, %v1847
      %v1849 = vmul.f32 %v1846, %v1848
      %v1850 = vadd.f32 %v1846, %v1849
      %vm1851 = vweird.f32 %v1829
      %vm1852 = vweird.f32 %v1846
      %vm1853 = vmor %vm1851, %vm1852
      %v1854 = vsel %vm1853, %v1846, %v1850
      %v1855 = vand.u32 2147483647, %v1829
      %vm1856 = vcmp.eq.f32.partialorder %v1855, 8.507059e+37
      %v1857 = vand.u32 %v1829, 2147483648
      %v1858 = vor.u32 1.1754944e-38, %v1857
      %v1859 = vsel %vm1856, %v1858, %v1854
      %v1860 = vmul.f32 1.0, %v1859
      %v1861 = vrcp.pop %v1830
      %v1862 = vmul.f32 %v1830, %v1861
      %v1863 = vsub.f32 1.0, %v1862
      %v1864 = vmul.f32 %v1861, %v1863
      %v1865 = vadd.f32 %v1861, %v1864
      %vm1866 = vweird.f32 %v1830
      %vm1867 = vweird.f32 %v1861
      %vm1868 = vmor %vm1866, %vm1867
      %v1869 = vsel %vm1868, %v1861, %v1865
      %v1870 = vand.u32 2147483647, %v1830
      %vm1871 = vcmp.eq.f32.partialorder %v1870, 8.507059e+37
      %v1872 = vand.u32 %v1830, 2147483648
      %v1873 = vor.u32 1.1754944e-38, %v1872
      %v1874 = vsel %vm1871, %v1873, %v1869
      %v1875 = vmul.f32 1.0, %v1874
      %v1876 = vtanh.pop %v1816
      %v1877 = vtanh.pop %v1817
      %v1878 = vtanh.pop %v1818
      %1879 = vrot.lane.b32.xlu0 %v1228, 48
      %v1880 = vpop.permute.xlu0 %1879
      %1881 = vrot.lane.b32.xlu0 %v1229, 48
      %v1882 = vpop.permute.xlu0 %1881
      %1883 = vrot.lane.b32.xlu0 %v1230, 48
      %v1884 = vpop.permute.xlu0 %1883
      %v1888 = vmul.f32 %v1845, %v1880
      %v1889 = vmul.f32 %v1860, %v1882
      %v1890 = vmul.f32 %v1875, %v1884
      %1894 = vrot.lane.b32.xlu0 %v1876, 112
      %v1895 = vpop.permute.xlu0 %1894
      %1896 = vrot.lane.b32.xlu0 %v1877, 112
      %v1897 = vpop.permute.xlu0 %1896
      %1898 = vrot.lane.b32.xlu0 %v1878, 112
      %v1899 = vpop.permute.xlu0 %1898
      %v1903 = vmul.f32 %v1845, %v1895
      %v1904 = vmul.f32 %v1860, %v1897
      %v1905 = vmul.f32 %v1875, %v1899
      %1909 = vrot.lane.b32.xlu0 %v1903, 32
      %v1910 = vpop.permute.xlu0 %1909
      %1911 = vrot.lane.b32.xlu0 %v1904, 32
      %v1912 = vpop.permute.xlu0 %1911
      %1913 = vrot.lane.b32.xlu0 %v1905, 32
      %v1914 = vpop.permute.xlu0 %1913
      %v1918 = vadd.f32 %v1888, %v1910
      %v1919 = vadd.f32 %v1889, %v1912
      %v1920 = vadd.f32 %v1890, %v1914
      %v1921 = vmul.f32 %v1918, %v1282
      %v1922 = vmul.f32 %v1919, %v1287
      %v1923 = vmul.f32 %v1920, %v1292
      %v1924 = vadd.f32 %v1168, %v1801
      %v1925 = vadd.f32 %v1169, %v1802
      %v1926 = vadd.f32 %v1170, %v1803
      %v1927 = vpack.c.bf16 %v1921, %v1921
      %v1928 = vpack.c.bf16 %v1922, %v1922
      %v1929 = vpack.c.bf16 %v1923, %v1923
      %v1931 = vshll.u32 %v1927, 16
      %v1933 = vrot.slane %v1931, 5
      %v1934 = vshrl.u32 %v1927, 16
      %v1936 = vrot.slane %v1934, 4
      %v1937 = vor.u32 %v1936, %v1933
      %v1938 = vrot.slane %v1937, 4
      %v1940 = vshll.u32 %v1928, 16
      %v1942 = vrot.slane %v1940, 5
      %v1943 = vsel %vm1309, %v1938, %v1942
      %v1944 = vshrl.u32 %v1928, 16
      %v1946 = vrot.slane %v1944, 4
      %v1947 = vor.u32 %v1946, %v1942
      %v1948 = vrot.slane %v1947, 4
      %v1950 = vshll.u32 %v1929, 16
      %v1952 = vrot.slane %v1950, 5
      %v1953 = vsel %vm1309, %v1948, %v1952
      %v1954 = vshrl.u32 %v1929, 16
      %v1956 = vrot.slane %v1954, 4
      %v1957 = vor.u32 %v1956, %v1952
      %v1958 = vrot.slane %v1957, 4
      %1959 = vrot.lane.b32.xlu0 %v1933, 96
      %v1960 = vpop.permute.xlu0 %1959
      %1961 = vrot.lane.b32.xlu0 %v1943, 96
      %v1962 = vpop.permute.xlu0 %1961
      %1963 = vrot.lane.b32.xlu0 %v1953, 96
      %v1964 = vpop.permute.xlu0 %1963
      %1965 = vrot.lane.b32.xlu0 %v1958, 96
      %v1966 = vpop.permute.xlu0 %1965
      %v1971 = vsel %vm1353, %v1960, %v1502
      %1972 = vst [vmem:[#allocation2] sm:$0x8] %v1971
      %1973 = vst.msk [vmem:[#allocation2 + $0x4] sm:$0xf] %vm1297, %v1962
      %1974 = vst.msk [vmem:[#allocation2 + $0x8] sm:$0xf] %vm1297, %v1964
      %v1975 = vld [vmem:[#allocation2 + $0xc] sm:$0xf]
      %v1976 = vsel %vm1360, %v1966, %v1975
      %1977 = vst [vmem:[#allocation2 + $0xc] sm:$0xf] %v1976
      %v1978 = vld [vmem:[#allocation2] sm:$0xf]
      %v1979 = vld [vmem:[#allocation2 + $0x4] sm:$0xf]
      %v1980 = vld [vmem:[#allocation2 + $0x8] sm:$0xf]
      %v1981 = vld [vmem:[%s7] sm:$0xf]
      %v1982 = vld [vmem:[%s7 + $0x4] sm:$0xf]
      %v1983 = vld [vmem:[#allocation2 + $0xc] sm:$0x1]
      %s1984 = scalar_lea.vmem %s7, 8
      %v1985 = vld [vmem:[%s1984] sm:$0xf]
      %v1986 = vld [vmem:[%s1984 + $0x4] sm:$0xf]
      %v1991 = vunpack.c.l.b16 %v1978
      %v1992 = vunpack.c.l.b16 %v1979
      %v1993 = vunpack.c.l.b16 %v1980
      %v1994 = vunpack.c.l.b16 %v1983
      %v1995 = vpack.c.b16 %v1992, %v1991
      %v1996 = vpack.c.b16 %v1994, %v1993
      %v1998 = vshrl.u32 %v1995, 16
      %v2000 = vshll.u32 %v1995, 16
      %v2002 = vrot.slane %v2000, 1
      %v2003 = vor.u32 %v1998, %v2002
      %v2005 = vshll.u32 %v1996, 16
      %v2007 = vrot.slane %v2005, 1
      %v2008 = vsel %vm546, %v2003, %v2007
      %v2009 = vshrl.u32 %v1996, 16
      %v2011 = vor.u32 %v2009, %v2007
      %v2014 = vunpack.c.l.b16 %v1985
      %v2015 = vunpack.c.l.b16 %v1986
      %v2016 = vpack.c.b16 %v2015, %v2014
      %v2019 = vsel %vm1404, %v2008, 0
      %v2022 = vsel %vm1404, %v2011, 0
      %2024 = vmatpush.bf16.msra.mxu0 0
      %2025 = vmatpush.bf16.msra.mxu0 0
      %2026 = vmatpush.bf16.msra.mxu0 0
      %2027 = vmatpush.bf16.msra.mxu0 0
      %2028 = vmatpush.bf16.msra.mxu0 0
      %2029 = vmatpush.bf16.msra.mxu0 0
      %2030 = vmatpush.bf16.msra.mxu0 0
      %2031 = vmatpush.bf16.msra.mxu0 %v2016
      %2032 = vmatmul.bf16.gmra.mxu0 %v2019
      %v2033 = vpop.f32.mrf.mxu0
      %v2034 = vadd.f32 0.0, %v2033
      %v2035 = vpop.f32.mrf.mxu0
      %v2036 = vadd.f32 0.0, %v2035
      %2037 = vmatmul.bf16.gmra.mxu0 %v2022
      %v2038 = vpop.f32.mrf.mxu0
      %v2039 = vadd.f32 0.0, %v2038
      %v2040 = vpop.f32.mrf.mxu0
      %2041 = vdwg.mxu0
      %v2042 = vpack.c.b16 %v1993, %v1993
      %v2045 = vunpack.c.l.b16 %v1981
      %v2046 = vunpack.c.l.b16 %v1982
      %v2047 = vpack.c.b16 %v2046, %v2045
      %v2049 = vsel %vm1404, %v1995, 0
      %v2052 = vsel %vm1404, %v2042, 0
      %2054 = vmatpush.bf16.msra.mxu0 0
      %2055 = vmatpush.bf16.msra.mxu0 0
      %2056 = vmatpush.bf16.msra.mxu0 0
      %2057 = vmatpush.bf16.msra.mxu0 0
      %2058 = vmatpush.bf16.msra.mxu0 0
      %2059 = vmatpush.bf16.msra.mxu0 0
      %2060 = vmatpush.bf16.msra.mxu0 0
      %2061 = vmatpush.bf16.msra.mxu0 %v2047
      %2062 = vmatmul.bf16.gmra.mxu0 %v2049
      %v2063 = vpop.f32.mrf.mxu0
      %v2064 = vadd.f32 %v2034, %v2063
      %v2065 = vpop.f32.mrf.mxu0
      %v2066 = vadd.f32 %v2036, %v2065
      %2067 = vmatmul.bf16.gmra.mxu0 %v2052
      %v2068 = vpop.f32.mrf.mxu0
      %v2069 = vadd.f32 %v2039, %v2068
      %v2070 = vpop.f32.mrf.mxu0
      %2071 = vdwg.mxu0
      %v2072 = vld [vmem:[#allocation2] sm:$0xe]
      %s2073 = scalar_lea.vmem %s7, 16
      %v2074 = vld [vmem:[%s2073] sm:$0xf]
      %v2075 = vld [vmem:[%s2073 + $0x4] sm:$0xf]
      %v2077 = vunpack.c.l.b16 %v2072
      %v2078 = vpack.c.b16 %v1992, %v2077
      %v2079 = vrot.slane %v2078, 1
      %v2080 = vrot.slane %v1996, 1
      %v2081 = vsel %vm672, %v2079, %v2080
      %v2084 = vunpack.c.l.b16 %v2074
      %v2085 = vunpack.c.l.b16 %v2075
      %v2086 = vpack.c.b16 %v2085, %v2084
      %v2089 = vsel %vm1404, %v2081, 0
      %v2092 = vsel %vm1404, %v2080, 0
      %2094 = vmatpush.bf16.msra.mxu0 0
      %2095 = vmatpush.bf16.msra.mxu0 0
      %2096 = vmatpush.bf16.msra.mxu0 0
      %2097 = vmatpush.bf16.msra.mxu0 0
      %2098 = vmatpush.bf16.msra.mxu0 0
      %2099 = vmatpush.bf16.msra.mxu0 0
      %2100 = vmatpush.bf16.msra.mxu0 0
      %2101 = vmatpush.bf16.msra.mxu0 %v2086
      %2102 = vmatmul.bf16.gmra.mxu0 %v2089
      %v2103 = vpop.f32.mrf.mxu0
      %v2104 = vadd.f32 0.0, %v2103
      %v2105 = vpop.f32.mrf.mxu0
      %v2106 = vadd.f32 0.0, %v2105
      %2107 = vmatmul.bf16.gmra.mxu0 %v2092
      %v2108 = vpop.f32.mrf.mxu0
      %v2109 = vadd.f32 0.0, %v2108
      %v2110 = vpop.f32.mrf.mxu0
      %2111 = vdwg.mxu0
      %v2112 = vadd.f32 %v2064, %v2104
      %v2113 = vadd.f32 %v2066, %v2106
      %v2114 = vadd.f32 %v2069, %v2109
      %v2115 = vld [vmem:[#allocation2] sm:$0x8]
      %v2116 = vld [vmem:[#allocation2 + $0xc] sm:$0x7]
      %s2117 = scalar_lea.vmem %s7, 24
      %v2118 = vld [vmem:[%s2117] sm:$0xf]
      %v2119 = vld [vmem:[%s2117 + $0x4] sm:$0xf]
      %v2122 = vunpack.c.l.b16 %v2115
      %v2123 = vunpack.c.l.b16 %v2116
      %v2124 = vpack.c.b16 %v1992, %v2122
      %v2125 = vpack.c.b16 %v2123, %v1993
      %v2126 = vrot.slane %v2124, 3
      %v2127 = vrot.slane %v2125, 3
      %v2128 = vsel %vm743, %v2126, %v2127
      %v2131 = vunpack.c.l.b16 %v2118
      %v2132 = vunpack.c.l.b16 %v2119
      %v2133 = vpack.c.b16 %v2132, %v2131
      %v2136 = vsel %vm1404, %v2128, 0
      %v2139 = vsel %vm1404, %v2127, 0
      %2141 = vmatpush.bf16.msra.mxu0 0
      %2142 = vmatpush.bf16.msra.mxu0 0
      %2143 = vmatpush.bf16.msra.mxu0 0
      %2144 = vmatpush.bf16.msra.mxu0 0
      %2145 = vmatpush.bf16.msra.mxu0 0
      %2146 = vmatpush.bf16.msra.mxu0 0
      %2147 = vmatpush.bf16.msra.mxu0 0
      %2148 = vmatpush.bf16.msra.mxu0 %v2133
      %2149 = vmatmul.bf16.gmra.mxu0 %v2136
      %v2150 = vpop.f32.mrf.mxu0
      %v2151 = vadd.f32 0.0, %v2150
      %v2152 = vpop.f32.mrf.mxu0
      %v2153 = vadd.f32 0.0, %v2152
      %2154 = vmatmul.bf16.gmra.mxu0 %v2139
      %v2155 = vpop.f32.mrf.mxu0
      %v2156 = vadd.f32 0.0, %v2155
      %v2157 = vpop.f32.mrf.mxu0
      %2158 = vdwg.mxu0
      %v2159 = vadd.f32 %v2112, %v2151
      %v2160 = vadd.f32 %v2113, %v2153
      %v2161 = vadd.f32 %v2114, %v2156
      %v2162 = vld [vmem:[#allocation2 + $0xc] sm:$0xf]
      %s2163 = scalar_lea.vmem %s7, 32
      %v2164 = vld [vmem:[%s2163] sm:$0xf]
      %v2165 = vld [vmem:[%s2163 + $0x4] sm:$0xf]
      %v2167 = vunpack.c.l.b16 %v2162
      %v2168 = vpack.c.b16 %v2167, %v1993
      %v2170 = vshrl.u32 %v2124, 16
      %v2172 = vrot.slane %v2170, 3
      %v2173 = vshll.u32 %v2124, 16
      %v2175 = vrot.slane %v2173, 4
      %v2176 = vor.u32 %v2172, %v2175
      %v2178 = vshrl.u32 %v2168, 16
      %v2180 = vrot.slane %v2178, 3
      %v2181 = vshll.u32 %v2168, 16
      %v2183 = vrot.slane %v2181, 4
      %v2184 = vor.u32 %v2180, %v2183
      %v2185 = vsel %vm810, %v2176, %v2184
      %v2188 = vunpack.c.l.b16 %v2164
      %v2189 = vunpack.c.l.b16 %v2165
      %v2190 = vpack.c.b16 %v2189, %v2188
      %v2193 = vsel %vm1404, %v2185, 0
      %v2196 = vsel %vm1404, %v2184, 0
      %2198 = vmatpush.bf16.msra.mxu0 0
      %2199 = vmatpush.bf16.msra.mxu0 0
      %2200 = vmatpush.bf16.msra.mxu0 0
      %2201 = vmatpush.bf16.msra.mxu0 0
      %2202 = vmatpush.bf16.msra.mxu0 0
      %2203 = vmatpush.bf16.msra.mxu0 0
      %2204 = vmatpush.bf16.msra.mxu0 0
      %2205 = vmatpush.bf16.msra.mxu0 %v2190
      %2206 = vmatmul.bf16.gmra.mxu0 %v2193
      %v2207 = vpop.f32.mrf.mxu0
      %v2208 = vadd.f32 0.0, %v2207
      %v2209 = vpop.f32.mrf.mxu0
      %v2210 = vadd.f32 0.0, %v2209
      %2211 = vmatmul.bf16.gmra.mxu0 %v2196
      %v2212 = vpop.f32.mrf.mxu0
      %v2213 = vadd.f32 0.0, %v2212
      %v2214 = vpop.f32.mrf.mxu0
      %2215 = vdwg.mxu0
      %v2216 = vadd.f32 %v2159, %v2208
      %v2217 = vadd.f32 %v2160, %v2210
      %v2218 = vadd.f32 %v2161, %v2213
      %s2219 = scalar_lea.vmem %s7, 40
      %v2220 = vld [vmem:[%s2219] sm:$0xf]
      %v2221 = vld [vmem:[%s2219 + $0x4] sm:$0xf]
      %v2222 = vpack.c.b16 %v1993, %v1992
      %v2223 = vpack.c.b16 %v2167, %v2167
      %v2226 = vunpack.c.l.b16 %v2220
      %v2227 = vunpack.c.l.b16 %v2221
      %v2228 = vpack.c.b16 %v2227, %v2226
      %v2231 = vsel %vm1404, %v2222, 0
      %v2234 = vsel %vm1404, %v2223, 0
      %2236 = vmatpush.bf16.msra.mxu0 0
      %2237 = vmatpush.bf16.msra.mxu0 0
      %2238 = vmatpush.bf16.msra.mxu0 0
      %2239 = vmatpush.bf16.msra.mxu0 0
      %2240 = vmatpush.bf16.msra.mxu0 0
      %2241 = vmatpush.bf16.msra.mxu0 0
      %2242 = vmatpush.bf16.msra.mxu0 0
      %2243 = vmatpush.bf16.msra.mxu0 %v2228
      %2244 = vmatmul.bf16.gmra.mxu0 %v2231
      %v2245 = vpop.f32.mrf.mxu0
      %v2246 = vadd.f32 0.0, %v2245
      %v2247 = vpop.f32.mrf.mxu0
      %v2248 = vadd.f32 0.0, %v2247
      %2249 = vmatmul.bf16.gmra.mxu0 %v2234
      %v2250 = vpop.f32.mrf.mxu0
      %v2251 = vadd.f32 0.0, %v2250
      %v2252 = vpop.f32.mrf.mxu0
      %2253 = vdwg.mxu0
      %v2254 = vadd.f32 %v2216, %v2246
      %v2255 = vadd.f32 %v2217, %v2248
      %v2256 = vadd.f32 %v2218, %v2251
      %v2257 = vld [vmem:[#allocation2 + $0x4] sm:$0xc]
      %v2258 = vld [vmem:[#allocation2 + $0x8] sm:$0xf]
      %v2259 = vld [vmem:[#allocation2 + $0xc] sm:$0xf]
      %v2260 = vld [vmem:[#allocation2 + $0x10] sm:$0x3]
      %s2261 = scalar_lea.vmem %s7, 48
      %v2262 = vld [vmem:[%s2261] sm:$0xf]
      %v2263 = vld [vmem:[%s2261 + $0x4] sm:$0xf]
      %v2268 = vunpack.c.l.b16 %v2257
      %v2269 = vunpack.c.l.b16 %v2258
      %v2270 = vunpack.c.l.b16 %v2259
      %v2271 = vunpack.c.l.b16 %v2260
      %v2272 = vpack.c.b16 %v2269, %v2268
      %v2273 = vpack.c.b16 %v2271, %v2270
      %v2274 = vrot.slane %v2272, 2
      %v2275 = vrot.slane %v2273, 2
      %v2276 = vsel %vm962, %v2274, %v2275
      %v2279 = vunpack.c.l.b16 %v2262
      %v2280 = vunpack.c.l.b16 %v2263
      %v2281 = vpack.c.b16 %v2280, %v2279
      %v2284 = vsel %vm1404, %v2276, 0
      %v2287 = vsel %vm1404, %v2275, 0
      %2289 = vmatpush.bf16.msra.mxu0 0
      %2290 = vmatpush.bf16.msra.mxu0 0
      %2291 = vmatpush.bf16.msra.mxu0 0
      %2292 = vmatpush.bf16.msra.mxu0 0
      %2293 = vmatpush.bf16.msra.mxu0 0
      %2294 = vmatpush.bf16.msra.mxu0 0
      %2295 = vmatpush.bf16.msra.mxu0 0
      %2296 = vmatpush.bf16.msra.mxu0 %v2281
      %2297 = vmatmul.bf16.gmra.mxu0 %v2284
      %v2298 = vpop.f32.mrf.mxu0
      %v2299 = vadd.f32 0.0, %v2298
      %v2300 = vpop.f32.mrf.mxu0
      %v2301 = vadd.f32 0.0, %v2300
      %2302 = vmatmul.bf16.gmra.mxu0 %v2287
      %v2303 = vpop.f32.mrf.mxu0
      %v2304 = vadd.f32 0.0, %v2303
      %v2305 = vpop.f32.mrf.mxu0
      %2306 = vdwg.mxu0
      %v2307 = vadd.f32 %v2254, %v2299
      %v2308 = vadd.f32 %v2255, %v2301
      %v2309 = vadd.f32 %v2256, %v2304
      %v2310 = vld [vmem:[#allocation2 + $0x10] sm:$0x7]
      %s2311 = scalar_lea.vmem %s7, 56
      %v2312 = vld [vmem:[%s2311] sm:$0xf]
      %v2313 = vld [vmem:[%s2311 + $0x4] sm:$0xf]
      %v2315 = vunpack.c.l.b16 %v2310
      %v2316 = vpack.c.b16 %v2315, %v2270
      %v2318 = vshrl.u32 %v2272, 16
      %v2320 = vrot.slane %v2318, 2
      %v2321 = vshll.u32 %v2272, 16
      %v2323 = vrot.slane %v2321, 3
      %v2324 = vor.u32 %v2320, %v2323
      %v2326 = vshrl.u32 %v2316, 16
      %v2328 = vrot.slane %v2326, 2
      %v2329 = vshll.u32 %v2316, 16
      %v2331 = vrot.slane %v2329, 3
      %v2332 = vor.u32 %v2328, %v2331
      %v2333 = vsel %vm1029, %v2324, %v2332
      %v2336 = vunpack.c.l.b16 %v2312
      %v2337 = vunpack.c.l.b16 %v2313
      %v2338 = vpack.c.b16 %v2337, %v2336
      %v2341 = vsel %vm1404, %v2333, 0
      %v2344 = vsel %vm1404, %v2332, 0
      %2346 = vmatpush.bf16.msra.mxu0 0
      %2347 = vmatpush.bf16.msra.mxu0 0
      %2348 = vmatpush.bf16.msra.mxu0 0
      %2349 = vmatpush.bf16.msra.mxu0 0
      %2350 = vmatpush.bf16.msra.mxu0 0
      %2351 = vmatpush.bf16.msra.mxu0 0
      %2352 = vmatpush.bf16.msra.mxu0 0
      %2353 = vmatpush.bf16.msra.mxu0 %v2338
      %2354 = vmatmul.bf16.gmra.mxu0 %v2341
      %v2355 = vpop.f32.mrf.mxu0
      %v2356 = vadd.f32 0.0, %v2355
      %v2357 = vpop.f32.mrf.mxu0
      %v2358 = vadd.f32 0.0, %v2357
      %2359 = vmatmul.bf16.gmra.mxu0 %v2344
      %v2360 = vpop.f32.mrf.mxu0
      %v2361 = vadd.f32 0.0, %v2360
      %v2362 = vpop.f32.mrf.mxu0
      %2363 = vdwg.mxu0
      %v2364 = vadd.f32 %v2307, %v2356
      %v2365 = vadd.f32 %v2308, %v2358
      %v2366 = vadd.f32 %v2309, %v2361
      %v2367 = vld [vmem:[#allocation2 + $0x4] sm:$0x8]
      %s2368 = scalar_lea.vmem %s7, 64
      %v2369 = vld [vmem:[%s2368] sm:$0xf]
      %v2370 = vld [vmem:[%s2368 + $0x4] sm:$0xf]
      %v2372 = vunpack.c.l.b16 %v2367
      %v2373 = vpack.c.b16 %v2269, %v2372
      %v2374 = vrot.slane %v2373, 3
      %v2375 = vrot.slane %v2316, 3
      %v2376 = vsel %vm743, %v2374, %v2375
      %v2379 = vunpack.c.l.b16 %v2369
      %v2380 = vunpack.c.l.b16 %v2370
      %v2381 = vpack.c.b16 %v2380, %v2379
      %v2384 = vsel %vm1404, %v2376, 0
      %v2387 = vsel %vm1404, %v2375, 0
      %2389 = vmatpush.bf16.msra.mxu0 0
      %2390 = vmatpush.bf16.msra.mxu0 0
      %2391 = vmatpush.bf16.msra.mxu0 0
      %2392 = vmatpush.bf16.msra.mxu0 0
      %2393 = vmatpush.bf16.msra.mxu0 0
      %2394 = vmatpush.bf16.msra.mxu0 0
      %2395 = vmatpush.bf16.msra.mxu0 0
      %2396 = vmatpush.bf16.msra.mxu0 %v2381
      %2397 = vmatmul.bf16.gmra.mxu0 %v2384
      %v2398 = vpop.f32.mrf.mxu0
      %v2399 = vadd.f32 0.0, %v2398
      %v2400 = vpop.f32.mrf.mxu0
      %v2401 = vadd.f32 0.0, %v2400
      %2402 = vmatmul.bf16.gmra.mxu0 %v2387
      %v2403 = vpop.f32.mrf.mxu0
      %v2404 = vadd.f32 0.0, %v2403
      %v2405 = vpop.f32.mrf.mxu0
      %2406 = vdwg.mxu0
      %v2407 = vadd.f32 %v2364, %v2399
      %v2408 = vadd.f32 %v2365, %v2401
      %v2409 = vadd.f32 %v2366, %v2404
      %v2410 = vld [vmem:[%s8] sm:$0x1]
      %v2412 = vperm.slane %v2410, 0
      %v2414 = vadd.f32 %v2407, %v2412
      %v2415 = vadd.f32 %v2408, %v2412
      %v2416 = vadd.f32 %v2409, %v2412
      %v2417 = vld [vmem:[%s9] sm:$0xf]
      %v2418 = vld [vmem:[%s9 + $0x4] sm:$0xf]
      %v2419 = vld [vmem:[%s10] sm:$0xf]
      %v2420 = vld [vmem:[%s10 + $0x4] sm:$0xf]
      %v2424 = vunpack.c.l.b16 %v1927
      %v2425 = vunpack.c.l.b16 %v1928
      %v2426 = vunpack.c.l.b16 %v1929
      %v2427 = vpack.c.b16 %v2425, %v2424
      %v2428 = vpack.c.b16 %v2426, %v2426
      %2429 = vrot.lane.b32.xlu0 %v2427, 96
      %v2430 = vpop.permute.xlu0 %2429
      %2431 = vrot.lane.b32.xlu0 %v2428, 96
      %v2432 = vpop.permute.xlu0 %2431
      %v2435 = vunpack.c.l.b16 %v2419
      %v2436 = vunpack.c.l.b16 %v2420
      %v2437 = vpack.c.b16 %v2436, %v2435
      %v2440 = vsel %vm1404, %v2430, 0
      %v2443 = vsel %vm1404, %v2432, 0
      %2445 = vmatpush.bf16.msra.mxu0 0
      %2446 = vmatpush.bf16.msra.mxu0 0
      %2447 = vmatpush.bf16.msra.mxu0 0
      %2448 = vmatpush.bf16.msra.mxu0 0
      %2449 = vmatpush.bf16.msra.mxu0 0
      %2450 = vmatpush.bf16.msra.mxu0 0
      %2451 = vmatpush.bf16.msra.mxu0 0
      %2452 = vmatpush.bf16.msra.mxu0 %v2437
      %2453 = vmatmul.bf16.gmra.mxu0 %v2440
      %v2454 = vpop.f32.mrf.mxu0
      %v2455 = vadd.f32 0.0, %v2454
      %v2456 = vpop.f32.mrf.mxu0
      %v2457 = vadd.f32 0.0, %v2456
      %2458 = vmatmul.bf16.gmra.mxu0 %v2443
      %v2459 = vpop.f32.mrf.mxu0
      %v2460 = vadd.f32 0.0, %v2459
      %v2461 = vpop.f32.mrf.mxu0
      %2462 = vdwg.mxu0
      %v2466 = vunpack.c.l.b16 %v1304
      %v2467 = vunpack.c.l.b16 %v1305
      %v2468 = vunpack.c.l.b16 %v1306
      %v2469 = vpack.c.b16 %v2467, %v2466
      %v2470 = vpack.c.b16 %v2468, %v2468
      %2471 = vrot.lane.b32.xlu0 %v2469, 96
      %v2472 = vpop.permute.xlu0 %2471
      %2473 = vrot.lane.b32.xlu0 %v2470, 96
      %v2474 = vpop.permute.xlu0 %2473
      %v2477 = vunpack.c.l.b16 %v2417
      %v2478 = vunpack.c.l.b16 %v2418
      %v2479 = vpack.c.b16 %v2478, %v2477
      %v2482 = vsel %vm1404, %v2472, 0
      %v2485 = vsel %vm1404, %v2474, 0
      %2487 = vmatpush.bf16.msra.mxu0 0
      %2488 = vmatpush.bf16.msra.mxu0 0
      %2489 = vmatpush.bf16.msra.mxu0 0
      %2490 = vmatpush.bf16.msra.mxu0 0
      %2491 = vmatpush.bf16.msra.mxu0 0
      %2492 = vmatpush.bf16.msra.mxu0 0
      %2493 = vmatpush.bf16.msra.mxu0 0
      %2494 = vmatpush.bf16.msra.mxu0 %v2479
      %2495 = vmatmul.bf16.gmra.mxu0 %v2482
      %v2496 = vpop.f32.mrf.mxu0
      %v2497 = vadd.f32 %v2455, %v2496
      %v2498 = vpop.f32.mrf.mxu0
      %v2499 = vadd.f32 %v2457, %v2498
      %2500 = vmatmul.bf16.gmra.mxu0 %v2485
      %v2501 = vpop.f32.mrf.mxu0
      %v2502 = vadd.f32 %v2460, %v2501
      %v2503 = vpop.f32.mrf.mxu0
      %2504 = vdwg.mxu0
      %v2505 = vld [vmem:[%s11] sm:$0x1]
      %v2507 = vperm.slane %v2505, 0
      %v2509 = vadd.f32 %v2497, %v2507
      %v2510 = vadd.f32 %v2499, %v2507
      %v2511 = vadd.f32 %v2502, %v2507
      %2515 = vrot.lane.b32.xlu0 %v2414, 48
      %v2516 = vpop.permute.xlu0 %2515
      %2517 = vrot.lane.b32.xlu0 %v2415, 48
      %v2518 = vpop.permute.xlu0 %2517
      %2519 = vrot.lane.b32.xlu0 %v2416, 48
      %v2520 = vpop.permute.xlu0 %2519
      %v2524 = vadd.f32 %v1924, %v2516
      %v2525 = vadd.f32 %v1925, %v2518
      %v2526 = vadd.f32 %v1926, %v2520
      %v2527 = vtanh.pop %v2524
      %v2528 = vtanh.pop %v2525
      %v2529 = vtanh.pop %v2526
      %v2530 = vtanh.pop %v2509
      %v2531 = vtanh.pop %v2510
      %v2532 = vtanh.pop %v2511
      %2536 = vrot.lane.b32.xlu0 %v2530, 48
      %v2537 = vpop.permute.xlu0 %2536
      %2538 = vrot.lane.b32.xlu0 %v2531, 48
      %v2539 = vpop.permute.xlu0 %2538
      %2540 = vrot.lane.b32.xlu0 %v2532, 48
      %v2541 = vpop.permute.xlu0 %2540
      %v2545 = vmul.f32 %v2527, %v2537
      %v2546 = vmul.f32 %v2528, %v2539
      %v2547 = vmul.f32 %v2529, %v2541
      %v2548 = vmul.f32 %v2545, %v1282
      %v2549 = vmul.f32 %v2546, %v1287
      %v2550 = vmul.f32 %v2547, %v1292
      %2554 = vrot.lane.b32.xlu0 %v2548, 80
      %v2555 = vpop.permute.xlu0 %2554
      %2556 = vrot.lane.b32.xlu0 %v2549, 80
      %v2557 = vpop.permute.xlu0 %2556
      %2558 = vrot.lane.b32.xlu0 %v2550, 80
      %v2559 = vpop.permute.xlu0 %2558
      %2563 = vst.msk [vmem:[%s502] sm:$0xff] %vm1404, %v2555
      %2564 = vst.msk [vmem:[%s502 + $0x8] sm:$0xff] %vm1404, %v2557
      %2565 = vst.msk [vmem:[%s502 + $0x10] sm:$0xff] %vm1404, %v2559
      %2569 = vrot.lane.b32.xlu0 %v1294, 96
      %v2570 = vpop.permute.xlu0 %2569
      %2571 = vrot.lane.b32.xlu0 %v1295, 96
      %v2572 = vpop.permute.xlu0 %2571
      %2573 = vrot.lane.b32.xlu0 %v1296, 96
      %v2574 = vpop.permute.xlu0 %2573
      %2578 = vst.msk [vmem:[%s507] sm:$0xff] %vm1404, %v2570
      %2579 = vst.msk [vmem:[%s507 + $0x8] sm:$0xff] %vm1404, %v2572
      %2580 = vst.msk [vmem:[%s507 + $0x10] sm:$0xff] %vm1404, %v2574
      %2584 = vrot.lane.b32.xlu0 %v1921, 96
      %v2585 = vpop.permute.xlu0 %2584
      %2586 = vrot.lane.b32.xlu0 %v1922, 96
      %v2587 = vpop.permute.xlu0 %2586
      %2588 = vrot.lane.b32.xlu0 %v1923, 96
      %v2589 = vpop.permute.xlu0 %2588
      %2593 = vst.msk [vmem:[%s512] sm:$0xff] %vm1404, %v2585
      %2594 = vst.msk [vmem:[%s512 + $0x8] sm:$0xff] %vm1404, %v2587
      %2595 = vst.msk [vmem:[%s512 + $0x10] sm:$0xff] %vm1404, %v2589
      %p2596 = scmp.lt.s32.totalorder %s26, 1
      %s2597 = scalar_select %p2596, %s26, 1
      %s2598 = smul.addr %s2597, 3
      %s2599 = smul.addr %s2598, 8
      %s2600 = scalar_lea.vmem %s12, %s2599
      %p2601 = scmp.lt.s32.totalorder %s26, 1
      %s2602 = scalar_select %p2601, %s26, 1
      %s2603 = smul.addr %s2602, 3
      %s2604 = smul.addr %s2603, 8
      %s2605 = scalar_lea.vmem %s13, %s2604
      %p2606 = scmp.lt.s32.totalorder %s26, 1
      %s2607 = scalar_select %p2606, %s26, 1
      %s2608 = smul.addr %s2607, 3
      %s2609 = smul.addr %s2608, 8
      %s2610 = scalar_lea.vmem %s14, %s2609
      // Predicated region
      $region69: #{closed_call.82} parent=67 // pred_check
        %p2611 = pneg %p306
      $region70: #{closed_call.82} parent=67 // pred_check_branch
        %2613 = sbr.rel (%p2611) target = $region72
      $region71: #{closed_call.82} parent=67 // pred_region
        _
      $region72: #{closed_call.82} parent=67 // pred_fallthru
        _
      // Predicated region
      $region73: #{closed_call.82} parent=67 // pred_check
        %p2614 = pneg %p332
      $region74: #{closed_call.82} parent=67 // pred_check_branch
        %2616 = sbr.rel (%p2614) target = $region76
      $region75: #{closed_call.82} parent=67 // pred_region
        _
      $region76: #{closed_call.82} parent=67 // pred_fallthru
        _
      // Predicated region
      $region77: #{closed_call.82} parent=67 // pred_check
        %p2617 = pneg %p358
      $region78: #{closed_call.82} parent=67 // pred_check_branch
        %2619 = sbr.rel (%p2617) target = $region80
      $region79: #{closed_call.82} parent=67 // pred_region
        _
      $region80: #{closed_call.82} parent=67 // pred_fallthru
        _
    $region68: #{closed_call.82} parent=5 // pred_fallthru
      _
    %p2620 = scmp.le.s32.totalorder 2, %s21
    // Predicated region
    $region81: #{closed_call.82} parent=5 // pred_check
      %p2621 = pneg %p2620
    $region82: #{closed_call.82} parent=5 // pred_check_branch
      %2623 = sbr.rel (%p2621) target = $region84
    $region83: #{closed_call.82} parent=5 // pred_region
      %s2624 = ssub.s32 %s21, 2
      // Predicated region
      $region85: #{closed_call.82} parent=83 // pred_check
        %p2625 = pneg %p312
      $region86: #{closed_call.82} parent=83 // pred_check_branch
        %2627 = sbr.rel (%p2625) target = $region88
      $region87: #{closed_call.82} parent=83 // pred_region
        %p2628 = scmp.lt.s32.totalorder %s27, 1
        %s2629 = scalar_select %p2628, %s27, 1
        %s2630 = smul.addr %s2629, 3
        %s2631 = smul.addr %s2630, 8
        %s2632 = scalar_lea.vmem %s12, %s2631
      $region88: #{closed_call.82} parent=83 // pred_fallthru
        _
      // Predicated region
      $region89: #{closed_call.82} parent=83 // pred_check
        %p2633 = pneg %p338
      $region90: #{closed_call.82} parent=83 // pred_check_branch
        %2635 = sbr.rel (%p2633) target = $region92
      $region91: #{closed_call.82} parent=83 // pred_region
        %p2636 = scmp.lt.s32.totalorder %s27, 1
        %s2637 = scalar_select %p2636, %s27, 1
        %s2638 = smul.addr %s2637, 3
        %s2639 = smul.addr %s2638, 8
        %s2640 = scalar_lea.vmem %s13, %s2639
      $region92: #{closed_call.82} parent=83 // pred_fallthru
        _
      // Predicated region
      $region93: #{closed_call.82} parent=83 // pred_check
        %p2641 = pneg %p364
      $region94: #{closed_call.82} parent=83 // pred_check_branch
        %2643 = sbr.rel (%p2641) target = $region96
      $region95: #{closed_call.82} parent=83 // pred_region
        %p2644 = scmp.lt.s32.totalorder %s27, 1
        %s2645 = scalar_select %p2644, %s27, 1
        %s2646 = smul.addr %s2645, 3
        %s2647 = smul.addr %s2646, 8
        %s2648 = scalar_lea.vmem %s14, %s2647
      $region96: #{closed_call.82} parent=83 // pred_fallthru
        _
    $region84: #{closed_call.82} parent=5 // pred_fallthru
      _
  $region6: #{closed_call.82} parent=0 // loop_footer
    %s25 = sadd.s32 1, %s21
  $region7: #{closed_call.82} parent=0 // loop_footer_branch
    %20 = sbr.rel target = $region3
  $region8: #{closed_call.82} parent=0 // loop_exit
    _

// kernel: closed_call.84
$region0: #{closed_call.84}
  #allocation0 [shape = 'u32[]', space=smem, size = 0x4, offset = 0x4, fixed_abs, tag = 'smem constant byte address 0x4 - core index']
  #allocation1 [shape = 'u32[72,128]{1,0:T(1,128)}', space=vmem, size = 0x9000, scoped, tag = 'internal scratch']
  %s0 = inlined_call_operand.vmem [shape: bf16[50,64], index: 0, kind: input, shape index: {}]
  %s1 = inlined_call_operand.vmem [shape: bf16[64,9], index: 1, kind: input, shape index: {}]
  %s2 = inlined_call_operand.vmem [shape: f32[1,9], index: 2, kind: input, shape index: {}]
  %s3 = inlined_call_operand.vmem [shape: f32[50,9], index: 3, kind: output, shape index: {}]
  %s4 = sld [smem:[#allocation0]]
  $region22: #{closed_call.84} parent=0
    _
  %s6 = ssub.s32 1, %s4
  %s7 = scalar_select 0, %s6, %s4
  // Predicated region
  $region2: #{closed_call.84} parent=0 // pred_check
    _
  $region3: #{closed_call.84} parent=0 // pred_check_branch
    %9 = sbr.rel (0) target = $region5
  $region4: #{closed_call.84} parent=0 // pred_region
    _
  $region5: #{closed_call.84} parent=0 // pred_fallthru
    _
  // Predicated region
  $region6: #{closed_call.84} parent=0 // pred_check
    _
  $region7: #{closed_call.84} parent=0 // pred_check_branch
    %11 = sbr.rel (0) target = $region9
  $region8: #{closed_call.84} parent=0 // pred_region
    _
  $region9: #{closed_call.84} parent=0 // pred_fallthru
    _
  // Predicated region
  $region10: #{closed_call.84} parent=0 // pred_check
    _
  $region11: #{closed_call.84} parent=0 // pred_check_branch
    %13 = sbr.rel (0) target = $region13
  $region12: #{closed_call.84} parent=0 // pred_region
    _
  $region13: #{closed_call.84} parent=0 // pred_fallthru
    _
  %v15 = vld [vmem:[%s0] sm:$0xf]
  %v16 = vld [vmem:[%s0 + $0x4] sm:$0xf]
  %v17 = vld [vmem:[%s0 + $0x8] sm:$0xf]
  %v18 = vld [vmem:[%s0 + $0xc] sm:$0xf]
  %v19 = vld [vmem:[%s0 + $0x10] sm:$0xf]
  %v20 = vld [vmem:[%s0 + $0x14] sm:$0xf]
  %v21 = vld [vmem:[%s0 + $0x18] sm:$0x1]
  %v22 = vld [vmem:[%s1] sm:$0xf]
  %v23 = vld [vmem:[%s1 + $0x4] sm:$0xf]
  %v24 = vld [vmem:[%s1 + $0x8] sm:$0xf]
  %v25 = vld [vmem:[%s1 + $0xc] sm:$0xf]
  %v26 = vld [vmem:[%s1 + $0x10] sm:$0xf]
  %v27 = vld [vmem:[%s1 + $0x14] sm:$0xf]
  %v28 = vld [vmem:[%s1 + $0x18] sm:$0xf]
  %v29 = vld [vmem:[%s1 + $0x1c] sm:$0xf]
  %v30 = vld [vmem:[%s2] sm:$0x1]
  %v32 = vperm.slane %v30, 0
  %v41 = vunpack.c.l.b16 %v15
  %v42 = vunpack.c.l.b16 %v16
  %v43 = vunpack.c.l.b16 %v17
  %v44 = vunpack.c.l.b16 %v18
  %v45 = vunpack.c.l.b16 %v19
  %v46 = vunpack.c.l.b16 %v20
  %v47 = vunpack.c.l.b16 %v21
  %v48 = vpack.c.b16 %v42, %v41
  %v49 = vpack.c.b16 %v44, %v43
  %v50 = vpack.c.b16 %v46, %v45
  %v51 = vpack.c.b16 %v47, %v47
  %v60 = vunpack.c.l.b16 %v22
  %v61 = vunpack.c.l.b16 %v23
  %v62 = vunpack.c.l.b16 %v24
  %v63 = vunpack.c.l.b16 %v25
  %v64 = vunpack.c.l.b16 %v26
  %v65 = vunpack.c.l.b16 %v27
  %v66 = vunpack.c.l.b16 %v28
  %v67 = vunpack.c.l.b16 %v29
  %v68 = vpack.c.b16 %v61, %v60
  %v69 = vpack.c.b16 %v63, %v62
  %v70 = vpack.c.b16 %v65, %v64
  %v71 = vpack.c.b16 %v67, %v66
  %vm76 = vcmask 523264
  %v78 = vsel %vm76, %v48, 0
  %v81 = vsel %vm76, %v49, 0
  %v84 = vsel %vm76, %v50, 0
  %v87 = vsel %vm76, %v51, 0
  %89 = vmatpush.bf16.msra.mxu0 0
  %90 = vmatpush.bf16.msra.mxu0 0
  %91 = vmatpush.bf16.msra.mxu0 0
  %92 = vmatpush.bf16.msra.mxu0 0
  %93 = vmatpush.bf16.msra.mxu0 %v71
  %94 = vmatpush.bf16.msra.mxu0 %v70
  %95 = vmatpush.bf16.msra.mxu0 %v69
  %96 = vmatpush.bf16.msra.mxu0 %v68
  %97 = vmatmul.bf16.gmra.mxu0 %v78
  %v98 = vpop.f32.mrf.mxu0
  %v99 = vadd.f32 %v32, %v98
  %v100 = vpop.f32.mrf.mxu0
  %v101 = vadd.f32 %v32, %v100
  %102 = vmatmul.bf16.gmra.mxu0 %v81
  %v103 = vpop.f32.mrf.mxu0
  %v104 = vadd.f32 %v32, %v103
  %v105 = vpop.f32.mrf.mxu0
  %v106 = vadd.f32 %v32, %v105
  %107 = vmatmul.bf16.gmra.mxu0 %v84
  %v108 = vpop.f32.mrf.mxu0
  %v109 = vadd.f32 %v32, %v108
  %v110 = vpop.f32.mrf.mxu0
  %v111 = vadd.f32 %v32, %v110
  %112 = vmatmul.bf16.gmra.mxu0 %v87
  %v113 = vpop.f32.mrf.mxu0
  %v114 = vadd.f32 %v32, %v113
  %v115 = vpop.f32.mrf.mxu0
  %116 = vdwg.mxu0
  %vm117 = vcmask 72704
  %118 = vst.msk [vmem:[%s3] sm:$0xff] %vm117, %v99
  %119 = vst.msk [vmem:[%s3 + $0x8] sm:$0xff] %vm117, %v101
  %120 = vst.msk [vmem:[%s3 + $0x10] sm:$0xff] %vm117, %v104
  %121 = vst.msk [vmem:[%s3 + $0x18] sm:$0xff] %vm117, %v106
  %122 = vst.msk [vmem:[%s3 + $0x20] sm:$0xff] %vm117, %v109
  %123 = vst.msk [vmem:[%s3 + $0x28] sm:$0xff] %vm117, %v111
  %vm124 = vcmask 66560
  %125 = vst.msk [vmem:[%s3 + $0x30] sm:$0x3] %vm124, %v114
  // Predicated region
  $region14: #{closed_call.84} parent=0 // pred_check
    _
  $region15: #{closed_call.84} parent=0 // pred_check_branch
    %127 = sbr.rel (0) target = $region17
  $region16: #{closed_call.84} parent=0 // pred_region
    _
  $region17: #{closed_call.84} parent=0 // pred_fallthru
    _
  // Predicated region
  $region18: #{closed_call.84} parent=0 // pred_check
    _
  $region19: #{closed_call.84} parent=0 // pred_check_branch
    %129 = sbr.rel (0) target = $region21
  $region20: #{closed_call.84} parent=0 // pred_region
    _
  $region21: #{closed_call.84} parent=0 // pred_fallthru
    _

// kernel: closed_call.83
$region0: #{closed_call.83}
  #allocation0 [shape = 'u32[]', space=smem, size = 0x4, offset = 0x4, fixed_abs, tag = 'smem constant byte address 0x4 - core index']
  #allocation1 [shape = 'u32[72,128]{1,0:T(1,128)}', space=vmem, size = 0x9000, scoped, tag = 'internal scratch']
  #allocation2 [shape = 'bf16[38,16]{1,0:T(8,128)(2,1)}', space=vmem, size = 0x2800, scoped, tag = 'scratch operand']
  %s0 = inlined_call_operand.vmem [shape: bf16[2,38,64], index: 0, kind: input, shape index: {}]
  %s1 = inlined_call_operand.vmem [shape: f32[2,24,16], index: 1, kind: input, shape index: {}]
  %s2 = inlined_call_operand.vmem [shape: f32[24,1], index: 2, kind: input, shape index: {}]
  %s3 = inlined_call_operand.vmem [shape: bf16[9,64,128], index: 3, kind: input, shape index: {}]
  %s4 = inlined_call_operand.vmem [shape: f32[1,128], index: 4, kind: input, shape index: {}]
  %s5 = inlined_call_operand.vmem [shape: bf16[9,16,64], index: 5, kind: input, shape index: {}]
  %s6 = inlined_call_operand.vmem [shape: f32[1,64], index: 6, kind: input, shape index: {}]
  %s7 = inlined_call_operand.vmem [shape: bf16[9,16,16], index: 7, kind: input, shape index: {}]
  %s8 = inlined_call_operand.vmem [shape: f32[1,16], index: 8, kind: input, shape index: {}]
  %s9 = inlined_call_operand.vmem [shape: bf16[16,16], index: 9, kind: input, shape index: {}]
  %s10 = inlined_call_operand.vmem [shape: bf16[16,16], index: 10, kind: input, shape index: {}]
  %s11 = inlined_call_operand.vmem [shape: f32[1,16], index: 11, kind: input, shape index: {}]
  %s12 = inlined_call_operand.vmem [shape: f32[2,24,16], index: 12, kind: output, shape index: {0}]
  %s13 = inlined_call_operand.vmem [shape: f32[2,24,16], index: 13, kind: output, shape index: {1}]
  %s14 = inlined_call_operand.vmem [shape: f32[2,24,16], index: 14, kind: output, shape index: {2}]
  %15 = xla_tuple %s12, %s13, %s14
  %s16 = sld [smem:[#allocation0]]
  $region97: #{closed_call.83} parent=0
    _
  %s18 = ssub.s32 1, %s16
  %s19 = scalar_select 0, %s18, %s16
  loop: start=0, step=1, limit=4
  $region2: #{closed_call.83} parent=0 // loop_pre_header
    _
  $region3: #{closed_call.83} parent=0 // loop_header
    %s21 = sphi 0, %s25
    %p22 = scmp.ge.s32.totalorder %s21, 4
    %s31 = sphi 0, %s33
    %s34 = sphi 0, %s31
    %s35 = sphi 0, %s34
    %s51 = sphi 0, %s35
    %s57 = sphi 0, %s59
    %s60 = sphi 0, %s57
    %s61 = sphi 0, %s60
    %s77 = sphi 0, %s61
    %s81 = sphi 0, %s81
    %s83 = sphi 0, %s81
    %s84 = sphi 0, %s83
    %s98 = sphi 0, %s84
    %s102 = sphi 0, %s102
    %s104 = sphi 0, %s102
    %s105 = sphi 0, %s104
    %s119 = sphi 0, %s105
    %s123 = sphi 0, %s123
    %s125 = sphi 0, %s123
    %s126 = sphi 0, %s125
    %s140 = sphi 0, %s126
    %s144 = sphi 0, %s144
    %s146 = sphi 0, %s144
    %s147 = sphi 0, %s146
    %s161 = sphi 0, %s147
    %s165 = sphi 0, %s165
    %s167 = sphi 0, %s165
    %s168 = sphi 0, %s167
    %s182 = sphi 0, %s168
    %s186 = sphi 0, %s186
    %s188 = sphi 0, %s186
    %s189 = sphi 0, %s188
    %s203 = sphi 0, %s189
    %s207 = sphi 0, %s207
    %s209 = sphi 0, %s207
    %s210 = sphi 0, %s209
    %s224 = sphi 0, %s210
    %s228 = sphi 0, %s228
    %s230 = sphi 0, %s228
    %s231 = sphi 0, %s230
    %s245 = sphi 0, %s231
    %s249 = sphi 0, %s249
    %s251 = sphi 0, %s249
    %s252 = sphi 0, %s251
    %s266 = sphi 0, %s252
    %s270 = sphi 0, %s270
    %s272 = sphi 0, %s270
    %s273 = sphi 0, %s272
    %s287 = sphi 0, %s273
    %s293 = sphi 0, %s295
    %s296 = sphi 0, %s293
    %s297 = sphi 0, %s296
    %s313 = sphi 0, %s297
    %s319 = sphi 0, %s321
    %s322 = sphi 0, %s319
    %s323 = sphi 0, %s322
    %s339 = sphi 0, %s323
    %s345 = sphi 0, %s347
    %s348 = sphi 0, %s345
    %s349 = sphi 0, %s348
    %s365 = sphi 0, %s349
  $region4: #{closed_call.83} parent=0 // loop_header_branch
    %24 = sbr.rel (%p22) target = $region8
  $region5: #{closed_call.83} parent=0 // loop_body
    %s26 = ssub.s32 %s21, 1
    %s27 = ssub.s32 %s21, 2
    %s28 = sadd.s32 %s21, 1
    %s29 = ssub.s32 %s21, %s28
    %p30 = scmp.eq.s32.totalorder %s29, 0
    %s32 = sadd.s32 %s31, 1
    %s33 = scalar_select %p30, %s31, %s32
    %p36 = pneg %p30
    %p37 = scmp.eq.s32.totalorder %s21, 1
    %p38 = por %p36, %p37
    %p39 = scmp.ne.s32.totalorder %s31, %s34
    %p40 = scmp.eq.s32.totalorder %s21, 0
    %p41 = por %p39, %p40
    %p42 = scmp.ne.s32.totalorder %s31, %s34
    %p43 = scmp.eq.s32.totalorder %s26, 1
    %p44 = por %p42, %p43
    %p45 = scmp.ne.s32.totalorder %s34, %s35
    %p46 = scmp.eq.s32.totalorder %s26, 0
    %p47 = por %p45, %p46
    %p48 = scmp.ne.s32.totalorder %s34, %s35
    %p49 = scmp.eq.s32.totalorder %s27, 1
    %p50 = por %p48, %p49
    %p52 = scmp.ne.s32.totalorder %s35, %s51
    %p53 = scmp.eq.s32.totalorder %s27, 0
    %p54 = por %p52, %p53
    %s55 = ssub.s32 %s21, %s28
    %p56 = scmp.eq.s32.totalorder %s55, 0
    %s58 = sadd.s32 %s57, 1
    %s59 = scalar_select %p56, %s57, %s58
    %p62 = pneg %p56
    %p63 = scmp.eq.s32.totalorder %s21, 1
    %p64 = por %p62, %p63
    %p65 = scmp.ne.s32.totalorder %s57, %s60
    %p66 = scmp.eq.s32.totalorder %s21, 0
    %p67 = por %p65, %p66
    %p68 = scmp.ne.s32.totalorder %s57, %s60
    %p69 = scmp.eq.s32.totalorder %s26, 1
    %p70 = por %p68, %p69
    %p71 = scmp.ne.s32.totalorder %s60, %s61
    %p72 = scmp.eq.s32.totalorder %s26, 0
    %p73 = por %p71, %p72
    %p74 = scmp.ne.s32.totalorder %s60, %s61
    %p75 = scmp.eq.s32.totalorder %s27, 1
    %p76 = por %p74, %p75
    %p78 = scmp.ne.s32.totalorder %s61, %s77
    %p79 = scmp.eq.s32.totalorder %s27, 0
    %p80 = por %p78, %p79
    %s82 = sadd.s32 %s81, 1
    %p85 = scmp.eq.s32.totalorder %s21, 1
    %p86 = scmp.ne.s32.totalorder %s81, %s83
    %p87 = scmp.eq.s32.totalorder %s21, 0
    %p88 = por %p86, %p87
    %p89 = scmp.ne.s32.totalorder %s81, %s83
    %p90 = scmp.eq.s32.totalorder %s26, 1
    %p91 = por %p89, %p90
    %p92 = scmp.ne.s32.totalorder %s83, %s84
    %p93 = scmp.eq.s32.totalorder %s26, 0
    %p94 = por %p92, %p93
    %p95 = scmp.ne.s32.totalorder %s83, %s84
    %p96 = scmp.eq.s32.totalorder %s27, 1
    %p97 = por %p95, %p96
    %p99 = scmp.ne.s32.totalorder %s84, %s98
    %p100 = scmp.eq.s32.totalorder %s27, 0
    %p101 = por %p99, %p100
    %s103 = sadd.s32 %s102, 1
    %p106 = scmp.eq.s32.totalorder %s21, 1
    %p107 = scmp.ne.s32.totalorder %s102, %s104
    %p108 = scmp.eq.s32.totalorder %s21, 0
    %p109 = por %p107, %p108
    %p110 = scmp.ne.s32.totalorder %s102, %s104
    %p111 = scmp.eq.s32.totalorder %s26, 1
    %p112 = por %p110, %p111
    %p113 = scmp.ne.s32.totalorder %s104, %s105
    %p114 = scmp.eq.s32.totalorder %s26, 0
    %p115 = por %p113, %p114
    %p116 = scmp.ne.s32.totalorder %s104, %s105
    %p117 = scmp.eq.s32.totalorder %s27, 1
    %p118 = por %p116, %p117
    %p120 = scmp.ne.s32.totalorder %s105, %s119
    %p121 = scmp.eq.s32.totalorder %s27, 0
    %p122 = por %p120, %p121
    %s124 = sadd.s32 %s123, 1
    %p127 = scmp.eq.s32.totalorder %s21, 1
    %p128 = scmp.ne.s32.totalorder %s123, %s125
    %p129 = scmp.eq.s32.totalorder %s21, 0
    %p130 = por %p128, %p129
    %p131 = scmp.ne.s32.totalorder %s123, %s125
    %p132 = scmp.eq.s32.totalorder %s26, 1
    %p133 = por %p131, %p132
    %p134 = scmp.ne.s32.totalorder %s125, %s126
    %p135 = scmp.eq.s32.totalorder %s26, 0
    %p136 = por %p134, %p135
    %p137 = scmp.ne.s32.totalorder %s125, %s126
    %p138 = scmp.eq.s32.totalorder %s27, 1
    %p139 = por %p137, %p138
    %p141 = scmp.ne.s32.totalorder %s126, %s140
    %p142 = scmp.eq.s32.totalorder %s27, 0
    %p143 = por %p141, %p142
    %s145 = sadd.s32 %s144, 1
    %p148 = scmp.eq.s32.totalorder %s21, 1
    %p149 = scmp.ne.s32.totalorder %s144, %s146
    %p150 = scmp.eq.s32.totalorder %s21, 0
    %p151 = por %p149, %p150
    %p152 = scmp.ne.s32.totalorder %s144, %s146
    %p153 = scmp.eq.s32.totalorder %s26, 1
    %p154 = por %p152, %p153
    %p155 = scmp.ne.s32.totalorder %s146, %s147
    %p156 = scmp.eq.s32.totalorder %s26, 0
    %p157 = por %p155, %p156
    %p158 = scmp.ne.s32.totalorder %s146, %s147
    %p159 = scmp.eq.s32.totalorder %s27, 1
    %p160 = por %p158, %p159
    %p162 = scmp.ne.s32.totalorder %s147, %s161
    %p163 = scmp.eq.s32.totalorder %s27, 0
    %p164 = por %p162, %p163
    %s166 = sadd.s32 %s165, 1
    %p169 = scmp.eq.s32.totalorder %s21, 1
    %p170 = scmp.ne.s32.totalorder %s165, %s167
    %p171 = scmp.eq.s32.totalorder %s21, 0
    %p172 = por %p170, %p171
    %p173 = scmp.ne.s32.totalorder %s165, %s167
    %p174 = scmp.eq.s32.totalorder %s26, 1
    %p175 = por %p173, %p174
    %p176 = scmp.ne.s32.totalorder %s167, %s168
    %p177 = scmp.eq.s32.totalorder %s26, 0
    %p178 = por %p176, %p177
    %p179 = scmp.ne.s32.totalorder %s167, %s168
    %p180 = scmp.eq.s32.totalorder %s27, 1
    %p181 = por %p179, %p180
    %p183 = scmp.ne.s32.totalorder %s168, %s182
    %p184 = scmp.eq.s32.totalorder %s27, 0
    %p185 = por %p183, %p184
    %s187 = sadd.s32 %s186, 1
    %p190 = scmp.eq.s32.totalorder %s21, 1
    %p191 = scmp.ne.s32.totalorder %s186, %s188
    %p192 = scmp.eq.s32.totalorder %s21, 0
    %p193 = por %p191, %p192
    %p194 = scmp.ne.s32.totalorder %s186, %s188
    %p195 = scmp.eq.s32.totalorder %s26, 1
    %p196 = por %p194, %p195
    %p197 = scmp.ne.s32.totalorder %s188, %s189
    %p198 = scmp.eq.s32.totalorder %s26, 0
    %p199 = por %p197, %p198
    %p200 = scmp.ne.s32.totalorder %s188, %s189
    %p201 = scmp.eq.s32.totalorder %s27, 1
    %p202 = por %p200, %p201
    %p204 = scmp.ne.s32.totalorder %s189, %s203
    %p205 = scmp.eq.s32.totalorder %s27, 0
    %p206 = por %p204, %p205
    %s208 = sadd.s32 %s207, 1
    %p211 = scmp.eq.s32.totalorder %s21, 1
    %p212 = scmp.ne.s32.totalorder %s207, %s209
    %p213 = scmp.eq.s32.totalorder %s21, 0
    %p214 = por %p212, %p213
    %p215 = scmp.ne.s32.totalorder %s207, %s209
    %p216 = scmp.eq.s32.totalorder %s26, 1
    %p217 = por %p215, %p216
    %p218 = scmp.ne.s32.totalorder %s209, %s210
    %p219 = scmp.eq.s32.totalorder %s26, 0
    %p220 = por %p218, %p219
    %p221 = scmp.ne.s32.totalorder %s209, %s210
    %p222 = scmp.eq.s32.totalorder %s27, 1
    %p223 = por %p221, %p222
    %p225 = scmp.ne.s32.totalorder %s210, %s224
    %p226 = scmp.eq.s32.totalorder %s27, 0
    %p227 = por %p225, %p226
    %s229 = sadd.s32 %s228, 1
    %p232 = scmp.eq.s32.totalorder %s21, 1
    %p233 = scmp.ne.s32.totalorder %s228, %s230
    %p234 = scmp.eq.s32.totalorder %s21, 0
    %p235 = por %p233, %p234
    %p236 = scmp.ne.s32.totalorder %s228, %s230
    %p237 = scmp.eq.s32.totalorder %s26, 1
    %p238 = por %p236, %p237
    %p239 = scmp.ne.s32.totalorder %s230, %s231
    %p240 = scmp.eq.s32.totalorder %s26, 0
    %p241 = por %p239, %p240
    %p242 = scmp.ne.s32.totalorder %s230, %s231
    %p243 = scmp.eq.s32.totalorder %s27, 1
    %p244 = por %p242, %p243
    %p246 = scmp.ne.s32.totalorder %s231, %s245
    %p247 = scmp.eq.s32.totalorder %s27, 0
    %p248 = por %p246, %p247
    %s250 = sadd.s32 %s249, 1
    %p253 = scmp.eq.s32.totalorder %s21, 1
    %p254 = scmp.ne.s32.totalorder %s249, %s251
    %p255 = scmp.eq.s32.totalorder %s21, 0
    %p256 = por %p254, %p255
    %p257 = scmp.ne.s32.totalorder %s249, %s251
    %p258 = scmp.eq.s32.totalorder %s26, 1
    %p259 = por %p257, %p258
    %p260 = scmp.ne.s32.totalorder %s251, %s252
    %p261 = scmp.eq.s32.totalorder %s26, 0
    %p262 = por %p260, %p261
    %p263 = scmp.ne.s32.totalorder %s251, %s252
    %p264 = scmp.eq.s32.totalorder %s27, 1
    %p265 = por %p263, %p264
    %p267 = scmp.ne.s32.totalorder %s252, %s266
    %p268 = scmp.eq.s32.totalorder %s27, 0
    %p269 = por %p267, %p268
    %s271 = sadd.s32 %s270, 1
    %p274 = scmp.eq.s32.totalorder %s21, 1
    %p275 = scmp.ne.s32.totalorder %s270, %s272
    %p276 = scmp.eq.s32.totalorder %s21, 0
    %p277 = por %p275, %p276
    %p278 = scmp.ne.s32.totalorder %s270, %s272
    %p279 = scmp.eq.s32.totalorder %s26, 1
    %p280 = por %p278, %p279
    %p281 = scmp.ne.s32.totalorder %s272, %s273
    %p282 = scmp.eq.s32.totalorder %s26, 0
    %p283 = por %p281, %p282
    %p284 = scmp.ne.s32.totalorder %s272, %s273
    %p285 = scmp.eq.s32.totalorder %s27, 1
    %p286 = por %p284, %p285
    %p288 = scmp.ne.s32.totalorder %s273, %s287
    %p289 = scmp.eq.s32.totalorder %s27, 0
    %p290 = por %p288, %p289
    %s291 = ssub.s32 %s21, %s28
    %p292 = scmp.eq.s32.totalorder %s291, 0
    %s294 = sadd.s32 %s293, 1
    %s295 = scalar_select %p292, %s293, %s294
    %p298 = pneg %p292
    %p299 = scmp.eq.s32.totalorder %s21, 1
    %p300 = por %p298, %p299
    %p301 = scmp.ne.s32.totalorder %s293, %s296
    %p302 = scmp.eq.s32.totalorder %s21, 0
    %p303 = por %p301, %p302
    %p304 = scmp.ne.s32.totalorder %s293, %s296
    %p305 = scmp.eq.s32.totalorder %s26, 1
    %p306 = por %p304, %p305
    %p307 = scmp.ne.s32.totalorder %s296, %s297
    %p308 = scmp.eq.s32.totalorder %s26, 0
    %p309 = por %p307, %p308
    %p310 = scmp.ne.s32.totalorder %s296, %s297
    %p311 = scmp.eq.s32.totalorder %s27, 1
    %p312 = por %p310, %p311
    %p314 = scmp.ne.s32.totalorder %s297, %s313
    %p315 = scmp.eq.s32.totalorder %s27, 0
    %p316 = por %p314, %p315
    %s317 = ssub.s32 %s21, %s28
    %p318 = scmp.eq.s32.totalorder %s317, 0
    %s320 = sadd.s32 %s319, 1
    %s321 = scalar_select %p318, %s319, %s320
    %p324 = pneg %p318
    %p325 = scmp.eq.s32.totalorder %s21, 1
    %p326 = por %p324, %p325
    %p327 = scmp.ne.s32.totalorder %s319, %s322
    %p328 = scmp.eq.s32.totalorder %s21, 0
    %p329 = por %p327, %p328
    %p330 = scmp.ne.s32.totalorder %s319, %s322
    %p331 = scmp.eq.s32.totalorder %s26, 1
    %p332 = por %p330, %p331
    %p333 = scmp.ne.s32.totalorder %s322, %s323
    %p334 = scmp.eq.s32.totalorder %s26, 0
    %p335 = por %p333, %p334
    %p336 = scmp.ne.s32.totalorder %s322, %s323
    %p337 = scmp.eq.s32.totalorder %s27, 1
    %p338 = por %p336, %p337
    %p340 = scmp.ne.s32.totalorder %s323, %s339
    %p341 = scmp.eq.s32.totalorder %s27, 0
    %p342 = por %p340, %p341
    %s343 = ssub.s32 %s21, %s28
    %p344 = scmp.eq.s32.totalorder %s343, 0
    %s346 = sadd.s32 %s345, 1
    %s347 = scalar_select %p344, %s345, %s346
    %p350 = pneg %p344
    %p351 = scmp.eq.s32.totalorder %s21, 1
    %p352 = por %p350, %p351
    %p353 = scmp.ne.s32.totalorder %s345, %s348
    %p354 = scmp.eq.s32.totalorder %s21, 0
    %p355 = por %p353, %p354
    %p356 = scmp.ne.s32.totalorder %s345, %s348
    %p357 = scmp.eq.s32.totalorder %s26, 1
    %p358 = por %p356, %p357
    %p359 = scmp.ne.s32.totalorder %s348, %s349
    %p360 = scmp.eq.s32.totalorder %s26, 0
    %p361 = por %p359, %p360
    %p362 = scmp.ne.s32.totalorder %s348, %s349
    %p363 = scmp.eq.s32.totalorder %s27, 1
    %p364 = por %p362, %p363
    %p366 = scmp.ne.s32.totalorder %s349, %s365
    %p367 = scmp.eq.s32.totalorder %s27, 0
    %p368 = por %p366, %p367
    %p369 = scmp.le.s32.totalorder 1, %s21
    %p370 = scmp.lt.s32.totalorder %s21, 3
    %p371 = pnand %p369, %p370
    %p372 = pneg %p371
    // Predicated region
    $region9: #{closed_call.83} parent=5 // pred_check
      _
    $region10: #{closed_call.83} parent=5 // pred_check_branch
      %374 = sbr.rel (%p371) target = $region12
    $region11: #{closed_call.83} parent=5 // pred_region
      %s375 = ssub.s32 %s21, 1
      // Predicated region
      $region13: #{closed_call.83} parent=11 // pred_check
        %p376 = pneg %p94
      $region14: #{closed_call.83} parent=11 // pred_check_branch
        %378 = sbr.rel (%p376) target = $region16
      $region15: #{closed_call.83} parent=11 // pred_region
        _
      $region16: #{closed_call.83} parent=11 // pred_fallthru
        _
      // Predicated region
      $region17: #{closed_call.83} parent=11 // pred_check
        %p379 = pneg %p115
      $region18: #{closed_call.83} parent=11 // pred_check_branch
        %381 = sbr.rel (%p379) target = $region20
      $region19: #{closed_call.83} parent=11 // pred_region
        _
      $region20: #{closed_call.83} parent=11 // pred_fallthru
        _
      // Predicated region
      $region21: #{closed_call.83} parent=11 // pred_check
        %p382 = pneg %p136
      $region22: #{closed_call.83} parent=11 // pred_check_branch
        %384 = sbr.rel (%p382) target = $region24
      $region23: #{closed_call.83} parent=11 // pred_region
        _
      $region24: #{closed_call.83} parent=11 // pred_fallthru
        _
      // Predicated region
      $region25: #{closed_call.83} parent=11 // pred_check
        %p385 = pneg %p157
      $region26: #{closed_call.83} parent=11 // pred_check_branch
        %387 = sbr.rel (%p385) target = $region28
      $region27: #{closed_call.83} parent=11 // pred_region
        _
      $region28: #{closed_call.83} parent=11 // pred_fallthru
        _
      // Predicated region
      $region29: #{closed_call.83} parent=11 // pred_check
        %p388 = pneg %p178
      $region30: #{closed_call.83} parent=11 // pred_check_branch
        %390 = sbr.rel (%p388) target = $region32
      $region31: #{closed_call.83} parent=11 // pred_region
        _
      $region32: #{closed_call.83} parent=11 // pred_fallthru
        _
      // Predicated region
      $region33: #{closed_call.83} parent=11 // pred_check
        %p391 = pneg %p199
      $region34: #{closed_call.83} parent=11 // pred_check_branch
        %393 = sbr.rel (%p391) target = $region36
      $region35: #{closed_call.83} parent=11 // pred_region
        _
      $region36: #{closed_call.83} parent=11 // pred_fallthru
        _
      // Predicated region
      $region37: #{closed_call.83} parent=11 // pred_check
        %p394 = pneg %p220
      $region38: #{closed_call.83} parent=11 // pred_check_branch
        %396 = sbr.rel (%p394) target = $region40
      $region39: #{closed_call.83} parent=11 // pred_region
        _
      $region40: #{closed_call.83} parent=11 // pred_fallthru
        _
      // Predicated region
      $region41: #{closed_call.83} parent=11 // pred_check
        %p397 = pneg %p241
      $region42: #{closed_call.83} parent=11 // pred_check_branch
        %399 = sbr.rel (%p397) target = $region44
      $region43: #{closed_call.83} parent=11 // pred_region
        _
      $region44: #{closed_call.83} parent=11 // pred_fallthru
        _
      // Predicated region
      $region45: #{closed_call.83} parent=11 // pred_check
        %p400 = pneg %p262
      $region46: #{closed_call.83} parent=11 // pred_check_branch
        %402 = sbr.rel (%p400) target = $region48
      $region47: #{closed_call.83} parent=11 // pred_region
        _
      $region48: #{closed_call.83} parent=11 // pred_fallthru
        _
      // Predicated region
      $region49: #{closed_call.83} parent=11 // pred_check
        %p403 = pneg %p283
      $region50: #{closed_call.83} parent=11 // pred_check_branch
        %405 = sbr.rel (%p403) target = $region52
      $region51: #{closed_call.83} parent=11 // pred_region
        _
      $region52: #{closed_call.83} parent=11 // pred_fallthru
        _
    $region12: #{closed_call.83} parent=5 // pred_fallthru
      _
    %p406 = scmp.lt.s32.totalorder %s21, 2
    // Predicated region
    $region53: #{closed_call.83} parent=5 // pred_check
      %p407 = pneg %p406
    $region54: #{closed_call.83} parent=5 // pred_check_branch
      %409 = sbr.rel (%p407) target = $region56
    $region55: #{closed_call.83} parent=5 // pred_region
      // Predicated region
      $region57: #{closed_call.83} parent=55 // pred_check
        %p410 = pneg %p41
      $region58: #{closed_call.83} parent=55 // pred_check_branch
        %412 = sbr.rel (%p410) target = $region60
      $region59: #{closed_call.83} parent=55 // pred_region
        %p413 = scmp.lt.s32.totalorder %s21, 1
        %s414 = scalar_select %p413, %s21, 1
        %s415 = smul.addr %s414, 5
        %s416 = smul.addr %s415, 4
        %s417 = scalar_lea.vmem %s0, %s416
      $region60: #{closed_call.83} parent=55 // pred_fallthru
        _
      // Predicated region
      $region61: #{closed_call.83} parent=55 // pred_check
        %p418 = pneg %p67
      $region62: #{closed_call.83} parent=55 // pred_check_branch
        %420 = sbr.rel (%p418) target = $region64
      $region63: #{closed_call.83} parent=55 // pred_region
        %p421 = scmp.lt.s32.totalorder %s21, 1
        %s422 = scalar_select %p421, %s21, 1
        %s423 = smul.addr %s422, 3
        %s424 = smul.addr %s423, 8
        %s425 = scalar_lea.vmem %s1, %s424
      $region64: #{closed_call.83} parent=55 // pred_fallthru
        _
    $region56: #{closed_call.83} parent=5 // pred_fallthru
      _
    %p426 = scmp.le.s32.totalorder 1, %s21
    %p427 = scmp.lt.s32.totalorder %s21, 3
    %p428 = pnand %p426, %p427
    %p429 = pneg %p428
    // Predicated region
    $region65: #{closed_call.83} parent=5 // pred_check
      _
    $region66: #{closed_call.83} parent=5 // pred_check_branch
      %431 = sbr.rel (%p428) target = $region68
    $region67: #{closed_call.83} parent=5 // pred_region
      %s432 = ssub.s32 %s21, 1
      %p433 = scmp.lt.s32.totalorder %s26, 1
      %s434 = scalar_select %p433, %s26, 1
      %s435 = smul.addr %s434, 5
      %s436 = smul.addr %s435, 4
      %s437 = scalar_lea.vmem %s0, %s436
      %p438 = pneg %p47
      %p439 = pneg %p44
      %p440 = scmp.lt.s32.totalorder %s26, 1
      %s441 = scalar_select %p440, %s26, 1
      %s442 = smul.addr %s441, 3
      %s443 = smul.addr %s442, 8
      %s444 = scalar_lea.vmem %s1, %s443
      %p445 = pneg %p73
      %p446 = pneg %p70
      %p447 = pneg %p94
      %p448 = pneg %p91
      %p449 = pneg %p115
      %p450 = pneg %p112
      %p451 = pneg %p136
      %p452 = pneg %p133
      %p453 = pneg %p157
      %p454 = pneg %p154
      %p455 = pneg %p178
      %p456 = pneg %p175
      %p457 = pneg %p199
      %p458 = pneg %p196
      %p459 = pneg %p220
      %p460 = pneg %p217
      %p461 = pneg %p241
      %p462 = pneg %p238
      %p463 = pneg %p262
      %p464 = pneg %p259
      %p465 = pneg %p283
      %p466 = pneg %p280
      %p467 = pneg %p309
      %p468 = pneg %p306
      %p469 = scmp.lt.s32.totalorder %s26, 1
      %s470 = scalar_select %p469, %s26, 1
      %s471 = smul.addr %s470, 3
      %s472 = smul.addr %s471, 8
      %s473 = scalar_lea.vmem %s12, %s472
      %p474 = pneg %p335
      %p475 = pneg %p332
      %p476 = scmp.lt.s32.totalorder %s26, 1
      %s477 = scalar_select %p476, %s26, 1
      %s478 = smul.addr %s477, 3
      %s479 = smul.addr %s478, 8
      %s480 = scalar_lea.vmem %s13, %s479
      %p481 = pneg %p361
      %p482 = pneg %p358
      %p483 = scmp.lt.s32.totalorder %s26, 1
      %s484 = scalar_select %p483, %s26, 1
      %s485 = smul.addr %s484, 3
      %s486 = smul.addr %s485, 8
      %s487 = scalar_lea.vmem %s14, %s486
      %p488 = scmp.lt.s32.totalorder %s26, 1
      %s489 = scalar_select %p488, %s26, 1
      %s490 = smul.addr %s489, 5
      %s491 = smul.addr %s490, 4
      %s492 = scalar_lea.vmem %s0, %s491
      %p493 = scmp.lt.s32.totalorder %s26, 1
      %s494 = scalar_select %p493, %s26, 1
      %s495 = smul.addr %s494, 3
      %s496 = smul.addr %s495, 8
      %s497 = scalar_lea.vmem %s1, %s496
      %p498 = scmp.lt.s32.totalorder %s26, 1
      %s499 = scalar_select %p498, %s26, 1
      %s500 = smul.addr %s499, 3
      %s501 = smul.addr %s500, 8
      %s502 = scalar_lea.vmem %s12, %s501
      %p503 = scmp.lt.s32.totalorder %s26, 1
      %s504 = scalar_select %p503, %s26, 1
      %s505 = smul.addr %s504, 3
      %s506 = smul.addr %s505, 8
      %s507 = scalar_lea.vmem %s13, %s506
      %p508 = scmp.lt.s32.totalorder %s26, 1
      %s509 = scalar_select %p508, %s26, 1
      %s510 = smul.addr %s509, 3
      %s511 = smul.addr %s510, 8
      %s512 = scalar_lea.vmem %s14, %s511
      %v514 = vld [vmem:[%s2] sm:$0xff]
      %v515 = vld [vmem:[%s2 + $0x8] sm:$0xff]
      %v516 = vld [vmem:[%s2 + $0x10] sm:$0xff]
      %v517 = vld [vmem:[%s492] sm:$0xf]
      %v518 = vld [vmem:[%s492 + $0x4] sm:$0xf]
      %v519 = vld [vmem:[%s492 + $0x8] sm:$0xf]
      %v520 = vld [vmem:[%s3] sm:$0xf]
      %v521 = vld [vmem:[%s3 + $0x4] sm:$0xf]
      %v522 = vld [vmem:[%s3 + $0x8] sm:$0xf]
      %v523 = vld [vmem:[%s3 + $0xc] sm:$0xf]
      %v524 = vld [vmem:[%s3 + $0x10] sm:$0xf]
      %v525 = vld [vmem:[%s3 + $0x14] sm:$0xf]
      %v526 = vld [vmem:[%s3 + $0x18] sm:$0xf]
      %v527 = vld [vmem:[%s3 + $0x1c] sm:$0xf]
      %v528 = vld [vmem:[%s492 + $0xc] sm:$0x1]
      %s529 = scalar_lea.vmem %s3, 32
      %v530 = vld [vmem:[%s529] sm:$0xf]
      %v531 = vld [vmem:[%s529 + $0x4] sm:$0xf]
      %v532 = vld [vmem:[%s529 + $0x8] sm:$0xf]
      %v533 = vld [vmem:[%s529 + $0xc] sm:$0xf]
      %v534 = vld [vmem:[%s529 + $0x10] sm:$0xf]
      %v535 = vld [vmem:[%s529 + $0x14] sm:$0xf]
      %v536 = vld [vmem:[%s529 + $0x18] sm:$0xf]
      %v537 = vld [vmem:[%s529 + $0x1c] sm:$0xf]
      %v542 = vunpack.c.l.b16 %v517
      %v543 = vunpack.c.l.b16 %v518
      %v544 = vunpack.c.l.b16 %v519
      %v545 = vunpack.c.l.b16 %v528
      %v546 = vpack.c.b16 %v543, %v542
      %v547 = vpack.c.b16 %v545, %v544
      %vm548 = vsmask.f32 7424
      %v550 = vshrl.u32 %v546, 16
      %v552 = vshll.u32 %v546, 16
      %v554 = vrot.slane %v552, 1
      %v555 = vor.u32 %v550, %v554
      %v557 = vshll.u32 %v547, 16
      %v559 = vrot.slane %v557, 1
      %v560 = vsel %vm548, %v555, %v559
      %v561 = vshrl.u32 %v547, 16
      %v563 = vor.u32 %v561, %v559
      %v572 = vunpack.c.l.b16 %v530
      %v573 = vunpack.c.l.b16 %v531
      %v574 = vunpack.c.l.b16 %v532
      %v575 = vunpack.c.l.b16 %v533
      %v576 = vunpack.c.l.b16 %v534
      %v577 = vunpack.c.l.b16 %v535
      %v578 = vunpack.c.l.b16 %v536
      %v579 = vunpack.c.l.b16 %v537
      %v580 = vpack.c.b16 %v573, %v572
      %v581 = vpack.c.b16 %v575, %v574
      %v582 = vpack.c.b16 %v577, %v576
      %v583 = vpack.c.b16 %v579, %v578
      %vm588 = vcmask 523264
      %v590 = vsel %vm588, %v560, 0
      %v593 = vsel %vm588, %v563, 0
      %595 = vmatpush.bf16.msra.mxu0 0
      %596 = vmatpush.bf16.msra.mxu0 0
      %597 = vmatpush.bf16.msra.mxu0 0
      %598 = vmatpush.bf16.msra.mxu0 0
      %599 = vmatpush.bf16.msra.mxu0 %v583
      %600 = vmatpush.bf16.msra.mxu0 %v582
      %601 = vmatpush.bf16.msra.mxu0 %v581
      %602 = vmatpush.bf16.msra.mxu0 %v580
      %603 = vmatmul.bf16.gmra.mxu0 %v590
      %v604 = vpop.f32.mrf.mxu0
      %v605 = vadd.f32 0.0, %v604
      %v606 = vpop.f32.mrf.mxu0
      %v607 = vadd.f32 0.0, %v606
      %608 = vmatmul.bf16.gmra.mxu0 %v593
      %v609 = vpop.f32.mrf.mxu0
      %v610 = vadd.f32 0.0, %v609
      %v611 = vpop.f32.mrf.mxu0
      %612 = vdwg.mxu0
      %v613 = vpack.c.b16 %v544, %v544
      %v622 = vunpack.c.l.b16 %v520
      %v623 = vunpack.c.l.b16 %v521
      %v624 = vunpack.c.l.b16 %v522
      %v625 = vunpack.c.l.b16 %v523
      %v626 = vunpack.c.l.b16 %v524
      %v627 = vunpack.c.l.b16 %v525
      %v628 = vunpack.c.l.b16 %v526
      %v629 = vunpack.c.l.b16 %v527
      %v630 = vpack.c.b16 %v623, %v622
      %v631 = vpack.c.b16 %v625, %v624
      %v632 = vpack.c.b16 %v627, %v626
      %v633 = vpack.c.b16 %v629, %v628
      %v638 = vsel %vm588, %v546, 0
      %v641 = vsel %vm588, %v613, 0
      %643 = vmatpush.bf16.msra.mxu0 0
      %644 = vmatpush.bf16.msra.mxu0 0
      %645 = vmatpush.bf16.msra.mxu0 0
      %646 = vmatpush.bf16.msra.mxu0 0
      %647 = vmatpush.bf16.msra.mxu0 %v633
      %648 = vmatpush.bf16.msra.mxu0 %v632
      %649 = vmatpush.bf16.msra.mxu0 %v631
      %650 = vmatpush.bf16.msra.mxu0 %v630
      %651 = vmatmul.bf16.gmra.mxu0 %v638
      %v652 = vpop.f32.mrf.mxu0
      %v653 = vadd.f32 %v605, %v652
      %v654 = vpop.f32.mrf.mxu0
      %v655 = vadd.f32 %v607, %v654
      %656 = vmatmul.bf16.gmra.mxu0 %v641
      %v657 = vpop.f32.mrf.mxu0
      %v658 = vadd.f32 %v610, %v657
      %v659 = vpop.f32.mrf.mxu0
      %660 = vdwg.mxu0
      %v661 = vld [vmem:[%s492] sm:$0xe]
      %s662 = scalar_lea.vmem %s3, 64
      %v663 = vld [vmem:[%s662] sm:$0xf]
      %v664 = vld [vmem:[%s662 + $0x4] sm:$0xf]
      %v665 = vld [vmem:[%s662 + $0x8] sm:$0xf]
      %v666 = vld [vmem:[%s662 + $0xc] sm:$0xf]
      %v667 = vld [vmem:[%s662 + $0x10] sm:$0xf]
      %v668 = vld [vmem:[%s662 + $0x14] sm:$0xf]
      %v669 = vld [vmem:[%s662 + $0x18] sm:$0xf]
      %v670 = vld [vmem:[%s662 + $0x1c] sm:$0xf]
      %v672 = vunpack.c.l.b16 %v661
      %v673 = vpack.c.b16 %v543, %v672
      %vm674 = vcmask 1046528
      %v675 = vrot.slane %v673, 1
      %v676 = vrot.slane %v547, 1
      %v677 = vsel %vm674, %v675, %v676
      %v686 = vunpack.c.l.b16 %v663
      %v687 = vunpack.c.l.b16 %v664
      %v688 = vunpack.c.l.b16 %v665
      %v689 = vunpack.c.l.b16 %v666
      %v690 = vunpack.c.l.b16 %v667
      %v691 = vunpack.c.l.b16 %v668
      %v692 = vunpack.c.l.b16 %v669
      %v693 = vunpack.c.l.b16 %v670
      %v694 = vpack.c.b16 %v687, %v686
      %v695 = vpack.c.b16 %v689, %v688
      %v696 = vpack.c.b16 %v691, %v690
      %v697 = vpack.c.b16 %v693, %v692
      %v703 = vsel %vm588, %v677, 0
      %v706 = vsel %vm588, %v676, 0
      %708 = vmatpush.bf16.msra.mxu0 0
      %709 = vmatpush.bf16.msra.mxu0 0
      %710 = vmatpush.bf16.msra.mxu0 0
      %711 = vmatpush.bf16.msra.mxu0 0
      %712 = vmatpush.bf16.msra.mxu0 %v697
      %713 = vmatpush.bf16.msra.mxu0 %v696
      %714 = vmatpush.bf16.msra.mxu0 %v695
      %715 = vmatpush.bf16.msra.mxu0 %v694
      %716 = vmatmul.bf16.gmra.mxu0 %v703
      %v717 = vpop.f32.mrf.mxu0
      %v718 = vadd.f32 0.0, %v717
      %v719 = vpop.f32.mrf.mxu0
      %v720 = vadd.f32 0.0, %v719
      %721 = vmatmul.bf16.gmra.mxu0 %v706
      %v722 = vpop.f32.mrf.mxu0
      %v723 = vadd.f32 0.0, %v722
      %v724 = vpop.f32.mrf.mxu0
      %725 = vdwg.mxu0
      %v726 = vadd.f32 %v653, %v718
      %v727 = vadd.f32 %v655, %v720
      %v728 = vadd.f32 %v658, %v723
      %v729 = vld [vmem:[%s492] sm:$0x8]
      %v730 = vld [vmem:[%s492 + $0xc] sm:$0x7]
      %s731 = scalar_lea.vmem %s3, 96
      %v732 = vld [vmem:[%s731] sm:$0xf]
      %v733 = vld [vmem:[%s731 + $0x4] sm:$0xf]
      %v734 = vld [vmem:[%s731 + $0x8] sm:$0xf]
      %v735 = vld [vmem:[%s731 + $0xc] sm:$0xf]
      %v736 = vld [vmem:[%s731 + $0x10] sm:$0xf]
      %v737 = vld [vmem:[%s731 + $0x14] sm:$0xf]
      %v738 = vld [vmem:[%s731 + $0x18] sm:$0xf]
      %v739 = vld [vmem:[%s731 + $0x1c] sm:$0xf]
      %v742 = vunpack.c.l.b16 %v729
      %v743 = vunpack.c.l.b16 %v730
      %v744 = vpack.c.b16 %v543, %v742
      %v745 = vpack.c.b16 %v743, %v544
      %vm746 = vcmask 1044480
      %v747 = vrot.slane %v744, 3
      %v748 = vrot.slane %v745, 3
      %v749 = vsel %vm746, %v747, %v748
      %v758 = vunpack.c.l.b16 %v732
      %v759 = vunpack.c.l.b16 %v733
      %v760 = vunpack.c.l.b16 %v734
      %v761 = vunpack.c.l.b16 %v735
      %v762 = vunpack.c.l.b16 %v736
      %v763 = vunpack.c.l.b16 %v737
      %v764 = vunpack.c.l.b16 %v738
      %v765 = vunpack.c.l.b16 %v739
      %v766 = vpack.c.b16 %v759, %v758
      %v767 = vpack.c.b16 %v761, %v760
      %v768 = vpack.c.b16 %v763, %v762
      %v769 = vpack.c.b16 %v765, %v764
      %v775 = vsel %vm588, %v749, 0
      %v778 = vsel %vm588, %v748, 0
      %780 = vmatpush.bf16.msra.mxu0 0
      %781 = vmatpush.bf16.msra.mxu0 0
      %782 = vmatpush.bf16.msra.mxu0 0
      %783 = vmatpush.bf16.msra.mxu0 0
      %784 = vmatpush.bf16.msra.mxu0 %v769
      %785 = vmatpush.bf16.msra.mxu0 %v768
      %786 = vmatpush.bf16.msra.mxu0 %v767
      %787 = vmatpush.bf16.msra.mxu0 %v766
      %788 = vmatmul.bf16.gmra.mxu0 %v775
      %v789 = vpop.f32.mrf.mxu0
      %v790 = vadd.f32 0.0, %v789
      %v791 = vpop.f32.mrf.mxu0
      %v792 = vadd.f32 0.0, %v791
      %793 = vmatmul.bf16.gmra.mxu0 %v778
      %v794 = vpop.f32.mrf.mxu0
      %v795 = vadd.f32 0.0, %v794
      %v796 = vpop.f32.mrf.mxu0
      %797 = vdwg.mxu0
      %v798 = vadd.f32 %v726, %v790
      %v799 = vadd.f32 %v727, %v792
      %v800 = vadd.f32 %v728, %v795
      %v801 = vld [vmem:[%s492 + $0xc] sm:$0xf]
      %s802 = scalar_lea.vmem %s3, 128
      %v803 = vld [vmem:[%s802] sm:$0xf]
      %v804 = vld [vmem:[%s802 + $0x4] sm:$0xf]
      %v805 = vld [vmem:[%s802 + $0x8] sm:$0xf]
      %v806 = vld [vmem:[%s802 + $0xc] sm:$0xf]
      %v807 = vld [vmem:[%s802 + $0x10] sm:$0xf]
      %v808 = vld [vmem:[%s802 + $0x14] sm:$0xf]
      %v809 = vld [vmem:[%s802 + $0x18] sm:$0xf]
      %v810 = vld [vmem:[%s802 + $0x1c] sm:$0xf]
      %v812 = vunpack.c.l.b16 %v801
      %v813 = vpack.c.b16 %v812, %v544
      %vm814 = vsmask.f32 4352
      %v816 = vshrl.u32 %v744, 16
      %v818 = vrot.slane %v816, 3
      %v819 = vshll.u32 %v744, 16
      %v821 = vrot.slane %v819, 4
      %v822 = vor.u32 %v818, %v821
      %v824 = vshrl.u32 %v813, 16
      %v826 = vrot.slane %v824, 3
      %v827 = vshll.u32 %v813, 16
      %v829 = vrot.slane %v827, 4
      %v830 = vor.u32 %v826, %v829
      %v831 = vsel %vm814, %v822, %v830
      %v840 = vunpack.c.l.b16 %v803
      %v841 = vunpack.c.l.b16 %v804
      %v842 = vunpack.c.l.b16 %v805
      %v843 = vunpack.c.l.b16 %v806
      %v844 = vunpack.c.l.b16 %v807
      %v845 = vunpack.c.l.b16 %v808
      %v846 = vunpack.c.l.b16 %v809
      %v847 = vunpack.c.l.b16 %v810
      %v848 = vpack.c.b16 %v841, %v840
      %v849 = vpack.c.b16 %v843, %v842
      %v850 = vpack.c.b16 %v845, %v844
      %v851 = vpack.c.b16 %v847, %v846
      %v857 = vsel %vm588, %v831, 0
      %v860 = vsel %vm588, %v830, 0
      %862 = vmatpush.bf16.msra.mxu0 0
      %863 = vmatpush.bf16.msra.mxu0 0
      %864 = vmatpush.bf16.msra.mxu0 0
      %865 = vmatpush.bf16.msra.mxu0 0
      %866 = vmatpush.bf16.msra.mxu0 %v851
      %867 = vmatpush.bf16.msra.mxu0 %v850
      %868 = vmatpush.bf16.msra.mxu0 %v849
      %869 = vmatpush.bf16.msra.mxu0 %v848
      %870 = vmatmul.bf16.gmra.mxu0 %v857
      %v871 = vpop.f32.mrf.mxu0
      %v872 = vadd.f32 0.0, %v871
      %v873 = vpop.f32.mrf.mxu0
      %v874 = vadd.f32 0.0, %v873
      %875 = vmatmul.bf16.gmra.mxu0 %v860
      %v876 = vpop.f32.mrf.mxu0
      %v877 = vadd.f32 0.0, %v876
      %v878 = vpop.f32.mrf.mxu0
      %879 = vdwg.mxu0
      %v880 = vadd.f32 %v798, %v872
      %v881 = vadd.f32 %v799, %v874
      %v882 = vadd.f32 %v800, %v877
      %s883 = scalar_lea.vmem %s3, 160
      %v884 = vld [vmem:[%s883] sm:$0xf]
      %v885 = vld [vmem:[%s883 + $0x4] sm:$0xf]
      %v886 = vld [vmem:[%s883 + $0x8] sm:$0xf]
      %v887 = vld [vmem:[%s883 + $0xc] sm:$0xf]
      %v888 = vld [vmem:[%s883 + $0x10] sm:$0xf]
      %v889 = vld [vmem:[%s883 + $0x14] sm:$0xf]
      %v890 = vld [vmem:[%s883 + $0x18] sm:$0xf]
      %v891 = vld [vmem:[%s883 + $0x1c] sm:$0xf]
      %v892 = vpack.c.b16 %v544, %v543
      %v893 = vpack.c.b16 %v812, %v812
      %v902 = vunpack.c.l.b16 %v884
      %v903 = vunpack.c.l.b16 %v885
      %v904 = vunpack.c.l.b16 %v886
      %v905 = vunpack.c.l.b16 %v887
      %v906 = vunpack.c.l.b16 %v888
      %v907 = vunpack.c.l.b16 %v889
      %v908 = vunpack.c.l.b16 %v890
      %v909 = vunpack.c.l.b16 %v891
      %v910 = vpack.c.b16 %v903, %v902
      %v911 = vpack.c.b16 %v905, %v904
      %v912 = vpack.c.b16 %v907, %v906
      %v913 = vpack.c.b16 %v909, %v908
      %v919 = vsel %vm588, %v892, 0
      %v922 = vsel %vm588, %v893, 0
      %924 = vmatpush.bf16.msra.mxu0 0
      %925 = vmatpush.bf16.msra.mxu0 0
      %926 = vmatpush.bf16.msra.mxu0 0
      %927 = vmatpush.bf16.msra.mxu0 0
      %928 = vmatpush.bf16.msra.mxu0 %v913
      %929 = vmatpush.bf16.msra.mxu0 %v912
      %930 = vmatpush.bf16.msra.mxu0 %v911
      %931 = vmatpush.bf16.msra.mxu0 %v910
      %932 = vmatmul.bf16.gmra.mxu0 %v919
      %v933 = vpop.f32.mrf.mxu0
      %v934 = vadd.f32 0.0, %v933
      %v935 = vpop.f32.mrf.mxu0
      %v936 = vadd.f32 0.0, %v935
      %937 = vmatmul.bf16.gmra.mxu0 %v922
      %v938 = vpop.f32.mrf.mxu0
      %v939 = vadd.f32 0.0, %v938
      %v940 = vpop.f32.mrf.mxu0
      %941 = vdwg.mxu0
      %v942 = vadd.f32 %v880, %v934
      %v943 = vadd.f32 %v881, %v936
      %v944 = vadd.f32 %v882, %v939
      %v945 = vld [vmem:[%s492 + $0x4] sm:$0xc]
      %v946 = vld [vmem:[%s492 + $0x8] sm:$0xf]
      %v947 = vld [vmem:[%s492 + $0xc] sm:$0xf]
      %v948 = vld [vmem:[%s492 + $0x10] sm:$0x3]
      %s949 = scalar_lea.vmem %s3, 192
      %v950 = vld [vmem:[%s949] sm:$0xf]
      %v951 = vld [vmem:[%s949 + $0x4] sm:$0xf]
      %v952 = vld [vmem:[%s949 + $0x8] sm:$0xf]
      %v953 = vld [vmem:[%s949 + $0xc] sm:$0xf]
      %v954 = vld [vmem:[%s949 + $0x10] sm:$0xf]
      %v955 = vld [vmem:[%s949 + $0x14] sm:$0xf]
      %v956 = vld [vmem:[%s949 + $0x18] sm:$0xf]
      %v957 = vld [vmem:[%s949 + $0x1c] sm:$0xf]
      %v962 = vunpack.c.l.b16 %v945
      %v963 = vunpack.c.l.b16 %v946
      %v964 = vunpack.c.l.b16 %v947
      %v965 = vunpack.c.l.b16 %v948
      %v966 = vpack.c.b16 %v963, %v962
      %v967 = vpack.c.b16 %v965, %v964
      %vm968 = vcmask 1045504
      %v969 = vrot.slane %v966, 2
      %v970 = vrot.slane %v967, 2
      %v971 = vsel %vm968, %v969, %v970
      %v980 = vunpack.c.l.b16 %v950
      %v981 = vunpack.c.l.b16 %v951
      %v982 = vunpack.c.l.b16 %v952
      %v983 = vunpack.c.l.b16 %v953
      %v984 = vunpack.c.l.b16 %v954
      %v985 = vunpack.c.l.b16 %v955
      %v986 = vunpack.c.l.b16 %v956
      %v987 = vunpack.c.l.b16 %v957
      %v988 = vpack.c.b16 %v981, %v980
      %v989 = vpack.c.b16 %v983, %v982
      %v990 = vpack.c.b16 %v985, %v984
      %v991 = vpack.c.b16 %v987, %v986
      %v997 = vsel %vm588, %v971, 0
      %v1000 = vsel %vm588, %v970, 0
      %1002 = vmatpush.bf16.msra.mxu0 0
      %1003 = vmatpush.bf16.msra.mxu0 0
      %1004 = vmatpush.bf16.msra.mxu0 0
      %1005 = vmatpush.bf16.msra.mxu0 0
      %1006 = vmatpush.bf16.msra.mxu0 %v991
      %1007 = vmatpush.bf16.msra.mxu0 %v990
      %1008 = vmatpush.bf16.msra.mxu0 %v989
      %1009 = vmatpush.bf16.msra.mxu0 %v988
      %1010 = vmatmul.bf16.gmra.mxu0 %v997
      %v1011 = vpop.f32.mrf.mxu0
      %v1012 = vadd.f32 0.0, %v1011
      %v1013 = vpop.f32.mrf.mxu0
      %v1014 = vadd.f32 0.0, %v1013
      %1015 = vmatmul.bf16.gmra.mxu0 %v1000
      %v1016 = vpop.f32.mrf.mxu0
      %v1017 = vadd.f32 0.0, %v1016
      %v1018 = vpop.f32.mrf.mxu0
      %1019 = vdwg.mxu0
      %v1020 = vadd.f32 %v942, %v1012
      %v1021 = vadd.f32 %v943, %v1014
      %v1022 = vadd.f32 %v944, %v1017
      %v1023 = vld [vmem:[%s492 + $0x10] sm:$0x7]
      %s1024 = scalar_lea.vmem %s3, 224
      %v1025 = vld [vmem:[%s1024] sm:$0xf]
      %v1026 = vld [vmem:[%s1024 + $0x4] sm:$0xf]
      %v1027 = vld [vmem:[%s1024 + $0x8] sm:$0xf]
      %v1028 = vld [vmem:[%s1024 + $0xc] sm:$0xf]
      %v1029 = vld [vmem:[%s1024 + $0x10] sm:$0xf]
      %v1030 = vld [vmem:[%s1024 + $0x14] sm:$0xf]
      %v1031 = vld [vmem:[%s1024 + $0x18] sm:$0xf]
      %v1032 = vld [vmem:[%s1024 + $0x1c] sm:$0xf]
      %v1034 = vunpack.c.l.b16 %v1023
      %v1035 = vpack.c.b16 %v1034, %v964
      %vm1036 = vsmask.f32 5376
      %v1038 = vshrl.u32 %v966, 16
      %v1040 = vrot.slane %v1038, 2
      %v1041 = vshll.u32 %v966, 16
      %v1043 = vrot.slane %v1041, 3
      %v1044 = vor.u32 %v1040, %v1043
      %v1046 = vshrl.u32 %v1035, 16
      %v1048 = vrot.slane %v1046, 2
      %v1049 = vshll.u32 %v1035, 16
      %v1051 = vrot.slane %v1049, 3
      %v1052 = vor.u32 %v1048, %v1051
      %v1053 = vsel %vm1036, %v1044, %v1052
      %v1062 = vunpack.c.l.b16 %v1025
      %v1063 = vunpack.c.l.b16 %v1026
      %v1064 = vunpack.c.l.b16 %v1027
      %v1065 = vunpack.c.l.b16 %v1028
      %v1066 = vunpack.c.l.b16 %v1029
      %v1067 = vunpack.c.l.b16 %v1030
      %v1068 = vunpack.c.l.b16 %v1031
      %v1069 = vunpack.c.l.b16 %v1032
      %v1070 = vpack.c.b16 %v1063, %v1062
      %v1071 = vpack.c.b16 %v1065, %v1064
      %v1072 = vpack.c.b16 %v1067, %v1066
      %v1073 = vpack.c.b16 %v1069, %v1068
      %v1079 = vsel %vm588, %v1053, 0
      %v1082 = vsel %vm588, %v1052, 0
      %1084 = vmatpush.bf16.msra.mxu0 0
      %1085 = vmatpush.bf16.msra.mxu0 0
      %1086 = vmatpush.bf16.msra.mxu0 0
      %1087 = vmatpush.bf16.msra.mxu0 0
      %1088 = vmatpush.bf16.msra.mxu0 %v1073
      %1089 = vmatpush.bf16.msra.mxu0 %v1072
      %1090 = vmatpush.bf16.msra.mxu0 %v1071
      %1091 = vmatpush.bf16.msra.mxu0 %v1070
      %1092 = vmatmul.bf16.gmra.mxu0 %v1079
      %v1093 = vpop.f32.mrf.mxu0
      %v1094 = vadd.f32 0.0, %v1093
      %v1095 = vpop.f32.mrf.mxu0
      %v1096 = vadd.f32 0.0, %v1095
      %1097 = vmatmul.bf16.gmra.mxu0 %v1082
      %v1098 = vpop.f32.mrf.mxu0
      %v1099 = vadd.f32 0.0, %v1098
      %v1100 = vpop.f32.mrf.mxu0
      %1101 = vdwg.mxu0
      %v1102 = vadd.f32 %v1020, %v1094
      %v1103 = vadd.f32 %v1021, %v1096
      %v1104 = vadd.f32 %v1022, %v1099
      %v1105 = vld [vmem:[%s492 + $0x4] sm:$0x8]
      %s1106 = scalar_lea.vmem %s3, 256
      %v1107 = vld [vmem:[%s1106] sm:$0xf]
      %v1108 = vld [vmem:[%s1106 + $0x4] sm:$0xf]
      %v1109 = vld [vmem:[%s1106 + $0x8] sm:$0xf]
      %v1110 = vld [vmem:[%s1106 + $0xc] sm:$0xf]
      %v1111 = vld [vmem:[%s1106 + $0x10] sm:$0xf]
      %v1112 = vld [vmem:[%s1106 + $0x14] sm:$0xf]
      %v1113 = vld [vmem:[%s1106 + $0x18] sm:$0xf]
      %v1114 = vld [vmem:[%s1106 + $0x1c] sm:$0xf]
      %v1116 = vunpack.c.l.b16 %v1105
      %v1117 = vpack.c.b16 %v963, %v1116
      %v1118 = vrot.slane %v1117, 3
      %v1119 = vrot.slane %v1035, 3
      %v1120 = vsel %vm746, %v1118, %v1119
      %v1129 = vunpack.c.l.b16 %v1107
      %v1130 = vunpack.c.l.b16 %v1108
      %v1131 = vunpack.c.l.b16 %v1109
      %v1132 = vunpack.c.l.b16 %v1110
      %v1133 = vunpack.c.l.b16 %v1111
      %v1134 = vunpack.c.l.b16 %v1112
      %v1135 = vunpack.c.l.b16 %v1113
      %v1136 = vunpack.c.l.b16 %v1114
      %v1137 = vpack.c.b16 %v1130, %v1129
      %v1138 = vpack.c.b16 %v1132, %v1131
      %v1139 = vpack.c.b16 %v1134, %v1133
      %v1140 = vpack.c.b16 %v1136, %v1135
      %v1146 = vsel %vm588, %v1120, 0
      %v1149 = vsel %vm588, %v1119, 0
      %1151 = vmatpush.bf16.msra.mxu0 0
      %1152 = vmatpush.bf16.msra.mxu0 0
      %1153 = vmatpush.bf16.msra.mxu0 0
      %1154 = vmatpush.bf16.msra.mxu0 0
      %1155 = vmatpush.bf16.msra.mxu0 %v1140
      %1156 = vmatpush.bf16.msra.mxu0 %v1139
      %1157 = vmatpush.bf16.msra.mxu0 %v1138
      %1158 = vmatpush.bf16.msra.mxu0 %v1137
      %1159 = vmatmul.bf16.gmra.mxu0 %v1146
      %v1160 = vpop.f32.mrf.mxu0
      %v1161 = vadd.f32 0.0, %v1160
      %v1162 = vpop.f32.mrf.mxu0
      %v1163 = vadd.f32 0.0, %v1162
      %1164 = vmatmul.bf16.gmra.mxu0 %v1149
      %v1165 = vpop.f32.mrf.mxu0
      %v1166 = vadd.f32 0.0, %v1165
      %v1167 = vpop.f32.mrf.mxu0
      %1168 = vdwg.mxu0
      %v1169 = vadd.f32 %v1102, %v1161
      %v1170 = vadd.f32 %v1103, %v1163
      %v1171 = vadd.f32 %v1104, %v1166
      %v1172 = vld [vmem:[%s4] sm:$0x1]
      %v1174 = vperm.slane %v1172, 0
      %v1176 = vadd.f32 %v1169, %v1174
      %v1177 = vadd.f32 %v1170, %v1174
      %v1178 = vadd.f32 %v1171, %v1174
      %v1179 = vxor.u32 %v1176, 2147483648
      %v1180 = vxor.u32 %v1177, 2147483648
      %v1181 = vxor.u32 %v1178, 2147483648
      %v1182 = vmul.f32 %v1179, 1.442695
      %v1183 = vpow.pop %v1182
      %v1184 = vmul.f32 %v1180, 1.442695
      %v1185 = vpow.pop %v1184
      %v1186 = vmul.f32 %v1181, 1.442695
      %v1187 = vpow.pop %v1186
      %v1188 = vadd.f32 %v1183, 1.0
      %v1189 = vadd.f32 %v1185, 1.0
      %v1190 = vadd.f32 %v1187, 1.0
      %v1191 = vrcp.pop %v1188
      %v1192 = vmul.f32 %v1188, %v1191
      %v1193 = vsub.f32 1.0, %v1192
      %v1194 = vmul.f32 %v1191, %v1193
      %v1195 = vadd.f32 %v1191, %v1194
      %vm1196 = vweird.f32 %v1188
      %vm1197 = vweird.f32 %v1191
      %vm1198 = vmor %vm1196, %vm1197
      %v1199 = vsel %vm1198, %v1191, %v1195
      %v1200 = vand.u32 2147483647, %v1188
      %vm1201 = vcmp.eq.f32.partialorder %v1200, 8.507059e+37
      %v1202 = vand.u32 %v1188, 2147483648
      %v1203 = vor.u32 1.1754944e-38, %v1202
      %v1204 = vsel %vm1201, %v1203, %v1199
      %v1205 = vmul.f32 1.0, %v1204
      %v1206 = vrcp.pop %v1189
      %v1207 = vmul.f32 %v1189, %v1206
      %v1208 = vsub.f32 1.0, %v1207
      %v1209 = vmul.f32 %v1206, %v1208
      %v1210 = vadd.f32 %v1206, %v1209
      %vm1211 = vweird.f32 %v1189
      %vm1212 = vweird.f32 %v1206
      %vm1213 = vmor %vm1211, %vm1212
      %v1214 = vsel %vm1213, %v1206, %v1210
      %v1215 = vand.u32 2147483647, %v1189
      %vm1216 = vcmp.eq.f32.partialorder %v1215, 8.507059e+37
      %v1217 = vand.u32 %v1189, 2147483648
      %v1218 = vor.u32 1.1754944e-38, %v1217
      %v1219 = vsel %vm1216, %v1218, %v1214
      %v1220 = vmul.f32 1.0, %v1219
      %v1221 = vrcp.pop %v1190
      %v1222 = vmul.f32 %v1190, %v1221
      %v1223 = vsub.f32 1.0, %v1222
      %v1224 = vmul.f32 %v1221, %v1223
      %v1225 = vadd.f32 %v1221, %v1224
      %vm1226 = vweird.f32 %v1190
      %vm1227 = vweird.f32 %v1221
      %vm1228 = vmor %vm1226, %vm1227
      %v1229 = vsel %vm1228, %v1221, %v1225
      %v1230 = vand.u32 2147483647, %v1190
      %vm1231 = vcmp.eq.f32.partialorder %v1230, 8.507059e+37
      %v1232 = vand.u32 %v1190, 2147483648
      %v1233 = vor.u32 1.1754944e-38, %v1232
      %v1234 = vsel %vm1231, %v1233, %v1229
      %v1235 = vmul.f32 1.0, %v1234
      %v1236 = vtanh.pop %v1176
      %v1237 = vtanh.pop %v1177
      %v1238 = vtanh.pop %v1178
      %v1239 = vld [vmem:[%s497] sm:$0xff]
      %v1240 = vld [vmem:[%s497 + $0x8] sm:$0xff]
      %v1241 = vld [vmem:[%s497 + $0x10] sm:$0xff]
      %1245 = vrot.lane.b32.xlu0 %v1239, 32
      %v1246 = vpop.permute.xlu0 %1245
      %1247 = vrot.lane.b32.xlu0 %v1240, 32
      %v1248 = vpop.permute.xlu0 %1247
      %1249 = vrot.lane.b32.xlu0 %v1241, 32
      %v1250 = vpop.permute.xlu0 %1249
      %v1254 = vmul.f32 %v1205, %v1246
      %v1255 = vmul.f32 %v1220, %v1248
      %v1256 = vmul.f32 %v1235, %v1250
      %1260 = vrot.lane.b32.xlu0 %v1236, 112
      %v1261 = vpop.permute.xlu0 %1260
      %1262 = vrot.lane.b32.xlu0 %v1237, 112
      %v1263 = vpop.permute.xlu0 %1262
      %1264 = vrot.lane.b32.xlu0 %v1238, 112
      %v1265 = vpop.permute.xlu0 %1264
      %v1269 = vmul.f32 %v1205, %v1261
      %v1270 = vmul.f32 %v1220, %v1263
      %v1271 = vmul.f32 %v1235, %v1265
      %1275 = vrot.lane.b32.xlu0 %v1269, 32
      %v1276 = vpop.permute.xlu0 %1275
      %1277 = vrot.lane.b32.xlu0 %v1270, 32
      %v1278 = vpop.permute.xlu0 %1277
      %1279 = vrot.lane.b32.xlu0 %v1271, 32
      %v1280 = vpop.permute.xlu0 %1279
      %v1284 = vadd.f32 %v1254, %v1276
      %v1285 = vadd.f32 %v1255, %v1278
      %v1286 = vadd.f32 %v1256, %v1280
      %1288 = vset.pattern.permute.xlu0 0
      %1289 = vperm.xlu0 %1288, %v514
      %v1290 = vpop.permute.xlu0 %1289
      %1293 = vset.pattern.permute.xlu0 0
      %1294 = vperm.xlu0 %1293, %v515
      %v1295 = vpop.permute.xlu0 %1294
      %1298 = vset.pattern.permute.xlu0 0
      %1299 = vperm.xlu0 %1298, %v516
      %v1300 = vpop.permute.xlu0 %1299
      %v1302 = vmul.f32 %v1284, %v1290
      %v1303 = vmul.f32 %v1285, %v1295
      %v1304 = vmul.f32 %v1286, %v1300
      %vm1305 = vcmask 125952
      %1306 = vst.msk [vmem:[#allocation2] sm:$0xf] %vm1305, 0
      %1307 = vst.msk [vmem:[#allocation2 + $0x4] sm:$0xf] %vm1305, 0
      %1308 = vst.msk [vmem:[#allocation2 + $0x8] sm:$0xf] %vm1305, 0
      %1309 = vst.msk [vmem:[#allocation2 + $0xc] sm:$0xf] %vm1305, 0
      %vm1310 = vcmask 124928
      %1311 = vst.msk [vmem:[#allocation2 + $0x10] sm:$0x7] %vm1310, 0
      %v1312 = vpack.c.bf16 %v1302, %v1302
      %v1313 = vpack.c.bf16 %v1303, %v1303
      %v1314 = vpack.c.bf16 %v1304, %v1304
      %vm1315 = vsmask.f32 3328
      %vm1316 = vsmask.f32 7440
      %vm1317 = vmor %vm1315, %vm1316
      %v1319 = vshll.u32 %v1312, 16
      %v1321 = vrot.slane %v1319, 5
      %v1322 = vshrl.u32 %v1312, 16
      %v1324 = vrot.slane %v1322, 4
      %v1325 = vor.u32 %v1324, %v1321
      %v1326 = vrot.slane %v1325, 4
      %v1328 = vshll.u32 %v1313, 16
      %v1330 = vrot.slane %v1328, 5
      %v1331 = vsel %vm1317, %v1326, %v1330
      %v1332 = vshrl.u32 %v1313, 16
      %v1334 = vrot.slane %v1332, 4
      %v1335 = vor.u32 %v1334, %v1330
      %v1336 = vrot.slane %v1335, 4
      %v1338 = vshll.u32 %v1314, 16
      %v1340 = vrot.slane %v1338, 5
      %v1341 = vsel %vm1317, %v1336, %v1340
      %v1342 = vshrl.u32 %v1314, 16
      %v1344 = vrot.slane %v1342, 4
      %v1345 = vor.u32 %v1344, %v1340
      %v1346 = vrot.slane %v1345, 4
      %1347 = vrot.lane.b32.xlu0 %v1321, 96
      %v1348 = vpop.permute.xlu0 %1347
      %1349 = vrot.lane.b32.xlu0 %v1331, 96
      %v1350 = vpop.permute.xlu0 %1349
      %1351 = vrot.lane.b32.xlu0 %v1341, 96
      %v1352 = vpop.permute.xlu0 %1351
      %1353 = vrot.lane.b32.xlu0 %v1346, 96
      %v1354 = vpop.permute.xlu0 %1353
      %vm1359 = vcmask 125955
      %vm1360 = vsmask.f32 7950
      %vm1361 = vmand %vm1359, %vm1360
      %v1362 = vld [vmem:[#allocation2] sm:$0x8]
      %v1363 = vsel %vm1361, %v1348, %v1362
      %1364 = vst [vmem:[#allocation2] sm:$0x8] %v1363
      %1365 = vst.msk [vmem:[#allocation2 + $0x4] sm:$0xf] %vm1305, %v1350
      %1366 = vst.msk [vmem:[#allocation2 + $0x8] sm:$0xf] %vm1305, %v1352
      %vm1367 = vcmask 125952
      %vm1368 = vmand %vm1367, %vm1315
      %v1369 = vld [vmem:[#allocation2 + $0xc] sm:$0xf]
      %v1370 = vsel %vm1368, %v1354, %v1369
      %1371 = vst [vmem:[#allocation2 + $0xc] sm:$0xf] %v1370
      %v1372 = vld [vmem:[#allocation2] sm:$0xf]
      %v1373 = vld [vmem:[#allocation2 + $0x4] sm:$0xf]
      %v1374 = vld [vmem:[#allocation2 + $0x8] sm:$0xf]
      %v1375 = vld [vmem:[%s5] sm:$0xf]
      %v1376 = vld [vmem:[%s5 + $0x4] sm:$0xf]
      %v1377 = vld [vmem:[#allocation2 + $0xc] sm:$0x1]
      %s1378 = scalar_lea.vmem %s5, 8
      %v1379 = vld [vmem:[%s1378] sm:$0xf]
      %v1380 = vld [vmem:[%s1378 + $0x4] sm:$0xf]
      %v1385 = vunpack.c.l.b16 %v1372
      %v1386 = vunpack.c.l.b16 %v1373
      %v1387 = vunpack.c.l.b16 %v1374
      %v1388 = vunpack.c.l.b16 %v1377
      %v1389 = vpack.c.b16 %v1386, %v1385
      %v1390 = vpack.c.b16 %v1388, %v1387
      %v1392 = vshrl.u32 %v1389, 16
      %v1394 = vshll.u32 %v1389, 16
      %v1396 = vrot.slane %v1394, 1
      %v1397 = vor.u32 %v1392, %v1396
      %v1399 = vshll.u32 %v1390, 16
      %v1401 = vrot.slane %v1399, 1
      %v1402 = vsel %vm548, %v1397, %v1401
      %v1403 = vshrl.u32 %v1390, 16
      %v1405 = vor.u32 %v1403, %v1401
      %v1408 = vunpack.c.l.b16 %v1379
      %v1409 = vunpack.c.l.b16 %v1380
      %v1410 = vpack.c.b16 %v1409, %v1408
      %vm1412 = vcmask 130048
      %v1414 = vsel %vm1412, %v1402, 0
      %v1417 = vsel %vm1412, %v1405, 0
      %1419 = vmatpush.bf16.msra.mxu0 0
      %1420 = vmatpush.bf16.msra.mxu0 0
      %1421 = vmatpush.bf16.msra.mxu0 0
      %1422 = vmatpush.bf16.msra.mxu0 0
      %1423 = vmatpush.bf16.msra.mxu0 0
      %1424 = vmatpush.bf16.msra.mxu0 0
      %1425 = vmatpush.bf16.msra.mxu0 0
      %1426 = vmatpush.bf16.msra.mxu0 %v1410
      %1427 = vmatmul.bf16.gmra.mxu0 %v1414
      %v1428 = vpop.f32.mrf.mxu0
      %v1429 = vadd.f32 0.0, %v1428
      %v1430 = vpop.f32.mrf.mxu0
      %v1431 = vadd.f32 0.0, %v1430
      %1432 = vmatmul.bf16.gmra.mxu0 %v1417
      %v1433 = vpop.f32.mrf.mxu0
      %v1434 = vadd.f32 0.0, %v1433
      %v1435 = vpop.f32.mrf.mxu0
      %1436 = vdwg.mxu0
      %v1437 = vpack.c.b16 %v1387, %v1387
      %v1440 = vunpack.c.l.b16 %v1375
      %v1441 = vunpack.c.l.b16 %v1376
      %v1442 = vpack.c.b16 %v1441, %v1440
      %v1444 = vsel %vm1412, %v1389, 0
      %v1447 = vsel %vm1412, %v1437, 0
      %1449 = vmatpush.bf16.msra.mxu0 0
      %1450 = vmatpush.bf16.msra.mxu0 0
      %1451 = vmatpush.bf16.msra.mxu0 0
      %1452 = vmatpush.bf16.msra.mxu0 0
      %1453 = vmatpush.bf16.msra.mxu0 0
      %1454 = vmatpush.bf16.msra.mxu0 0
      %1455 = vmatpush.bf16.msra.mxu0 0
      %1456 = vmatpush.bf16.msra.mxu0 %v1442
      %1457 = vmatmul.bf16.gmra.mxu0 %v1444
      %v1458 = vpop.f32.mrf.mxu0
      %v1459 = vadd.f32 %v1429, %v1458
      %v1460 = vpop.f32.mrf.mxu0
      %v1461 = vadd.f32 %v1431, %v1460
      %1462 = vmatmul.bf16.gmra.mxu0 %v1447
      %v1463 = vpop.f32.mrf.mxu0
      %v1464 = vadd.f32 %v1434, %v1463
      %v1465 = vpop.f32.mrf.mxu0
      %1466 = vdwg.mxu0
      %v1467 = vld [vmem:[#allocation2] sm:$0xe]
      %s1468 = scalar_lea.vmem %s5, 16
      %v1469 = vld [vmem:[%s1468] sm:$0xf]
      %v1470 = vld [vmem:[%s1468 + $0x4] sm:$0xf]
      %v1472 = vunpack.c.l.b16 %v1467
      %v1473 = vpack.c.b16 %v1386, %v1472
      %v1474 = vrot.slane %v1473, 1
      %v1475 = vrot.slane %v1390, 1
      %v1476 = vsel %vm674, %v1474, %v1475
      %v1479 = vunpack.c.l.b16 %v1469
      %v1480 = vunpack.c.l.b16 %v1470
      %v1481 = vpack.c.b16 %v1480, %v1479
      %v1484 = vsel %vm1412, %v1476, 0
      %v1487 = vsel %vm1412, %v1475, 0
      %1489 = vmatpush.bf16.msra.mxu0 0
      %1490 = vmatpush.bf16.msra.mxu0 0
      %1491 = vmatpush.bf16.msra.mxu0 0
      %1492 = vmatpush.bf16.msra.mxu0 0
      %1493 = vmatpush.bf16.msra.mxu0 0
      %1494 = vmatpush.bf16.msra.mxu0 0
      %1495 = vmatpush.bf16.msra.mxu0 0
      %1496 = vmatpush.bf16.msra.mxu0 %v1481
      %1497 = vmatmul.bf16.gmra.mxu0 %v1484
      %v1498 = vpop.f32.mrf.mxu0
      %v1499 = vadd.f32 0.0, %v1498
      %v1500 = vpop.f32.mrf.mxu0
      %v1501 = vadd.f32 0.0, %v1500
      %1502 = vmatmul.bf16.gmra.mxu0 %v1487
      %v1503 = vpop.f32.mrf.mxu0
      %v1504 = vadd.f32 0.0, %v1503
      %v1505 = vpop.f32.mrf.mxu0
      %1506 = vdwg.mxu0
      %v1507 = vadd.f32 %v1459, %v1499
      %v1508 = vadd.f32 %v1461, %v1501
      %v1509 = vadd.f32 %v1464, %v1504
      %v1510 = vld [vmem:[#allocation2] sm:$0x8]
      %v1511 = vld [vmem:[#allocation2 + $0xc] sm:$0x7]
      %s1512 = scalar_lea.vmem %s5, 24
      %v1513 = vld [vmem:[%s1512] sm:$0xf]
      %v1514 = vld [vmem:[%s1512 + $0x4] sm:$0xf]
      %v1517 = vunpack.c.l.b16 %v1510
      %v1518 = vunpack.c.l.b16 %v1511
      %v1519 = vpack.c.b16 %v1386, %v1517
      %v1520 = vpack.c.b16 %v1518, %v1387
      %v1521 = vrot.slane %v1519, 3
      %v1522 = vrot.slane %v1520, 3
      %v1523 = vsel %vm746, %v1521, %v1522
      %v1526 = vunpack.c.l.b16 %v1513
      %v1527 = vunpack.c.l.b16 %v1514
      %v1528 = vpack.c.b16 %v1527, %v1526
      %v1531 = vsel %vm1412, %v1523, 0
      %v1534 = vsel %vm1412, %v1522, 0
      %1536 = vmatpush.bf16.msra.mxu0 0
      %1537 = vmatpush.bf16.msra.mxu0 0
      %1538 = vmatpush.bf16.msra.mxu0 0
      %1539 = vmatpush.bf16.msra.mxu0 0
      %1540 = vmatpush.bf16.msra.mxu0 0
      %1541 = vmatpush.bf16.msra.mxu0 0
      %1542 = vmatpush.bf16.msra.mxu0 0
      %1543 = vmatpush.bf16.msra.mxu0 %v1528
      %1544 = vmatmul.bf16.gmra.mxu0 %v1531
      %v1545 = vpop.f32.mrf.mxu0
      %v1546 = vadd.f32 0.0, %v1545
      %v1547 = vpop.f32.mrf.mxu0
      %v1548 = vadd.f32 0.0, %v1547
      %1549 = vmatmul.bf16.gmra.mxu0 %v1534
      %v1550 = vpop.f32.mrf.mxu0
      %v1551 = vadd.f32 0.0, %v1550
      %v1552 = vpop.f32.mrf.mxu0
      %1553 = vdwg.mxu0
      %v1554 = vadd.f32 %v1507, %v1546
      %v1555 = vadd.f32 %v1508, %v1548
      %v1556 = vadd.f32 %v1509, %v1551
      %v1557 = vld [vmem:[#allocation2 + $0xc] sm:$0xf]
      %s1558 = scalar_lea.vmem %s5, 32
      %v1559 = vld [vmem:[%s1558] sm:$0xf]
      %v1560 = vld [vmem:[%s1558 + $0x4] sm:$0xf]
      %v1562 = vunpack.c.l.b16 %v1557
      %v1563 = vpack.c.b16 %v1562, %v1387
      %v1565 = vshrl.u32 %v1519, 16
      %v1567 = vrot.slane %v1565, 3
      %v1568 = vshll.u32 %v1519, 16
      %v1570 = vrot.slane %v1568, 4
      %v1571 = vor.u32 %v1567, %v1570
      %v1573 = vshrl.u32 %v1563, 16
      %v1575 = vrot.slane %v1573, 3
      %v1576 = vshll.u32 %v1563, 16
      %v1578 = vrot.slane %v1576, 4
      %v1579 = vor.u32 %v1575, %v1578
      %v1580 = vsel %vm814, %v1571, %v1579
      %v1583 = vunpack.c.l.b16 %v1559
      %v1584 = vunpack.c.l.b16 %v1560
      %v1585 = vpack.c.b16 %v1584, %v1583
      %v1588 = vsel %vm1412, %v1580, 0
      %v1591 = vsel %vm1412, %v1579, 0
      %1593 = vmatpush.bf16.msra.mxu0 0
      %1594 = vmatpush.bf16.msra.mxu0 0
      %1595 = vmatpush.bf16.msra.mxu0 0
      %1596 = vmatpush.bf16.msra.mxu0 0
      %1597 = vmatpush.bf16.msra.mxu0 0
      %1598 = vmatpush.bf16.msra.mxu0 0
      %1599 = vmatpush.bf16.msra.mxu0 0
      %1600 = vmatpush.bf16.msra.mxu0 %v1585
      %1601 = vmatmul.bf16.gmra.mxu0 %v1588
      %v1602 = vpop.f32.mrf.mxu0
      %v1603 = vadd.f32 0.0, %v1602
      %v1604 = vpop.f32.mrf.mxu0
      %v1605 = vadd.f32 0.0, %v1604
      %1606 = vmatmul.bf16.gmra.mxu0 %v1591
      %v1607 = vpop.f32.mrf.mxu0
      %v1608 = vadd.f32 0.0, %v1607
      %v1609 = vpop.f32.mrf.mxu0
      %1610 = vdwg.mxu0
      %v1611 = vadd.f32 %v1554, %v1603
      %v1612 = vadd.f32 %v1555, %v1605
      %v1613 = vadd.f32 %v1556, %v1608
      %s1614 = scalar_lea.vmem %s5, 40
      %v1615 = vld [vmem:[%s1614] sm:$0xf]
      %v1616 = vld [vmem:[%s1614 + $0x4] sm:$0xf]
      %v1617 = vpack.c.b16 %v1387, %v1386
      %v1618 = vpack.c.b16 %v1562, %v1562
      %v1621 = vunpack.c.l.b16 %v1615
      %v1622 = vunpack.c.l.b16 %v1616
      %v1623 = vpack.c.b16 %v1622, %v1621
      %v1626 = vsel %vm1412, %v1617, 0
      %v1629 = vsel %vm1412, %v1618, 0
      %1631 = vmatpush.bf16.msra.mxu0 0
      %1632 = vmatpush.bf16.msra.mxu0 0
      %1633 = vmatpush.bf16.msra.mxu0 0
      %1634 = vmatpush.bf16.msra.mxu0 0
      %1635 = vmatpush.bf16.msra.mxu0 0
      %1636 = vmatpush.bf16.msra.mxu0 0
      %1637 = vmatpush.bf16.msra.mxu0 0
      %1638 = vmatpush.bf16.msra.mxu0 %v1623
      %1639 = vmatmul.bf16.gmra.mxu0 %v1626
      %v1640 = vpop.f32.mrf.mxu0
      %v1641 = vadd.f32 0.0, %v1640
      %v1642 = vpop.f32.mrf.mxu0
      %v1643 = vadd.f32 0.0, %v1642
      %1644 = vmatmul.bf16.gmra.mxu0 %v1629
      %v1645 = vpop.f32.mrf.mxu0
      %v1646 = vadd.f32 0.0, %v1645
      %v1647 = vpop.f32.mrf.mxu0
      %1648 = vdwg.mxu0
      %v1649 = vadd.f32 %v1611, %v1641
      %v1650 = vadd.f32 %v1612, %v1643
      %v1651 = vadd.f32 %v1613, %v1646
      %v1652 = vld [vmem:[#allocation2 + $0x4] sm:$0xc]
      %v1653 = vld [vmem:[#allocation2 + $0x8] sm:$0xf]
      %v1654 = vld [vmem:[#allocation2 + $0xc] sm:$0xf]
      %v1655 = vld [vmem:[#allocation2 + $0x10] sm:$0x3]
      %s1656 = scalar_lea.vmem %s5, 48
      %v1657 = vld [vmem:[%s1656] sm:$0xf]
      %v1658 = vld [vmem:[%s1656 + $0x4] sm:$0xf]
      %v1663 = vunpack.c.l.b16 %v1652
      %v1664 = vunpack.c.l.b16 %v1653
      %v1665 = vunpack.c.l.b16 %v1654
      %v1666 = vunpack.c.l.b16 %v1655
      %v1667 = vpack.c.b16 %v1664, %v1663
      %v1668 = vpack.c.b16 %v1666, %v1665
      %v1669 = vrot.slane %v1667, 2
      %v1670 = vrot.slane %v1668, 2
      %v1671 = vsel %vm968, %v1669, %v1670
      %v1674 = vunpack.c.l.b16 %v1657
      %v1675 = vunpack.c.l.b16 %v1658
      %v1676 = vpack.c.b16 %v1675, %v1674
      %v1679 = vsel %vm1412, %v1671, 0
      %v1682 = vsel %vm1412, %v1670, 0
      %1684 = vmatpush.bf16.msra.mxu0 0
      %1685 = vmatpush.bf16.msra.mxu0 0
      %1686 = vmatpush.bf16.msra.mxu0 0
      %1687 = vmatpush.bf16.msra.mxu0 0
      %1688 = vmatpush.bf16.msra.mxu0 0
      %1689 = vmatpush.bf16.msra.mxu0 0
      %1690 = vmatpush.bf16.msra.mxu0 0
      %1691 = vmatpush.bf16.msra.mxu0 %v1676
      %1692 = vmatmul.bf16.gmra.mxu0 %v1679
      %v1693 = vpop.f32.mrf.mxu0
      %v1694 = vadd.f32 0.0, %v1693
      %v1695 = vpop.f32.mrf.mxu0
      %v1696 = vadd.f32 0.0, %v1695
      %1697 = vmatmul.bf16.gmra.mxu0 %v1682
      %v1698 = vpop.f32.mrf.mxu0
      %v1699 = vadd.f32 0.0, %v1698
      %v1700 = vpop.f32.mrf.mxu0
      %1701 = vdwg.mxu0
      %v1702 = vadd.f32 %v1649, %v1694
      %v1703 = vadd.f32 %v1650, %v1696
      %v1704 = vadd.f32 %v1651, %v1699
      %v1705 = vld [vmem:[#allocation2 + $0x10] sm:$0x7]
      %s1706 = scalar_lea.vmem %s5, 56
      %v1707 = vld [vmem:[%s1706] sm:$0xf]
      %v1708 = vld [vmem:[%s1706 + $0x4] sm:$0xf]
      %v1710 = vunpack.c.l.b16 %v1705
      %v1711 = vpack.c.b16 %v1710, %v1665
      %v1713 = vshrl.u32 %v1667, 16
      %v1715 = vrot.slane %v1713, 2
      %v1716 = vshll.u32 %v1667, 16
      %v1718 = vrot.slane %v1716, 3
      %v1719 = vor.u32 %v1715, %v1718
      %v1721 = vshrl.u32 %v1711, 16
      %v1723 = vrot.slane %v1721, 2
      %v1724 = vshll.u32 %v1711, 16
      %v1726 = vrot.slane %v1724, 3
      %v1727 = vor.u32 %v1723, %v1726
      %v1728 = vsel %vm1036, %v1719, %v1727
      %v1731 = vunpack.c.l.b16 %v1707
      %v1732 = vunpack.c.l.b16 %v1708
      %v1733 = vpack.c.b16 %v1732, %v1731
      %v1736 = vsel %vm1412, %v1728, 0
      %v1739 = vsel %vm1412, %v1727, 0
      %1741 = vmatpush.bf16.msra.mxu0 0
      %1742 = vmatpush.bf16.msra.mxu0 0
      %1743 = vmatpush.bf16.msra.mxu0 0
      %1744 = vmatpush.bf16.msra.mxu0 0
      %1745 = vmatpush.bf16.msra.mxu0 0
      %1746 = vmatpush.bf16.msra.mxu0 0
      %1747 = vmatpush.bf16.msra.mxu0 0
      %1748 = vmatpush.bf16.msra.mxu0 %v1733
      %1749 = vmatmul.bf16.gmra.mxu0 %v1736
      %v1750 = vpop.f32.mrf.mxu0
      %v1751 = vadd.f32 0.0, %v1750
      %v1752 = vpop.f32.mrf.mxu0
      %v1753 = vadd.f32 0.0, %v1752
      %1754 = vmatmul.bf16.gmra.mxu0 %v1739
      %v1755 = vpop.f32.mrf.mxu0
      %v1756 = vadd.f32 0.0, %v1755
      %v1757 = vpop.f32.mrf.mxu0
      %1758 = vdwg.mxu0
      %v1759 = vadd.f32 %v1702, %v1751
      %v1760 = vadd.f32 %v1703, %v1753
      %v1761 = vadd.f32 %v1704, %v1756
      %v1762 = vld [vmem:[#allocation2 + $0x4] sm:$0x8]
      %s1763 = scalar_lea.vmem %s5, 64
      %v1764 = vld [vmem:[%s1763] sm:$0xf]
      %v1765 = vld [vmem:[%s1763 + $0x4] sm:$0xf]
      %v1767 = vunpack.c.l.b16 %v1762
      %v1768 = vpack.c.b16 %v1664, %v1767
      %v1769 = vrot.slane %v1768, 3
      %v1770 = vrot.slane %v1711, 3
      %v1771 = vsel %vm746, %v1769, %v1770
      %v1774 = vunpack.c.l.b16 %v1764
      %v1775 = vunpack.c.l.b16 %v1765
      %v1776 = vpack.c.b16 %v1775, %v1774
      %v1779 = vsel %vm1412, %v1771, 0
      %v1782 = vsel %vm1412, %v1770, 0
      %1784 = vmatpush.bf16.msra.mxu0 0
      %1785 = vmatpush.bf16.msra.mxu0 0
      %1786 = vmatpush.bf16.msra.mxu0 0
      %1787 = vmatpush.bf16.msra.mxu0 0
      %1788 = vmatpush.bf16.msra.mxu0 0
      %1789 = vmatpush.bf16.msra.mxu0 0
      %1790 = vmatpush.bf16.msra.mxu0 0
      %1791 = vmatpush.bf16.msra.mxu0 %v1776
      %1792 = vmatmul.bf16.gmra.mxu0 %v1779
      %v1793 = vpop.f32.mrf.mxu0
      %v1794 = vadd.f32 0.0, %v1793
      %v1795 = vpop.f32.mrf.mxu0
      %v1796 = vadd.f32 0.0, %v1795
      %1797 = vmatmul.bf16.gmra.mxu0 %v1782
      %v1798 = vpop.f32.mrf.mxu0
      %v1799 = vadd.f32 0.0, %v1798
      %v1800 = vpop.f32.mrf.mxu0
      %1801 = vdwg.mxu0
      %v1802 = vadd.f32 %v1759, %v1794
      %v1803 = vadd.f32 %v1760, %v1796
      %v1804 = vadd.f32 %v1761, %v1799
      %v1805 = vld [vmem:[%s6] sm:$0x1]
      %v1807 = vperm.slane %v1805, 0
      %v1809 = vadd.f32 %v1802, %v1807
      %v1810 = vadd.f32 %v1803, %v1807
      %v1811 = vadd.f32 %v1804, %v1807
      %1815 = vrot.lane.b32.xlu0 %v1176, 64
      %v1816 = vpop.permute.xlu0 %1815
      %1817 = vrot.lane.b32.xlu0 %v1177, 64
      %v1818 = vpop.permute.xlu0 %1817
      %1819 = vrot.lane.b32.xlu0 %v1178, 64
      %v1820 = vpop.permute.xlu0 %1819
      %v1824 = vadd.f32 %v1809, %v1816
      %v1825 = vadd.f32 %v1810, %v1818
      %v1826 = vadd.f32 %v1811, %v1820
      %v1827 = vxor.u32 %v1824, 2147483648
      %v1828 = vxor.u32 %v1825, 2147483648
      %v1829 = vxor.u32 %v1826, 2147483648
      %v1830 = vmul.f32 %v1827, 1.442695
      %v1831 = vpow.pop %v1830
      %v1832 = vmul.f32 %v1828, 1.442695
      %v1833 = vpow.pop %v1832
      %v1834 = vmul.f32 %v1829, 1.442695
      %v1835 = vpow.pop %v1834
      %v1836 = vadd.f32 %v1831, 1.0
      %v1837 = vadd.f32 %v1833, 1.0
      %v1838 = vadd.f32 %v1835, 1.0
      %v1839 = vrcp.pop %v1836
      %v1840 = vmul.f32 %v1836, %v1839
      %v1841 = vsub.f32 1.0, %v1840
      %v1842 = vmul.f32 %v1839, %v1841
      %v1843 = vadd.f32 %v1839, %v1842
      %vm1844 = vweird.f32 %v1836
      %vm1845 = vweird.f32 %v1839
      %vm1846 = vmor %vm1844, %vm1845
      %v1847 = vsel %vm1846, %v1839, %v1843
      %v1848 = vand.u32 2147483647, %v1836
      %vm1849 = vcmp.eq.f32.partialorder %v1848, 8.507059e+37
      %v1850 = vand.u32 %v1836, 2147483648
      %v1851 = vor.u32 1.1754944e-38, %v1850
      %v1852 = vsel %vm1849, %v1851, %v1847
      %v1853 = vmul.f32 1.0, %v1852
      %v1854 = vrcp.pop %v1837
      %v1855 = vmul.f32 %v1837, %v1854
      %v1856 = vsub.f32 1.0, %v1855
      %v1857 = vmul.f32 %v1854, %v1856
      %v1858 = vadd.f32 %v1854, %v1857
      %vm1859 = vweird.f32 %v1837
      %vm1860 = vweird.f32 %v1854
      %vm1861 = vmor %vm1859, %vm1860
      %v1862 = vsel %vm1861, %v1854, %v1858
      %v1863 = vand.u32 2147483647, %v1837
      %vm1864 = vcmp.eq.f32.partialorder %v1863, 8.507059e+37
      %v1865 = vand.u32 %v1837, 2147483648
      %v1866 = vor.u32 1.1754944e-38, %v1865
      %v1867 = vsel %vm1864, %v1866, %v1862
      %v1868 = vmul.f32 1.0, %v1867
      %v1869 = vrcp.pop %v1838
      %v1870 = vmul.f32 %v1838, %v1869
      %v1871 = vsub.f32 1.0, %v1870
      %v1872 = vmul.f32 %v1869, %v1871
      %v1873 = vadd.f32 %v1869, %v1872
      %vm1874 = vweird.f32 %v1838
      %vm1875 = vweird.f32 %v1869
      %vm1876 = vmor %vm1874, %vm1875
      %v1877 = vsel %vm1876, %v1869, %v1873
      %v1878 = vand.u32 2147483647, %v1838
      %vm1879 = vcmp.eq.f32.partialorder %v1878, 8.507059e+37
      %v1880 = vand.u32 %v1838, 2147483648
      %v1881 = vor.u32 1.1754944e-38, %v1880
      %v1882 = vsel %vm1879, %v1881, %v1877
      %v1883 = vmul.f32 1.0, %v1882
      %v1884 = vtanh.pop %v1824
      %v1885 = vtanh.pop %v1825
      %v1886 = vtanh.pop %v1826
      %1887 = vrot.lane.b32.xlu0 %v1236, 48
      %v1888 = vpop.permute.xlu0 %1887
      %1889 = vrot.lane.b32.xlu0 %v1237, 48
      %v1890 = vpop.permute.xlu0 %1889
      %1891 = vrot.lane.b32.xlu0 %v1238, 48
      %v1892 = vpop.permute.xlu0 %1891
      %v1896 = vmul.f32 %v1853, %v1888
      %v1897 = vmul.f32 %v1868, %v1890
      %v1898 = vmul.f32 %v1883, %v1892
      %1902 = vrot.lane.b32.xlu0 %v1884, 112
      %v1903 = vpop.permute.xlu0 %1902
      %1904 = vrot.lane.b32.xlu0 %v1885, 112
      %v1905 = vpop.permute.xlu0 %1904
      %1906 = vrot.lane.b32.xlu0 %v1886, 112
      %v1907 = vpop.permute.xlu0 %1906
      %v1911 = vmul.f32 %v1853, %v1903
      %v1912 = vmul.f32 %v1868, %v1905
      %v1913 = vmul.f32 %v1883, %v1907
      %1917 = vrot.lane.b32.xlu0 %v1911, 32
      %v1918 = vpop.permute.xlu0 %1917
      %1919 = vrot.lane.b32.xlu0 %v1912, 32
      %v1920 = vpop.permute.xlu0 %1919
      %1921 = vrot.lane.b32.xlu0 %v1913, 32
      %v1922 = vpop.permute.xlu0 %1921
      %v1926 = vadd.f32 %v1896, %v1918
      %v1927 = vadd.f32 %v1897, %v1920
      %v1928 = vadd.f32 %v1898, %v1922
      %v1929 = vmul.f32 %v1926, %v1290
      %v1930 = vmul.f32 %v1927, %v1295
      %v1931 = vmul.f32 %v1928, %v1300
      %v1932 = vadd.f32 %v1176, %v1809
      %v1933 = vadd.f32 %v1177, %v1810
      %v1934 = vadd.f32 %v1178, %v1811
      %v1935 = vpack.c.bf16 %v1929, %v1929
      %v1936 = vpack.c.bf16 %v1930, %v1930
      %v1937 = vpack.c.bf16 %v1931, %v1931
      %v1939 = vshll.u32 %v1935, 16
      %v1941 = vrot.slane %v1939, 5
      %v1942 = vshrl.u32 %v1935, 16
      %v1944 = vrot.slane %v1942, 4
      %v1945 = vor.u32 %v1944, %v1941
      %v1946 = vrot.slane %v1945, 4
      %v1948 = vshll.u32 %v1936, 16
      %v1950 = vrot.slane %v1948, 5
      %v1951 = vsel %vm1317, %v1946, %v1950
      %v1952 = vshrl.u32 %v1936, 16
      %v1954 = vrot.slane %v1952, 4
      %v1955 = vor.u32 %v1954, %v1950
      %v1956 = vrot.slane %v1955, 4
      %v1958 = vshll.u32 %v1937, 16
      %v1960 = vrot.slane %v1958, 5
      %v1961 = vsel %vm1317, %v1956, %v1960
      %v1962 = vshrl.u32 %v1937, 16
      %v1964 = vrot.slane %v1962, 4
      %v1965 = vor.u32 %v1964, %v1960
      %v1966 = vrot.slane %v1965, 4
      %1967 = vrot.lane.b32.xlu0 %v1941, 96
      %v1968 = vpop.permute.xlu0 %1967
      %1969 = vrot.lane.b32.xlu0 %v1951, 96
      %v1970 = vpop.permute.xlu0 %1969
      %1971 = vrot.lane.b32.xlu0 %v1961, 96
      %v1972 = vpop.permute.xlu0 %1971
      %1973 = vrot.lane.b32.xlu0 %v1966, 96
      %v1974 = vpop.permute.xlu0 %1973
      %v1979 = vsel %vm1361, %v1968, %v1510
      %1980 = vst [vmem:[#allocation2] sm:$0x8] %v1979
      %1981 = vst.msk [vmem:[#allocation2 + $0x4] sm:$0xf] %vm1305, %v1970
      %1982 = vst.msk [vmem:[#allocation2 + $0x8] sm:$0xf] %vm1305, %v1972
      %v1983 = vld [vmem:[#allocation2 + $0xc] sm:$0xf]
      %v1984 = vsel %vm1368, %v1974, %v1983
      %1985 = vst [vmem:[#allocation2 + $0xc] sm:$0xf] %v1984
      %v1986 = vld [vmem:[#allocation2] sm:$0xf]
      %v1987 = vld [vmem:[#allocation2 + $0x4] sm:$0xf]
      %v1988 = vld [vmem:[#allocation2 + $0x8] sm:$0xf]
      %v1989 = vld [vmem:[%s7] sm:$0xf]
      %v1990 = vld [vmem:[%s7 + $0x4] sm:$0xf]
      %v1991 = vld [vmem:[#allocation2 + $0xc] sm:$0x1]
      %s1992 = scalar_lea.vmem %s7, 8
      %v1993 = vld [vmem:[%s1992] sm:$0xf]
      %v1994 = vld [vmem:[%s1992 + $0x4] sm:$0xf]
      %v1999 = vunpack.c.l.b16 %v1986
      %v2000 = vunpack.c.l.b16 %v1987
      %v2001 = vunpack.c.l.b16 %v1988
      %v2002 = vunpack.c.l.b16 %v1991
      %v2003 = vpack.c.b16 %v2000, %v1999
      %v2004 = vpack.c.b16 %v2002, %v2001
      %v2006 = vshrl.u32 %v2003, 16
      %v2008 = vshll.u32 %v2003, 16
      %v2010 = vrot.slane %v2008, 1
      %v2011 = vor.u32 %v2006, %v2010
      %v2013 = vshll.u32 %v2004, 16
      %v2015 = vrot.slane %v2013, 1
      %v2016 = vsel %vm548, %v2011, %v2015
      %v2017 = vshrl.u32 %v2004, 16
      %v2019 = vor.u32 %v2017, %v2015
      %v2022 = vunpack.c.l.b16 %v1993
      %v2023 = vunpack.c.l.b16 %v1994
      %v2024 = vpack.c.b16 %v2023, %v2022
      %v2027 = vsel %vm1412, %v2016, 0
      %v2030 = vsel %vm1412, %v2019, 0
      %2032 = vmatpush.bf16.msra.mxu0 0
      %2033 = vmatpush.bf16.msra.mxu0 0
      %2034 = vmatpush.bf16.msra.mxu0 0
      %2035 = vmatpush.bf16.msra.mxu0 0
      %2036 = vmatpush.bf16.msra.mxu0 0
      %2037 = vmatpush.bf16.msra.mxu0 0
      %2038 = vmatpush.bf16.msra.mxu0 0
      %2039 = vmatpush.bf16.msra.mxu0 %v2024
      %2040 = vmatmul.bf16.gmra.mxu0 %v2027
      %v2041 = vpop.f32.mrf.mxu0
      %v2042 = vadd.f32 0.0, %v2041
      %v2043 = vpop.f32.mrf.mxu0
      %v2044 = vadd.f32 0.0, %v2043
      %2045 = vmatmul.bf16.gmra.mxu0 %v2030
      %v2046 = vpop.f32.mrf.mxu0
      %v2047 = vadd.f32 0.0, %v2046
      %v2048 = vpop.f32.mrf.mxu0
      %2049 = vdwg.mxu0
      %v2050 = vpack.c.b16 %v2001, %v2001
      %v2053 = vunpack.c.l.b16 %v1989
      %v2054 = vunpack.c.l.b16 %v1990
      %v2055 = vpack.c.b16 %v2054, %v2053
      %v2057 = vsel %vm1412, %v2003, 0
      %v2060 = vsel %vm1412, %v2050, 0
      %2062 = vmatpush.bf16.msra.mxu0 0
      %2063 = vmatpush.bf16.msra.mxu0 0
      %2064 = vmatpush.bf16.msra.mxu0 0
      %2065 = vmatpush.bf16.msra.mxu0 0
      %2066 = vmatpush.bf16.msra.mxu0 0
      %2067 = vmatpush.bf16.msra.mxu0 0
      %2068 = vmatpush.bf16.msra.mxu0 0
      %2069 = vmatpush.bf16.msra.mxu0 %v2055
      %2070 = vmatmul.bf16.gmra.mxu0 %v2057
      %v2071 = vpop.f32.mrf.mxu0
      %v2072 = vadd.f32 %v2042, %v2071
      %v2073 = vpop.f32.mrf.mxu0
      %v2074 = vadd.f32 %v2044, %v2073
      %2075 = vmatmul.bf16.gmra.mxu0 %v2060
      %v2076 = vpop.f32.mrf.mxu0
      %v2077 = vadd.f32 %v2047, %v2076
      %v2078 = vpop.f32.mrf.mxu0
      %2079 = vdwg.mxu0
      %v2080 = vld [vmem:[#allocation2] sm:$0xe]
      %s2081 = scalar_lea.vmem %s7, 16
      %v2082 = vld [vmem:[%s2081] sm:$0xf]
      %v2083 = vld [vmem:[%s2081 + $0x4] sm:$0xf]
      %v2085 = vunpack.c.l.b16 %v2080
      %v2086 = vpack.c.b16 %v2000, %v2085
      %v2087 = vrot.slane %v2086, 1
      %v2088 = vrot.slane %v2004, 1
      %v2089 = vsel %vm674, %v2087, %v2088
      %v2092 = vunpack.c.l.b16 %v2082
      %v2093 = vunpack.c.l.b16 %v2083
      %v2094 = vpack.c.b16 %v2093, %v2092
      %v2097 = vsel %vm1412, %v2089, 0
      %v2100 = vsel %vm1412, %v2088, 0
      %2102 = vmatpush.bf16.msra.mxu0 0
      %2103 = vmatpush.bf16.msra.mxu0 0
      %2104 = vmatpush.bf16.msra.mxu0 0
      %2105 = vmatpush.bf16.msra.mxu0 0
      %2106 = vmatpush.bf16.msra.mxu0 0
      %2107 = vmatpush.bf16.msra.mxu0 0
      %2108 = vmatpush.bf16.msra.mxu0 0
      %2109 = vmatpush.bf16.msra.mxu0 %v2094
      %2110 = vmatmul.bf16.gmra.mxu0 %v2097
      %v2111 = vpop.f32.mrf.mxu0
      %v2112 = vadd.f32 0.0, %v2111
      %v2113 = vpop.f32.mrf.mxu0
      %v2114 = vadd.f32 0.0, %v2113
      %2115 = vmatmul.bf16.gmra.mxu0 %v2100
      %v2116 = vpop.f32.mrf.mxu0
      %v2117 = vadd.f32 0.0, %v2116
      %v2118 = vpop.f32.mrf.mxu0
      %2119 = vdwg.mxu0
      %v2120 = vadd.f32 %v2072, %v2112
      %v2121 = vadd.f32 %v2074, %v2114
      %v2122 = vadd.f32 %v2077, %v2117
      %v2123 = vld [vmem:[#allocation2] sm:$0x8]
      %v2124 = vld [vmem:[#allocation2 + $0xc] sm:$0x7]
      %s2125 = scalar_lea.vmem %s7, 24
      %v2126 = vld [vmem:[%s2125] sm:$0xf]
      %v2127 = vld [vmem:[%s2125 + $0x4] sm:$0xf]
      %v2130 = vunpack.c.l.b16 %v2123
      %v2131 = vunpack.c.l.b16 %v2124
      %v2132 = vpack.c.b16 %v2000, %v2130
      %v2133 = vpack.c.b16 %v2131, %v2001
      %v2134 = vrot.slane %v2132, 3
      %v2135 = vrot.slane %v2133, 3
      %v2136 = vsel %vm746, %v2134, %v2135
      %v2139 = vunpack.c.l.b16 %v2126
      %v2140 = vunpack.c.l.b16 %v2127
      %v2141 = vpack.c.b16 %v2140, %v2139
      %v2144 = vsel %vm1412, %v2136, 0
      %v2147 = vsel %vm1412, %v2135, 0
      %2149 = vmatpush.bf16.msra.mxu0 0
      %2150 = vmatpush.bf16.msra.mxu0 0
      %2151 = vmatpush.bf16.msra.mxu0 0
      %2152 = vmatpush.bf16.msra.mxu0 0
      %2153 = vmatpush.bf16.msra.mxu0 0
      %2154 = vmatpush.bf16.msra.mxu0 0
      %2155 = vmatpush.bf16.msra.mxu0 0
      %2156 = vmatpush.bf16.msra.mxu0 %v2141
      %2157 = vmatmul.bf16.gmra.mxu0 %v2144
      %v2158 = vpop.f32.mrf.mxu0
      %v2159 = vadd.f32 0.0, %v2158
      %v2160 = vpop.f32.mrf.mxu0
      %v2161 = vadd.f32 0.0, %v2160
      %2162 = vmatmul.bf16.gmra.mxu0 %v2147
      %v2163 = vpop.f32.mrf.mxu0
      %v2164 = vadd.f32 0.0, %v2163
      %v2165 = vpop.f32.mrf.mxu0
      %2166 = vdwg.mxu0
      %v2167 = vadd.f32 %v2120, %v2159
      %v2168 = vadd.f32 %v2121, %v2161
      %v2169 = vadd.f32 %v2122, %v2164
      %v2170 = vld [vmem:[#allocation2 + $0xc] sm:$0xf]
      %s2171 = scalar_lea.vmem %s7, 32
      %v2172 = vld [vmem:[%s2171] sm:$0xf]
      %v2173 = vld [vmem:[%s2171 + $0x4] sm:$0xf]
      %v2175 = vunpack.c.l.b16 %v2170
      %v2176 = vpack.c.b16 %v2175, %v2001
      %v2178 = vshrl.u32 %v2132, 16
      %v2180 = vrot.slane %v2178, 3
      %v2181 = vshll.u32 %v2132, 16
      %v2183 = vrot.slane %v2181, 4
      %v2184 = vor.u32 %v2180, %v2183
      %v2186 = vshrl.u32 %v2176, 16
      %v2188 = vrot.slane %v2186, 3
      %v2189 = vshll.u32 %v2176, 16
      %v2191 = vrot.slane %v2189, 4
      %v2192 = vor.u32 %v2188, %v2191
      %v2193 = vsel %vm814, %v2184, %v2192
      %v2196 = vunpack.c.l.b16 %v2172
      %v2197 = vunpack.c.l.b16 %v2173
      %v2198 = vpack.c.b16 %v2197, %v2196
      %v2201 = vsel %vm1412, %v2193, 0
      %v2204 = vsel %vm1412, %v2192, 0
      %2206 = vmatpush.bf16.msra.mxu0 0
      %2207 = vmatpush.bf16.msra.mxu0 0
      %2208 = vmatpush.bf16.msra.mxu0 0
      %2209 = vmatpush.bf16.msra.mxu0 0
      %2210 = vmatpush.bf16.msra.mxu0 0
      %2211 = vmatpush.bf16.msra.mxu0 0
      %2212 = vmatpush.bf16.msra.mxu0 0
      %2213 = vmatpush.bf16.msra.mxu0 %v2198
      %2214 = vmatmul.bf16.gmra.mxu0 %v2201
      %v2215 = vpop.f32.mrf.mxu0
      %v2216 = vadd.f32 0.0, %v2215
      %v2217 = vpop.f32.mrf.mxu0
      %v2218 = vadd.f32 0.0, %v2217
      %2219 = vmatmul.bf16.gmra.mxu0 %v2204
      %v2220 = vpop.f32.mrf.mxu0
      %v2221 = vadd.f32 0.0, %v2220
      %v2222 = vpop.f32.mrf.mxu0
      %2223 = vdwg.mxu0
      %v2224 = vadd.f32 %v2167, %v2216
      %v2225 = vadd.f32 %v2168, %v2218
      %v2226 = vadd.f32 %v2169, %v2221
      %s2227 = scalar_lea.vmem %s7, 40
      %v2228 = vld [vmem:[%s2227] sm:$0xf]
      %v2229 = vld [vmem:[%s2227 + $0x4] sm:$0xf]
      %v2230 = vpack.c.b16 %v2001, %v2000
      %v2231 = vpack.c.b16 %v2175, %v2175
      %v2234 = vunpack.c.l.b16 %v2228
      %v2235 = vunpack.c.l.b16 %v2229
      %v2236 = vpack.c.b16 %v2235, %v2234
      %v2239 = vsel %vm1412, %v2230, 0
      %v2242 = vsel %vm1412, %v2231, 0
      %2244 = vmatpush.bf16.msra.mxu0 0
      %2245 = vmatpush.bf16.msra.mxu0 0
      %2246 = vmatpush.bf16.msra.mxu0 0
      %2247 = vmatpush.bf16.msra.mxu0 0
      %2248 = vmatpush.bf16.msra.mxu0 0
      %2249 = vmatpush.bf16.msra.mxu0 0
      %2250 = vmatpush.bf16.msra.mxu0 0
      %2251 = vmatpush.bf16.msra.mxu0 %v2236
      %2252 = vmatmul.bf16.gmra.mxu0 %v2239
      %v2253 = vpop.f32.mrf.mxu0
      %v2254 = vadd.f32 0.0, %v2253
      %v2255 = vpop.f32.mrf.mxu0
      %v2256 = vadd.f32 0.0, %v2255
      %2257 = vmatmul.bf16.gmra.mxu0 %v2242
      %v2258 = vpop.f32.mrf.mxu0
      %v2259 = vadd.f32 0.0, %v2258
      %v2260 = vpop.f32.mrf.mxu0
      %2261 = vdwg.mxu0
      %v2262 = vadd.f32 %v2224, %v2254
      %v2263 = vadd.f32 %v2225, %v2256
      %v2264 = vadd.f32 %v2226, %v2259
      %v2265 = vld [vmem:[#allocation2 + $0x4] sm:$0xc]
      %v2266 = vld [vmem:[#allocation2 + $0x8] sm:$0xf]
      %v2267 = vld [vmem:[#allocation2 + $0xc] sm:$0xf]
      %v2268 = vld [vmem:[#allocation2 + $0x10] sm:$0x3]
      %s2269 = scalar_lea.vmem %s7, 48
      %v2270 = vld [vmem:[%s2269] sm:$0xf]
      %v2271 = vld [vmem:[%s2269 + $0x4] sm:$0xf]
      %v2276 = vunpack.c.l.b16 %v2265
      %v2277 = vunpack.c.l.b16 %v2266
      %v2278 = vunpack.c.l.b16 %v2267
      %v2279 = vunpack.c.l.b16 %v2268
      %v2280 = vpack.c.b16 %v2277, %v2276
      %v2281 = vpack.c.b16 %v2279, %v2278
      %v2282 = vrot.slane %v2280, 2
      %v2283 = vrot.slane %v2281, 2
      %v2284 = vsel %vm968, %v2282, %v2283
      %v2287 = vunpack.c.l.b16 %v2270
      %v2288 = vunpack.c.l.b16 %v2271
      %v2289 = vpack.c.b16 %v2288, %v2287
      %v2292 = vsel %vm1412, %v2284, 0
      %v2295 = vsel %vm1412, %v2283, 0
      %2297 = vmatpush.bf16.msra.mxu0 0
      %2298 = vmatpush.bf16.msra.mxu0 0
      %2299 = vmatpush.bf16.msra.mxu0 0
      %2300 = vmatpush.bf16.msra.mxu0 0
      %2301 = vmatpush.bf16.msra.mxu0 0
      %2302 = vmatpush.bf16.msra.mxu0 0
      %2303 = vmatpush.bf16.msra.mxu0 0
      %2304 = vmatpush.bf16.msra.mxu0 %v2289
      %2305 = vmatmul.bf16.gmra.mxu0 %v2292
      %v2306 = vpop.f32.mrf.mxu0
      %v2307 = vadd.f32 0.0, %v2306
      %v2308 = vpop.f32.mrf.mxu0
      %v2309 = vadd.f32 0.0, %v2308
      %2310 = vmatmul.bf16.gmra.mxu0 %v2295
      %v2311 = vpop.f32.mrf.mxu0
      %v2312 = vadd.f32 0.0, %v2311
      %v2313 = vpop.f32.mrf.mxu0
      %2314 = vdwg.mxu0
      %v2315 = vadd.f32 %v2262, %v2307
      %v2316 = vadd.f32 %v2263, %v2309
      %v2317 = vadd.f32 %v2264, %v2312
      %v2318 = vld [vmem:[#allocation2 + $0x10] sm:$0x7]
      %s2319 = scalar_lea.vmem %s7, 56
      %v2320 = vld [vmem:[%s2319] sm:$0xf]
      %v2321 = vld [vmem:[%s2319 + $0x4] sm:$0xf]
      %v2323 = vunpack.c.l.b16 %v2318
      %v2324 = vpack.c.b16 %v2323, %v2278
      %v2326 = vshrl.u32 %v2280, 16
      %v2328 = vrot.slane %v2326, 2
      %v2329 = vshll.u32 %v2280, 16
      %v2331 = vrot.slane %v2329, 3
      %v2332 = vor.u32 %v2328, %v2331
      %v2334 = vshrl.u32 %v2324, 16
      %v2336 = vrot.slane %v2334, 2
      %v2337 = vshll.u32 %v2324, 16
      %v2339 = vrot.slane %v2337, 3
      %v2340 = vor.u32 %v2336, %v2339
      %v2341 = vsel %vm1036, %v2332, %v2340
      %v2344 = vunpack.c.l.b16 %v2320
      %v2345 = vunpack.c.l.b16 %v2321
      %v2346 = vpack.c.b16 %v2345, %v2344
      %v2349 = vsel %vm1412, %v2341, 0
      %v2352 = vsel %vm1412, %v2340, 0
      %2354 = vmatpush.bf16.msra.mxu0 0
      %2355 = vmatpush.bf16.msra.mxu0 0
      %2356 = vmatpush.bf16.msra.mxu0 0
      %2357 = vmatpush.bf16.msra.mxu0 0
      %2358 = vmatpush.bf16.msra.mxu0 0
      %2359 = vmatpush.bf16.msra.mxu0 0
      %2360 = vmatpush.bf16.msra.mxu0 0
      %2361 = vmatpush.bf16.msra.mxu0 %v2346
      %2362 = vmatmul.bf16.gmra.mxu0 %v2349
      %v2363 = vpop.f32.mrf.mxu0
      %v2364 = vadd.f32 0.0, %v2363
      %v2365 = vpop.f32.mrf.mxu0
      %v2366 = vadd.f32 0.0, %v2365
      %2367 = vmatmul.bf16.gmra.mxu0 %v2352
      %v2368 = vpop.f32.mrf.mxu0
      %v2369 = vadd.f32 0.0, %v2368
      %v2370 = vpop.f32.mrf.mxu0
      %2371 = vdwg.mxu0
      %v2372 = vadd.f32 %v2315, %v2364
      %v2373 = vadd.f32 %v2316, %v2366
      %v2374 = vadd.f32 %v2317, %v2369
      %v2375 = vld [vmem:[#allocation2 + $0x4] sm:$0x8]
      %s2376 = scalar_lea.vmem %s7, 64
      %v2377 = vld [vmem:[%s2376] sm:$0xf]
      %v2378 = vld [vmem:[%s2376 + $0x4] sm:$0xf]
      %v2380 = vunpack.c.l.b16 %v2375
      %v2381 = vpack.c.b16 %v2277, %v2380
      %v2382 = vrot.slane %v2381, 3
      %v2383 = vrot.slane %v2324, 3
      %v2384 = vsel %vm746, %v2382, %v2383
      %v2387 = vunpack.c.l.b16 %v2377
      %v2388 = vunpack.c.l.b16 %v2378
      %v2389 = vpack.c.b16 %v2388, %v2387
      %v2392 = vsel %vm1412, %v2384, 0
      %v2395 = vsel %vm1412, %v2383, 0
      %2397 = vmatpush.bf16.msra.mxu0 0
      %2398 = vmatpush.bf16.msra.mxu0 0
      %2399 = vmatpush.bf16.msra.mxu0 0
      %2400 = vmatpush.bf16.msra.mxu0 0
      %2401 = vmatpush.bf16.msra.mxu0 0
      %2402 = vmatpush.bf16.msra.mxu0 0
      %2403 = vmatpush.bf16.msra.mxu0 0
      %2404 = vmatpush.bf16.msra.mxu0 %v2389
      %2405 = vmatmul.bf16.gmra.mxu0 %v2392
      %v2406 = vpop.f32.mrf.mxu0
      %v2407 = vadd.f32 0.0, %v2406
      %v2408 = vpop.f32.mrf.mxu0
      %v2409 = vadd.f32 0.0, %v2408
      %2410 = vmatmul.bf16.gmra.mxu0 %v2395
      %v2411 = vpop.f32.mrf.mxu0
      %v2412 = vadd.f32 0.0, %v2411
      %v2413 = vpop.f32.mrf.mxu0
      %2414 = vdwg.mxu0
      %v2415 = vadd.f32 %v2372, %v2407
      %v2416 = vadd.f32 %v2373, %v2409
      %v2417 = vadd.f32 %v2374, %v2412
      %v2418 = vld [vmem:[%s8] sm:$0x1]
      %v2420 = vperm.slane %v2418, 0
      %v2422 = vadd.f32 %v2415, %v2420
      %v2423 = vadd.f32 %v2416, %v2420
      %v2424 = vadd.f32 %v2417, %v2420
      %v2425 = vld [vmem:[%s9] sm:$0xf]
      %v2426 = vld [vmem:[%s9 + $0x4] sm:$0xf]
      %v2427 = vld [vmem:[%s10] sm:$0xf]
      %v2428 = vld [vmem:[%s10 + $0x4] sm:$0xf]
      %v2432 = vunpack.c.l.b16 %v1935
      %v2433 = vunpack.c.l.b16 %v1936
      %v2434 = vunpack.c.l.b16 %v1937
      %v2435 = vpack.c.b16 %v2433, %v2432
      %v2436 = vpack.c.b16 %v2434, %v2434
      %2437 = vrot.lane.b32.xlu0 %v2435, 96
      %v2438 = vpop.permute.xlu0 %2437
      %2439 = vrot.lane.b32.xlu0 %v2436, 96
      %v2440 = vpop.permute.xlu0 %2439
      %v2443 = vunpack.c.l.b16 %v2427
      %v2444 = vunpack.c.l.b16 %v2428
      %v2445 = vpack.c.b16 %v2444, %v2443
      %v2448 = vsel %vm1412, %v2438, 0
      %v2451 = vsel %vm1412, %v2440, 0
      %2453 = vmatpush.bf16.msra.mxu0 0
      %2454 = vmatpush.bf16.msra.mxu0 0
      %2455 = vmatpush.bf16.msra.mxu0 0
      %2456 = vmatpush.bf16.msra.mxu0 0
      %2457 = vmatpush.bf16.msra.mxu0 0
      %2458 = vmatpush.bf16.msra.mxu0 0
      %2459 = vmatpush.bf16.msra.mxu0 0
      %2460 = vmatpush.bf16.msra.mxu0 %v2445
      %2461 = vmatmul.bf16.gmra.mxu0 %v2448
      %v2462 = vpop.f32.mrf.mxu0
      %v2463 = vadd.f32 0.0, %v2462
      %v2464 = vpop.f32.mrf.mxu0
      %v2465 = vadd.f32 0.0, %v2464
      %2466 = vmatmul.bf16.gmra.mxu0 %v2451
      %v2467 = vpop.f32.mrf.mxu0
      %v2468 = vadd.f32 0.0, %v2467
      %v2469 = vpop.f32.mrf.mxu0
      %2470 = vdwg.mxu0
      %v2474 = vunpack.c.l.b16 %v1312
      %v2475 = vunpack.c.l.b16 %v1313
      %v2476 = vunpack.c.l.b16 %v1314
      %v2477 = vpack.c.b16 %v2475, %v2474
      %v2478 = vpack.c.b16 %v2476, %v2476
      %2479 = vrot.lane.b32.xlu0 %v2477, 96
      %v2480 = vpop.permute.xlu0 %2479
      %2481 = vrot.lane.b32.xlu0 %v2478, 96
      %v2482 = vpop.permute.xlu0 %2481
      %v2485 = vunpack.c.l.b16 %v2425
      %v2486 = vunpack.c.l.b16 %v2426
      %v2487 = vpack.c.b16 %v2486, %v2485
      %v2490 = vsel %vm1412, %v2480, 0
      %v2493 = vsel %vm1412, %v2482, 0
      %2495 = vmatpush.bf16.msra.mxu0 0
      %2496 = vmatpush.bf16.msra.mxu0 0
      %2497 = vmatpush.bf16.msra.mxu0 0
      %2498 = vmatpush.bf16.msra.mxu0 0
      %2499 = vmatpush.bf16.msra.mxu0 0
      %2500 = vmatpush.bf16.msra.mxu0 0
      %2501 = vmatpush.bf16.msra.mxu0 0
      %2502 = vmatpush.bf16.msra.mxu0 %v2487
      %2503 = vmatmul.bf16.gmra.mxu0 %v2490
      %v2504 = vpop.f32.mrf.mxu0
      %v2505 = vadd.f32 %v2463, %v2504
      %v2506 = vpop.f32.mrf.mxu0
      %v2507 = vadd.f32 %v2465, %v2506
      %2508 = vmatmul.bf16.gmra.mxu0 %v2493
      %v2509 = vpop.f32.mrf.mxu0
      %v2510 = vadd.f32 %v2468, %v2509
      %v2511 = vpop.f32.mrf.mxu0
      %2512 = vdwg.mxu0
      %v2513 = vld [vmem:[%s11] sm:$0x1]
      %v2515 = vperm.slane %v2513, 0
      %v2517 = vadd.f32 %v2505, %v2515
      %v2518 = vadd.f32 %v2507, %v2515
      %v2519 = vadd.f32 %v2510, %v2515
      %2523 = vrot.lane.b32.xlu0 %v2422, 48
      %v2524 = vpop.permute.xlu0 %2523
      %2525 = vrot.lane.b32.xlu0 %v2423, 48
      %v2526 = vpop.permute.xlu0 %2525
      %2527 = vrot.lane.b32.xlu0 %v2424, 48
      %v2528 = vpop.permute.xlu0 %2527
      %v2532 = vadd.f32 %v1932, %v2524
      %v2533 = vadd.f32 %v1933, %v2526
      %v2534 = vadd.f32 %v1934, %v2528
      %v2535 = vtanh.pop %v2532
      %v2536 = vtanh.pop %v2533
      %v2537 = vtanh.pop %v2534
      %v2538 = vtanh.pop %v2517
      %v2539 = vtanh.pop %v2518
      %v2540 = vtanh.pop %v2519
      %2544 = vrot.lane.b32.xlu0 %v2538, 48
      %v2545 = vpop.permute.xlu0 %2544
      %2546 = vrot.lane.b32.xlu0 %v2539, 48
      %v2547 = vpop.permute.xlu0 %2546
      %2548 = vrot.lane.b32.xlu0 %v2540, 48
      %v2549 = vpop.permute.xlu0 %2548
      %v2553 = vmul.f32 %v2535, %v2545
      %v2554 = vmul.f32 %v2536, %v2547
      %v2555 = vmul.f32 %v2537, %v2549
      %v2556 = vmul.f32 %v2553, %v1290
      %v2557 = vmul.f32 %v2554, %v1295
      %v2558 = vmul.f32 %v2555, %v1300
      %2562 = vrot.lane.b32.xlu0 %v2556, 80
      %v2563 = vpop.permute.xlu0 %2562
      %2564 = vrot.lane.b32.xlu0 %v2557, 80
      %v2565 = vpop.permute.xlu0 %2564
      %2566 = vrot.lane.b32.xlu0 %v2558, 80
      %v2567 = vpop.permute.xlu0 %2566
      %2571 = vst.msk [vmem:[%s502] sm:$0xff] %vm1412, %v2563
      %2572 = vst.msk [vmem:[%s502 + $0x8] sm:$0xff] %vm1412, %v2565
      %2573 = vst.msk [vmem:[%s502 + $0x10] sm:$0xff] %vm1412, %v2567
      %2577 = vrot.lane.b32.xlu0 %v1302, 96
      %v2578 = vpop.permute.xlu0 %2577
      %2579 = vrot.lane.b32.xlu0 %v1303, 96
      %v2580 = vpop.permute.xlu0 %2579
      %2581 = vrot.lane.b32.xlu0 %v1304, 96
      %v2582 = vpop.permute.xlu0 %2581
      %2586 = vst.msk [vmem:[%s507] sm:$0xff] %vm1412, %v2578
      %2587 = vst.msk [vmem:[%s507 + $0x8] sm:$0xff] %vm1412, %v2580
      %2588 = vst.msk [vmem:[%s507 + $0x10] sm:$0xff] %vm1412, %v2582
      %2592 = vrot.lane.b32.xlu0 %v1929, 96
      %v2593 = vpop.permute.xlu0 %2592
      %2594 = vrot.lane.b32.xlu0 %v1930, 96
      %v2595 = vpop.permute.xlu0 %2594
      %2596 = vrot.lane.b32.xlu0 %v1931, 96
      %v2597 = vpop.permute.xlu0 %2596
      %2601 = vst.msk [vmem:[%s512] sm:$0xff] %vm1412, %v2593
      %2602 = vst.msk [vmem:[%s512 + $0x8] sm:$0xff] %vm1412, %v2595
      %2603 = vst.msk [vmem:[%s512 + $0x10] sm:$0xff] %vm1412, %v2597
      %p2604 = scmp.lt.s32.totalorder %s26, 1
      %s2605 = scalar_select %p2604, %s26, 1
      %s2606 = smul.addr %s2605, 3
      %s2607 = smul.addr %s2606, 8
      %s2608 = scalar_lea.vmem %s12, %s2607
      %p2609 = scmp.lt.s32.totalorder %s26, 1
      %s2610 = scalar_select %p2609, %s26, 1
      %s2611 = smul.addr %s2610, 3
      %s2612 = smul.addr %s2611, 8
      %s2613 = scalar_lea.vmem %s13, %s2612
      %p2614 = scmp.lt.s32.totalorder %s26, 1
      %s2615 = scalar_select %p2614, %s26, 1
      %s2616 = smul.addr %s2615, 3
      %s2617 = smul.addr %s2616, 8
      %s2618 = scalar_lea.vmem %s14, %s2617
      // Predicated region
      $region69: #{closed_call.83} parent=67 // pred_check
        %p2619 = pneg %p306
      $region70: #{closed_call.83} parent=67 // pred_check_branch
        %2621 = sbr.rel (%p2619) target = $region72
      $region71: #{closed_call.83} parent=67 // pred_region
        _
      $region72: #{closed_call.83} parent=67 // pred_fallthru
        _
      // Predicated region
      $region73: #{closed_call.83} parent=67 // pred_check
        %p2622 = pneg %p332
      $region74: #{closed_call.83} parent=67 // pred_check_branch
        %2624 = sbr.rel (%p2622) target = $region76
      $region75: #{closed_call.83} parent=67 // pred_region
        _
      $region76: #{closed_call.83} parent=67 // pred_fallthru
        _
      // Predicated region
      $region77: #{closed_call.83} parent=67 // pred_check
        %p2625 = pneg %p358
      $region78: #{closed_call.83} parent=67 // pred_check_branch
        %2627 = sbr.rel (%p2625) target = $region80
      $region79: #{closed_call.83} parent=67 // pred_region
        _
      $region80: #{closed_call.83} parent=67 // pred_fallthru
        _
    $region68: #{closed_call.83} parent=5 // pred_fallthru
      _
    %p2628 = scmp.le.s32.totalorder 2, %s21
    // Predicated region
    $region81: #{closed_call.83} parent=5 // pred_check
      %p2629 = pneg %p2628
    $region82: #{closed_call.83} parent=5 // pred_check_branch
      %2631 = sbr.rel (%p2629) target = $region84
    $region83: #{closed_call.83} parent=5 // pred_region
      %s2632 = ssub.s32 %s21, 2
      // Predicated region
      $region85: #{closed_call.83} parent=83 // pred_check
        %p2633 = pneg %p312
      $region86: #{closed_call.83} parent=83 // pred_check_branch
        %2635 = sbr.rel (%p2633) target = $region88
      $region87: #{closed_call.83} parent=83 // pred_region
        %p2636 = scmp.lt.s32.totalorder %s27, 1
        %s2637 = scalar_select %p2636, %s27, 1
        %s2638 = smul.addr %s2637, 3
        %s2639 = smul.addr %s2638, 8
        %s2640 = scalar_lea.vmem %s12, %s2639
      $region88: #{closed_call.83} parent=83 // pred_fallthru
        _
      // Predicated region
      $region89: #{closed_call.83} parent=83 // pred_check
        %p2641 = pneg %p338
      $region90: #{closed_call.83} parent=83 // pred_check_branch
        %2643 = sbr.rel (%p2641) target = $region92
      $region91: #{closed_call.83} parent=83 // pred_region
        %p2644 = scmp.lt.s32.totalorder %s27, 1
        %s2645 = scalar_select %p2644, %s27, 1
        %s2646 = smul.addr %s2645, 3
        %s2647 = smul.addr %s2646, 8
        %s2648 = scalar_lea.vmem %s13, %s2647
      $region92: #{closed_call.83} parent=83 // pred_fallthru
        _
      // Predicated region
      $region93: #{closed_call.83} parent=83 // pred_check
        %p2649 = pneg %p364
      $region94: #{closed_call.83} parent=83 // pred_check_branch
        %2651 = sbr.rel (%p2649) target = $region96
      $region95: #{closed_call.83} parent=83 // pred_region
        %p2652 = scmp.lt.s32.totalorder %s27, 1
        %s2653 = scalar_select %p2652, %s27, 1
        %s2654 = smul.addr %s2653, 3
        %s2655 = smul.addr %s2654, 8
        %s2656 = scalar_lea.vmem %s14, %s2655
      $region96: #{closed_call.83} parent=83 // pred_fallthru
        _
    $region84: #{closed_call.83} parent=5 // pred_fallthru
      _
  $region6: #{closed_call.83} parent=0 // loop_footer
    %s25 = sadd.s32 1, %s21
  $region7: #{closed_call.83} parent=0 // loop_footer_branch
    %20 = sbr.rel target = $region3
  $region8: #{closed_call.83} parent=0 // loop_exit
    _

// kernel: custom-call.1
$region0: #{custom-call.1}
  %s0 = inlined_call_operand.hbm [shape: f32[4,2,16,16], index: 0, kind: output, shape index: {}]

</llo_original>
